<compile_context>
chip_gen: v6e
topology: v6e:2x2x1
jax: 0.10.0
libtpu: 0.0.40
codegen_flags: <defaults>
</compile_context>

<pallas_src>
import functools
import math

import numpy as np
import jax
import jax.numpy as jnp
from jax.experimental import pallas as pl
from jax.experimental.pallas import tpu as pltpu


# ----------------------------------------------------------------------------
# Config (small shapes consistent with the module; img_size must be a multiple
# of 16 because of the 4*2*2 T2T downsampling)
# ----------------------------------------------------------------------------
CFG = dict(
    img_size=32,
    in_chans=3,
    token_dim=16,
    embed_dim=64,
    depth=2,
    num_heads=4,
    num_classes=10,
    mlp_ratio=4.0,
    kernel_ratio=0.5,
)

_VMEM_LIMIT = 64 * 1024 * 1024     # explicit scoped-VMEM ceiling (<= v7x physical)
_ACT_DTYPE = jnp.bfloat16          # inter-kernel activation dtype


# ----------------------------------------------------------------------------
# In-kernel helpers (only ops with known-good Mosaic lowerings)
# ----------------------------------------------------------------------------
def _ln(x, g, b, eps=1e-5):
    """LayerNorm over last dim (f32).  g, b: (1, D)."""
    mu = jnp.mean(x, axis=-1, keepdims=True)
    xc = x - mu
    var = jnp.mean(xc * xc, axis=-1, keepdims=True)
    return xc * jax.lax.rsqrt(var + eps) * g + b


def _erf_approx(x):
    # Abramowitz & Stegun 7.1.26 polynomial erf, |abs err| < 1.6e-7.  Used
    # because lax.erf may not have a Mosaic lowering.
    a1, a2, a3, a4, a5 = (0.254829592, -0.284496736, 1.421413741,
                          -1.453152027, 1.061405429)
    p = 0.3275911
    sgn = jnp.where(x >= 0.0, 1.0, -1.0)
    ax = jnp.abs(x)
    t = 1.0 / (1.0 + p * ax)
    poly = ((((a5 * t + a4) * t + a3) * t + a2) * t + a1) * t
    return sgn * (1.0 - poly * jnp.exp(-ax * ax))


def _gelu(x):
    # nn.GELU() default (erf formulation), erf approximated as above.
    return 0.5 * x * (1.0 + _erf_approx(x * 0.7071067811865475))


def _bf16_dot(a, b):
    """bf16 operands, f32 accumulation on the MXU."""
    return jnp.dot(a.astype(jnp.bfloat16), b.astype(jnp.bfloat16),
                   preferred_element_type=jnp.float32)


def _pick_bt_merge(B, T, row_budget=2048):
    """Batch-tile for kernels that merge batch into the sublane (row) dim."""
    if T % 8 != 0:          # merging non-8-aligned T would need a relayout
        return 1
    bt = max(1, min(B, max(1, row_budget // T)))
    while B % bt:
        bt -= 1
    return bt


def _pick_bt_loop(B, max_bt=8):
    """Batch-tile for kernels that loop per batch element inside the body."""
    bt = min(B, max_bt)
    while B % bt:
        bt -= 1
    return bt


# ----------------------------------------------------------------------------
# Fused Token_performer kernel (one grid step per batch tile)
# ----------------------------------------------------------------------------
def _token_performer_kernel(x_ref, n1g_ref, n1b_ref, kqvw_ref, kqvb_ref, wt_ref,
                            projw_ref, projb_ref, n2g_ref, n2b_ref,
                            fc1w_ref, fc1b_ref, fc2w_ref, fc2b_ref, o_ref):
    bt, T, dim = x_ref.shape
    emb = projw_ref.shape[0]
    m = wt_ref.shape[1]
    inv_sqrt_m = 1.0 / math.sqrt(m)

    # Wrapper guarantees T % 8 == 0 when bt > 1, so this reshape is layout-free.
    x2 = x_ref[...].astype(jnp.float32).reshape(bt * T, dim)

    n1g, n1b = n1g_ref[...], n1b_ref[...]
    n2g, n2b = n2g_ref[...], n2b_ref[...]
    kqvb, projb = kqvb_ref[...], projb_ref[...]
    fc1b, fc2b = fc1b_ref[...], fc2b_ref[...]
    pw, f1w, f2w = projw_ref[...], fc1w_ref[...], fc2w_ref[...]
    wt = wt_ref[...]

    # Fused LN1 -> k|q|v projection: ONE wide MXU matmul (bf16 ops, f32 acc).
    xn = _ln(x2, n1g, n1b)
    kqv = _bf16_dot(xn, kqvw_ref[...]) + kqvb                   # (bt*T, 3*emb)
    k = kqv[:, :emb]
    q = kqv[:, emb:2 * emb]
    v = kqv[:, 2 * emb:]

    def prm_exp(z):                                             # positive random features
        zd = 0.5 * jnp.sum(z * z, axis=-1, keepdims=True)       # f32
        wtx = _bf16_dot(z, wt)                                  # (N, m), f32 acc
        return jnp.exp(wtx - zd) * inv_sqrt_m                   # exponent <= m/2, finite

    kp = prm_exp(k)                                             # (bt*T, m)
    qp = prm_exp(q)                                             # (bt*T, m)

    # Linear attention (per batch element; bt is small and static).
    for b in range(bt):
        r0 = b * T
        kp_b = kp[r0:r0 + T]
        qp_b = qp[r0:r0 + T]
        v_b = v[r0:r0 + T]

        # True linear order: O(T*m*emb), no (T,T) score matrix.
        ksum = jnp.sum(kp_b, axis=0, keepdims=True)             # (1, m)
        kptv = jax.lax.dot_general(kp_b, v_b, (((0,), (0,)), ((), ())),
                                   preferred_element_type=jnp.float32)  # (m, emb)
        d = jnp.sum(qp_b * ksum, axis=-1, keepdims=True)        # (T, 1)
        y = jnp.dot(qp_b, kptv, preferred_element_type=jnp.float32) / (d + 1e-8)

        # skip connection on v (as in the reference Token_performer)
        y = v_b + (_bf16_dot(y, pw) + projb)

        # fused LN2 + MLP (ratio 1.0) + residual; hidden never leaves VMEM.
        yn = _ln(y, n2g, n2b)
        h = _gelu(_bf16_dot(yn, f1w) + fc1b)
        h = _bf16_dot(h, f2w) + fc2b
        o_ref[b] = (y + h).astype(o_ref.dtype)


def token_performer_forward(p, x):
    """Fused Token_performer forward (eval). x: (B, T, dim) -> (B, T, emb) bf16."""
    B, T, dim = x.shape
    emb = p["proj_w"].shape[0]
    bt = _pick_bt_merge(B, T)

    weights = (p["norm1_g"], p["norm1_b"], p["kqv_w"], p["kqv_b"], p["w_t"],
               p["proj_w"], p["proj_b"], p["norm2_g"], p["norm2_b"],
               p["fc1_w"], p["fc1_b"], p["fc2_w"], p["fc2_b"])

    return pl.pallas_call(
        _token_performer_kernel,
        out_shape=jax.ShapeDtypeStruct((B, T, emb), _ACT_DTYPE),
        grid=(B // bt,),
        in_specs=[pl.BlockSpec((bt, T, dim), lambda i: (i, 0, 0))]
        + [pl.BlockSpec(w.shape, lambda i: (0, 0)) for w in weights],
        out_specs=pl.BlockSpec((bt, T, emb), lambda i: (i, 0, 0)),
        compiler_params=pltpu.CompilerParams(
            dimension_semantics=("parallel",),
            vmem_limit_bytes=_VMEM_LIMIT),
    )(x, *weights)


# ----------------------------------------------------------------------------
# Fused ViT block kernel (one grid step per batch tile)
# ----------------------------------------------------------------------------
def _vit_block_kernel(x_ref, n1g_ref, n1b_ref, wqkv_ref,
                      projw_ref, projb_ref, n2g_ref, n2b_ref,
                      fc1w_ref, fc1b_ref, fc2w_ref, fc2b_ref, o_ref,
                      *, num_heads, scale):
    # TODO(synk): StepAdaBlock's adaptive head/layer/token gating source was
    # not provided; this is the standard pre-norm ViT block path (all heads /
    # layers / tokens kept), so select outputs are None.
    bt, T, C = x_ref.shape
    hd = C // num_heads

    n1g, n1b = n1g_ref[...], n1b_ref[...]
    n2g, n2b = n2g_ref[...], n2b_ref[...]
    projb, fc1b, fc2b = projb_ref[...], fc1b_ref[...], fc2b_ref[...]
    wqkv, pw = wqkv_ref[...], projw_ref[...]
    f1w, f2w = fc1w_ref[...], fc2w_ref[...]

    for b in range(bt):                                          # static, small
        x = x_ref[b].astype(jnp.float32)                         # (T, C)
        xn = _ln(x, n1g, n1b)

        # Fused qkv projection: one (T, C) @ (C, 3C) matmul (qkv_bias=False).
        qkv = _bf16_dot(xn, wqkv)                                # (T, 3C)

        # Per-head attention with static slices; head concat is folded into the
        # output projection so the accumulator stays lane-dense (T, C).
        acc = jnp.zeros((T, C), jnp.float32)
        for h in range(num_heads):
            lo = h * hd
            qh = qkv[:, lo:lo + hd]                              # (T, hd)
            kh = qkv[:, C + lo:C + lo + hd]
            vh = qkv[:, 2 * C + lo:2 * C + lo + hd]
            s = jax.lax.dot_general(qh, kh, (((1,), (1,)), ((), ())),
                                    preferred_element_type=jnp.float32) * scale
            s = s - jnp.max(s, axis=-1, keepdims=True)
            e = jnp.exp(s)
            p = e / jnp.sum(e, axis=-1, keepdims=True)
            oh = jnp.dot(p, vh, preferred_element_type=jnp.float32)   # (T, hd)
            acc = acc + _bf16_dot(oh, pw[lo:lo + hd, :])               # (T, C)

        x1 = x + acc + projb

        # fused LN2 + MLP (4x hidden stays in VMEM) + residual.
        xn2 = _ln(x1, n2g, n2b)
        h1 = _gelu(_bf16_dot(xn2, f1w) + fc1b)
        h2 = _bf16_dot(h1, f2w) + fc2b
        o_ref[b] = (x1 + h2).astype(o_ref.dtype)


def vit_block_forward(p, x, num_heads):
    B, T, C = x.shape
    scale = float((C // num_heads) ** -0.5)
    bt = _pick_bt_loop(B)
    weights = (p["norm1_g"], p["norm1_b"], p["qkv_w"],
               p["proj_w"], p["proj_b"], p["norm2_g"], p["norm2_b"],
               p["fc1_w"], p["fc1_b"], p["fc2_w"], p["fc2_b"])
    return pl.pallas_call(
        functools.partial(_vit_block_kernel, num_heads=num_heads, scale=scale),
        out_shape=jax.ShapeDtypeStruct((B, T, C), _ACT_DTYPE),
        grid=(B // bt,),
        in_specs=[pl.BlockSpec((bt, T, C), lambda i: (i, 0, 0))]
        + [pl.BlockSpec(w.shape, lambda i: (0, 0)) for w in weights],
        out_specs=pl.BlockSpec((bt, T, C), lambda i: (i, 0, 0)),
        compiler_params=pltpu.CompilerParams(
            dimension_semantics=("parallel",),
            vmem_limit_bytes=_VMEM_LIMIT),
    )(x, *weights)


# ----------------------------------------------------------------------------
# Small standalone kernels: matmul+bias (T2T project) and fused final-LN+head
# ----------------------------------------------------------------------------
def _linear_bias_kernel(x_ref, w_ref, b_ref, o_ref):
    o_ref[...] = (_bf16_dot(x_ref[...], w_ref[...]) + b_ref[...]).astype(o_ref.dtype)


def pallas_linear(x2d, w, b2d, tile_m=256, out_dtype=_ACT_DTYPE):
    """x2d: (M, K) @ w: (K, N) + b2d: (1, N) -> (M, N); row-tiled.

    Non-divisible M is handled by zero-padding the rows to a multiple of the
    row tile (never by collapsing to one giant block)."""
    M, K = x2d.shape
    N = w.shape[1]
    if M <= tile_m:
        tile, Mp, xp = M, M, x2d                      # single full-extent block
    else:
        tile = tile_m
        Mp = tile * pl.cdiv(M, tile)
        xp = jnp.pad(x2d, ((0, Mp - M), (0, 0))) if Mp != M else x2d
    out = pl.pallas_call(
        _linear_bias_kernel,
        out_shape=jax.ShapeDtypeStruct((Mp, N), out_dtype),
        grid=(Mp // tile,),
        in_specs=[
            pl.BlockSpec((tile, K), lambda i: (i, 0)),
            pl.BlockSpec((K, N), lambda i: (0, 0)),
            pl.BlockSpec((1, N), lambda i: (0, 0)),
        ],
        out_specs=pl.BlockSpec((tile, N), lambda i: (i, 0)),
        compiler_params=pltpu.CompilerParams(
            dimension_semantics=("parallel",),
            vmem_limit_bytes=_VMEM_LIMIT),
    )(xp, w, b2d)
    return out[:M] if Mp != M else out


def _ln_head_kernel(x_ref, g_ref, b_ref, w_ref, hb_ref, o_ref):
    xn = _ln(x_ref[...].astype(jnp.float32), g_ref[...], b_ref[...])
    o_ref[...] = jnp.dot(xn, w_ref[...],
                         preferred_element_type=jnp.float32) + hb_ref[...]


def pallas_ln_head(cls_feat, g, b, w, hb):
    """Fused final LayerNorm (on cls rows only) + classification head."""
    M, C = cls_feat.shape
    N = w.shape[1]
    return pl.pallas_call(
        _ln_head_kernel,
        out_shape=jax.ShapeDtypeStruct((M, N), jnp.float32),
        grid=(1,),
        in_specs=[
            pl.BlockSpec((M, C), lambda i: (0, 0)),
            pl.BlockSpec((1, C), lambda i: (0, 0)),
            pl.BlockSpec((1, C), lambda i: (0, 0)),
            pl.BlockSpec((C, N), lambda i: (0, 0)),
            pl.BlockSpec((1, N), lambda i: (0, 0)),
        ],
        out_specs=pl.BlockSpec((M, N), lambda i: (0, 0)),
        compiler_params=pltpu.CompilerParams(
            dimension_semantics=("arbitrary",),
            vmem_limit_bytes=_VMEM_LIMIT),
    )(cls_feat, g, b, w, hb)


# ----------------------------------------------------------------------------
# Plain-JAX glue
# ----------------------------------------------------------------------------
def unfold(x, k, stride, pad):
    """nn.Unfold semantics: NCHW -> (B, C*k*k, L), channel-major (c, ki, kj)."""
    patches = jax.lax.conv_general_dilated_patches(
        x, filter_shape=(k, k), window_strides=(stride, stride),
        padding=((pad, pad), (pad, pad)),
        dimension_numbers=("NCHW", "OIHW", "NCHW"))
    B, CKK, Ho, Wo = patches.shape
    return patches.reshape(B, CKK, Ho * Wo)


def get_sinusoid_encoding(n_position, d_hid):
    pos = np.arange(n_position)[:, None].astype(np.float64)
    hid = np.arange(d_hid)[None, :]
    angle = pos / np.power(10000, 2 * (hid // 2) / d_hid)
    table = np.zeros((n_position, d_hid))
    table[:, 0::2] = np.sin(angle[:, 0::2])
    table[:, 1::2] = np.cos(angle[:, 1::2])
    return jnp.asarray(table, dtype=jnp.float32)[None]       # (1, n_pos, d_hid)


# ----------------------------------------------------------------------------
# Parameter init (deterministic, mirrors AdaStepT2T_ViT._init_weights; layouts
# are kernel-ready: biases / LN params stored as (1, N), kqv/qkv fused (K, 3N))
# ----------------------------------------------------------------------------
def trunc_normal(key, shape, std=0.02):
    return std * jax.random.truncated_normal(key, -2.0, 2.0, shape, dtype=jnp.float32)


def orthogonal_rows(key, m, n):
    a = jax.random.normal(key, (n, m), dtype=jnp.float32)
    q, _ = jnp.linalg.qr(a)          # (n, m), orthonormal columns
    return q.T                       # (m, n), orthonormal rows


def init_token_performer(key, dim, in_dim, kernel_ratio=0.5):
    emb = in_dim
    m = int(emb * kernel_ratio)
    ks = jax.random.split(key, 5)
    return dict(
        norm1_g=jnp.ones((1, dim), jnp.float32), norm1_b=jnp.zeros((1, dim), jnp.float32),
        kqv_w=trunc_normal(ks[0], (dim, 3 * emb)),               # split order: k|q|v
        kqv_b=jnp.zeros((1, 3 * emb), jnp.float32),
        w_t=jnp.transpose(orthogonal_rows(ks[1], m, emb) * math.sqrt(m)),   # (emb, m), fixed
        proj_w=trunc_normal(ks[2], (emb, emb)), proj_b=jnp.zeros((1, emb), jnp.float32),
        norm2_g=jnp.ones((1, emb), jnp.float32), norm2_b=jnp.zeros((1, emb), jnp.float32),
        fc1_w=trunc_normal(ks[3], (emb, emb)), fc1_b=jnp.zeros((1, emb), jnp.float32),
        fc2_w=trunc_normal(ks[4], (emb, emb)), fc2_b=jnp.zeros((1, emb), jnp.float32),
    )


def init_block(key, dim, num_heads, mlp_ratio):
    hidden = int(dim * mlp_ratio)
    ks = jax.random.split(key, 4)
    return dict(
        norm1_g=jnp.ones((1, dim), jnp.float32), norm1_b=jnp.zeros((1, dim), jnp.float32),
        qkv_w=trunc_normal(ks[0], (dim, 3 * dim)),               # qkv_bias=False
        proj_w=trunc_normal(ks[1], (dim, dim)), proj_b=jnp.zeros((1, dim), jnp.float32),
        norm2_g=jnp.ones((1, dim), jnp.float32), norm2_b=jnp.zeros((1, dim), jnp.float32),
        fc1_w=trunc_normal(ks[2], (dim, hidden)), fc1_b=jnp.zeros((1, hidden), jnp.float32),
        fc2_w=trunc_normal(ks[3], (hidden, dim)), fc2_b=jnp.zeros((1, dim), jnp.float32),
    )


def init_model(key, cfg):
    ks = jax.random.split(key, 8 + cfg["depth"])
    in_chans, token_dim, embed_dim = cfg["in_chans"], cfg["token_dim"], cfg["embed_dim"]
    num_patches = (cfg["img_size"] // (4 * 2 * 2)) * (cfg["img_size"] // (4 * 2 * 2))
    t2t = dict(
        attention1=init_token_performer(ks[0], in_chans * 7 * 7, token_dim, cfg["kernel_ratio"]),
        attention2=init_token_performer(ks[1], token_dim * 3 * 3, token_dim, cfg["kernel_ratio"]),
        project_w=trunc_normal(ks[2], (token_dim * 3 * 3, embed_dim)),
        project_b=jnp.zeros((1, embed_dim), jnp.float32),
    )
    return dict(
        t2t=t2t,
        cls_token=trunc_normal(ks[3], (1, 1, embed_dim), std=0.02),
        pos_embed=get_sinusoid_encoding(num_patches + 1, embed_dim),
        blocks=[init_block(ks[4 + i], embed_dim, cfg["num_heads"], cfg["mlp_ratio"])
                for i in range(cfg["depth"])],
        norm_g=jnp.ones((1, embed_dim), jnp.float32),
        norm_b=jnp.zeros((1, embed_dim), jnp.float32),
        head_w=trunc_normal(ks[4 + cfg["depth"]], (embed_dim, cfg["num_classes"])),
        head_b=jnp.zeros((1, cfg["num_classes"]), jnp.float32),
    )


# ----------------------------------------------------------------------------
# Forward
# ----------------------------------------------------------------------------
def t2t_forward(p, x):
    """Tokens-to-token module (performer variant)."""
    x = jnp.transpose(unfold(x, 7, 4, 2), (0, 2, 1))          # (B, 64, 147)
    x = token_performer_forward(p["attention1"], x)           # (B, 64, 16) bf16
    B, T, C = x.shape
    s = int(np.sqrt(T))
    x = jnp.transpose(x, (0, 2, 1)).reshape(B, C, s, s)
    x = jnp.transpose(unfold(x, 3, 2, 1), (0, 2, 1))          # (B, 16, 144)
    x = token_performer_forward(p["attention2"], x)           # (B, 16, 16) bf16
    B, T, C = x.shape
    s = int(np.sqrt(T))
    x = jnp.transpose(x, (0, 2, 1)).reshape(B, C, s, s)
    x = jnp.transpose(unfold(x, 3, 2, 1), (0, 2, 1))          # (B, 4, 144)
    B, T, C = x.shape
    x = pallas_linear(x.reshape(B * T, C), p["project_w"], p["project_b"])
    return x.reshape(B, T, -1)                                # (B, 4, embed_dim) bf16


def adavit_forward(params, x):
    """AdaStepT2T_ViT.forward(x) -> (logits, head_select, layer_select,
    token_select, select_logits)."""
    B = x.shape[0]
    x = t2t_forward(params["t2t"], x)                         # (B, num_patches, D)
    D = params["cls_token"].shape[-1]
    cls = jnp.broadcast_to(params["cls_token"], (B, 1, D)).astype(x.dtype)
    x = jnp.concatenate([cls, x], axis=1)
    x = x + params["pos_embed"].astype(x.dtype)               # pos_drop p=0

    for blk_p in params["blocks"]:
        x = vit_block_forward(blk_p, x, CFG["num_heads"])

    # TODO(synk): attn_list / hidden_list are not materialized — forward()
    # with default ret_attn_list=False never returns them (dead work removed).
    cls_feat = x[:, 0]                                        # (B, D) bf16
    logits = pallas_ln_head(cls_feat, params["norm_g"], params["norm_b"],
                            params["head_w"], params["head_b"])
    select_logits = dict(head_select_logits=None, layer_select_logits=None)
    return logits, None, None, None, select_logits


# ----------------------------------------------------------------------------
# Main
# ----------------------------------------------------------------------------
if __name__ == "__main__":
    key = jax.random.PRNGKey(0)
    pkey, xkey = jax.random.split(key)
    params = init_model(pkey, CFG)
    x = jax.random.normal(
        xkey, (2, CFG["in_chans"], CFG["img_size"], CFG["img_size"]), dtype=jnp.float32)

    fwd = jax.jit(adavit_forward)
    logits, head_sel, layer_sel, token_sel, sel_logits = fwd(params, x)
    jax.block_until_ready(logits)
    assert logits.shape == (2, CFG["num_classes"])
    assert bool(jnp.all(jnp.isfinite(logits)))
    print("KERNEL_OK")
</pallas_src>

<mosaic_0001>
module attributes {stable_mosaic.version = 11 : i64} {
  func.func @_token_performer_kernel(%arg0: i32, %arg1: memref<2x64x147xf32, #tpu.memory_space<vmem>>, %arg2: memref<1x147xf32, #tpu.memory_space<vmem>>, %arg3: memref<1x147xf32, #tpu.memory_space<vmem>>, %arg4: memref<147x48xf32, #tpu.memory_space<vmem>>, %arg5: memref<1x48xf32, #tpu.memory_space<vmem>>, %arg6: memref<16x8xf32, #tpu.memory_space<vmem>>, %arg7: memref<16x16xf32, #tpu.memory_space<vmem>>, %arg8: memref<1x16xf32, #tpu.memory_space<vmem>>, %arg9: memref<1x16xf32, #tpu.memory_space<vmem>>, %arg10: memref<1x16xf32, #tpu.memory_space<vmem>>, %arg11: memref<16x16xf32, #tpu.memory_space<vmem>>, %arg12: memref<1x16xf32, #tpu.memory_space<vmem>>, %arg13: memref<16x16xf32, #tpu.memory_space<vmem>>, %arg14: memref<1x16xf32, #tpu.memory_space<vmem>>, %arg15: memref<2x64x16xbf16, #tpu.memory_space<vmem>>) attributes {dimension_semantics = [#tpu.dimension_semantics<parallel>], iteration_bounds = array<i64: 1>, scalar_prefetch = 0 : i64, scratch_operands = 0 : i64, tpu.core_type = #tpu.core_type<tc>, window_params = [{transform_indices = @transform_0, window_bounds = array<i64: 2, 64, 147>}, {pipeline_mode = #tpu.pipeline_mode<synchronous>, transform_indices = @transform_1, window_bounds = array<i64: 1, 147>}, {pipeline_mode = #tpu.pipeline_mode<synchronous>, transform_indices = @transform_2, window_bounds = array<i64: 1, 147>}, {pipeline_mode = #tpu.pipeline_mode<synchronous>, transform_indices = @transform_3, window_bounds = array<i64: 147, 48>}, {pipeline_mode = #tpu.pipeline_mode<synchronous>, transform_indices = @transform_4, window_bounds = array<i64: 1, 48>}, {pipeline_mode = #tpu.pipeline_mode<synchronous>, transform_indices = @transform_5, window_bounds = array<i64: 16, 8>}, {pipeline_mode = #tpu.pipeline_mode<synchronous>, transform_indices = @transform_6, window_bounds = array<i64: 16, 16>}, {pipeline_mode = #tpu.pipeline_mode<synchronous>, transform_indices = @transform_7, window_bounds = array<i64: 1, 16>}, {pipeline_mode = #tpu.pipeline_mode<synchronous>, transform_indices = @transform_8, window_bounds = array<i64: 1, 16>}, {pipeline_mode = #tpu.pipeline_mode<synchronous>, transform_indices = @transform_9, window_bounds = array<i64: 1, 16>}, {pipeline_mode = #tpu.pipeline_mode<synchronous>, transform_indices = @transform_10, window_bounds = array<i64: 16, 16>}, {pipeline_mode = #tpu.pipeline_mode<synchronous>, transform_indices = @transform_11, window_bounds = array<i64: 1, 16>}, {pipeline_mode = #tpu.pipeline_mode<synchronous>, transform_indices = @transform_12, window_bounds = array<i64: 16, 16>}, {pipeline_mode = #tpu.pipeline_mode<synchronous>, transform_indices = @transform_13, window_bounds = array<i64: 1, 16>}, {transform_indices = @transform_14, window_bounds = array<i64: 2, 64, 16>}]} {
    %c0 = arith.constant 0 : index
    %c0_0 = arith.constant 0 : index
    %c0_1 = arith.constant 0 : index
    %0 = vector.load %arg1[%c0, %c0_0, %c0_1] : memref<2x64x147xf32, #tpu.memory_space<vmem>>, vector<2x64x147xf32>
    %1 = vector.shape_cast %0 : vector<2x64x147xf32> to vector<128x147xf32>
    %c0_2 = arith.constant 0 : index
    %c0_3 = arith.constant 0 : index
    %2 = vector.load %arg2[%c0_2, %c0_3] : memref<1x147xf32, #tpu.memory_space<vmem>>, vector<1x147xf32>
    %c0_4 = arith.constant 0 : index
    %c0_5 = arith.constant 0 : index
    %3 = vector.load %arg3[%c0_4, %c0_5] : memref<1x147xf32, #tpu.memory_space<vmem>>, vector<1x147xf32>
    %c0_6 = arith.constant 0 : index
    %c0_7 = arith.constant 0 : index
    %4 = vector.load %arg9[%c0_6, %c0_7] : memref<1x16xf32, #tpu.memory_space<vmem>>, vector<1x16xf32>
    %c0_8 = arith.constant 0 : index
    %c0_9 = arith.constant 0 : index
    %5 = vector.load %arg10[%c0_8, %c0_9] : memref<1x16xf32, #tpu.memory_space<vmem>>, vector<1x16xf32>
    %c0_10 = arith.constant 0 : index
    %c0_11 = arith.constant 0 : index
    %6 = vector.load %arg5[%c0_10, %c0_11] : memref<1x48xf32, #tpu.memory_space<vmem>>, vector<1x48xf32>
    %c0_12 = arith.constant 0 : index
    %c0_13 = arith.constant 0 : index
    %7 = vector.load %arg8[%c0_12, %c0_13] : memref<1x16xf32, #tpu.memory_space<vmem>>, vector<1x16xf32>
    %c0_14 = arith.constant 0 : index
    %c0_15 = arith.constant 0 : index
    %8 = vector.load %arg12[%c0_14, %c0_15] : memref<1x16xf32, #tpu.memory_space<vmem>>, vector<1x16xf32>
    %c0_16 = arith.constant 0 : index
    %c0_17 = arith.constant 0 : index
    %9 = vector.load %arg14[%c0_16, %c0_17] : memref<1x16xf32, #tpu.memory_space<vmem>>, vector<1x16xf32>
    %c0_18 = arith.constant 0 : index
    %c0_19 = arith.constant 0 : index
    %10 = vector.load %arg7[%c0_18, %c0_19] : memref<16x16xf32, #tpu.memory_space<vmem>>, vector<16x16xf32>
    %c0_20 = arith.constant 0 : index
    %c0_21 = arith.constant 0 : index
    %11 = vector.load %arg11[%c0_20, %c0_21] : memref<16x16xf32, #tpu.memory_space<vmem>>, vector<16x16xf32>
    %c0_22 = arith.constant 0 : index
    %c0_23 = arith.constant 0 : index
    %12 = vector.load %arg13[%c0_22, %c0_23] : memref<16x16xf32, #tpu.memory_space<vmem>>, vector<16x16xf32>
    %c0_24 = arith.constant 0 : index
    %c0_25 = arith.constant 0 : index
    %13 = vector.load %arg6[%c0_24, %c0_25] : memref<16x8xf32, #tpu.memory_space<vmem>>, vector<16x8xf32>
    %cst = arith.constant dense<0.000000e+00> : vector<128xf32>
    %14 = vector.multi_reduction <add>, %1, %cst [1] : vector<128x147xf32> to vector<128xf32>
    %15 = vector.shape_cast %14 : vector<128xf32> to vector<128x1xf32>
    %cst_26 = arith.constant 1.470000e+02 : f32
    %16 = vector.broadcast %cst_26 : f32 to vector<128x1xf32>
    %17 = arith.divf %15, %16 : vector<128x1xf32>
    %18 = vector.broadcast %17 : vector<128x1xf32> to vector<128x147xf32>
    %19 = arith.subf %1, %18 : vector<128x147xf32>
    %20 = arith.mulf %19, %19 : vector<128x147xf32>
    %cst_27 = arith.constant dense<0.000000e+00> : vector<128xf32>
    %21 = vector.multi_reduction <add>, %20, %cst_27 [1] : vector<128x147xf32> to vector<128xf32>
    %22 = vector.shape_cast %21 : vector<128xf32> to vector<128x1xf32>
    %cst_28 = arith.constant 1.470000e+02 : f32
    %23 = vector.broadcast %cst_28 : f32 to vector<128x1xf32>
    %24 = arith.divf %22, %23 : vector<128x1xf32>
    %cst_29 = arith.constant 9.99999974E-6 : f32
    %25 = vector.broadcast %cst_29 : f32 to vector<128x1xf32>
    %26 = arith.addf %24, %25 : vector<128x1xf32>
    %27 = math.rsqrt %26 : vector<128x1xf32>
    %28 = vector.broadcast %27 : vector<128x1xf32> to vector<128x147xf32>
    %29 = arith.mulf %19, %28 : vector<128x147xf32>
    %30 = vector.broadcast %2 : vector<1x147xf32> to vector<128x147xf32>
    %31 = arith.mulf %29, %30 : vector<128x147xf32>
    %32 = vector.broadcast %3 : vector<1x147xf32> to vector<128x147xf32>
    %33 = arith.addf %31, %32 : vector<128x147xf32>
    %c0_30 = arith.constant 0 : index
    %c0_31 = arith.constant 0 : index
    %34 = vector.load %arg4[%c0_30, %c0_31] : memref<147x48xf32, #tpu.memory_space<vmem>>, vector<147x48xf32>
    %35 = arith.truncf %33 : vector<128x147xf32> to vector<128x147xbf16>
    %36 = arith.truncf %34 : vector<147x48xf32> to vector<147x48xbf16>
    %cst_32 = arith.constant dense<0.000000e+00> : vector<128x48xf32>
    %37 = tpu.matmul %35, %36, %cst_32 {dimension_numbers = #tpu.dot_dimension_numbers<[1], [0], [0], [1], [0, 0, 1, 1], [], []>} : vector<128x147xbf16>, vector<147x48xbf16>, vector<128x48xf32> -> vector<128x48xf32>
    %38 = vector.broadcast %6 : vector<1x48xf32> to vector<128x48xf32>
    %39 = arith.addf %37, %38 : vector<128x48xf32>
    %40 = vector.extract_strided_slice %39 {offsets = [0, 0], sizes = [128, 16], strides = [1, 1]} : vector<128x48xf32> to vector<128x16xf32>
    %41 = vector.extract_strided_slice %39 {offsets = [0, 16], sizes = [128, 16], strides = [1, 1]} : vector<128x48xf32> to vector<128x16xf32>
    %42 = vector.extract_strided_slice %39 {offsets = [0, 32], sizes = [128, 16], strides = [1, 1]} : vector<128x48xf32> to vector<128x16xf32>
    %43 = arith.mulf %40, %40 : vector<128x16xf32>
    %cst_33 = arith.constant dense<0.000000e+00> : vector<128xf32>
    %44 = vector.multi_reduction <add>, %43, %cst_33 [1] : vector<128x16xf32> to vector<128xf32>
    %45 = vector.shape_cast %44 : vector<128xf32> to vector<128x1xf32>
    %cst_34 = arith.constant 5.000000e-01 : f32
    %46 = vector.broadcast %cst_34 : f32 to vector<128x1xf32>
    %47 = arith.mulf %46, %45 : vector<128x1xf32>
    %48 = arith.truncf %40 : vector<128x16xf32> to vector<128x16xbf16>
    %49 = arith.truncf %13 : vector<16x8xf32> to vector<16x8xbf16>
    %cst_35 = arith.constant dense<0.000000e+00> : vector<128x8xf32>
    %50 = tpu.matmul %48, %49, %cst_35 {dimension_numbers = #tpu.dot_dimension_numbers<[1], [0], [0], [1], [0, 0, 1, 1], [], []>} : vector<128x16xbf16>, vector<16x8xbf16>, vector<128x8xf32> -> vector<128x8xf32>
    %51 = vector.broadcast %47 : vector<128x1xf32> to vector<128x8xf32>
    %52 = arith.subf %50, %51 : vector<128x8xf32>
    %53 = math.exp %52 : vector<128x8xf32>
    %cst_36 = arith.constant 0.353553385 : f32
    %54 = vector.broadcast %cst_36 : f32 to vector<128x8xf32>
    %55 = arith.mulf %53, %54 : vector<128x8xf32>
    %56 = arith.mulf %41, %41 : vector<128x16xf32>
    %cst_37 = arith.constant dense<0.000000e+00> : vector<128xf32>
    %57 = vector.multi_reduction <add>, %56, %cst_37 [1] : vector<128x16xf32> to vector<128xf32>
    %58 = vector.shape_cast %57 : vector<128xf32> to vector<128x1xf32>
    %cst_38 = arith.constant 5.000000e-01 : f32
    %59 = vector.broadcast %cst_38 : f32 to vector<128x1xf32>
    %60 = arith.mulf %59, %58 : vector<128x1xf32>
    %61 = arith.truncf %41 : vector<128x16xf32> to vector<128x16xbf16>
    %62 = arith.truncf %13 : vector<16x8xf32> to vector<16x8xbf16>
    %cst_39 = arith.constant dense<0.000000e+00> : vector<128x8xf32>
    %63 = tpu.matmul %61, %62, %cst_39 {dimension_numbers = #tpu.dot_dimension_numbers<[1], [0], [0], [1], [0, 0, 1, 1], [], []>} : vector<128x16xbf16>, vector<16x8xbf16>, vector<128x8xf32> -> vector<128x8xf32>
    %64 = vector.broadcast %60 : vector<128x1xf32> to vector<128x8xf32>
    %65 = arith.subf %63, %64 : vector<128x8xf32>
    %66 = math.exp %65 : vector<128x8xf32>
    %cst_40 = arith.constant 0.353553385 : f32
    %67 = vector.broadcast %cst_40 : f32 to vector<128x8xf32>
    %68 = arith.mulf %66, %67 : vector<128x8xf32>
    %69 = vector.extract_strided_slice %55 {offsets = [0, 0], sizes = [64, 8], strides = [1, 1]} : vector<128x8xf32> to vector<64x8xf32>
    %70 = vector.extract_strided_slice %68 {offsets = [0, 0], sizes = [64, 8], strides = [1, 1]} : vector<128x8xf32> to vector<64x8xf32>
    %71 = vector.extract_strided_slice %42 {offsets = [0, 0], sizes = [64, 16], strides = [1, 1]} : vector<128x16xf32> to vector<64x16xf32>
    %cst_41 = arith.constant dense<0.000000e+00> : vector<8xf32>
    %72 = vector.multi_reduction <add>, %69, %cst_41 [0] : vector<64x8xf32> to vector<8xf32>
    %73 = vector.shape_cast %72 : vector<8xf32> to vector<1x8xf32>
    %cst_42 = arith.constant dense<0.000000e+00> : vector<8x16xf32>
    %74 = tpu.matmul %69, %71, %cst_42 {dimension_numbers = #tpu.dot_dimension_numbers<[0], [0], [1], [1], [0, 1, 1, 1], [], []>} : vector<64x8xf32>, vector<64x16xf32>, vector<8x16xf32> -> vector<8x16xf32>
    %75 = vector.broadcast %73 : vector<1x8xf32> to vector<64x8xf32>
    %76 = arith.mulf %70, %75 : vector<64x8xf32>
    %cst_43 = arith.constant dense<0.000000e+00> : vector<64xf32>
    %77 = vector.multi_reduction <add>, %76, %cst_43 [1] : vector<64x8xf32> to vector<64xf32>
    %78 = vector.shape_cast %77 : vector<64xf32> to vector<64x1xf32>
    %cst_44 = arith.constant dense<0.000000e+00> : vector<64x16xf32>
    %79 = tpu.matmul %70, %74, %cst_44 {dimension_numbers = #tpu.dot_dimension_numbers<[1], [0], [0], [1], [0, 0, 1, 1], [], []>} : vector<64x8xf32>, vector<8x16xf32>, vector<64x16xf32> -> vector<64x16xf32>
    %cst_45 = arith.constant 9.99999993E-9 : f32
    %80 = vector.broadcast %cst_45 : f32 to vector<64x1xf32>
    %81 = arith.addf %78, %80 : vector<64x1xf32>
    %82 = vector.broadcast %81 : vector<64x1xf32> to vector<64x16xf32>
    %83 = arith.divf %79, %82 : vector<64x16xf32>
    %84 = arith.truncf %83 : vector<64x16xf32> to vector<64x16xbf16>
    %85 = arith.truncf %10 : vector<16x16xf32> to vector<16x16xbf16>
    %cst_46 = arith.constant dense<0.000000e+00> : vector<64x16xf32>
    %86 = tpu.matmul %84, %85, %cst_46 {dimension_numbers = #tpu.dot_dimension_numbers<[1], [0], [0], [1], [0, 0, 1, 1], [], []>} : vector<64x16xbf16>, vector<16x16xbf16>, vector<64x16xf32> -> vector<64x16xf32>
    %87 = vector.broadcast %7 : vector<1x16xf32> to vector<64x16xf32>
    %88 = arith.addf %86, %87 : vector<64x16xf32>
    %89 = arith.addf %71, %88 : vector<64x16xf32>
    %cst_47 = arith.constant dense<0.000000e+00> : vector<64xf32>
    %90 = vector.multi_reduction <add>, %89, %cst_47 [1] : vector<64x16xf32> to vector<64xf32>
    %91 = vector.shape_cast %90 : vector<64xf32> to vector<64x1xf32>
    %cst_48 = arith.constant 1.600000e+01 : f32
    %92 = vector.broadcast %cst_48 : f32 to vector<64x1xf32>
    %93 = arith.divf %91, %92 : vector<64x1xf32>
    %94 = vector.broadcast %93 : vector<64x1xf32> to vector<64x16xf32>
    %95 = arith.subf %89, %94 : vector<64x16xf32>
    %96 = arith.mulf %95, %95 : vector<64x16xf32>
    %cst_49 = arith.constant dense<0.000000e+00> : vector<64xf32>
    %97 = vector.multi_reduction <add>, %96, %cst_49 [1] : vector<64x16xf32> to vector<64xf32>
    %98 = vector.shape_cast %97 : vector<64xf32> to vector<64x1xf32>
    %cst_50 = arith.constant 1.600000e+01 : f32
    %99 = vector.broadcast %cst_50 : f32 to vector<64x1xf32>
    %100 = arith.divf %98, %99 : vector<64x1xf32>
    %cst_51 = arith.constant 9.99999974E-6 : f32
    %101 = vector.broadcast %cst_51 : f32 to vector<64x1xf32>
    %102 = arith.addf %100, %101 : vector<64x1xf32>
    %103 = math.rsqrt %102 : vector<64x1xf32>
    %104 = vector.broadcast %103 : vector<64x1xf32> to vector<64x16xf32>
    %105 = arith.mulf %95, %104 : vector<64x16xf32>
    %106 = vector.broadcast %4 : vector<1x16xf32> to vector<64x16xf32>
    %107 = arith.mulf %105, %106 : vector<64x16xf32>
    %108 = vector.broadcast %5 : vector<1x16xf32> to vector<64x16xf32>
    %109 = arith.addf %107, %108 : vector<64x16xf32>
    %110 = arith.truncf %109 : vector<64x16xf32> to vector<64x16xbf16>
    %111 = arith.truncf %11 : vector<16x16xf32> to vector<16x16xbf16>
    %cst_52 = arith.constant dense<0.000000e+00> : vector<64x16xf32>
    %112 = tpu.matmul %110, %111, %cst_52 {dimension_numbers = #tpu.dot_dimension_numbers<[1], [0], [0], [1], [0, 0, 1, 1], [], []>} : vector<64x16xbf16>, vector<16x16xbf16>, vector<64x16xf32> -> vector<64x16xf32>
    %113 = vector.broadcast %8 : vector<1x16xf32> to vector<64x16xf32>
    %114 = arith.addf %112, %113 : vector<64x16xf32>
    %cst_53 = arith.constant 5.000000e-01 : f32
    %115 = vector.broadcast %cst_53 : f32 to vector<64x16xf32>
    %116 = arith.mulf %115, %114 : vector<64x16xf32>
    %cst_54 = arith.constant 0.707106769 : f32
    %117 = vector.broadcast %cst_54 : f32 to vector<64x16xf32>
    %118 = arith.mulf %114, %117 : vector<64x16xf32>
    %cst_55 = arith.constant 0.000000e+00 : f32
    %119 = vector.broadcast %cst_55 : f32 to vector<64x16xf32>
    %120 = arith.cmpf oge, %118, %119 : vector<64x16xf32>
    %cst_56 = arith.constant 1.000000e+00 : f32
    %cst_57 = arith.constant -1.000000e+00 : f32
    %121 = vector.broadcast %cst_56 : f32 to vector<64x16xf32>
    %122 = vector.broadcast %cst_57 : f32 to vector<64x16xf32>
    %123 = arith.select %120, %121, %122 : vector<64x16xi1>, vector<64x16xf32>
    %124 = math.absf %118 : vector<64x16xf32>
    %cst_58 = arith.constant 0.327591091 : f32
    %125 = vector.broadcast %cst_58 : f32 to vector<64x16xf32>
    %126 = arith.mulf %125, %124 : vector<64x16xf32>
    %cst_59 = arith.constant 1.000000e+00 : f32
    %127 = vector.broadcast %cst_59 : f32 to vector<64x16xf32>
    %128 = arith.addf %127, %126 : vector<64x16xf32>
    %cst_60 = arith.constant 1.000000e+00 : f32
    %129 = vector.broadcast %cst_60 : f32 to vector<64x16xf32>
    %130 = arith.divf %129, %128 : vector<64x16xf32>
    %cst_61 = arith.constant 1.06140542 : f32
    %131 = vector.broadcast %cst_61 : f32 to vector<64x16xf32>
    %132 = arith.mulf %131, %130 : vector<64x16xf32>
    %cst_62 = arith.constant -1.45315206 : f32
    %133 = vector.broadcast %cst_62 : f32 to vector<64x16xf32>
    %134 = arith.addf %132, %133 : vector<64x16xf32>
    %135 = arith.mulf %134, %130 : vector<64x16xf32>
    %cst_63 = arith.constant 1.42141378 : f32
    %136 = vector.broadcast %cst_63 : f32 to vector<64x16xf32>
    %137 = arith.addf %135, %136 : vector<64x16xf32>
    %138 = arith.mulf %137, %130 : vector<64x16xf32>
    %cst_64 = arith.constant -0.284496725 : f32
    %139 = vector.broadcast %cst_64 : f32 to vector<64x16xf32>
    %140 = arith.addf %138, %139 : vector<64x16xf32>
    %141 = arith.mulf %140, %130 : vector<64x16xf32>
    %cst_65 = arith.constant 0.254829586 : f32
    %142 = vector.broadcast %cst_65 : f32 to vector<64x16xf32>
    %143 = arith.addf %141, %142 : vector<64x16xf32>
    %144 = arith.mulf %143, %130 : vector<64x16xf32>
    %cst_66 = arith.constant 0.000000e+00 : f32
    %145 = vector.broadcast %cst_66 : f32 to vector<64x16xf32>
    %146 = arith.subf %145, %124 : vector<64x16xf32>
    %147 = arith.mulf %146, %124 : vector<64x16xf32>
    %148 = math.exp %147 : vector<64x16xf32>
    %149 = arith.mulf %144, %148 : vector<64x16xf32>
    %cst_67 = arith.constant 1.000000e+00 : f32
    %150 = vector.broadcast %cst_67 : f32 to vector<64x16xf32>
    %151 = arith.subf %150, %149 : vector<64x16xf32>
    %152 = arith.mulf %123, %151 : vector<64x16xf32>
    %cst_68 = arith.constant 1.000000e+00 : f32
    %153 = vector.broadcast %cst_68 : f32 to vector<64x16xf32>
    %154 = arith.addf %153, %152 : vector<64x16xf32>
    %155 = arith.mulf %116, %154 : vector<64x16xf32>
    %156 = arith.truncf %155 : vector<64x16xf32> to vector<64x16xbf16>
    %157 = arith.truncf %12 : vector<16x16xf32> to vector<16x16xbf16>
    %cst_69 = arith.constant dense<0.000000e+00> : vector<64x16xf32>
    %158 = tpu.matmul %156, %157, %cst_69 {dimension_numbers = #tpu.dot_dimension_numbers<[1], [0], [0], [1], [0, 0, 1, 1], [], []>} : vector<64x16xbf16>, vector<16x16xbf16>, vector<64x16xf32> -> vector<64x16xf32>
    %159 = vector.broadcast %9 : vector<1x16xf32> to vector<64x16xf32>
    %160 = arith.addf %158, %159 : vector<64x16xf32>
    %161 = arith.addf %89, %160 : vector<64x16xf32>
    %162 = arith.truncf %161 : vector<64x16xf32> to vector<64x16xbf16>
    %c0_70 = arith.constant 0 : index
    %c0_71 = arith.constant 0 : index
    %c0_72 = arith.constant 0 : index
    %163 = vector.load %arg15[%c0_70, %c0_71, %c0_72] : memref<2x64x16xbf16, #tpu.memory_space<vmem>>, vector<1x64x16xbf16>
    %164 = vector.shape_cast %163 : vector<1x64x16xbf16> to vector<64x16xbf16>
    %165 = vector.shape_cast %162 : vector<64x16xbf16> to vector<1x64x16xbf16>
    tpu.vector_store %arg15[%c0_70, %c0_71, %c0_72], %165 {strides = array<i32>} : memref<2x64x16xbf16, #tpu.memory_space<vmem>>, vector<1x64x16xbf16>,
    %166 = vector.extract_strided_slice %55 {offsets = [64, 0], sizes = [64, 8], strides = [1, 1]} : vector<128x8xf32> to vector<64x8xf32>
    %167 = vector.extract_strided_slice %68 {offsets = [64, 0], sizes = [64, 8], strides = [1, 1]} : vector<128x8xf32> to vector<64x8xf32>
    %168 = vector.extract_strided_slice %42 {offsets = [64, 0], sizes = [64, 16], strides = [1, 1]} : vector<128x16xf32> to vector<64x16xf32>
    %cst_73 = arith.constant dense<0.000000e+00> : vector<8xf32>
    %169 = vector.multi_reduction <add>, %166, %cst_73 [0] : vector<64x8xf32> to vector<8xf32>
    %170 = vector.shape_cast %169 : vector<8xf32> to vector<1x8xf32>
    %cst_74 = arith.constant dense<0.000000e+00> : vector<8x16xf32>
    %171 = tpu.matmul %166, %168, %cst_74 {dimension_numbers = #tpu.dot_dimension_numbers<[0], [0], [1], [1], [0, 1, 1, 1], [], []>} : vector<64x8xf32>, vector<64x16xf32>, vector<8x16xf32> -> vector<8x16xf32>
    %172 = vector.broadcast %170 : vector<1x8xf32> to vector<64x8xf32>
    %173 = arith.mulf %167, %172 : vector<64x8xf32>
    %cst_75 = arith.constant dense<0.000000e+00> : vector<64xf32>
    %174 = vector.multi_reduction <add>, %173, %cst_75 [1] : vector<64x8xf32> to vector<64xf32>
    %175 = vector.shape_cast %174 : vector<64xf32> to vector<64x1xf32>
    %cst_76 = arith.constant dense<0.000000e+00> : vector<64x16xf32>
    %176 = tpu.matmul %167, %171, %cst_76 {dimension_numbers = #tpu.dot_dimension_numbers<[1], [0], [0], [1], [0, 0, 1, 1], [], []>} : vector<64x8xf32>, vector<8x16xf32>, vector<64x16xf32> -> vector<64x16xf32>
    %cst_77 = arith.constant 9.99999993E-9 : f32
    %177 = vector.broadcast %cst_77 : f32 to vector<64x1xf32>
    %178 = arith.addf %175, %177 : vector<64x1xf32>
    %179 = vector.broadcast %178 : vector<64x1xf32> to vector<64x16xf32>
    %180 = arith.divf %176, %179 : vector<64x16xf32>
    %181 = arith.truncf %180 : vector<64x16xf32> to vector<64x16xbf16>
    %182 = arith.truncf %10 : vector<16x16xf32> to vector<16x16xbf16>
    %cst_78 = arith.constant dense<0.000000e+00> : vector<64x16xf32>
    %183 = tpu.matmul %181, %182, %cst_78 {dimension_numbers = #tpu.dot_dimension_numbers<[1], [0], [0], [1], [0, 0, 1, 1], [], []>} : vector<64x16xbf16>, vector<16x16xbf16>, vector<64x16xf32> -> vector<64x16xf32>
    %184 = vector.broadcast %7 : vector<1x16xf32> to vector<64x16xf32>
    %185 = arith.addf %183, %184 : vector<64x16xf32>
    %186 = arith.addf %168, %185 : vector<64x16xf32>
    %cst_79 = arith.constant dense<0.000000e+00> : vector<64xf32>
    %187 = vector.multi_reduction <add>, %186, %cst_79 [1] : vector<64x16xf32> to vector<64xf32>
    %188 = vector.shape_cast %187 : vector<64xf32> to vector<64x1xf32>
    %cst_80 = arith.constant 1.600000e+01 : f32
    %189 = vector.broadcast %cst_80 : f32 to vector<64x1xf32>
    %190 = arith.divf %188, %189 : vector<64x1xf32>
    %191 = vector.broadcast %190 : vector<64x1xf32> to vector<64x16xf32>
    %192 = arith.subf %186, %191 : vector<64x16xf32>
    %193 = arith.mulf %192, %192 : vector<64x16xf32>
    %cst_81 = arith.constant dense<0.000000e+00> : vector<64xf32>
    %194 = vector.multi_reduction <add>, %193, %cst_81 [1] : vector<64x16xf32> to vector<64xf32>
    %195 = vector.shape_cast %194 : vector<64xf32> to vector<64x1xf32>
    %cst_82 = arith.constant 1.600000e+01 : f32
    %196 = vector.broadcast %cst_82 : f32 to vector<64x1xf32>
    %197 = arith.divf %195, %196 : vector<64x1xf32>
    %cst_83 = arith.constant 9.99999974E-6 : f32
    %198 = vector.broadcast %cst_83 : f32 to vector<64x1xf32>
    %199 = arith.addf %197, %198 : vector<64x1xf32>
    %200 = math.rsqrt %199 : vector<64x1xf32>
    %201 = vector.broadcast %200 : vector<64x1xf32> to vector<64x16xf32>
    %202 = arith.mulf %192, %201 : vector<64x16xf32>
    %203 = vector.broadcast %4 : vector<1x16xf32> to vector<64x16xf32>
    %204 = arith.mulf %202, %203 : vector<64x16xf32>
    %205 = vector.broadcast %5 : vector<1x16xf32> to vector<64x16xf32>
    %206 = arith.addf %204, %205 : vector<64x16xf32>
    %207 = arith.truncf %206 : vector<64x16xf32> to vector<64x16xbf16>
    %208 = arith.truncf %11 : vector<16x16xf32> to vector<16x16xbf16>
    %cst_84 = arith.constant dense<0.000000e+00> : vector<64x16xf32>
    %209 = tpu.matmul %207, %208, %cst_84 {dimension_numbers = #tpu.dot_dimension_numbers<[1], [0], [0], [1], [0, 0, 1, 1], [], []>} : vector<64x16xbf16>, vector<16x16xbf16>, vector<64x16xf32> -> vector<64x16xf32>
    %210 = vector.broadcast %8 : vector<1x16xf32> to vector<64x16xf32>
    %211 = arith.addf %209, %210 : vector<64x16xf32>
    %cst_85 = arith.constant 5.000000e-01 : f32
    %212 = vector.broadcast %cst_85 : f32 to vector<64x16xf32>
    %213 = arith.mulf %212, %211 : vector<64x16xf32>
    %cst_86 = arith.constant 0.707106769 : f32
    %214 = vector.broadcast %cst_86 : f32 to vector<64x16xf32>
    %215 = arith.mulf %211, %214 : vector<64x16xf32>
    %cst_87 = arith.constant 0.000000e+00 : f32
    %216 = vector.broadcast %cst_87 : f32 to vector<64x16xf32>
    %217 = arith.cmpf oge, %215, %216 : vector<64x16xf32>
    %cst_88 = arith.constant 1.000000e+00 : f32
    %cst_89 = arith.constant -1.000000e+00 : f32
    %218 = vector.broadcast %cst_88 : f32 to vector<64x16xf32>
    %219 = vector.broadcast %cst_89 : f32 to vector<64x16xf32>
    %220 = arith.select %217, %218, %219 : vector<64x16xi1>, vector<64x16xf32>
    %221 = math.absf %215 : vector<64x16xf32>
    %cst_90 = arith.constant 0.327591091 : f32
    %222 = vector.broadcast %cst_90 : f32 to vector<64x16xf32>
    %223 = arith.mulf %222, %221 : vector<64x16xf32>
    %cst_91 = arith.constant 1.000000e+00 : f32
    %224 = vector.broadcast %cst_91 : f32 to vector<64x16xf32>
    %225 = arith.addf %224, %223 : vector<64x16xf32>
    %cst_92 = arith.constant 1.000000e+00 : f32
    %226 = vector.broadcast %cst_92 : f32 to vector<64x16xf32>
    %227 = arith.divf %226, %225 : vector<64x16xf32>
    %cst_93 = arith.constant 1.06140542 : f32
    %228 = vector.broadcast %cst_93 : f32 to vector<64x16xf32>
    %229 = arith.mulf %228, %227 : vector<64x16xf32>
    %cst_94 = arith.constant -1.45315206 : f32
    %230 = vector.broadcast %cst_94 : f32 to vector<64x16xf32>
    %231 = arith.addf %229, %230 : vector<64x16xf32>
    %232 = arith.mulf %231, %227 : vector<64x16xf32>
    %cst_95 = arith.constant 1.42141378 : f32
    %233 = vector.broadcast %cst_95 : f32 to vector<64x16xf32>
    %234 = arith.addf %232, %233 : vector<64x16xf32>
    %235 = arith.mulf %234, %227 : vector<64x16xf32>
    %cst_96 = arith.constant -0.284496725 : f32
    %236 = vector.broadcast %cst_96 : f32 to vector<64x16xf32>
    %237 = arith.addf %235, %236 : vector<64x16xf32>
    %238 = arith.mulf %237, %227 : vector<64x16xf32>
    %cst_97 = arith.constant 0.254829586 : f32
    %239 = vector.broadcast %cst_97 : f32 to vector<64x16xf32>
    %240 = arith.addf %238, %239 : vector<64x16xf32>
    %241 = arith.mulf %240, %227 : vector<64x16xf32>
    %cst_98 = arith.constant 0.000000e+00 : f32
    %242 = vector.broadcast %cst_98 : f32 to vector<64x16xf32>
    %243 = arith.subf %242, %221 : vector<64x16xf32>
    %244 = arith.mulf %243, %221 : vector<64x16xf32>
    %245 = math.exp %244 : vector<64x16xf32>
    %246 = arith.mulf %241, %245 : vector<64x16xf32>
    %cst_99 = arith.constant 1.000000e+00 : f32
    %247 = vector.broadcast %cst_99 : f32 to vector<64x16xf32>
    %248 = arith.subf %247, %246 : vector<64x16xf32>
    %249 = arith.mulf %220, %248 : vector<64x16xf32>
    %cst_100 = arith.constant 1.000000e+00 : f32
    %250 = vector.broadcast %cst_100 : f32 to vector<64x16xf32>
    %251 = arith.addf %250, %249 : vector<64x16xf32>
    %252 = arith.mulf %213, %251 : vector<64x16xf32>
    %253 = arith.truncf %252 : vector<64x16xf32> to vector<64x16xbf16>
    %254 = arith.truncf %12 : vector<16x16xf32> to vector<16x16xbf16>
    %cst_101 = arith.constant dense<0.000000e+00> : vector<64x16xf32>
    %255 = tpu.matmul %253, %254, %cst_101 {dimension_numbers = #tpu.dot_dimension_numbers<[1], [0], [0], [1], [0, 0, 1, 1], [], []>} : vector<64x16xbf16>, vector<16x16xbf16>, vector<64x16xf32> -> vector<64x16xf32>
    %256 = vector.broadcast %9 : vector<1x16xf32> to vector<64x16xf32>
    %257 = arith.addf %255, %256 : vector<64x16xf32>
    %258 = arith.addf %186, %257 : vector<64x16xf32>
    %259 = arith.truncf %258 : vector<64x16xf32> to vector<64x16xbf16>
    %c1 = arith.constant 1 : index
    %c0_102 = arith.constant 0 : index
    %c0_103 = arith.constant 0 : index
    %260 = vector.load %arg15[%c1, %c0_102, %c0_103] : memref<2x64x16xbf16, #tpu.memory_space<vmem>>, vector<1x64x16xbf16>
    %261 = vector.shape_cast %260 : vector<1x64x16xbf16> to vector<64x16xbf16>
    %262 = vector.shape_cast %259 : vector<64x16xbf16> to vector<1x64x16xbf16>
    tpu.vector_store %arg15[%c1, %c0_102, %c0_103], %262 {strides = array<i32>} : memref<2x64x16xbf16, #tpu.memory_space<vmem>>, vector<1x64x16xbf16>,
    return
  }
  func.func @transform_0(%arg0: i32) -> (i32, i32, i32) {
    %c0_i32 = arith.constant 0 : i32
    %c0_i32_0 = arith.constant 0 : i32
    %c0_i32_1 = arith.constant 0 : i32
    return %arg0, %c0_i32, %c0_i32_0 : i32, i32, i32
  }
  func.func @transform_1(%arg0: i32) -> (i32, i32) {
    %c0_i32 = arith.constant 0 : i32
    %c0_i32_0 = arith.constant 0 : i32
    %c0_i32_1 = arith.constant 0 : i32
    return %c0_i32, %c0_i32_0 : i32, i32
  }
  func.func @transform_2(%arg0: i32) -> (i32, i32) {
    %c0_i32 = arith.constant 0 : i32
    %c0_i32_0 = arith.constant 0 : i32
    %c0_i32_1 = arith.constant 0 : i32
    return %c0_i32, %c0_i32_0 : i32, i32
  }
  func.func @transform_3(%arg0: i32) -> (i32, i32) {
    %c0_i32 = arith.constant 0 : i32
    %c0_i32_0 = arith.constant 0 : i32
    %c0_i32_1 = arith.constant 0 : i32
    return %c0_i32, %c0_i32_0 : i32, i32
  }
  func.func @transform_4(%arg0: i32) -> (i32, i32) {
    %c0_i32 = arith.constant 0 : i32
    %c0_i32_0 = arith.constant 0 : i32
    %c0_i32_1 = arith.constant 0 : i32
    return %c0_i32, %c0_i32_0 : i32, i32
  }
  func.func @transform_5(%arg0: i32) -> (i32, i32) {
    %c0_i32 = arith.constant 0 : i32
    %c0_i32_0 = arith.constant 0 : i32
    %c0_i32_1 = arith.constant 0 : i32
    return %c0_i32, %c0_i32_0 : i32, i32
  }
  func.func @transform_6(%arg0: i32) -> (i32, i32) {
    %c0_i32 = arith.constant 0 : i32
    %c0_i32_0 = arith.constant 0 : i32
    %c0_i32_1 = arith.constant 0 : i32
    return %c0_i32, %c0_i32_0 : i32, i32
  }
  func.func @transform_7(%arg0: i32) -> (i32, i32) {
    %c0_i32 = arith.constant 0 : i32
    %c0_i32_0 = arith.constant 0 : i32
    %c0_i32_1 = arith.constant 0 : i32
    return %c0_i32, %c0_i32_0 : i32, i32
  }
  func.func @transform_8(%arg0: i32) -> (i32, i32) {
    %c0_i32 = arith.constant 0 : i32
    %c0_i32_0 = arith.constant 0 : i32
    %c0_i32_1 = arith.constant 0 : i32
    return %c0_i32, %c0_i32_0 : i32, i32
  }
  func.func @transform_9(%arg0: i32) -> (i32, i32) {
    %c0_i32 = arith.constant 0 : i32
    %c0_i32_0 = arith.constant 0 : i32
    %c0_i32_1 = arith.constant 0 : i32
    return %c0_i32, %c0_i32_0 : i32, i32
  }
  func.func @transform_10(%arg0: i32) -> (i32, i32) {
    %c0_i32 = arith.constant 0 : i32
    %c0_i32_0 = arith.constant 0 : i32
    %c0_i32_1 = arith.constant 0 : i32
    return %c0_i32, %c0_i32_0 : i32, i32
  }
  func.func @transform_11(%arg0: i32) -> (i32, i32) {
    %c0_i32 = arith.constant 0 : i32
    %c0_i32_0 = arith.constant 0 : i32
    %c0_i32_1 = arith.constant 0 : i32
    return %c0_i32, %c0_i32_0 : i32, i32
  }
  func.func @transform_12(%arg0: i32) -> (i32, i32) {
    %c0_i32 = arith.constant 0 : i32
    %c0_i32_0 = arith.constant 0 : i32
    %c0_i32_1 = arith.constant 0 : i32
    return %c0_i32, %c0_i32_0 : i32, i32
  }
  func.func @transform_13(%arg0: i32) -> (i32, i32) {
    %c0_i32 = arith.constant 0 : i32
    %c0_i32_0 = arith.constant 0 : i32
    %c0_i32_1 = arith.constant 0 : i32
    return %c0_i32, %c0_i32_0 : i32, i32
  }
  func.func @transform_14(%arg0: i32) -> (i32, i32, i32) {
    %c0_i32 = arith.constant 0 : i32
    %c0_i32_0 = arith.constant 0 : i32
    %c0_i32_1 = arith.constant 0 : i32
    return %arg0, %c0_i32, %c0_i32_0 : i32, i32, i32
  }
}

module attributes {stable_mosaic.version = 11 : i64} {
  func.func @_token_performer_kernel(%arg0: i32, %arg1: memref<2x16x144xbf16, #tpu.memory_space<vmem>>, %arg2: memref<1x144xf32, #tpu.memory_space<vmem>>, %arg3: memref<1x144xf32, #tpu.memory_space<vmem>>, %arg4: memref<144x48xf32, #tpu.memory_space<vmem>>, %arg5: memref<1x48xf32, #tpu.memory_space<vmem>>, %arg6: memref<16x8xf32, #tpu.memory_space<vmem>>, %arg7: memref<16x16xf32, #tpu.memory_space<vmem>>, %arg8: memref<1x16xf32, #tpu.memory_space<vmem>>, %arg9: memref<1x16xf32, #tpu.memory_space<vmem>>, %arg10: memref<1x16xf32, #tpu.memory_space<vmem>>, %arg11: memref<16x16xf32, #tpu.memory_space<vmem>>, %arg12: memref<1x16xf32, #tpu.memory_space<vmem>>, %arg13: memref<16x16xf32, #tpu.memory_space<vmem>>, %arg14: memref<1x16xf32, #tpu.memory_space<vmem>>, %arg15: memref<2x16x16xbf16, #tpu.memory_space<vmem>>) attributes {dimension_semantics = [#tpu.dimension_semantics<parallel>], iteration_bounds = array<i64: 1>, scalar_prefetch = 0 : i64, scratch_operands = 0 : i64, tpu.core_type = #tpu.core_type<tc>, window_params = [{transform_indices = @transform_0, window_bounds = array<i64: 2, 16, 144>}, {pipeline_mode = #tpu.pipeline_mode<synchronous>, transform_indices = @transform_1, window_bounds = array<i64: 1, 144>}, {pipeline_mode = #tpu.pipeline_mode<synchronous>, transform_indices = @transform_2, window_bounds = array<i64: 1, 144>}, {pipeline_mode = #tpu.pipeline_mode<synchronous>, transform_indices = @transform_3, window_bounds = array<i64: 144, 48>}, {pipeline_mode = #tpu.pipeline_mode<synchronous>, transform_indices = @transform_4, window_bounds = array<i64: 1, 48>}, {pipeline_mode = #tpu.pipeline_mode<synchronous>, transform_indices = @transform_5, window_bounds = array<i64: 16, 8>}, {pipeline_mode = #tpu.pipeline_mode<synchronous>, transform_indices = @transform_6, window_bounds = array<i64: 16, 16>}, {pipeline_mode = #tpu.pipeline_mode<synchronous>, transform_indices = @transform_7, window_bounds = array<i64: 1, 16>}, {pipeline_mode = #tpu.pipeline_mode<synchronous>, transform_indices = @transform_8, window_bounds = array<i64: 1, 16>}, {pipeline_mode = #tpu.pipeline_mode<synchronous>, transform_indices = @transform_9, window_bounds = array<i64: 1, 16>}, {pipeline_mode = #tpu.pipeline_mode<synchronous>, transform_indices = @transform_10, window_bounds = array<i64: 16, 16>}, {pipeline_mode = #tpu.pipeline_mode<synchronous>, transform_indices = @transform_11, window_bounds = array<i64: 1, 16>}, {pipeline_mode = #tpu.pipeline_mode<synchronous>, transform_indices = @transform_12, window_bounds = array<i64: 16, 16>}, {pipeline_mode = #tpu.pipeline_mode<synchronous>, transform_indices = @transform_13, window_bounds = array<i64: 1, 16>}, {transform_indices = @transform_14, window_bounds = array<i64: 2, 16, 16>}]} {
    %c0 = arith.constant 0 : index
    %c0_0 = arith.constant 0 : index
    %c0_1 = arith.constant 0 : index
    %0 = vector.load %arg1[%c0, %c0_0, %c0_1] : memref<2x16x144xbf16, #tpu.memory_space<vmem>>, vector<2x16x144xbf16>
    %1 = arith.extf %0 : vector<2x16x144xbf16> to vector<2x16x144xf32>
    %2 = vector.shape_cast %1 : vector<2x16x144xf32> to vector<32x144xf32>
    %c0_2 = arith.constant 0 : index
    %c0_3 = arith.constant 0 : index
    %3 = vector.load %arg2[%c0_2, %c0_3] : memref<1x144xf32, #tpu.memory_space<vmem>>, vector<1x144xf32>
    %c0_4 = arith.constant 0 : index
    %c0_5 = arith.constant 0 : index
    %4 = vector.load %arg3[%c0_4, %c0_5] : memref<1x144xf32, #tpu.memory_space<vmem>>, vector<1x144xf32>
    %c0_6 = arith.constant 0 : index
    %c0_7 = arith.constant 0 : index
    %5 = vector.load %arg9[%c0_6, %c0_7] : memref<1x16xf32, #tpu.memory_space<vmem>>, vector<1x16xf32>
    %c0_8 = arith.constant 0 : index
    %c0_9 = arith.constant 0 : index
    %6 = vector.load %arg10[%c0_8, %c0_9] : memref<1x16xf32, #tpu.memory_space<vmem>>, vector<1x16xf32>
    %c0_10 = arith.constant 0 : index
    %c0_11 = arith.constant 0 : index
    %7 = vector.load %arg5[%c0_10, %c0_11] : memref<1x48xf32, #tpu.memory_space<vmem>>, vector<1x48xf32>
    %c0_12 = arith.constant 0 : index
    %c0_13 = arith.constant 0 : index
    %8 = vector.load %arg8[%c0_12, %c0_13] : memref<1x16xf32, #tpu.memory_space<vmem>>, vector<1x16xf32>
    %c0_14 = arith.constant 0 : index
    %c0_15 = arith.constant 0 : index
    %9 = vector.load %arg12[%c0_14, %c0_15] : memref<1x16xf32, #tpu.memory_space<vmem>>, vector<1x16xf32>
    %c0_16 = arith.constant 0 : index
    %c0_17 = arith.constant 0 : index
    %10 = vector.load %arg14[%c0_16, %c0_17] : memref<1x16xf32, #tpu.memory_space<vmem>>, vector<1x16xf32>
    %c0_18 = arith.constant 0 : index
    %c0_19 = arith.constant 0 : index
    %11 = vector.load %arg7[%c0_18, %c0_19] : memref<16x16xf32, #tpu.memory_space<vmem>>, vector<16x16xf32>
    %c0_20 = arith.constant 0 : index
    %c0_21 = arith.constant 0 : index
    %12 = vector.load %arg11[%c0_20, %c0_21] : memref<16x16xf32, #tpu.memory_space<vmem>>, vector<16x16xf32>
    %c0_22 = arith.constant 0 : index
    %c0_23 = arith.constant 0 : index
    %13 = vector.load %arg13[%c0_22, %c0_23] : memref<16x16xf32, #tpu.memory_space<vmem>>, vector<16x16xf32>
    %c0_24 = arith.constant 0 : index
    %c0_25 = arith.constant 0 : index
    %14 = vector.load %arg6[%c0_24, %c0_25] : memref<16x8xf32, #tpu.memory_space<vmem>>, vector<16x8xf32>
    %cst = arith.constant dense<0.000000e+00> : vector<32xf32>
    %15 = vector.multi_reduction <add>, %2, %cst [1] : vector<32x144xf32> to vector<32xf32>
    %16 = vector.shape_cast %15 : vector<32xf32> to vector<32x1xf32>
    %cst_26 = arith.constant 1.440000e+02 : f32
    %17 = vector.broadcast %cst_26 : f32 to vector<32x1xf32>
    %18 = arith.divf %16, %17 : vector<32x1xf32>
    %19 = vector.broadcast %18 : vector<32x1xf32> to vector<32x144xf32>
    %20 = arith.subf %2, %19 : vector<32x144xf32>
    %21 = arith.mulf %20, %20 : vector<32x144xf32>
    %cst_27 = arith.constant dense<0.000000e+00> : vector<32xf32>
    %22 = vector.multi_reduction <add>, %21, %cst_27 [1] : vector<32x144xf32> to vector<32xf32>
    %23 = vector.shape_cast %22 : vector<32xf32> to vector<32x1xf32>
    %cst_28 = arith.constant 1.440000e+02 : f32
    %24 = vector.broadcast %cst_28 : f32 to vector<32x1xf32>
    %25 = arith.divf %23, %24 : vector<32x1xf32>
    %cst_29 = arith.constant 9.99999974E-6 : f32
    %26 = vector.broadcast %cst_29 : f32 to vector<32x1xf32>
    %27 = arith.addf %25, %26 : vector<32x1xf32>
    %28 = math.rsqrt %27 : vector<32x1xf32>
    %29 = vector.broadcast %28 : vector<32x1xf32> to vector<32x144xf32>
    %30 = arith.mulf %20, %29 : vector<32x144xf32>
    %31 = vector.broadcast %3 : vector<1x144xf32> to vector<32x144xf32>
    %32 = arith.mulf %30, %31 : vector<32x144xf32>
    %33 = vector.broadcast %4 : vector<1x144xf32> to vector<32x144xf32>
    %34 = arith.addf %32, %33 : vector<32x144xf32>
    %c0_30 = arith.constant 0 : index
    %c0_31 = arith.constant 0 : index
    %35 = vector.load %arg4[%c0_30, %c0_31] : memref<144x48xf32, #tpu.memory_space<vmem>>, vector<144x48xf32>
    %36 = arith.truncf %34 : vector<32x144xf32> to vector<32x144xbf16>
    %37 = arith.truncf %35 : vector<144x48xf32> to vector<144x48xbf16>
    %cst_32 = arith.constant dense<0.000000e+00> : vector<32x48xf32>
    %38 = tpu.matmul %36, %37, %cst_32 {dimension_numbers = #tpu.dot_dimension_numbers<[1], [0], [0], [1], [0, 0, 1, 1], [], []>} : vector<32x144xbf16>, vector<144x48xbf16>, vector<32x48xf32> -> vector<32x48xf32>
    %39 = vector.broadcast %7 : vector<1x48xf32> to vector<32x48xf32>
    %40 = arith.addf %38, %39 : vector<32x48xf32>
    %41 = vector.extract_strided_slice %40 {offsets = [0, 0], sizes = [32, 16], strides = [1, 1]} : vector<32x48xf32> to vector<32x16xf32>
    %42 = vector.extract_strided_slice %40 {offsets = [0, 16], sizes = [32, 16], strides = [1, 1]} : vector<32x48xf32> to vector<32x16xf32>
    %43 = vector.extract_strided_slice %40 {offsets = [0, 32], sizes = [32, 16], strides = [1, 1]} : vector<32x48xf32> to vector<32x16xf32>
    %44 = arith.mulf %41, %41 : vector<32x16xf32>
    %cst_33 = arith.constant dense<0.000000e+00> : vector<32xf32>
    %45 = vector.multi_reduction <add>, %44, %cst_33 [1] : vector<32x16xf32> to vector<32xf32>
    %46 = vector.shape_cast %45 : vector<32xf32> to vector<32x1xf32>
    %cst_34 = arith.constant 5.000000e-01 : f32
    %47 = vector.broadcast %cst_34 : f32 to vector<32x1xf32>
    %48 = arith.mulf %47, %46 : vector<32x1xf32>
    %49 = arith.truncf %41 : vector<32x16xf32> to vector<32x16xbf16>
    %50 = arith.truncf %14 : vector<16x8xf32> to vector<16x8xbf16>
    %cst_35 = arith.constant dense<0.000000e+00> : vector<32x8xf32>
    %51 = tpu.matmul %49, %50, %cst_35 {dimension_numbers = #tpu.dot_dimension_numbers<[1], [0], [0], [1], [0, 0, 1, 1], [], []>} : vector<32x16xbf16>, vector<16x8xbf16>, vector<32x8xf32> -> vector<32x8xf32>
    %52 = vector.broadcast %48 : vector<32x1xf32> to vector<32x8xf32>
    %53 = arith.subf %51, %52 : vector<32x8xf32>
    %54 = math.exp %53 : vector<32x8xf32>
    %cst_36 = arith.constant 0.353553385 : f32
    %55 = vector.broadcast %cst_36 : f32 to vector<32x8xf32>
    %56 = arith.mulf %54, %55 : vector<32x8xf32>
    %57 = arith.mulf %42, %42 : vector<32x16xf32>
    %cst_37 = arith.constant dense<0.000000e+00> : vector<32xf32>
    %58 = vector.multi_reduction <add>, %57, %cst_37 [1] : vector<32x16xf32> to vector<32xf32>
    %59 = vector.shape_cast %58 : vector<32xf32> to vector<32x1xf32>
    %cst_38 = arith.constant 5.000000e-01 : f32
    %60 = vector.broadcast %cst_38 : f32 to vector<32x1xf32>
    %61 = arith.mulf %60, %59 : vector<32x1xf32>
    %62 = arith.truncf %42 : vector<32x16xf32> to vector<32x16xbf16>
    %63 = arith.truncf %14 : vector<16x8xf32> to vector<16x8xbf16>
    %cst_39 = arith.constant dense<0.000000e+00> : vector<32x8xf32>
    %64 = tpu.matmul %62, %63, %cst_39 {dimension_numbers = #tpu.dot_dimension_numbers<[1], [0], [0], [1], [0, 0, 1, 1], [], []>} : vector<32x16xbf16>, vector<16x8xbf16>, vector<32x8xf32> -> vector<32x8xf32>
    %65 = vector.broadcast %61 : vector<32x1xf32> to vector<32x8xf32>
    %66 = arith.subf %64, %65 : vector<32x8xf32>
    %67 = math.exp %66 : vector<32x8xf32>
    %cst_40 = arith.constant 0.353553385 : f32
    %68 = vector.broadcast %cst_40 : f32 to vector<32x8xf32>
    %69 = arith.mulf %67, %68 : vector<32x8xf32>
    %70 = vector.extract_strided_slice %56 {offsets = [0, 0], sizes = [16, 8], strides = [1, 1]} : vector<32x8xf32> to vector<16x8xf32>
    %71 = vector.extract_strided_slice %69 {offsets = [0, 0], sizes = [16, 8], strides = [1, 1]} : vector<32x8xf32> to vector<16x8xf32>
    %72 = vector.extract_strided_slice %43 {offsets = [0, 0], sizes = [16, 16], strides = [1, 1]} : vector<32x16xf32> to vector<16x16xf32>
    %cst_41 = arith.constant dense<0.000000e+00> : vector<8xf32>
    %73 = vector.multi_reduction <add>, %70, %cst_41 [0] : vector<16x8xf32> to vector<8xf32>
    %74 = vector.shape_cast %73 : vector<8xf32> to vector<1x8xf32>
    %cst_42 = arith.constant dense<0.000000e+00> : vector<8x16xf32>
    %75 = tpu.matmul %70, %72, %cst_42 {dimension_numbers = #tpu.dot_dimension_numbers<[0], [0], [1], [1], [0, 1, 1, 1], [], []>} : vector<16x8xf32>, vector<16x16xf32>, vector<8x16xf32> -> vector<8x16xf32>
    %76 = vector.broadcast %74 : vector<1x8xf32> to vector<16x8xf32>
    %77 = arith.mulf %71, %76 : vector<16x8xf32>
    %cst_43 = arith.constant dense<0.000000e+00> : vector<16xf32>
    %78 = vector.multi_reduction <add>, %77, %cst_43 [1] : vector<16x8xf32> to vector<16xf32>
    %79 = vector.shape_cast %78 : vector<16xf32> to vector<16x1xf32>
    %cst_44 = arith.constant dense<0.000000e+00> : vector<16x16xf32>
    %80 = tpu.matmul %71, %75, %cst_44 {dimension_numbers = #tpu.dot_dimension_numbers<[1], [0], [0], [1], [0, 0, 1, 1], [], []>} : vector<16x8xf32>, vector<8x16xf32>, vector<16x16xf32> -> vector<16x16xf32>
    %cst_45 = arith.constant 9.99999993E-9 : f32
    %81 = vector.broadcast %cst_45 : f32 to vector<16x1xf32>
    %82 = arith.addf %79, %81 : vector<16x1xf32>
    %83 = vector.broadcast %82 : vector<16x1xf32> to vector<16x16xf32>
    %84 = arith.divf %80, %83 : vector<16x16xf32>
    %85 = arith.truncf %84 : vector<16x16xf32> to vector<16x16xbf16>
    %86 = arith.truncf %11 : vector<16x16xf32> to vector<16x16xbf16>
    %cst_46 = arith.constant dense<0.000000e+00> : vector<16x16xf32>
    %87 = tpu.matmul %85, %86, %cst_46 {dimension_numbers = #tpu.dot_dimension_numbers<[1], [0], [0], [1], [0, 0, 1, 1], [], []>} : vector<16x16xbf16>, vector<16x16xbf16>, vector<16x16xf32> -> vector<16x16xf32>
    %88 = vector.broadcast %8 : vector<1x16xf32> to vector<16x16xf32>
    %89 = arith.addf %87, %88 : vector<16x16xf32>
    %90 = arith.addf %72, %89 : vector<16x16xf32>
    %cst_47 = arith.constant dense<0.000000e+00> : vector<16xf32>
    %91 = vector.multi_reduction <add>, %90, %cst_47 [1] : vector<16x16xf32> to vector<16xf32>
    %92 = vector.shape_cast %91 : vector<16xf32> to vector<16x1xf32>
    %cst_48 = arith.constant 1.600000e+01 : f32
    %93 = vector.broadcast %cst_48 : f32 to vector<16x1xf32>
    %94 = arith.divf %92, %93 : vector<16x1xf32>
    %95 = vector.broadcast %94 : vector<16x1xf32> to vector<16x16xf32>
    %96 = arith.subf %90, %95 : vector<16x16xf32>
    %97 = arith.mulf %96, %96 : vector<16x16xf32>
    %cst_49 = arith.constant dense<0.000000e+00> : vector<16xf32>
    %98 = vector.multi_reduction <add>, %97, %cst_49 [1] : vector<16x16xf32> to vector<16xf32>
    %99 = vector.shape_cast %98 : vector<16xf32> to vector<16x1xf32>
    %cst_50 = arith.constant 1.600000e+01 : f32
    %100 = vector.broadcast %cst_50 : f32 to vector<16x1xf32>
    %101 = arith.divf %99, %100 : vector<16x1xf32>
    %cst_51 = arith.constant 9.99999974E-6 : f32
    %102 = vector.broadcast %cst_51 : f32 to vector<16x1xf32>
    %103 = arith.addf %101, %102 : vector<16x1xf32>
    %104 = math.rsqrt %103 : vector<16x1xf32>
    %105 = vector.broadcast %104 : vector<16x1xf32> to vector<16x16xf32>
    %106 = arith.mulf %96, %105 : vector<16x16xf32>
    %107 = vector.broadcast %5 : vector<1x16xf32> to vector<16x16xf32>
    %108 = arith.mulf %106, %107 : vector<16x16xf32>
    %109 = vector.broadcast %6 : vector<1x16xf32> to vector<16x16xf32>
    %110 = arith.addf %108, %109 : vector<16x16xf32>
    %111 = arith.truncf %110 : vector<16x16xf32> to vector<16x16xbf16>
    %112 = arith.truncf %12 : vector<16x16xf32> to vector<16x16xbf16>
    %cst_52 = arith.constant dense<0.000000e+00> : vector<16x16xf32>
    %113 = tpu.matmul %111, %112, %cst_52 {dimension_numbers = #tpu.dot_dimension_numbers<[1], [0], [0], [1], [0, 0, 1, 1], [], []>} : vector<16x16xbf16>, vector<16x16xbf16>, vector<16x16xf32> -> vector<16x16xf32>
    %114 = vector.broadcast %9 : vector<1x16xf32> to vector<16x16xf32>
    %115 = arith.addf %113, %114 : vector<16x16xf32>
    %cst_53 = arith.constant 5.000000e-01 : f32
    %116 = vector.broadcast %cst_53 : f32 to vector<16x16xf32>
    %117 = arith.mulf %116, %115 : vector<16x16xf32>
    %cst_54 = arith.constant 0.707106769 : f32
    %118 = vector.broadcast %cst_54 : f32 to vector<16x16xf32>
    %119 = arith.mulf %115, %118 : vector<16x16xf32>
    %cst_55 = arith.constant 0.000000e+00 : f32
    %120 = vector.broadcast %cst_55 : f32 to vector<16x16xf32>
    %121 = arith.cmpf oge, %119, %120 : vector<16x16xf32>
    %cst_56 = arith.constant 1.000000e+00 : f32
    %cst_57 = arith.constant -1.000000e+00 : f32
    %122 = vector.broadcast %cst_56 : f32 to vector<16x16xf32>
    %123 = vector.broadcast %cst_57 : f32 to vector<16x16xf32>
    %124 = arith.select %121, %122, %123 : vector<16x16xi1>, vector<16x16xf32>
    %125 = math.absf %119 : vector<16x16xf32>
    %cst_58 = arith.constant 0.327591091 : f32
    %126 = vector.broadcast %cst_58 : f32 to vector<16x16xf32>
    %127 = arith.mulf %126, %125 : vector<16x16xf32>
    %cst_59 = arith.constant 1.000000e+00 : f32
    %128 = vector.broadcast %cst_59 : f32 to vector<16x16xf32>
    %129 = arith.addf %128, %127 : vector<16x16xf32>
    %cst_60 = arith.constant 1.000000e+00 : f32
    %130 = vector.broadcast %cst_60 : f32 to vector<16x16xf32>
    %131 = arith.divf %130, %129 : vector<16x16xf32>
    %cst_61 = arith.constant 1.06140542 : f32
    %132 = vector.broadcast %cst_61 : f32 to vector<16x16xf32>
    %133 = arith.mulf %132, %131 : vector<16x16xf32>
    %cst_62 = arith.constant -1.45315206 : f32
    %134 = vector.broadcast %cst_62 : f32 to vector<16x16xf32>
    %135 = arith.addf %133, %134 : vector<16x16xf32>
    %136 = arith.mulf %135, %131 : vector<16x16xf32>
    %cst_63 = arith.constant 1.42141378 : f32
    %137 = vector.broadcast %cst_63 : f32 to vector<16x16xf32>
    %138 = arith.addf %136, %137 : vector<16x16xf32>
    %139 = arith.mulf %138, %131 : vector<16x16xf32>
    %cst_64 = arith.constant -0.284496725 : f32
    %140 = vector.broadcast %cst_64 : f32 to vector<16x16xf32>
    %141 = arith.addf %139, %140 : vector<16x16xf32>
    %142 = arith.mulf %141, %131 : vector<16x16xf32>
    %cst_65 = arith.constant 0.254829586 : f32
    %143 = vector.broadcast %cst_65 : f32 to vector<16x16xf32>
    %144 = arith.addf %142, %143 : vector<16x16xf32>
    %145 = arith.mulf %144, %131 : vector<16x16xf32>
    %cst_66 = arith.constant 0.000000e+00 : f32
    %146 = vector.broadcast %cst_66 : f32 to vector<16x16xf32>
    %147 = arith.subf %146, %125 : vector<16x16xf32>
    %148 = arith.mulf %147, %125 : vector<16x16xf32>
    %149 = math.exp %148 : vector<16x16xf32>
    %150 = arith.mulf %145, %149 : vector<16x16xf32>
    %cst_67 = arith.constant 1.000000e+00 : f32
    %151 = vector.broadcast %cst_67 : f32 to vector<16x16xf32>
    %152 = arith.subf %151, %150 : vector<16x16xf32>
    %153 = arith.mulf %124, %152 : vector<16x16xf32>
    %cst_68 = arith.constant 1.000000e+00 : f32
    %154 = vector.broadcast %cst_68 : f32 to vector<16x16xf32>
    %155 = arith.addf %154, %153 : vector<16x16xf32>
    %156 = arith.mulf %117, %155 : vector<16x16xf32>
    %157 = arith.truncf %156 : vector<16x16xf32> to vector<16x16xbf16>
    %158 = arith.truncf %13 : vector<16x16xf32> to vector<16x16xbf16>
    %cst_69 = arith.constant dense<0.000000e+00> : vector<16x16xf32>
    %159 = tpu.matmul %157, %158, %cst_69 {dimension_numbers = #tpu.dot_dimension_numbers<[1], [0], [0], [1], [0, 0, 1, 1], [], []>} : vector<16x16xbf16>, vector<16x16xbf16>, vector<16x16xf32> -> vector<16x16xf32>
    %160 = vector.broadcast %10 : vector<1x16xf32> to vector<16x16xf32>
    %161 = arith.addf %159, %160 : vector<16x16xf32>
    %162 = arith.addf %90, %161 : vector<16x16xf32>
    %163 = arith.truncf %162 : vector<16x16xf32> to vector<16x16xbf16>
    %c0_70 = arith.constant 0 : index
    %c0_71 = arith.constant 0 : index
    %c0_72 = arith.constant 0 : index
    %164 = vector.load %arg15[%c0_70, %c0_71, %c0_72] : memref<2x16x16xbf16, #tpu.memory_space<vmem>>, vector<1x16x16xbf16>
    %165 = vector.shape_cast %164 : vector<1x16x16xbf16> to vector<16x16xbf16>
    %166 = vector.shape_cast %163 : vector<16x16xbf16> to vector<1x16x16xbf16>
    tpu.vector_store %arg15[%c0_70, %c0_71, %c0_72], %166 {strides = array<i32>} : memref<2x16x16xbf16, #tpu.memory_space<vmem>>, vector<1x16x16xbf16>,
    %167 = vector.extract_strided_slice %56 {offsets = [16, 0], sizes = [16, 8], strides = [1, 1]} : vector<32x8xf32> to vector<16x8xf32>
    %168 = vector.extract_strided_slice %69 {offsets = [16, 0], sizes = [16, 8], strides = [1, 1]} : vector<32x8xf32> to vector<16x8xf32>
    %169 = vector.extract_strided_slice %43 {offsets = [16, 0], sizes = [16, 16], strides = [1, 1]} : vector<32x16xf32> to vector<16x16xf32>
    %cst_73 = arith.constant dense<0.000000e+00> : vector<8xf32>
    %170 = vector.multi_reduction <add>, %167, %cst_73 [0] : vector<16x8xf32> to vector<8xf32>
    %171 = vector.shape_cast %170 : vector<8xf32> to vector<1x8xf32>
    %cst_74 = arith.constant dense<0.000000e+00> : vector<8x16xf32>
    %172 = tpu.matmul %167, %169, %cst_74 {dimension_numbers = #tpu.dot_dimension_numbers<[0], [0], [1], [1], [0, 1, 1, 1], [], []>} : vector<16x8xf32>, vector<16x16xf32>, vector<8x16xf32> -> vector<8x16xf32>
    %173 = vector.broadcast %171 : vector<1x8xf32> to vector<16x8xf32>
    %174 = arith.mulf %168, %173 : vector<16x8xf32>
    %cst_75 = arith.constant dense<0.000000e+00> : vector<16xf32>
    %175 = vector.multi_reduction <add>, %174, %cst_75 [1] : vector<16x8xf32> to vector<16xf32>
    %176 = vector.shape_cast %175 : vector<16xf32> to vector<16x1xf32>
    %cst_76 = arith.constant dense<0.000000e+00> : vector<16x16xf32>
    %177 = tpu.matmul %168, %172, %cst_76 {dimension_numbers = #tpu.dot_dimension_numbers<[1], [0], [0], [1], [0, 0, 1, 1], [], []>} : vector<16x8xf32>, vector<8x16xf32>, vector<16x16xf32> -> vector<16x16xf32>
    %cst_77 = arith.constant 9.99999993E-9 : f32
    %178 = vector.broadcast %cst_77 : f32 to vector<16x1xf32>
    %179 = arith.addf %176, %178 : vector<16x1xf32>
    %180 = vector.broadcast %179 : vector<16x1xf32> to vector<16x16xf32>
    %181 = arith.divf %177, %180 : vector<16x16xf32>
    %182 = arith.truncf %181 : vector<16x16xf32> to vector<16x16xbf16>
    %183 = arith.truncf %11 : vector<16x16xf32> to vector<16x16xbf16>
    %cst_78 = arith.constant dense<0.000000e+00> : vector<16x16xf32>
    %184 = tpu.matmul %182, %183, %cst_78 {dimension_numbers = #tpu.dot_dimension_numbers<[1], [0], [0], [1], [0, 0, 1, 1], [], []>} : vector<16x16xbf16>, vector<16x16xbf16>, vector<16x16xf32> -> vector<16x16xf32>
    %185 = vector.broadcast %8 : vector<1x16xf32> to vector<16x16xf32>
    %186 = arith.addf %184, %185 : vector<16x16xf32>
    %187 = arith.addf %169, %186 : vector<16x16xf32>
    %cst_79 = arith.constant dense<0.000000e+00> : vector<16xf32>
    %188 = vector.multi_reduction <add>, %187, %cst_79 [1] : vector<16x16xf32> to vector<16xf32>
    %189 = vector.shape_cast %188 : vector<16xf32> to vector<16x1xf32>
    %cst_80 = arith.constant 1.600000e+01 : f32
    %190 = vector.broadcast %cst_80 : f32 to vector<16x1xf32>
    %191 = arith.divf %189, %190 : vector<16x1xf32>
    %192 = vector.broadcast %191 : vector<16x1xf32> to vector<16x16xf32>
    %193 = arith.subf %187, %192 : vector<16x16xf32>
    %194 = arith.mulf %193, %193 : vector<16x16xf32>
    %cst_81 = arith.constant dense<0.000000e+00> : vector<16xf32>
    %195 = vector.multi_reduction <add>, %194, %cst_81 [1] : vector<16x16xf32> to vector<16xf32>
    %196 = vector.shape_cast %195 : vector<16xf32> to vector<16x1xf32>
    %cst_82 = arith.constant 1.600000e+01 : f32
    %197 = vector.broadcast %cst_82 : f32 to vector<16x1xf32>
    %198 = arith.divf %196, %197 : vector<16x1xf32>
    %cst_83 = arith.constant 9.99999974E-6 : f32
    %199 = vector.broadcast %cst_83 : f32 to vector<16x1xf32>
    %200 = arith.addf %198, %199 : vector<16x1xf32>
    %201 = math.rsqrt %200 : vector<16x1xf32>
    %202 = vector.broadcast %201 : vector<16x1xf32> to vector<16x16xf32>
    %203 = arith.mulf %193, %202 : vector<16x16xf32>
    %204 = vector.broadcast %5 : vector<1x16xf32> to vector<16x16xf32>
    %205 = arith.mulf %203, %204 : vector<16x16xf32>
    %206 = vector.broadcast %6 : vector<1x16xf32> to vector<16x16xf32>
    %207 = arith.addf %205, %206 : vector<16x16xf32>
    %208 = arith.truncf %207 : vector<16x16xf32> to vector<16x16xbf16>
    %209 = arith.truncf %12 : vector<16x16xf32> to vector<16x16xbf16>
    %cst_84 = arith.constant dense<0.000000e+00> : vector<16x16xf32>
    %210 = tpu.matmul %208, %209, %cst_84 {dimension_numbers = #tpu.dot_dimension_numbers<[1], [0], [0], [1], [0, 0, 1, 1], [], []>} : vector<16x16xbf16>, vector<16x16xbf16>, vector<16x16xf32> -> vector<16x16xf32>
    %211 = vector.broadcast %9 : vector<1x16xf32> to vector<16x16xf32>
    %212 = arith.addf %210, %211 : vector<16x16xf32>
    %cst_85 = arith.constant 5.000000e-01 : f32
    %213 = vector.broadcast %cst_85 : f32 to vector<16x16xf32>
    %214 = arith.mulf %213, %212 : vector<16x16xf32>
    %cst_86 = arith.constant 0.707106769 : f32
    %215 = vector.broadcast %cst_86 : f32 to vector<16x16xf32>
    %216 = arith.mulf %212, %215 : vector<16x16xf32>
    %cst_87 = arith.constant 0.000000e+00 : f32
    %217 = vector.broadcast %cst_87 : f32 to vector<16x16xf32>
    %218 = arith.cmpf oge, %216, %217 : vector<16x16xf32>
    %cst_88 = arith.constant 1.000000e+00 : f32
    %cst_89 = arith.constant -1.000000e+00 : f32
    %219 = vector.broadcast %cst_88 : f32 to vector<16x16xf32>
    %220 = vector.broadcast %cst_89 : f32 to vector<16x16xf32>
    %221 = arith.select %218, %219, %220 : vector<16x16xi1>, vector<16x16xf32>
    %222 = math.absf %216 : vector<16x16xf32>
    %cst_90 = arith.constant 0.327591091 : f32
    %223 = vector.broadcast %cst_90 : f32 to vector<16x16xf32>
    %224 = arith.mulf %223, %222 : vector<16x16xf32>
    %cst_91 = arith.constant 1.000000e+00 : f32
    %225 = vector.broadcast %cst_91 : f32 to vector<16x16xf32>
    %226 = arith.addf %225, %224 : vector<16x16xf32>
    %cst_92 = arith.constant 1.000000e+00 : f32
    %227 = vector.broadcast %cst_92 : f32 to vector<16x16xf32>
    %228 = arith.divf %227, %226 : vector<16x16xf32>
    %cst_93 = arith.constant 1.06140542 : f32
    %229 = vector.broadcast %cst_93 : f32 to vector<16x16xf32>
    %230 = arith.mulf %229, %228 : vector<16x16xf32>
    %cst_94 = arith.constant -1.45315206 : f32
    %231 = vector.broadcast %cst_94 : f32 to vector<16x16xf32>
    %232 = arith.addf %230, %231 : vector<16x16xf32>
    %233 = arith.mulf %232, %228 : vector<16x16xf32>
    %cst_95 = arith.constant 1.42141378 : f32
    %234 = vector.broadcast %cst_95 : f32 to vector<16x16xf32>
    %235 = arith.addf %233, %234 : vector<16x16xf32>
    %236 = arith.mulf %235, %228 : vector<16x16xf32>
    %cst_96 = arith.constant -0.284496725 : f32
    %237 = vector.broadcast %cst_96 : f32 to vector<16x16xf32>
    %238 = arith.addf %236, %237 : vector<16x16xf32>
    %239 = arith.mulf %238, %228 : vector<16x16xf32>
    %cst_97 = arith.constant 0.254829586 : f32
    %240 = vector.broadcast %cst_97 : f32 to vector<16x16xf32>
    %241 = arith.addf %239, %240 : vector<16x16xf32>
    %242 = arith.mulf %241, %228 : vector<16x16xf32>
    %cst_98 = arith.constant 0.000000e+00 : f32
    %243 = vector.broadcast %cst_98 : f32 to vector<16x16xf32>
    %244 = arith.subf %243, %222 : vector<16x16xf32>
    %245 = arith.mulf %244, %222 : vector<16x16xf32>
    %246 = math.exp %245 : vector<16x16xf32>
    %247 = arith.mulf %242, %246 : vector<16x16xf32>
    %cst_99 = arith.constant 1.000000e+00 : f32
    %248 = vector.broadcast %cst_99 : f32 to vector<16x16xf32>
    %249 = arith.subf %248, %247 : vector<16x16xf32>
    %250 = arith.mulf %221, %249 : vector<16x16xf32>
    %cst_100 = arith.constant 1.000000e+00 : f32
    %251 = vector.broadcast %cst_100 : f32 to vector<16x16xf32>
    %252 = arith.addf %251, %250 : vector<16x16xf32>
    %253 = arith.mulf %214, %252 : vector<16x16xf32>
    %254 = arith.truncf %253 : vector<16x16xf32> to vector<16x16xbf16>
    %255 = arith.truncf %13 : vector<16x16xf32> to vector<16x16xbf16>
    %cst_101 = arith.constant dense<0.000000e+00> : vector<16x16xf32>
    %256 = tpu.matmul %254, %255, %cst_101 {dimension_numbers = #tpu.dot_dimension_numbers<[1], [0], [0], [1], [0, 0, 1, 1], [], []>} : vector<16x16xbf16>, vector<16x16xbf16>, vector<16x16xf32> -> vector<16x16xf32>
    %257 = vector.broadcast %10 : vector<1x16xf32> to vector<16x16xf32>
    %258 = arith.addf %256, %257 : vector<16x16xf32>
    %259 = arith.addf %187, %258 : vector<16x16xf32>
    %260 = arith.truncf %259 : vector<16x16xf32> to vector<16x16xbf16>
    %c1 = arith.constant 1 : index
    %c0_102 = arith.constant 0 : index
    %c0_103 = arith.constant 0 : index
    %261 = vector.load %arg15[%c1, %c0_102, %c0_103] : memref<2x16x16xbf16, #tpu.memory_space<vmem>>, vector<1x16x16xbf16>
    %262 = vector.shape_cast %261 : vector<1x16x16xbf16> to vector<16x16xbf16>
    %263 = vector.shape_cast %260 : vector<16x16xbf16> to vector<1x16x16xbf16>
    tpu.vector_store %arg15[%c1, %c0_102, %c0_103], %263 {strides = array<i32>} : memref<2x16x16xbf16, #tpu.memory_space<vmem>>, vector<1x16x16xbf16>,
    return
  }
  func.func @transform_0(%arg0: i32) -> (i32, i32, i32) {
    %c0_i32 = arith.constant 0 : i32
    %c0_i32_0 = arith.constant 0 : i32
    %c0_i32_1 = arith.constant 0 : i32
    return %arg0, %c0_i32, %c0_i32_0 : i32, i32, i32
  }
  func.func @transform_1(%arg0: i32) -> (i32, i32) {
    %c0_i32 = arith.constant 0 : i32
    %c0_i32_0 = arith.constant 0 : i32
    %c0_i32_1 = arith.constant 0 : i32
    return %c0_i32, %c0_i32_0 : i32, i32
  }
  func.func @transform_2(%arg0: i32) -> (i32, i32) {
    %c0_i32 = arith.constant 0 : i32
    %c0_i32_0 = arith.constant 0 : i32
    %c0_i32_1 = arith.constant 0 : i32
    return %c0_i32, %c0_i32_0 : i32, i32
  }
  func.func @transform_3(%arg0: i32) -> (i32, i32) {
    %c0_i32 = arith.constant 0 : i32
    %c0_i32_0 = arith.constant 0 : i32
    %c0_i32_1 = arith.constant 0 : i32
    return %c0_i32, %c0_i32_0 : i32, i32
  }
  func.func @transform_4(%arg0: i32) -> (i32, i32) {
    %c0_i32 = arith.constant 0 : i32
    %c0_i32_0 = arith.constant 0 : i32
    %c0_i32_1 = arith.constant 0 : i32
    return %c0_i32, %c0_i32_0 : i32, i32
  }
  func.func @transform_5(%arg0: i32) -> (i32, i32) {
    %c0_i32 = arith.constant 0 : i32
    %c0_i32_0 = arith.constant 0 : i32
    %c0_i32_1 = arith.constant 0 : i32
    return %c0_i32, %c0_i32_0 : i32, i32
  }
  func.func @transform_6(%arg0: i32) -> (i32, i32) {
    %c0_i32 = arith.constant 0 : i32
    %c0_i32_0 = arith.constant 0 : i32
    %c0_i32_1 = arith.constant 0 : i32
    return %c0_i32, %c0_i32_0 : i32, i32
  }
  func.func @transform_7(%arg0: i32) -> (i32, i32) {
    %c0_i32 = arith.constant 0 : i32
    %c0_i32_0 = arith.constant 0 : i32
    %c0_i32_1 = arith.constant 0 : i32
    return %c0_i32, %c0_i32_0 : i32, i32
  }
  func.func @transform_8(%arg0: i32) -> (i32, i32) {
    %c0_i32 = arith.constant 0 : i32
    %c0_i32_0 = arith.constant 0 : i32
    %c0_i32_1 = arith.constant 0 : i32
    return %c0_i32, %c0_i32_0 : i32, i32
  }
  func.func @transform_9(%arg0: i32) -> (i32, i32) {
    %c0_i32 = arith.constant 0 : i32
    %c0_i32_0 = arith.constant 0 : i32
    %c0_i32_1 = arith.constant 0 : i32
    return %c0_i32, %c0_i32_0 : i32, i32
  }
  func.func @transform_10(%arg0: i32) -> (i32, i32) {
    %c0_i32 = arith.constant 0 : i32
    %c0_i32_0 = arith.constant 0 : i32
    %c0_i32_1 = arith.constant 0 : i32
    return %c0_i32, %c0_i32_0 : i32, i32
  }
  func.func @transform_11(%arg0: i32) -> (i32, i32) {
    %c0_i32 = arith.constant 0 : i32
    %c0_i32_0 = arith.constant 0 : i32
    %c0_i32_1 = arith.constant 0 : i32
    return %c0_i32, %c0_i32_0 : i32, i32
  }
  func.func @transform_12(%arg0: i32) -> (i32, i32) {
    %c0_i32 = arith.constant 0 : i32
    %c0_i32_0 = arith.constant 0 : i32
    %c0_i32_1 = arith.constant 0 : i32
    return %c0_i32, %c0_i32_0 : i32, i32
  }
  func.func @transform_13(%arg0: i32) -> (i32, i32) {
    %c0_i32 = arith.constant 0 : i32
    %c0_i32_0 = arith.constant 0 : i32
    %c0_i32_1 = arith.constant 0 : i32
    return %c0_i32, %c0_i32_0 : i32, i32
  }
  func.func @transform_14(%arg0: i32) -> (i32, i32, i32) {
    %c0_i32 = arith.constant 0 : i32
    %c0_i32_0 = arith.constant 0 : i32
    %c0_i32_1 = arith.constant 0 : i32
    return %arg0, %c0_i32, %c0_i32_0 : i32, i32, i32
  }
}

module attributes {stable_mosaic.version = 11 : i64} {
  func.func @_linear_bias_kernel(%arg0: i32, %arg1: memref<8x144xbf16, #tpu.memory_space<vmem>>, %arg2: memref<144x64xf32, #tpu.memory_space<vmem>>, %arg3: memref<1x64xf32, #tpu.memory_space<vmem>>, %arg4: memref<8x64xbf16, #tpu.memory_space<vmem>>) attributes {dimension_semantics = [#tpu.dimension_semantics<parallel>], iteration_bounds = array<i64: 1>, scalar_prefetch = 0 : i64, scratch_operands = 0 : i64, tpu.core_type = #tpu.core_type<tc>, window_params = [{transform_indices = @transform_0, window_bounds = array<i64: 8, 144>}, {pipeline_mode = #tpu.pipeline_mode<synchronous>, transform_indices = @transform_1, window_bounds = array<i64: 144, 64>}, {pipeline_mode = #tpu.pipeline_mode<synchronous>, transform_indices = @transform_2, window_bounds = array<i64: 1, 64>}, {transform_indices = @transform_3, window_bounds = array<i64: 8, 64>}]} {
    %c0 = arith.constant 0 : index
    %c0_0 = arith.constant 0 : index
    %0 = vector.load %arg1[%c0, %c0_0] : memref<8x144xbf16, #tpu.memory_space<vmem>>, vector<8x144xbf16>
    %c0_1 = arith.constant 0 : index
    %c0_2 = arith.constant 0 : index
    %1 = vector.load %arg2[%c0_1, %c0_2] : memref<144x64xf32, #tpu.memory_space<vmem>>, vector<144x64xf32>
    %2 = arith.truncf %1 : vector<144x64xf32> to vector<144x64xbf16>
    %cst = arith.constant dense<0.000000e+00> : vector<8x64xf32>
    %3 = tpu.matmul %0, %2, %cst {dimension_numbers = #tpu.dot_dimension_numbers<[1], [0], [0], [1], [0, 0, 1, 1], [], []>} : vector<8x144xbf16>, vector<144x64xbf16>, vector<8x64xf32> -> vector<8x64xf32>
    %c0_3 = arith.constant 0 : index
    %c0_4 = arith.constant 0 : index
    %4 = vector.load %arg3[%c0_3, %c0_4] : memref<1x64xf32, #tpu.memory_space<vmem>>, vector<1x64xf32>
    %5 = vector.broadcast %4 : vector<1x64xf32> to vector<8x64xf32>
    %6 = arith.addf %3, %5 : vector<8x64xf32>
    %7 = arith.truncf %6 : vector<8x64xf32> to vector<8x64xbf16>
    %c0_5 = arith.constant 0 : index
    %c0_6 = arith.constant 0 : index
    %8 = vector.load %arg4[%c0_5, %c0_6] : memref<8x64xbf16, #tpu.memory_space<vmem>>, vector<8x64xbf16>
    tpu.vector_store %arg4[%c0_5, %c0_6], %7 {strides = array<i32>} : memref<8x64xbf16, #tpu.memory_space<vmem>>, vector<8x64xbf16>,
    return
  }
  func.func @transform_0(%arg0: i32) -> (i32, i32) {
    %c0_i32 = arith.constant 0 : i32
    %c0_i32_0 = arith.constant 0 : i32
    return %arg0, %c0_i32 : i32, i32
  }
  func.func @transform_1(%arg0: i32) -> (i32, i32) {
    %c0_i32 = arith.constant 0 : i32
    %c0_i32_0 = arith.constant 0 : i32
    %c0_i32_1 = arith.constant 0 : i32
    return %c0_i32, %c0_i32_0 : i32, i32
  }
  func.func @transform_2(%arg0: i32) -> (i32, i32) {
    %c0_i32 = arith.constant 0 : i32
    %c0_i32_0 = arith.constant 0 : i32
    %c0_i32_1 = arith.constant 0 : i32
    return %c0_i32, %c0_i32_0 : i32, i32
  }
  func.func @transform_3(%arg0: i32) -> (i32, i32) {
    %c0_i32 = arith.constant 0 : i32
    %c0_i32_0 = arith.constant 0 : i32
    return %arg0, %c0_i32 : i32, i32
  }
}

module attributes {stable_mosaic.version = 11 : i64} {
  func.func @_vit_block_kernel(%arg0: i32, %arg1: memref<2x5x64xbf16, #tpu.memory_space<vmem>>, %arg2: memref<1x64xf32, #tpu.memory_space<vmem>>, %arg3: memref<1x64xf32, #tpu.memory_space<vmem>>, %arg4: memref<64x192xf32, #tpu.memory_space<vmem>>, %arg5: memref<64x64xf32, #tpu.memory_space<vmem>>, %arg6: memref<1x64xf32, #tpu.memory_space<vmem>>, %arg7: memref<1x64xf32, #tpu.memory_space<vmem>>, %arg8: memref<1x64xf32, #tpu.memory_space<vmem>>, %arg9: memref<64x256xf32, #tpu.memory_space<vmem>>, %arg10: memref<1x256xf32, #tpu.memory_space<vmem>>, %arg11: memref<256x64xf32, #tpu.memory_space<vmem>>, %arg12: memref<1x64xf32, #tpu.memory_space<vmem>>, %arg13: memref<2x5x64xbf16, #tpu.memory_space<vmem>>) attributes {dimension_semantics = [#tpu.dimension_semantics<parallel>], iteration_bounds = array<i64: 1>, scalar_prefetch = 0 : i64, scratch_operands = 0 : i64, tpu.core_type = #tpu.core_type<tc>, window_params = [{transform_indices = @transform_0, window_bounds = array<i64: 2, 5, 64>}, {pipeline_mode = #tpu.pipeline_mode<synchronous>, transform_indices = @transform_1, window_bounds = array<i64: 1, 64>}, {pipeline_mode = #tpu.pipeline_mode<synchronous>, transform_indices = @transform_2, window_bounds = array<i64: 1, 64>}, {pipeline_mode = #tpu.pipeline_mode<synchronous>, transform_indices = @transform_3, window_bounds = array<i64: 64, 192>}, {pipeline_mode = #tpu.pipeline_mode<synchronous>, transform_indices = @transform_4, window_bounds = array<i64: 64, 64>}, {pipeline_mode = #tpu.pipeline_mode<synchronous>, transform_indices = @transform_5, window_bounds = array<i64: 1, 64>}, {pipeline_mode = #tpu.pipeline_mode<synchronous>, transform_indices = @transform_6, window_bounds = array<i64: 1, 64>}, {pipeline_mode = #tpu.pipeline_mode<synchronous>, transform_indices = @transform_7, window_bounds = array<i64: 1, 64>}, {pipeline_mode = #tpu.pipeline_mode<synchronous>, transform_indices = @transform_8, window_bounds = array<i64: 64, 256>}, {pipeline_mode = #tpu.pipeline_mode<synchronous>, transform_indices = @transform_9, window_bounds = array<i64: 1, 256>}, {pipeline_mode = #tpu.pipeline_mode<synchronous>, transform_indices = @transform_10, window_bounds = array<i64: 256, 64>}, {pipeline_mode = #tpu.pipeline_mode<synchronous>, transform_indices = @transform_11, window_bounds = array<i64: 1, 64>}, {transform_indices = @transform_12, window_bounds = array<i64: 2, 5, 64>}]} {
    %c0 = arith.constant 0 : index
    %c0_0 = arith.constant 0 : index
    %0 = vector.load %arg2[%c0, %c0_0] : memref<1x64xf32, #tpu.memory_space<vmem>>, vector<1x64xf32>
    %c0_1 = arith.constant 0 : index
    %c0_2 = arith.constant 0 : index
    %1 = vector.load %arg3[%c0_1, %c0_2] : memref<1x64xf32, #tpu.memory_space<vmem>>, vector<1x64xf32>
    %c0_3 = arith.constant 0 : index
    %c0_4 = arith.constant 0 : index
    %2 = vector.load %arg7[%c0_3, %c0_4] : memref<1x64xf32, #tpu.memory_space<vmem>>, vector<1x64xf32>
    %c0_5 = arith.constant 0 : index
    %c0_6 = arith.constant 0 : index
    %3 = vector.load %arg8[%c0_5, %c0_6] : memref<1x64xf32, #tpu.memory_space<vmem>>, vector<1x64xf32>
    %c0_7 = arith.constant 0 : index
    %c0_8 = arith.constant 0 : index
    %4 = vector.load %arg6[%c0_7, %c0_8] : memref<1x64xf32, #tpu.memory_space<vmem>>, vector<1x64xf32>
    %c0_9 = arith.constant 0 : index
    %c0_10 = arith.constant 0 : index
    %5 = vector.load %arg10[%c0_9, %c0_10] : memref<1x256xf32, #tpu.memory_space<vmem>>, vector<1x256xf32>
    %c0_11 = arith.constant 0 : index
    %c0_12 = arith.constant 0 : index
    %6 = vector.load %arg12[%c0_11, %c0_12] : memref<1x64xf32, #tpu.memory_space<vmem>>, vector<1x64xf32>
    %c0_13 = arith.constant 0 : index
    %c0_14 = arith.constant 0 : index
    %7 = vector.load %arg4[%c0_13, %c0_14] : memref<64x192xf32, #tpu.memory_space<vmem>>, vector<64x192xf32>
    %c0_15 = arith.constant 0 : index
    %c0_16 = arith.constant 0 : index
    %8 = vector.load %arg5[%c0_15, %c0_16] : memref<64x64xf32, #tpu.memory_space<vmem>>, vector<64x64xf32>
    %c0_17 = arith.constant 0 : index
    %c0_18 = arith.constant 0 : index
    %9 = vector.load %arg9[%c0_17, %c0_18] : memref<64x256xf32, #tpu.memory_space<vmem>>, vector<64x256xf32>
    %c0_19 = arith.constant 0 : index
    %c0_20 = arith.constant 0 : index
    %10 = vector.load %arg11[%c0_19, %c0_20] : memref<256x64xf32, #tpu.memory_space<vmem>>, vector<256x64xf32>
    %c0_21 = arith.constant 0 : index
    %c0_22 = arith.constant 0 : index
    %c0_23 = arith.constant 0 : index
    %11 = vector.load %arg1[%c0_21, %c0_22, %c0_23] : memref<2x5x64xbf16, #tpu.memory_space<vmem>>, vector<1x5x64xbf16>
    %12 = vector.shape_cast %11 : vector<1x5x64xbf16> to vector<5x64xbf16>
    %13 = arith.extf %12 : vector<5x64xbf16> to vector<5x64xf32>
    %cst = arith.constant dense<0.000000e+00> : vector<5xf32>
    %14 = vector.multi_reduction <add>, %13, %cst [1] : vector<5x64xf32> to vector<5xf32>
    %15 = vector.shape_cast %14 : vector<5xf32> to vector<5x1xf32>
    %cst_24 = arith.constant 6.400000e+01 : f32
    %16 = vector.broadcast %cst_24 : f32 to vector<5x1xf32>
    %17 = arith.divf %15, %16 : vector<5x1xf32>
    %18 = vector.broadcast %17 : vector<5x1xf32> to vector<5x64xf32>
    %19 = arith.subf %13, %18 : vector<5x64xf32>
    %20 = arith.mulf %19, %19 : vector<5x64xf32>
    %cst_25 = arith.constant dense<0.000000e+00> : vector<5xf32>
    %21 = vector.multi_reduction <add>, %20, %cst_25 [1] : vector<5x64xf32> to vector<5xf32>
    %22 = vector.shape_cast %21 : vector<5xf32> to vector<5x1xf32>
    %cst_26 = arith.constant 6.400000e+01 : f32
    %23 = vector.broadcast %cst_26 : f32 to vector<5x1xf32>
    %24 = arith.divf %22, %23 : vector<5x1xf32>
    %cst_27 = arith.constant 9.99999974E-6 : f32
    %25 = vector.broadcast %cst_27 : f32 to vector<5x1xf32>
    %26 = arith.addf %24, %25 : vector<5x1xf32>
    %27 = math.rsqrt %26 : vector<5x1xf32>
    %28 = vector.broadcast %27 : vector<5x1xf32> to vector<5x64xf32>
    %29 = arith.mulf %19, %28 : vector<5x64xf32>
    %30 = vector.broadcast %0 : vector<1x64xf32> to vector<5x64xf32>
    %31 = arith.mulf %29, %30 : vector<5x64xf32>
    %32 = vector.broadcast %1 : vector<1x64xf32> to vector<5x64xf32>
    %33 = arith.addf %31, %32 : vector<5x64xf32>
    %34 = arith.truncf %33 : vector<5x64xf32> to vector<5x64xbf16>
    %35 = arith.truncf %7 : vector<64x192xf32> to vector<64x192xbf16>
    %cst_28 = arith.constant dense<0.000000e+00> : vector<5x192xf32>
    %36 = tpu.matmul %34, %35, %cst_28 {dimension_numbers = #tpu.dot_dimension_numbers<[1], [0], [0], [1], [0, 0, 1, 1], [], []>} : vector<5x64xbf16>, vector<64x192xbf16>, vector<5x192xf32> -> vector<5x192xf32>
    %cst_29 = arith.constant 0.000000e+00 : f32
    %37 = vector.broadcast %cst_29 : f32 to vector<5x64xf32>
    %38 = vector.extract_strided_slice %36 {offsets = [0, 0], sizes = [5, 16], strides = [1, 1]} : vector<5x192xf32> to vector<5x16xf32>
    %39 = vector.extract_strided_slice %36 {offsets = [0, 64], sizes = [5, 16], strides = [1, 1]} : vector<5x192xf32> to vector<5x16xf32>
    %40 = vector.extract_strided_slice %36 {offsets = [0, 128], sizes = [5, 16], strides = [1, 1]} : vector<5x192xf32> to vector<5x16xf32>
    %cst_30 = arith.constant dense<0.000000e+00> : vector<5x5xf32>
    %41 = tpu.matmul %38, %39, %cst_30 {dimension_numbers = #tpu.dot_dimension_numbers<[1], [1], [0], [0], [0, 0, 1, 0], [], []>} : vector<5x16xf32>, vector<5x16xf32>, vector<5x5xf32> -> vector<5x5xf32>
    %cst_31 = arith.constant 2.500000e-01 : f32
    %42 = vector.broadcast %cst_31 : f32 to vector<5x5xf32>
    %43 = arith.mulf %41, %42 : vector<5x5xf32>
    %cst_32 = arith.constant dense<0xFF800000> : vector<5xf32>
    %44 = vector.multi_reduction <maximumf>, %43, %cst_32 [1] : vector<5x5xf32> to vector<5xf32>
    %45 = vector.shape_cast %44 : vector<5xf32> to vector<5x1xf32>
    %46 = vector.broadcast %45 : vector<5x1xf32> to vector<5x5xf32>
    %47 = arith.subf %43, %46 : vector<5x5xf32>
    %48 = math.exp %47 : vector<5x5xf32>
    %cst_33 = arith.constant dense<0.000000e+00> : vector<5xf32>
    %49 = vector.multi_reduction <add>, %48, %cst_33 [1] : vector<5x5xf32> to vector<5xf32>
    %50 = vector.shape_cast %49 : vector<5xf32> to vector<5x1xf32>
    %51 = vector.broadcast %50 : vector<5x1xf32> to vector<5x5xf32>
    %52 = arith.divf %48, %51 : vector<5x5xf32>
    %cst_34 = arith.constant dense<0.000000e+00> : vector<5x16xf32>
    %53 = tpu.matmul %52, %40, %cst_34 {dimension_numbers = #tpu.dot_dimension_numbers<[1], [0], [0], [1], [0, 0, 1, 1], [], []>} : vector<5x5xf32>, vector<5x16xf32>, vector<5x16xf32> -> vector<5x16xf32>
    %54 = vector.extract_strided_slice %8 {offsets = [0, 0], sizes = [16, 64], strides = [1, 1]} : vector<64x64xf32> to vector<16x64xf32>
    %55 = arith.truncf %53 : vector<5x16xf32> to vector<5x16xbf16>
    %56 = arith.truncf %54 : vector<16x64xf32> to vector<16x64xbf16>
    %cst_35 = arith.constant dense<0.000000e+00> : vector<5x64xf32>
    %57 = tpu.matmul %55, %56, %cst_35 {dimension_numbers = #tpu.dot_dimension_numbers<[1], [0], [0], [1], [0, 0, 1, 1], [], []>} : vector<5x16xbf16>, vector<16x64xbf16>, vector<5x64xf32> -> vector<5x64xf32>
    %58 = arith.addf %37, %57 : vector<5x64xf32>
    %59 = vector.extract_strided_slice %36 {offsets = [0, 16], sizes = [5, 16], strides = [1, 1]} : vector<5x192xf32> to vector<5x16xf32>
    %60 = vector.extract_strided_slice %36 {offsets = [0, 80], sizes = [5, 16], strides = [1, 1]} : vector<5x192xf32> to vector<5x16xf32>
    %61 = vector.extract_strided_slice %36 {offsets = [0, 144], sizes = [5, 16], strides = [1, 1]} : vector<5x192xf32> to vector<5x16xf32>
    %cst_36 = arith.constant dense<0.000000e+00> : vector<5x5xf32>
    %62 = tpu.matmul %59, %60, %cst_36 {dimension_numbers = #tpu.dot_dimension_numbers<[1], [1], [0], [0], [0, 0, 1, 0], [], []>} : vector<5x16xf32>, vector<5x16xf32>, vector<5x5xf32> -> vector<5x5xf32>
    %cst_37 = arith.constant 2.500000e-01 : f32
    %63 = vector.broadcast %cst_37 : f32 to vector<5x5xf32>
    %64 = arith.mulf %62, %63 : vector<5x5xf32>
    %cst_38 = arith.constant dense<0xFF800000> : vector<5xf32>
    %65 = vector.multi_reduction <maximumf>, %64, %cst_38 [1] : vector<5x5xf32> to vector<5xf32>
    %66 = vector.shape_cast %65 : vector<5xf32> to vector<5x1xf32>
    %67 = vector.broadcast %66 : vector<5x1xf32> to vector<5x5xf32>
    %68 = arith.subf %64, %67 : vector<5x5xf32>
    %69 = math.exp %68 : vector<5x5xf32>
    %cst_39 = arith.constant dense<0.000000e+00> : vector<5xf32>
    %70 = vector.multi_reduction <add>, %69, %cst_39 [1] : vector<5x5xf32> to vector<5xf32>
    %71 = vector.shape_cast %70 : vector<5xf32> to vector<5x1xf32>
    %72 = vector.broadcast %71 : vector<5x1xf32> to vector<5x5xf32>
    %73 = arith.divf %69, %72 : vector<5x5xf32>
    %cst_40 = arith.constant dense<0.000000e+00> : vector<5x16xf32>
    %74 = tpu.matmul %73, %61, %cst_40 {dimension_numbers = #tpu.dot_dimension_numbers<[1], [0], [0], [1], [0, 0, 1, 1], [], []>} : vector<5x5xf32>, vector<5x16xf32>, vector<5x16xf32> -> vector<5x16xf32>
    %75 = vector.extract_strided_slice %8 {offsets = [16, 0], sizes = [16, 64], strides = [1, 1]} : vector<64x64xf32> to vector<16x64xf32>
    %76 = arith.truncf %74 : vector<5x16xf32> to vector<5x16xbf16>
    %77 = arith.truncf %75 : vector<16x64xf32> to vector<16x64xbf16>
    %cst_41 = arith.constant dense<0.000000e+00> : vector<5x64xf32>
    %78 = tpu.matmul %76, %77, %cst_41 {dimension_numbers = #tpu.dot_dimension_numbers<[1], [0], [0], [1], [0, 0, 1, 1], [], []>} : vector<5x16xbf16>, vector<16x64xbf16>, vector<5x64xf32> -> vector<5x64xf32>
    %79 = arith.addf %58, %78 : vector<5x64xf32>
    %80 = vector.extract_strided_slice %36 {offsets = [0, 32], sizes = [5, 16], strides = [1, 1]} : vector<5x192xf32> to vector<5x16xf32>
    %81 = vector.extract_strided_slice %36 {offsets = [0, 96], sizes = [5, 16], strides = [1, 1]} : vector<5x192xf32> to vector<5x16xf32>
    %82 = vector.extract_strided_slice %36 {offsets = [0, 160], sizes = [5, 16], strides = [1, 1]} : vector<5x192xf32> to vector<5x16xf32>
    %cst_42 = arith.constant dense<0.000000e+00> : vector<5x5xf32>
    %83 = tpu.matmul %80, %81, %cst_42 {dimension_numbers = #tpu.dot_dimension_numbers<[1], [1], [0], [0], [0, 0, 1, 0], [], []>} : vector<5x16xf32>, vector<5x16xf32>, vector<5x5xf32> -> vector<5x5xf32>
    %cst_43 = arith.constant 2.500000e-01 : f32
    %84 = vector.broadcast %cst_43 : f32 to vector<5x5xf32>
    %85 = arith.mulf %83, %84 : vector<5x5xf32>
    %cst_44 = arith.constant dense<0xFF800000> : vector<5xf32>
    %86 = vector.multi_reduction <maximumf>, %85, %cst_44 [1] : vector<5x5xf32> to vector<5xf32>
    %87 = vector.shape_cast %86 : vector<5xf32> to vector<5x1xf32>
    %88 = vector.broadcast %87 : vector<5x1xf32> to vector<5x5xf32>
    %89 = arith.subf %85, %88 : vector<5x5xf32>
    %90 = math.exp %89 : vector<5x5xf32>
    %cst_45 = arith.constant dense<0.000000e+00> : vector<5xf32>
    %91 = vector.multi_reduction <add>, %90, %cst_45 [1] : vector<5x5xf32> to vector<5xf32>
    %92 = vector.shape_cast %91 : vector<5xf32> to vector<5x1xf32>
    %93 = vector.broadcast %92 : vector<5x1xf32> to vector<5x5xf32>
    %94 = arith.divf %90, %93 : vector<5x5xf32>
    %cst_46 = arith.constant dense<0.000000e+00> : vector<5x16xf32>
    %95 = tpu.matmul %94, %82, %cst_46 {dimension_numbers = #tpu.dot_dimension_numbers<[1], [0], [0], [1], [0, 0, 1, 1], [], []>} : vector<5x5xf32>, vector<5x16xf32>, vector<5x16xf32> -> vector<5x16xf32>
    %96 = vector.extract_strided_slice %8 {offsets = [32, 0], sizes = [16, 64], strides = [1, 1]} : vector<64x64xf32> to vector<16x64xf32>
    %97 = arith.truncf %95 : vector<5x16xf32> to vector<5x16xbf16>
    %98 = arith.truncf %96 : vector<16x64xf32> to vector<16x64xbf16>
    %cst_47 = arith.constant dense<0.000000e+00> : vector<5x64xf32>
    %99 = tpu.matmul %97, %98, %cst_47 {dimension_numbers = #tpu.dot_dimension_numbers<[1], [0], [0], [1], [0, 0, 1, 1], [], []>} : vector<5x16xbf16>, vector<16x64xbf16>, vector<5x64xf32> -> vector<5x64xf32>
    %100 = arith.addf %79, %99 : vector<5x64xf32>
    %101 = vector.extract_strided_slice %36 {offsets = [0, 48], sizes = [5, 16], strides = [1, 1]} : vector<5x192xf32> to vector<5x16xf32>
    %102 = vector.extract_strided_slice %36 {offsets = [0, 112], sizes = [5, 16], strides = [1, 1]} : vector<5x192xf32> to vector<5x16xf32>
    %103 = vector.extract_strided_slice %36 {offsets = [0, 176], sizes = [5, 16], strides = [1, 1]} : vector<5x192xf32> to vector<5x16xf32>
    %cst_48 = arith.constant dense<0.000000e+00> : vector<5x5xf32>
    %104 = tpu.matmul %101, %102, %cst_48 {dimension_numbers = #tpu.dot_dimension_numbers<[1], [1], [0], [0], [0, 0, 1, 0], [], []>} : vector<5x16xf32>, vector<5x16xf32>, vector<5x5xf32> -> vector<5x5xf32>
    %cst_49 = arith.constant 2.500000e-01 : f32
    %105 = vector.broadcast %cst_49 : f32 to vector<5x5xf32>
    %106 = arith.mulf %104, %105 : vector<5x5xf32>
    %cst_50 = arith.constant dense<0xFF800000> : vector<5xf32>
    %107 = vector.multi_reduction <maximumf>, %106, %cst_50 [1] : vector<5x5xf32> to vector<5xf32>
    %108 = vector.shape_cast %107 : vector<5xf32> to vector<5x1xf32>
    %109 = vector.broadcast %108 : vector<5x1xf32> to vector<5x5xf32>
    %110 = arith.subf %106, %109 : vector<5x5xf32>
    %111 = math.exp %110 : vector<5x5xf32>
    %cst_51 = arith.constant dense<0.000000e+00> : vector<5xf32>
    %112 = vector.multi_reduction <add>, %111, %cst_51 [1] : vector<5x5xf32> to vector<5xf32>
    %113 = vector.shape_cast %112 : vector<5xf32> to vector<5x1xf32>
    %114 = vector.broadcast %113 : vector<5x1xf32> to vector<5x5xf32>
    %115 = arith.divf %111, %114 : vector<5x5xf32>
    %cst_52 = arith.constant dense<0.000000e+00> : vector<5x16xf32>
    %116 = tpu.matmul %115, %103, %cst_52 {dimension_numbers = #tpu.dot_dimension_numbers<[1], [0], [0], [1], [0, 0, 1, 1], [], []>} : vector<5x5xf32>, vector<5x16xf32>, vector<5x16xf32> -> vector<5x16xf32>
    %117 = vector.extract_strided_slice %8 {offsets = [48, 0], sizes = [16, 64], strides = [1, 1]} : vector<64x64xf32> to vector<16x64xf32>
    %118 = arith.truncf %116 : vector<5x16xf32> to vector<5x16xbf16>
    %119 = arith.truncf %117 : vector<16x64xf32> to vector<16x64xbf16>
    %cst_53 = arith.constant dense<0.000000e+00> : vector<5x64xf32>
    %120 = tpu.matmul %118, %119, %cst_53 {dimension_numbers = #tpu.dot_dimension_numbers<[1], [0], [0], [1], [0, 0, 1, 1], [], []>} : vector<5x16xbf16>, vector<16x64xbf16>, vector<5x64xf32> -> vector<5x64xf32>
    %121 = arith.addf %100, %120 : vector<5x64xf32>
    %122 = arith.addf %13, %121 : vector<5x64xf32>
    %123 = vector.broadcast %4 : vector<1x64xf32> to vector<5x64xf32>
    %124 = arith.addf %122, %123 : vector<5x64xf32>
    %cst_54 = arith.constant dense<0.000000e+00> : vector<5xf32>
    %125 = vector.multi_reduction <add>, %124, %cst_54 [1] : vector<5x64xf32> to vector<5xf32>
    %126 = vector.shape_cast %125 : vector<5xf32> to vector<5x1xf32>
    %cst_55 = arith.constant 6.400000e+01 : f32
    %127 = vector.broadcast %cst_55 : f32 to vector<5x1xf32>
    %128 = arith.divf %126, %127 : vector<5x1xf32>
    %129 = vector.broadcast %128 : vector<5x1xf32> to vector<5x64xf32>
    %130 = arith.subf %124, %129 : vector<5x64xf32>
    %131 = arith.mulf %130, %130 : vector<5x64xf32>
    %cst_56 = arith.constant dense<0.000000e+00> : vector<5xf32>
    %132 = vector.multi_reduction <add>, %131, %cst_56 [1] : vector<5x64xf32> to vector<5xf32>
    %133 = vector.shape_cast %132 : vector<5xf32> to vector<5x1xf32>
    %cst_57 = arith.constant 6.400000e+01 : f32
    %134 = vector.broadcast %cst_57 : f32 to vector<5x1xf32>
    %135 = arith.divf %133, %134 : vector<5x1xf32>
    %cst_58 = arith.constant 9.99999974E-6 : f32
    %136 = vector.broadcast %cst_58 : f32 to vector<5x1xf32>
    %137 = arith.addf %135, %136 : vector<5x1xf32>
    %138 = math.rsqrt %137 : vector<5x1xf32>
    %139 = vector.broadcast %138 : vector<5x1xf32> to vector<5x64xf32>
    %140 = arith.mulf %130, %139 : vector<5x64xf32>
    %141 = vector.broadcast %2 : vector<1x64xf32> to vector<5x64xf32>
    %142 = arith.mulf %140, %141 : vector<5x64xf32>
    %143 = vector.broadcast %3 : vector<1x64xf32> to vector<5x64xf32>
    %144 = arith.addf %142, %143 : vector<5x64xf32>
    %145 = arith.truncf %144 : vector<5x64xf32> to vector<5x64xbf16>
    %146 = arith.truncf %9 : vector<64x256xf32> to vector<64x256xbf16>
    %cst_59 = arith.constant dense<0.000000e+00> : vector<5x256xf32>
    %147 = tpu.matmul %145, %146, %cst_59 {dimension_numbers = #tpu.dot_dimension_numbers<[1], [0], [0], [1], [0, 0, 1, 1], [], []>} : vector<5x64xbf16>, vector<64x256xbf16>, vector<5x256xf32> -> vector<5x256xf32>
    %148 = vector.broadcast %5 : vector<1x256xf32> to vector<5x256xf32>
    %149 = arith.addf %147, %148 : vector<5x256xf32>
    %cst_60 = arith.constant 5.000000e-01 : f32
    %150 = vector.broadcast %cst_60 : f32 to vector<5x256xf32>
    %151 = arith.mulf %150, %149 : vector<5x256xf32>
    %cst_61 = arith.constant 0.707106769 : f32
    %152 = vector.broadcast %cst_61 : f32 to vector<5x256xf32>
    %153 = arith.mulf %149, %152 : vector<5x256xf32>
    %cst_62 = arith.constant 0.000000e+00 : f32
    %154 = vector.broadcast %cst_62 : f32 to vector<5x256xf32>
    %155 = arith.cmpf oge, %153, %154 : vector<5x256xf32>
    %cst_63 = arith.constant 1.000000e+00 : f32
    %cst_64 = arith.constant -1.000000e+00 : f32
    %156 = vector.broadcast %cst_63 : f32 to vector<5x256xf32>
    %157 = vector.broadcast %cst_64 : f32 to vector<5x256xf32>
    %158 = arith.select %155, %156, %157 : vector<5x256xi1>, vector<5x256xf32>
    %159 = math.absf %153 : vector<5x256xf32>
    %cst_65 = arith.constant 0.327591091 : f32
    %160 = vector.broadcast %cst_65 : f32 to vector<5x256xf32>
    %161 = arith.mulf %160, %159 : vector<5x256xf32>
    %cst_66 = arith.constant 1.000000e+00 : f32
    %162 = vector.broadcast %cst_66 : f32 to vector<5x256xf32>
    %163 = arith.addf %162, %161 : vector<5x256xf32>
    %cst_67 = arith.constant 1.000000e+00 : f32
    %164 = vector.broadcast %cst_67 : f32 to vector<5x256xf32>
    %165 = arith.divf %164, %163 : vector<5x256xf32>
    %cst_68 = arith.constant 1.06140542 : f32
    %166 = vector.broadcast %cst_68 : f32 to vector<5x256xf32>
    %167 = arith.mulf %166, %165 : vector<5x256xf32>
    %cst_69 = arith.constant -1.45315206 : f32
    %168 = vector.broadcast %cst_69 : f32 to vector<5x256xf32>
    %169 = arith.addf %167, %168 : vector<5x256xf32>
    %170 = arith.mulf %169, %165 : vector<5x256xf32>
    %cst_70 = arith.constant 1.42141378 : f32
    %171 = vector.broadcast %cst_70 : f32 to vector<5x256xf32>
    %172 = arith.addf %170, %171 : vector<5x256xf32>
    %173 = arith.mulf %172, %165 : vector<5x256xf32>
    %cst_71 = arith.constant -0.284496725 : f32
    %174 = vector.broadcast %cst_71 : f32 to vector<5x256xf32>
    %175 = arith.addf %173, %174 : vector<5x256xf32>
    %176 = arith.mulf %175, %165 : vector<5x256xf32>
    %cst_72 = arith.constant 0.254829586 : f32
    %177 = vector.broadcast %cst_72 : f32 to vector<5x256xf32>
    %178 = arith.addf %176, %177 : vector<5x256xf32>
    %179 = arith.mulf %178, %165 : vector<5x256xf32>
    %cst_73 = arith.constant 0.000000e+00 : f32
    %180 = vector.broadcast %cst_73 : f32 to vector<5x256xf32>
    %181 = arith.subf %180, %159 : vector<5x256xf32>
    %182 = arith.mulf %181, %159 : vector<5x256xf32>
    %183 = math.exp %182 : vector<5x256xf32>
    %184 = arith.mulf %179, %183 : vector<5x256xf32>
    %cst_74 = arith.constant 1.000000e+00 : f32
    %185 = vector.broadcast %cst_74 : f32 to vector<5x256xf32>
    %186 = arith.subf %185, %184 : vector<5x256xf32>
    %187 = arith.mulf %158, %186 : vector<5x256xf32>
    %cst_75 = arith.constant 1.000000e+00 : f32
    %188 = vector.broadcast %cst_75 : f32 to vector<5x256xf32>
    %189 = arith.addf %188, %187 : vector<5x256xf32>
    %190 = arith.mulf %151, %189 : vector<5x256xf32>
    %191 = arith.truncf %190 : vector<5x256xf32> to vector<5x256xbf16>
    %192 = arith.truncf %10 : vector<256x64xf32> to vector<256x64xbf16>
    %cst_76 = arith.constant dense<0.000000e+00> : vector<5x64xf32>
    %193 = tpu.matmul %191, %192, %cst_76 {dimension_numbers = #tpu.dot_dimension_numbers<[1], [0], [0], [1], [0, 0, 1, 1], [], []>} : vector<5x256xbf16>, vector<256x64xbf16>, vector<5x64xf32> -> vector<5x64xf32>
    %194 = vector.broadcast %6 : vector<1x64xf32> to vector<5x64xf32>
    %195 = arith.addf %193, %194 : vector<5x64xf32>
    %196 = arith.addf %124, %195 : vector<5x64xf32>
    %197 = arith.truncf %196 : vector<5x64xf32> to vector<5x64xbf16>
    %c0_77 = arith.constant 0 : index
    %c0_78 = arith.constant 0 : index
    %c0_79 = arith.constant 0 : index
    %198 = vector.load %arg13[%c0_77, %c0_78, %c0_79] : memref<2x5x64xbf16, #tpu.memory_space<vmem>>, vector<1x5x64xbf16>
    %199 = vector.shape_cast %198 : vector<1x5x64xbf16> to vector<5x64xbf16>
    %200 = vector.shape_cast %197 : vector<5x64xbf16> to vector<1x5x64xbf16>
    tpu.vector_store %arg13[%c0_77, %c0_78, %c0_79], %200 {strides = array<i32>} : memref<2x5x64xbf16, #tpu.memory_space<vmem>>, vector<1x5x64xbf16>,
    %c1 = arith.constant 1 : index
    %c0_80 = arith.constant 0 : index
    %c0_81 = arith.constant 0 : index
    %201 = vector.load %arg1[%c1, %c0_80, %c0_81] : memref<2x5x64xbf16, #tpu.memory_space<vmem>>, vector<1x5x64xbf16>
    %202 = vector.shape_cast %201 : vector<1x5x64xbf16> to vector<5x64xbf16>
    %203 = arith.extf %202 : vector<5x64xbf16> to vector<5x64xf32>
    %cst_82 = arith.constant dense<0.000000e+00> : vector<5xf32>
    %204 = vector.multi_reduction <add>, %203, %cst_82 [1] : vector<5x64xf32> to vector<5xf32>
    %205 = vector.shape_cast %204 : vector<5xf32> to vector<5x1xf32>
    %cst_83 = arith.constant 6.400000e+01 : f32
    %206 = vector.broadcast %cst_83 : f32 to vector<5x1xf32>
    %207 = arith.divf %205, %206 : vector<5x1xf32>
    %208 = vector.broadcast %207 : vector<5x1xf32> to vector<5x64xf32>
    %209 = arith.subf %203, %208 : vector<5x64xf32>
    %210 = arith.mulf %209, %209 : vector<5x64xf32>
    %cst_84 = arith.constant dense<0.000000e+00> : vector<5xf32>
    %211 = vector.multi_reduction <add>, %210, %cst_84 [1] : vector<5x64xf32> to vector<5xf32>
    %212 = vector.shape_cast %211 : vector<5xf32> to vector<5x1xf32>
    %cst_85 = arith.constant 6.400000e+01 : f32
    %213 = vector.broadcast %cst_85 : f32 to vector<5x1xf32>
    %214 = arith.divf %212, %213 : vector<5x1xf32>
    %cst_86 = arith.constant 9.99999974E-6 : f32
    %215 = vector.broadcast %cst_86 : f32 to vector<5x1xf32>
    %216 = arith.addf %214, %215 : vector<5x1xf32>
    %217 = math.rsqrt %216 : vector<5x1xf32>
    %218 = vector.broadcast %217 : vector<5x1xf32> to vector<5x64xf32>
    %219 = arith.mulf %209, %218 : vector<5x64xf32>
    %220 = vector.broadcast %0 : vector<1x64xf32> to vector<5x64xf32>
    %221 = arith.mulf %219, %220 : vector<5x64xf32>
    %222 = vector.broadcast %1 : vector<1x64xf32> to vector<5x64xf32>
    %223 = arith.addf %221, %222 : vector<5x64xf32>
    %224 = arith.truncf %223 : vector<5x64xf32> to vector<5x64xbf16>
    %225 = arith.truncf %7 : vector<64x192xf32> to vector<64x192xbf16>
    %cst_87 = arith.constant dense<0.000000e+00> : vector<5x192xf32>
    %226 = tpu.matmul %224, %225, %cst_87 {dimension_numbers = #tpu.dot_dimension_numbers<[1], [0], [0], [1], [0, 0, 1, 1], [], []>} : vector<5x64xbf16>, vector<64x192xbf16>, vector<5x192xf32> -> vector<5x192xf32>
    %cst_88 = arith.constant 0.000000e+00 : f32
    %227 = vector.broadcast %cst_88 : f32 to vector<5x64xf32>
    %228 = vector.extract_strided_slice %226 {offsets = [0, 0], sizes = [5, 16], strides = [1, 1]} : vector<5x192xf32> to vector<5x16xf32>
    %229 = vector.extract_strided_slice %226 {offsets = [0, 64], sizes = [5, 16], strides = [1, 1]} : vector<5x192xf32> to vector<5x16xf32>
    %230 = vector.extract_strided_slice %226 {offsets = [0, 128], sizes = [5, 16], strides = [1, 1]} : vector<5x192xf32> to vector<5x16xf32>
    %cst_89 = arith.constant dense<0.000000e+00> : vector<5x5xf32>
    %231 = tpu.matmul %228, %229, %cst_89 {dimension_numbers = #tpu.dot_dimension_numbers<[1], [1], [0], [0], [0, 0, 1, 0], [], []>} : vector<5x16xf32>, vector<5x16xf32>, vector<5x5xf32> -> vector<5x5xf32>
    %cst_90 = arith.constant 2.500000e-01 : f32
    %232 = vector.broadcast %cst_90 : f32 to vector<5x5xf32>
    %233 = arith.mulf %231, %232 : vector<5x5xf32>
    %cst_91 = arith.constant dense<0xFF800000> : vector<5xf32>
    %234 = vector.multi_reduction <maximumf>, %233, %cst_91 [1] : vector<5x5xf32> to vector<5xf32>
    %235 = vector.shape_cast %234 : vector<5xf32> to vector<5x1xf32>
    %236 = vector.broadcast %235 : vector<5x1xf32> to vector<5x5xf32>
    %237 = arith.subf %233, %236 : vector<5x5xf32>
    %238 = math.exp %237 : vector<5x5xf32>
    %cst_92 = arith.constant dense<0.000000e+00> : vector<5xf32>
    %239 = vector.multi_reduction <add>, %238, %cst_92 [1] : vector<5x5xf32> to vector<5xf32>
    %240 = vector.shape_cast %239 : vector<5xf32> to vector<5x1xf32>
    %241 = vector.broadcast %240 : vector<5x1xf32> to vector<5x5xf32>
    %242 = arith.divf %238, %241 : vector<5x5xf32>
    %cst_93 = arith.constant dense<0.000000e+00> : vector<5x16xf32>
    %243 = tpu.matmul %242, %230, %cst_93 {dimension_numbers = #tpu.dot_dimension_numbers<[1], [0], [0], [1], [0, 0, 1, 1], [], []>} : vector<5x5xf32>, vector<5x16xf32>, vector<5x16xf32> -> vector<5x16xf32>
    %244 = vector.extract_strided_slice %8 {offsets = [0, 0], sizes = [16, 64], strides = [1, 1]} : vector<64x64xf32> to vector<16x64xf32>
    %245 = arith.truncf %243 : vector<5x16xf32> to vector<5x16xbf16>
    %246 = arith.truncf %244 : vector<16x64xf32> to vector<16x64xbf16>
    %cst_94 = arith.constant dense<0.000000e+00> : vector<5x64xf32>
    %247 = tpu.matmul %245, %246, %cst_94 {dimension_numbers = #tpu.dot_dimension_numbers<[1], [0], [0], [1], [0, 0, 1, 1], [], []>} : vector<5x16xbf16>, vector<16x64xbf16>, vector<5x64xf32> -> vector<5x64xf32>
    %248 = arith.addf %227, %247 : vector<5x64xf32>
    %249 = vector.extract_strided_slice %226 {offsets = [0, 16], sizes = [5, 16], strides = [1, 1]} : vector<5x192xf32> to vector<5x16xf32>
    %250 = vector.extract_strided_slice %226 {offsets = [0, 80], sizes = [5, 16], strides = [1, 1]} : vector<5x192xf32> to vector<5x16xf32>
    %251 = vector.extract_strided_slice %226 {offsets = [0, 144], sizes = [5, 16], strides = [1, 1]} : vector<5x192xf32> to vector<5x16xf32>
    %cst_95 = arith.constant dense<0.000000e+00> : vector<5x5xf32>
    %252 = tpu.matmul %249, %250, %cst_95 {dimension_numbers = #tpu.dot_dimension_numbers<[1], [1], [0], [0], [0, 0, 1, 0], [], []>} : vector<5x16xf32>, vector<5x16xf32>, vector<5x5xf32> -> vector<5x5xf32>
    %cst_96 = arith.constant 2.500000e-01 : f32
    %253 = vector.broadcast %cst_96 : f32 to vector<5x5xf32>
    %254 = arith.mulf %252, %253 : vector<5x5xf32>
    %cst_97 = arith.constant dense<0xFF800000> : vector<5xf32>
    %255 = vector.multi_reduction <maximumf>, %254, %cst_97 [1] : vector<5x5xf32> to vector<5xf32>
    %256 = vector.shape_cast %255 : vector<5xf32> to vector<5x1xf32>
    %257 = vector.broadcast %256 : vector<5x1xf32> to vector<5x5xf32>
    %258 = arith.subf %254, %257 : vector<5x5xf32>
    %259 = math.exp %258 : vector<5x5xf32>
    %cst_98 = arith.constant dense<0.000000e+00> : vector<5xf32>
    %260 = vector.multi_reduction <add>, %259, %cst_98 [1] : vector<5x5xf32> to vector<5xf32>
    %261 = vector.shape_cast %260 : vector<5xf32> to vector<5x1xf32>
    %262 = vector.broadcast %261 : vector<5x1xf32> to vector<5x5xf32>
    %263 = arith.divf %259, %262 : vector<5x5xf32>
    %cst_99 = arith.constant dense<0.000000e+00> : vector<5x16xf32>
    %264 = tpu.matmul %263, %251, %cst_99 {dimension_numbers = #tpu.dot_dimension_numbers<[1], [0], [0], [1], [0, 0, 1, 1], [], []>} : vector<5x5xf32>, vector<5x16xf32>, vector<5x16xf32> -> vector<5x16xf32>
    %265 = vector.extract_strided_slice %8 {offsets = [16, 0], sizes = [16, 64], strides = [1, 1]} : vector<64x64xf32> to vector<16x64xf32>
    %266 = arith.truncf %264 : vector<5x16xf32> to vector<5x16xbf16>
    %267 = arith.truncf %265 : vector<16x64xf32> to vector<16x64xbf16>
    %cst_100 = arith.constant dense<0.000000e+00> : vector<5x64xf32>
    %268 = tpu.matmul %266, %267, %cst_100 {dimension_numbers = #tpu.dot_dimension_numbers<[1], [0], [0], [1], [0, 0, 1, 1], [], []>} : vector<5x16xbf16>, vector<16x64xbf16>, vector<5x64xf32> -> vector<5x64xf32>
    %269 = arith.addf %248, %268 : vector<5x64xf32>
    %270 = vector.extract_strided_slice %226 {offsets = [0, 32], sizes = [5, 16], strides = [1, 1]} : vector<5x192xf32> to vector<5x16xf32>
    %271 = vector.extract_strided_slice %226 {offsets = [0, 96], sizes = [5, 16], strides = [1, 1]} : vector<5x192xf32> to vector<5x16xf32>
    %272 = vector.extract_strided_slice %226 {offsets = [0, 160], sizes = [5, 16], strides = [1, 1]} : vector<5x192xf32> to vector<5x16xf32>
    %cst_101 = arith.constant dense<0.000000e+00> : vector<5x5xf32>
    %273 = tpu.matmul %270, %271, %cst_101 {dimension_numbers = #tpu.dot_dimension_numbers<[1], [1], [0], [0], [0, 0, 1, 0], [], []>} : vector<5x16xf32>, vector<5x16xf32>, vector<5x5xf32> -> vector<5x5xf32>
    %cst_102 = arith.constant 2.500000e-01 : f32
    %274 = vector.broadcast %cst_102 : f32 to vector<5x5xf32>
    %275 = arith.mulf %273, %274 : vector<5x5xf32>
    %cst_103 = arith.constant dense<0xFF800000> : vector<5xf32>
    %276 = vector.multi_reduction <maximumf>, %275, %cst_103 [1] : vector<5x5xf32> to vector<5xf32>
    %277 = vector.shape_cast %276 : vector<5xf32> to vector<5x1xf32>
    %278 = vector.broadcast %277 : vector<5x1xf32> to vector<5x5xf32>
    %279 = arith.subf %275, %278 : vector<5x5xf32>
    %280 = math.exp %279 : vector<5x5xf32>
    %cst_104 = arith.constant dense<0.000000e+00> : vector<5xf32>
    %281 = vector.multi_reduction <add>, %280, %cst_104 [1] : vector<5x5xf32> to vector<5xf32>
    %282 = vector.shape_cast %281 : vector<5xf32> to vector<5x1xf32>
    %283 = vector.broadcast %282 : vector<5x1xf32> to vector<5x5xf32>
    %284 = arith.divf %280, %283 : vector<5x5xf32>
    %cst_105 = arith.constant dense<0.000000e+00> : vector<5x16xf32>
    %285 = tpu.matmul %284, %272, %cst_105 {dimension_numbers = #tpu.dot_dimension_numbers<[1], [0], [0], [1], [0, 0, 1, 1], [], []>} : vector<5x5xf32>, vector<5x16xf32>, vector<5x16xf32> -> vector<5x16xf32>
    %286 = vector.extract_strided_slice %8 {offsets = [32, 0], sizes = [16, 64], strides = [1, 1]} : vector<64x64xf32> to vector<16x64xf32>
    %287 = arith.truncf %285 : vector<5x16xf32> to vector<5x16xbf16>
    %288 = arith.truncf %286 : vector<16x64xf32> to vector<16x64xbf16>
    %cst_106 = arith.constant dense<0.000000e+00> : vector<5x64xf32>
    %289 = tpu.matmul %287, %288, %cst_106 {dimension_numbers = #tpu.dot_dimension_numbers<[1], [0], [0], [1], [0, 0, 1, 1], [], []>} : vector<5x16xbf16>, vector<16x64xbf16>, vector<5x64xf32> -> vector<5x64xf32>
    %290 = arith.addf %269, %289 : vector<5x64xf32>
    %291 = vector.extract_strided_slice %226 {offsets = [0, 48], sizes = [5, 16], strides = [1, 1]} : vector<5x192xf32> to vector<5x16xf32>
    %292 = vector.extract_strided_slice %226 {offsets = [0, 112], sizes = [5, 16], strides = [1, 1]} : vector<5x192xf32> to vector<5x16xf32>
    %293 = vector.extract_strided_slice %226 {offsets = [0, 176], sizes = [5, 16], strides = [1, 1]} : vector<5x192xf32> to vector<5x16xf32>
    %cst_107 = arith.constant dense<0.000000e+00> : vector<5x5xf32>
    %294 = tpu.matmul %291, %292, %cst_107 {dimension_numbers = #tpu.dot_dimension_numbers<[1], [1], [0], [0], [0, 0, 1, 0], [], []>} : vector<5x16xf32>, vector<5x16xf32>, vector<5x5xf32> -> vector<5x5xf32>
    %cst_108 = arith.constant 2.500000e-01 : f32
    %295 = vector.broadcast %cst_108 : f32 to vector<5x5xf32>
    %296 = arith.mulf %294, %295 : vector<5x5xf32>
    %cst_109 = arith.constant dense<0xFF800000> : vector<5xf32>
    %297 = vector.multi_reduction <maximumf>, %296, %cst_109 [1] : vector<5x5xf32> to vector<5xf32>
    %298 = vector.shape_cast %297 : vector<5xf32> to vector<5x1xf32>
    %299 = vector.broadcast %298 : vector<5x1xf32> to vector<5x5xf32>
    %300 = arith.subf %296, %299 : vector<5x5xf32>
    %301 = math.exp %300 : vector<5x5xf32>
    %cst_110 = arith.constant dense<0.000000e+00> : vector<5xf32>
    %302 = vector.multi_reduction <add>, %301, %cst_110 [1] : vector<5x5xf32> to vector<5xf32>
    %303 = vector.shape_cast %302 : vector<5xf32> to vector<5x1xf32>
    %304 = vector.broadcast %303 : vector<5x1xf32> to vector<5x5xf32>
    %305 = arith.divf %301, %304 : vector<5x5xf32>
    %cst_111 = arith.constant dense<0.000000e+00> : vector<5x16xf32>
    %306 = tpu.matmul %305, %293, %cst_111 {dimension_numbers = #tpu.dot_dimension_numbers<[1], [0], [0], [1], [0, 0, 1, 1], [], []>} : vector<5x5xf32>, vector<5x16xf32>, vector<5x16xf32> -> vector<5x16xf32>
    %307 = vector.extract_strided_slice %8 {offsets = [48, 0], sizes = [16, 64], strides = [1, 1]} : vector<64x64xf32> to vector<16x64xf32>
    %308 = arith.truncf %306 : vector<5x16xf32> to vector<5x16xbf16>
    %309 = arith.truncf %307 : vector<16x64xf32> to vector<16x64xbf16>
    %cst_112 = arith.constant dense<0.000000e+00> : vector<5x64xf32>
    %310 = tpu.matmul %308, %309, %cst_112 {dimension_numbers = #tpu.dot_dimension_numbers<[1], [0], [0], [1], [0, 0, 1, 1], [], []>} : vector<5x16xbf16>, vector<16x64xbf16>, vector<5x64xf32> -> vector<5x64xf32>
    %311 = arith.addf %290, %310 : vector<5x64xf32>
    %312 = arith.addf %203, %311 : vector<5x64xf32>
    %313 = vector.broadcast %4 : vector<1x64xf32> to vector<5x64xf32>
    %314 = arith.addf %312, %313 : vector<5x64xf32>
    %cst_113 = arith.constant dense<0.000000e+00> : vector<5xf32>
    %315 = vector.multi_reduction <add>, %314, %cst_113 [1] : vector<5x64xf32> to vector<5xf32>
    %316 = vector.shape_cast %315 : vector<5xf32> to vector<5x1xf32>
    %cst_114 = arith.constant 6.400000e+01 : f32
    %317 = vector.broadcast %cst_114 : f32 to vector<5x1xf32>
    %318 = arith.divf %316, %317 : vector<5x1xf32>
    %319 = vector.broadcast %318 : vector<5x1xf32> to vector<5x64xf32>
    %320 = arith.subf %314, %319 : vector<5x64xf32>
    %321 = arith.mulf %320, %320 : vector<5x64xf32>
    %cst_115 = arith.constant dense<0.000000e+00> : vector<5xf32>
    %322 = vector.multi_reduction <add>, %321, %cst_115 [1] : vector<5x64xf32> to vector<5xf32>
    %323 = vector.shape_cast %322 : vector<5xf32> to vector<5x1xf32>
    %cst_116 = arith.constant 6.400000e+01 : f32
    %324 = vector.broadcast %cst_116 : f32 to vector<5x1xf32>
    %325 = arith.divf %323, %324 : vector<5x1xf32>
    %cst_117 = arith.constant 9.99999974E-6 : f32
    %326 = vector.broadcast %cst_117 : f32 to vector<5x1xf32>
    %327 = arith.addf %325, %326 : vector<5x1xf32>
    %328 = math.rsqrt %327 : vector<5x1xf32>
    %329 = vector.broadcast %328 : vector<5x1xf32> to vector<5x64xf32>
    %330 = arith.mulf %320, %329 : vector<5x64xf32>
    %331 = vector.broadcast %2 : vector<1x64xf32> to vector<5x64xf32>
    %332 = arith.mulf %330, %331 : vector<5x64xf32>
    %333 = vector.broadcast %3 : vector<1x64xf32> to vector<5x64xf32>
    %334 = arith.addf %332, %333 : vector<5x64xf32>
    %335 = arith.truncf %334 : vector<5x64xf32> to vector<5x64xbf16>
    %336 = arith.truncf %9 : vector<64x256xf32> to vector<64x256xbf16>
    %cst_118 = arith.constant dense<0.000000e+00> : vector<5x256xf32>
    %337 = tpu.matmul %335, %336, %cst_118 {dimension_numbers = #tpu.dot_dimension_numbers<[1], [0], [0], [1], [0, 0, 1, 1], [], []>} : vector<5x64xbf16>, vector<64x256xbf16>, vector<5x256xf32> -> vector<5x256xf32>
    %338 = vector.broadcast %5 : vector<1x256xf32> to vector<5x256xf32>
    %339 = arith.addf %337, %338 : vector<5x256xf32>
    %cst_119 = arith.constant 5.000000e-01 : f32
    %340 = vector.broadcast %cst_119 : f32 to vector<5x256xf32>
    %341 = arith.mulf %340, %339 : vector<5x256xf32>
    %cst_120 = arith.constant 0.707106769 : f32
    %342 = vector.broadcast %cst_120 : f32 to vector<5x256xf32>
    %343 = arith.mulf %339, %342 : vector<5x256xf32>
    %cst_121 = arith.constant 0.000000e+00 : f32
    %344 = vector.broadcast %cst_121 : f32 to vector<5x256xf32>
    %345 = arith.cmpf oge, %343, %344 : vector<5x256xf32>
    %cst_122 = arith.constant 1.000000e+00 : f32
    %cst_123 = arith.constant -1.000000e+00 : f32
    %346 = vector.broadcast %cst_122 : f32 to vector<5x256xf32>
    %347 = vector.broadcast %cst_123 : f32 to vector<5x256xf32>
    %348 = arith.select %345, %346, %347 : vector<5x256xi1>, vector<5x256xf32>
    %349 = math.absf %343 : vector<5x256xf32>
    %cst_124 = arith.constant 0.327591091 : f32
    %350 = vector.broadcast %cst_124 : f32 to vector<5x256xf32>
    %351 = arith.mulf %350, %349 : vector<5x256xf32>
    %cst_125 = arith.constant 1.000000e+00 : f32
    %352 = vector.broadcast %cst_125 : f32 to vector<5x256xf32>
    %353 = arith.addf %352, %351 : vector<5x256xf32>
    %cst_126 = arith.constant 1.000000e+00 : f32
    %354 = vector.broadcast %cst_126 : f32 to vector<5x256xf32>
    %355 = arith.divf %354, %353 : vector<5x256xf32>
    %cst_127 = arith.constant 1.06140542 : f32
    %356 = vector.broadcast %cst_127 : f32 to vector<5x256xf32>
    %357 = arith.mulf %356, %355 : vector<5x256xf32>
    %cst_128 = arith.constant -1.45315206 : f32
    %358 = vector.broadcast %cst_128 : f32 to vector<5x256xf32>
    %359 = arith.addf %357, %358 : vector<5x256xf32>
    %360 = arith.mulf %359, %355 : vector<5x256xf32>
    %cst_129 = arith.constant 1.42141378 : f32
    %361 = vector.broadcast %cst_129 : f32 to vector<5x256xf32>
    %362 = arith.addf %360, %361 : vector<5x256xf32>
    %363 = arith.mulf %362, %355 : vector<5x256xf32>
    %cst_130 = arith.constant -0.284496725 : f32
    %364 = vector.broadcast %cst_130 : f32 to vector<5x256xf32>
    %365 = arith.addf %363, %364 : vector<5x256xf32>
    %366 = arith.mulf %365, %355 : vector<5x256xf32>
    %cst_131 = arith.constant 0.254829586 : f32
    %367 = vector.broadcast %cst_131 : f32 to vector<5x256xf32>
    %368 = arith.addf %366, %367 : vector<5x256xf32>
    %369 = arith.mulf %368, %355 : vector<5x256xf32>
    %cst_132 = arith.constant 0.000000e+00 : f32
    %370 = vector.broadcast %cst_132 : f32 to vector<5x256xf32>
    %371 = arith.subf %370, %349 : vector<5x256xf32>
    %372 = arith.mulf %371, %349 : vector<5x256xf32>
    %373 = math.exp %372 : vector<5x256xf32>
    %374 = arith.mulf %369, %373 : vector<5x256xf32>
    %cst_133 = arith.constant 1.000000e+00 : f32
    %375 = vector.broadcast %cst_133 : f32 to vector<5x256xf32>
    %376 = arith.subf %375, %374 : vector<5x256xf32>
    %377 = arith.mulf %348, %376 : vector<5x256xf32>
    %cst_134 = arith.constant 1.000000e+00 : f32
    %378 = vector.broadcast %cst_134 : f32 to vector<5x256xf32>
    %379 = arith.addf %378, %377 : vector<5x256xf32>
    %380 = arith.mulf %341, %379 : vector<5x256xf32>
    %381 = arith.truncf %380 : vector<5x256xf32> to vector<5x256xbf16>
    %382 = arith.truncf %10 : vector<256x64xf32> to vector<256x64xbf16>
    %cst_135 = arith.constant dense<0.000000e+00> : vector<5x64xf32>
    %383 = tpu.matmul %381, %382, %cst_135 {dimension_numbers = #tpu.dot_dimension_numbers<[1], [0], [0], [1], [0, 0, 1, 1], [], []>} : vector<5x256xbf16>, vector<256x64xbf16>, vector<5x64xf32> -> vector<5x64xf32>
    %384 = vector.broadcast %6 : vector<1x64xf32> to vector<5x64xf32>
    %385 = arith.addf %383, %384 : vector<5x64xf32>
    %386 = arith.addf %314, %385 : vector<5x64xf32>
    %387 = arith.truncf %386 : vector<5x64xf32> to vector<5x64xbf16>
    %c1_136 = arith.constant 1 : index
    %c0_137 = arith.constant 0 : index
    %c0_138 = arith.constant 0 : index
    %388 = vector.load %arg13[%c1_136, %c0_137, %c0_138] : memref<2x5x64xbf16, #tpu.memory_space<vmem>>, vector<1x5x64xbf16>
    %389 = vector.shape_cast %388 : vector<1x5x64xbf16> to vector<5x64xbf16>
    %390 = vector.shape_cast %387 : vector<5x64xbf16> to vector<1x5x64xbf16>
    tpu.vector_store %arg13[%c1_136, %c0_137, %c0_138], %390 {strides = array<i32>} : memref<2x5x64xbf16, #tpu.memory_space<vmem>>, vector<1x5x64xbf16>,
    return
  }
  func.func @transform_0(%arg0: i32) -> (i32, i32, i32) {
    %c0_i32 = arith.constant 0 : i32
    %c0_i32_0 = arith.constant 0 : i32
    %c0_i32_1 = arith.constant 0 : i32
    return %arg0, %c0_i32, %c0_i32_0 : i32, i32, i32
  }
  func.func @transform_1(%arg0: i32) -> (i32, i32) {
    %c0_i32 = arith.constant 0 : i32
    %c0_i32_0 = arith.constant 0 : i32
    %c0_i32_1 = arith.constant 0 : i32
    return %c0_i32, %c0_i32_0 : i32, i32
  }
  func.func @transform_2(%arg0: i32) -> (i32, i32) {
    %c0_i32 = arith.constant 0 : i32
    %c0_i32_0 = arith.constant 0 : i32
    %c0_i32_1 = arith.constant 0 : i32
    return %c0_i32, %c0_i32_0 : i32, i32
  }
  func.func @transform_3(%arg0: i32) -> (i32, i32) {
    %c0_i32 = arith.constant 0 : i32
    %c0_i32_0 = arith.constant 0 : i32
    %c0_i32_1 = arith.constant 0 : i32
    return %c0_i32, %c0_i32_0 : i32, i32
  }
  func.func @transform_4(%arg0: i32) -> (i32, i32) {
    %c0_i32 = arith.constant 0 : i32
    %c0_i32_0 = arith.constant 0 : i32
    %c0_i32_1 = arith.constant 0 : i32
    return %c0_i32, %c0_i32_0 : i32, i32
  }
  func.func @transform_5(%arg0: i32) -> (i32, i32) {
    %c0_i32 = arith.constant 0 : i32
    %c0_i32_0 = arith.constant 0 : i32
    %c0_i32_1 = arith.constant 0 : i32
    return %c0_i32, %c0_i32_0 : i32, i32
  }
  func.func @transform_6(%arg0: i32) -> (i32, i32) {
    %c0_i32 = arith.constant 0 : i32
    %c0_i32_0 = arith.constant 0 : i32
    %c0_i32_1 = arith.constant 0 : i32
    return %c0_i32, %c0_i32_0 : i32, i32
  }
  func.func @transform_7(%arg0: i32) -> (i32, i32) {
    %c0_i32 = arith.constant 0 : i32
    %c0_i32_0 = arith.constant 0 : i32
    %c0_i32_1 = arith.constant 0 : i32
    return %c0_i32, %c0_i32_0 : i32, i32
  }
  func.func @transform_8(%arg0: i32) -> (i32, i32) {
    %c0_i32 = arith.constant 0 : i32
    %c0_i32_0 = arith.constant 0 : i32
    %c0_i32_1 = arith.constant 0 : i32
    return %c0_i32, %c0_i32_0 : i32, i32
  }
  func.func @transform_9(%arg0: i32) -> (i32, i32) {
    %c0_i32 = arith.constant 0 : i32
    %c0_i32_0 = arith.constant 0 : i32
    %c0_i32_1 = arith.constant 0 : i32
    return %c0_i32, %c0_i32_0 : i32, i32
  }
  func.func @transform_10(%arg0: i32) -> (i32, i32) {
    %c0_i32 = arith.constant 0 : i32
    %c0_i32_0 = arith.constant 0 : i32
    %c0_i32_1 = arith.constant 0 : i32
    return %c0_i32, %c0_i32_0 : i32, i32
  }
  func.func @transform_11(%arg0: i32) -> (i32, i32) {
    %c0_i32 = arith.constant 0 : i32
    %c0_i32_0 = arith.constant 0 : i32
    %c0_i32_1 = arith.constant 0 : i32
    return %c0_i32, %c0_i32_0 : i32, i32
  }
  func.func @transform_12(%arg0: i32) -> (i32, i32, i32) {
    %c0_i32 = arith.constant 0 : i32
    %c0_i32_0 = arith.constant 0 : i32
    %c0_i32_1 = arith.constant 0 : i32
    return %arg0, %c0_i32, %c0_i32_0 : i32, i32, i32
  }
}

module attributes {stable_mosaic.version = 11 : i64} {
  func.func @_ln_head_kernel(%arg0: i32, %arg1: memref<2x64xbf16, #tpu.memory_space<vmem>>, %arg2: memref<1x64xf32, #tpu.memory_space<vmem>>, %arg3: memref<1x64xf32, #tpu.memory_space<vmem>>, %arg4: memref<64x10xf32, #tpu.memory_space<vmem>>, %arg5: memref<1x10xf32, #tpu.memory_space<vmem>>, %arg6: memref<2x10xf32, #tpu.memory_space<vmem>>) attributes {dimension_semantics = [#tpu.dimension_semantics<arbitrary>], iteration_bounds = array<i64: 1>, scalar_prefetch = 0 : i64, scratch_operands = 0 : i64, tpu.core_type = #tpu.core_type<tc>, window_params = [{pipeline_mode = #tpu.pipeline_mode<synchronous>, transform_indices = @transform_0, window_bounds = array<i64: 2, 64>}, {pipeline_mode = #tpu.pipeline_mode<synchronous>, transform_indices = @transform_1, window_bounds = array<i64: 1, 64>}, {pipeline_mode = #tpu.pipeline_mode<synchronous>, transform_indices = @transform_2, window_bounds = array<i64: 1, 64>}, {pipeline_mode = #tpu.pipeline_mode<synchronous>, transform_indices = @transform_3, window_bounds = array<i64: 64, 10>}, {pipeline_mode = #tpu.pipeline_mode<synchronous>, transform_indices = @transform_4, window_bounds = array<i64: 1, 10>}, {pipeline_mode = #tpu.pipeline_mode<synchronous>, transform_indices = @transform_5, window_bounds = array<i64: 2, 10>}]} {
    %c0 = arith.constant 0 : index
    %c0_0 = arith.constant 0 : index
    %0 = vector.load %arg1[%c0, %c0_0] : memref<2x64xbf16, #tpu.memory_space<vmem>>, vector<2x64xbf16>
    %1 = arith.extf %0 : vector<2x64xbf16> to vector<2x64xf32>
    %c0_1 = arith.constant 0 : index
    %c0_2 = arith.constant 0 : index
    %2 = vector.load %arg2[%c0_1, %c0_2] : memref<1x64xf32, #tpu.memory_space<vmem>>, vector<1x64xf32>
    %c0_3 = arith.constant 0 : index
    %c0_4 = arith.constant 0 : index
    %3 = vector.load %arg3[%c0_3, %c0_4] : memref<1x64xf32, #tpu.memory_space<vmem>>, vector<1x64xf32>
    %cst = arith.constant dense<0.000000e+00> : vector<2xf32>
    %4 = vector.multi_reduction <add>, %1, %cst [1] : vector<2x64xf32> to vector<2xf32>
    %5 = vector.shape_cast %4 : vector<2xf32> to vector<2x1xf32>
    %cst_5 = arith.constant 6.400000e+01 : f32
    %6 = vector.broadcast %cst_5 : f32 to vector<2x1xf32>
    %7 = arith.divf %5, %6 : vector<2x1xf32>
    %8 = vector.broadcast %7 : vector<2x1xf32> to vector<2x64xf32>
    %9 = arith.subf %1, %8 : vector<2x64xf32>
    %10 = arith.mulf %9, %9 : vector<2x64xf32>
    %cst_6 = arith.constant dense<0.000000e+00> : vector<2xf32>
    %11 = vector.multi_reduction <add>, %10, %cst_6 [1] : vector<2x64xf32> to vector<2xf32>
    %12 = vector.shape_cast %11 : vector<2xf32> to vector<2x1xf32>
    %cst_7 = arith.constant 6.400000e+01 : f32
    %13 = vector.broadcast %cst_7 : f32 to vector<2x1xf32>
    %14 = arith.divf %12, %13 : vector<2x1xf32>
    %cst_8 = arith.constant 9.99999974E-6 : f32
    %15 = vector.broadcast %cst_8 : f32 to vector<2x1xf32>
    %16 = arith.addf %14, %15 : vector<2x1xf32>
    %17 = math.rsqrt %16 : vector<2x1xf32>
    %18 = vector.broadcast %17 : vector<2x1xf32> to vector<2x64xf32>
    %19 = arith.mulf %9, %18 : vector<2x64xf32>
    %20 = vector.broadcast %2 : vector<1x64xf32> to vector<2x64xf32>
    %21 = arith.mulf %19, %20 : vector<2x64xf32>
    %22 = vector.broadcast %3 : vector<1x64xf32> to vector<2x64xf32>
    %23 = arith.addf %21, %22 : vector<2x64xf32>
    %c0_9 = arith.constant 0 : index
    %c0_10 = arith.constant 0 : index
    %24 = vector.load %arg4[%c0_9, %c0_10] : memref<64x10xf32, #tpu.memory_space<vmem>>, vector<64x10xf32>
    %cst_11 = arith.constant dense<0.000000e+00> : vector<2x10xf32>
    %25 = tpu.matmul %23, %24, %cst_11 {dimension_numbers = #tpu.dot_dimension_numbers<[1], [0], [0], [1], [0, 0, 1, 1], [], []>} : vector<2x64xf32>, vector<64x10xf32>, vector<2x10xf32> -> vector<2x10xf32>
    %c0_12 = arith.constant 0 : index
    %c0_13 = arith.constant 0 : index
    %26 = vector.load %arg5[%c0_12, %c0_13] : memref<1x10xf32, #tpu.memory_space<vmem>>, vector<1x10xf32>
    %27 = vector.broadcast %26 : vector<1x10xf32> to vector<2x10xf32>
    %28 = arith.addf %25, %27 : vector<2x10xf32>
    %c0_14 = arith.constant 0 : index
    %c0_15 = arith.constant 0 : index
    %29 = vector.load %arg6[%c0_14, %c0_15] : memref<2x10xf32, #tpu.memory_space<vmem>>, vector<2x10xf32>
    tpu.vector_store %arg6[%c0_14, %c0_15], %28 {strides = array<i32>} : memref<2x10xf32, #tpu.memory_space<vmem>>, vector<2x10xf32>,
    return
  }
  func.func @transform_0(%arg0: i32) -> (i32, i32) {
    %c0_i32 = arith.constant 0 : i32
    %c0_i32_0 = arith.constant 0 : i32
    %c0_i32_1 = arith.constant 0 : i32
    return %c0_i32, %c0_i32_0 : i32, i32
  }
  func.func @transform_1(%arg0: i32) -> (i32, i32) {
    %c0_i32 = arith.constant 0 : i32
    %c0_i32_0 = arith.constant 0 : i32
    %c0_i32_1 = arith.constant 0 : i32
    return %c0_i32, %c0_i32_0 : i32, i32
  }
  func.func @transform_2(%arg0: i32) -> (i32, i32) {
    %c0_i32 = arith.constant 0 : i32
    %c0_i32_0 = arith.constant 0 : i32
    %c0_i32_1 = arith.constant 0 : i32
    return %c0_i32, %c0_i32_0 : i32, i32
  }
  func.func @transform_3(%arg0: i32) -> (i32, i32) {
    %c0_i32 = arith.constant 0 : i32
    %c0_i32_0 = arith.constant 0 : i32
    %c0_i32_1 = arith.constant 0 : i32
    return %c0_i32, %c0_i32_0 : i32, i32
  }
  func.func @transform_4(%arg0: i32) -> (i32, i32) {
    %c0_i32 = arith.constant 0 : i32
    %c0_i32_0 = arith.constant 0 : i32
    %c0_i32_1 = arith.constant 0 : i32
    return %c0_i32, %c0_i32_0 : i32, i32
  }
  func.func @transform_5(%arg0: i32) -> (i32, i32) {
    %c0_i32 = arith.constant 0 : i32
    %c0_i32_0 = arith.constant 0 : i32
    %c0_i32_1 = arith.constant 0 : i32
    return %c0_i32, %c0_i32_0 : i32, i32
  }
}

</mosaic_0001>

<llo_original>
// kernel: adavit_forward.7
$region0: #{adavit_forward.7}
  #allocation0 [shape = 'u32[]', space=smem, size = 0x4, offset = 0x4, fixed_abs, tag = 'smem constant byte address 0x4 - core index']
  #allocation1 [shape = 'u32[144,128]{1,0:T(1,128)}', space=vmem, size = 0x12000, scoped, tag = 'internal scratch']
  %s0 = inlined_call_operand.vmem [shape: bf16[2,16,144], index: 0, kind: input, shape index: {}]
  %s1 = inlined_call_operand.vmem [shape: f32[1,144], index: 1, kind: input, shape index: {}]
  %s2 = inlined_call_operand.vmem [shape: f32[1,144], index: 2, kind: input, shape index: {}]
  %s3 = inlined_call_operand.vmem [shape: f32[144,48], index: 3, kind: input, shape index: {}]
  %s4 = inlined_call_operand.vmem [shape: f32[1,48], index: 4, kind: input, shape index: {}]
  %s5 = inlined_call_operand.vmem [shape: f32[16,8], index: 5, kind: input, shape index: {}]
  %s6 = inlined_call_operand.vmem [shape: f32[16,16], index: 6, kind: input, shape index: {}]
  %s7 = inlined_call_operand.vmem [shape: f32[1,16], index: 7, kind: input, shape index: {}]
  %s8 = inlined_call_operand.vmem [shape: f32[1,16], index: 8, kind: input, shape index: {}]
  %s9 = inlined_call_operand.vmem [shape: f32[1,16], index: 9, kind: input, shape index: {}]
  %s10 = inlined_call_operand.vmem [shape: f32[16,16], index: 10, kind: input, shape index: {}]
  %s11 = inlined_call_operand.vmem [shape: f32[1,16], index: 11, kind: input, shape index: {}]
  %s12 = inlined_call_operand.vmem [shape: f32[16,16], index: 12, kind: input, shape index: {}]
  %s13 = inlined_call_operand.vmem [shape: f32[1,16], index: 13, kind: input, shape index: {}]
  %s14 = inlined_call_operand.vmem [shape: bf16[2,16,16], index: 14, kind: output, shape index: {}]
  %s15 = sld [smem:[#allocation0]]
  $region66: #{adavit_forward.7} parent=0
    _
  %s17 = ssub.s32 1, %s15
  %s18 = scalar_select 0, %s17, %s15
  // Predicated region
  $region2: #{adavit_forward.7} parent=0 // pred_check
    _
  $region3: #{adavit_forward.7} parent=0 // pred_check_branch
    %20 = sbr.rel (0) target = $region5
  $region4: #{adavit_forward.7} parent=0 // pred_region
    _
  $region5: #{adavit_forward.7} parent=0 // pred_fallthru
    _
  // Predicated region
  $region6: #{adavit_forward.7} parent=0 // pred_check
    _
  $region7: #{adavit_forward.7} parent=0 // pred_check_branch
    %22 = sbr.rel (0) target = $region9
  $region8: #{adavit_forward.7} parent=0 // pred_region
    _
  $region9: #{adavit_forward.7} parent=0 // pred_fallthru
    _
  // Predicated region
  $region10: #{adavit_forward.7} parent=0 // pred_check
    _
  $region11: #{adavit_forward.7} parent=0 // pred_check_branch
    %24 = sbr.rel (0) target = $region13
  $region12: #{adavit_forward.7} parent=0 // pred_region
    _
  $region13: #{adavit_forward.7} parent=0 // pred_fallthru
    _
  // Predicated region
  $region14: #{adavit_forward.7} parent=0 // pred_check
    _
  $region15: #{adavit_forward.7} parent=0 // pred_check_branch
    %26 = sbr.rel (0) target = $region17
  $region16: #{adavit_forward.7} parent=0 // pred_region
    _
  $region17: #{adavit_forward.7} parent=0 // pred_fallthru
    _
  // Predicated region
  $region18: #{adavit_forward.7} parent=0 // pred_check
    _
  $region19: #{adavit_forward.7} parent=0 // pred_check_branch
    %28 = sbr.rel (0) target = $region21
  $region20: #{adavit_forward.7} parent=0 // pred_region
    _
  $region21: #{adavit_forward.7} parent=0 // pred_fallthru
    _
  // Predicated region
  $region22: #{adavit_forward.7} parent=0 // pred_check
    _
  $region23: #{adavit_forward.7} parent=0 // pred_check_branch
    %30 = sbr.rel (0) target = $region25
  $region24: #{adavit_forward.7} parent=0 // pred_region
    _
  $region25: #{adavit_forward.7} parent=0 // pred_fallthru
    _
  // Predicated region
  $region26: #{adavit_forward.7} parent=0 // pred_check
    _
  $region27: #{adavit_forward.7} parent=0 // pred_check_branch
    %32 = sbr.rel (0) target = $region29
  $region28: #{adavit_forward.7} parent=0 // pred_region
    _
  $region29: #{adavit_forward.7} parent=0 // pred_fallthru
    _
  // Predicated region
  $region30: #{adavit_forward.7} parent=0 // pred_check
    _
  $region31: #{adavit_forward.7} parent=0 // pred_check_branch
    %34 = sbr.rel (0) target = $region33
  $region32: #{adavit_forward.7} parent=0 // pred_region
    _
  $region33: #{adavit_forward.7} parent=0 // pred_fallthru
    _
  // Predicated region
  $region34: #{adavit_forward.7} parent=0 // pred_check
    _
  $region35: #{adavit_forward.7} parent=0 // pred_check_branch
    %36 = sbr.rel (0) target = $region37
  $region36: #{adavit_forward.7} parent=0 // pred_region
    _
  $region37: #{adavit_forward.7} parent=0 // pred_fallthru
    _
  // Predicated region
  $region38: #{adavit_forward.7} parent=0 // pred_check
    _
  $region39: #{adavit_forward.7} parent=0 // pred_check_branch
    %38 = sbr.rel (0) target = $region41
  $region40: #{adavit_forward.7} parent=0 // pred_region
    _
  $region41: #{adavit_forward.7} parent=0 // pred_fallthru
    _
  // Predicated region
  $region42: #{adavit_forward.7} parent=0 // pred_check
    _
  $region43: #{adavit_forward.7} parent=0 // pred_check_branch
    %40 = sbr.rel (0) target = $region45
  $region44: #{adavit_forward.7} parent=0 // pred_region
    _
  $region45: #{adavit_forward.7} parent=0 // pred_fallthru
    _
  // Predicated region
  $region46: #{adavit_forward.7} parent=0 // pred_check
    _
  $region47: #{adavit_forward.7} parent=0 // pred_check_branch
    %42 = sbr.rel (0) target = $region49
  $region48: #{adavit_forward.7} parent=0 // pred_region
    _
  $region49: #{adavit_forward.7} parent=0 // pred_fallthru
    _
  // Predicated region
  $region50: #{adavit_forward.7} parent=0 // pred_check
    _
  $region51: #{adavit_forward.7} parent=0 // pred_check_branch
    %44 = sbr.rel (0) target = $region53
  $region52: #{adavit_forward.7} parent=0 // pred_region
    _
  $region53: #{adavit_forward.7} parent=0 // pred_fallthru
    _
  // Predicated region
  $region54: #{adavit_forward.7} parent=0 // pred_check
    _
  $region55: #{adavit_forward.7} parent=0 // pred_check_branch
    %46 = sbr.rel (0) target = $region57
  $region56: #{adavit_forward.7} parent=0 // pred_region
    _
  $region57: #{adavit_forward.7} parent=0 // pred_fallthru
    _
  %v48 = vld [vmem:[%s0] sm:$0xff]
  %v49 = vld [vmem:[%s0 + $0x8] sm:$0xff]
  %v50 = vld [vmem:[%s0 + $0x10] sm:$0xff]
  %v51 = vld [vmem:[%s0 + $0x18] sm:$0xff]
  %v52 = vunpack.c.l.bf16 %v48
  %v53 = vunpack.c.h.bf16 %v48
  %v54 = vunpack.c.l.bf16 %v49
  %v55 = vunpack.c.h.bf16 %v49
  %v56 = vunpack.c.l.bf16 %v50
  %v57 = vunpack.c.h.bf16 %v50
  %v58 = vunpack.c.l.bf16 %v51
  %v59 = vunpack.c.h.bf16 %v51
  %v60 = vld [vmem:[%s1] sm:$0x3]
  %v61 = vld [vmem:[%s2] sm:$0x3]
  %v62 = vld [vmem:[%s8] sm:$0x1]
  %v63 = vld [vmem:[%s9] sm:$0x1]
  %v64 = vld [vmem:[%s4] sm:$0x1]
  %v65 = vld [vmem:[%s7] sm:$0x1]
  %v66 = vld [vmem:[%s11] sm:$0x1]
  %v67 = vld [vmem:[%s13] sm:$0x1]
  %v68 = vld [vmem:[%s6] sm:$0xff]
  %v69 = vld [vmem:[%s6 + $0x8] sm:$0xff]
  %v70 = vld [vmem:[%s10] sm:$0xff]
  %v71 = vld [vmem:[%s10 + $0x8] sm:$0xff]
  %v72 = vld [vmem:[%s12] sm:$0xff]
  %v73 = vld [vmem:[%s12 + $0x8] sm:$0xff]
  %v74 = vld [vmem:[%s5] sm:$0xff]
  %v75 = vld [vmem:[%s5 + $0x8] sm:$0xff]
  %vm76 = vcmask 130048
  %v77 = vsel %vm76, %v53, 0.0
  %v78 = vadd.f32 %v52, %v77
  %79 = vadd.xlane.f32.xlu0 %v78
  %v80 = vpop.xlane.xlu0 %79
  %v81 = vsel %vm76, %v55, 0.0
  %v82 = vadd.f32 %v54, %v81
  %83 = vadd.xlane.f32.xlu0 %v82
  %v84 = vpop.xlane.xlu0 %83
  %v85 = vsel %vm76, %v57, 0.0
  %v86 = vadd.f32 %v56, %v85
  %87 = vadd.xlane.f32.xlu0 %v86
  %v88 = vpop.xlane.xlu0 %87
  %v89 = vsel %vm76, %v59, 0.0
  %v90 = vadd.f32 %v58, %v89
  %91 = vadd.xlane.f32.xlu0 %v90
  %v92 = vpop.xlane.xlu0 %91
  %v93 = vrcp.pop 144.0
  %v94 = vmul.f32 %v80, %v93
  %v95 = vmul.f32 %v84, %v93
  %v96 = vmul.f32 %v88, %v93
  %v97 = vmul.f32 %v92, %v93
  %v98 = vsub.f32 %v52, %v94
  %v99 = vsub.f32 %v53, %v94
  %v100 = vsub.f32 %v54, %v95
  %v101 = vsub.f32 %v55, %v95
  %v102 = vsub.f32 %v56, %v96
  %v103 = vsub.f32 %v57, %v96
  %v104 = vsub.f32 %v58, %v97
  %v105 = vsub.f32 %v59, %v97
  %v106 = vmul.f32 %v98, %v98
  %v107 = vmul.f32 %v99, %v99
  %v108 = vmul.f32 %v100, %v100
  %v109 = vmul.f32 %v101, %v101
  %v110 = vmul.f32 %v102, %v102
  %v111 = vmul.f32 %v103, %v103
  %v112 = vmul.f32 %v104, %v104
  %v113 = vmul.f32 %v105, %v105
  %v114 = vsel %vm76, %v107, 0.0
  %v115 = vadd.f32 %v106, %v114
  %116 = vadd.xlane.f32.xlu0 %v115
  %v117 = vpop.xlane.xlu0 %116
  %v118 = vsel %vm76, %v109, 0.0
  %v119 = vadd.f32 %v108, %v118
  %120 = vadd.xlane.f32.xlu0 %v119
  %v121 = vpop.xlane.xlu0 %120
  %v122 = vsel %vm76, %v111, 0.0
  %v123 = vadd.f32 %v110, %v122
  %124 = vadd.xlane.f32.xlu0 %v123
  %v125 = vpop.xlane.xlu0 %124
  %v126 = vsel %vm76, %v113, 0.0
  %v127 = vadd.f32 %v112, %v126
  %128 = vadd.xlane.f32.xlu0 %v127
  %v129 = vpop.xlane.xlu0 %128
  %v130 = vmul.f32 %v117, %v93
  %v131 = vmul.f32 %v121, %v93
  %v132 = vmul.f32 %v125, %v93
  %v133 = vmul.f32 %v129, %v93
  %v134 = vadd.f32 %v130, 1e-05
  %v135 = vadd.f32 %v131, 1e-05
  %v136 = vadd.f32 %v132, 1e-05
  %v137 = vadd.f32 %v133, 1e-05
  %v138 = vrsqrt.pop %v134
  %v139 = vrsqrt.pop %v135
  %v140 = vrsqrt.pop %v136
  %v141 = vrsqrt.pop %v137
  %v142 = vmul.f32 %v98, %v138
  %v143 = vmul.f32 %v99, %v138
  %v144 = vmul.f32 %v100, %v139
  %v145 = vmul.f32 %v101, %v139
  %v146 = vmul.f32 %v102, %v140
  %v147 = vmul.f32 %v103, %v140
  %v148 = vmul.f32 %v104, %v141
  %v149 = vmul.f32 %v105, %v141
  %v151 = vlaneseq
  %v152 = vshrl.u32 %v151, 7
  %v153 = vsub.s32 0, %v152
  %v154 = vrot.slane %v60, %v153
  %v155 = vlaneseq
  %v156 = vshrl.u32 %v155, 7
  %v157 = vsub.s32 1, %v156
  %v158 = vrot.slane %v60, %v157
  %v161 = vmul.f32 %v142, %v154
  %v162 = vmul.f32 %v143, %v158
  %v163 = vmul.f32 %v144, %v154
  %v164 = vmul.f32 %v145, %v158
  %v165 = vmul.f32 %v146, %v154
  %v166 = vmul.f32 %v147, %v158
  %v167 = vmul.f32 %v148, %v154
  %v168 = vmul.f32 %v149, %v158
  %v170 = vlaneseq
  %v171 = vshrl.u32 %v170, 7
  %v172 = vsub.s32 0, %v171
  %v173 = vrot.slane %v61, %v172
  %v174 = vlaneseq
  %v175 = vshrl.u32 %v174, 7
  %v176 = vsub.s32 1, %v175
  %v177 = vrot.slane %v61, %v176
  %v180 = vadd.f32 %v161, %v173
  %v181 = vadd.f32 %v162, %v177
  %v182 = vadd.f32 %v163, %v173
  %v183 = vadd.f32 %v164, %v177
  %v184 = vadd.f32 %v165, %v173
  %v185 = vadd.f32 %v166, %v177
  %v186 = vadd.f32 %v167, %v173
  %v187 = vadd.f32 %v168, %v177
  %v188 = vld [vmem:[%s3] sm:$0xff]
  %v189 = vld [vmem:[%s3 + $0x8] sm:$0xff]
  %v190 = vld [vmem:[%s3 + $0x10] sm:$0xff]
  %v191 = vld [vmem:[%s3 + $0x18] sm:$0xff]
  %v192 = vld [vmem:[%s3 + $0x20] sm:$0xff]
  %v193 = vld [vmem:[%s3 + $0x28] sm:$0xff]
  %v194 = vld [vmem:[%s3 + $0x30] sm:$0xff]
  %v195 = vld [vmem:[%s3 + $0x38] sm:$0xff]
  %v196 = vld [vmem:[%s3 + $0x40] sm:$0xff]
  %v197 = vld [vmem:[%s3 + $0x48] sm:$0xff]
  %v198 = vld [vmem:[%s3 + $0x50] sm:$0xff]
  %v199 = vld [vmem:[%s3 + $0x58] sm:$0xff]
  %v200 = vld [vmem:[%s3 + $0x60] sm:$0xff]
  %v201 = vld [vmem:[%s3 + $0x68] sm:$0xff]
  %v202 = vld [vmem:[%s3 + $0x70] sm:$0xff]
  %v203 = vld [vmem:[%s3 + $0x78] sm:$0xff]
  %v204 = vld [vmem:[%s3 + $0x80] sm:$0xff]
  %v205 = vld [vmem:[%s3 + $0x88] sm:$0xff]
  %v206 = vpack.c.bf16 %v182, %v180
  %v207 = vpack.c.bf16 %v183, %v181
  %v208 = vpack.c.bf16 %v186, %v184
  %v209 = vpack.c.bf16 %v187, %v185
  %v210 = vpack.c.bf16 %v189, %v188
  %v211 = vpack.c.bf16 %v191, %v190
  %v212 = vpack.c.bf16 %v193, %v192
  %v213 = vpack.c.bf16 %v195, %v194
  %v214 = vpack.c.bf16 %v197, %v196
  %v215 = vpack.c.bf16 %v199, %v198
  %v216 = vpack.c.bf16 %v201, %v200
  %v217 = vpack.c.bf16 %v203, %v202
  %v218 = vpack.c.bf16 %v205, %v204
  %v220 = vlaneseq
  %v221 = vshrl.u32 %v220, 7
  %v222 = vsub.s32 0, %v221
  %v223 = vrot.slane %v64, %v222
  %v226 = vsel %vm76, %v207, 0
  %v229 = vsel %vm76, %v209, 0
  %231 = vmatprep.subr.bf16.mxu0 0
  %232 = vmatpush1.bf16.msra.mxu0 %v217
  %233 = vmatprep.subr.bf16.mxu0 0
  %234 = vmatpush1.bf16.msra.mxu0 %v216
  %235 = vmatprep.subr.bf16.mxu0 0
  %236 = vmatpush1.bf16.msra.mxu0 %v215
  %237 = vmatprep.subr.bf16.mxu0 0
  %238 = vmatpush1.bf16.msra.mxu0 %v214
  %239 = vmatprep.subr.bf16.mxu0 0
  %240 = vmatpush1.bf16.msra.mxu0 %v213
  %241 = vmatprep.subr.bf16.mxu0 0
  %242 = vmatpush1.bf16.msra.mxu0 %v212
  %243 = vmatprep.subr.bf16.mxu0 0
  %244 = vmatpush1.bf16.msra.mxu0 %v211
  %245 = vmatprep.subr.bf16.mxu0 0
  %246 = vmatpush1.bf16.msra.mxu0 %v210
  %247 = vmatprep.subr.bf16.mxu0 0
  %248 = vmatpush2.bf16.msra.mxu0 0
  %249 = vmatprep.subr.bf16.mxu0 0
  %250 = vmatpush2.bf16.msra.mxu0 0
  %251 = vmatprep.subr.bf16.mxu0 0
  %252 = vmatpush2.bf16.msra.mxu0 0
  %253 = vmatprep.subr.bf16.mxu0 0
  %254 = vmatpush2.bf16.msra.mxu0 0
  %255 = vmatprep.subr.bf16.mxu0 0
  %256 = vmatpush2.bf16.msra.mxu0 0
  %257 = vmatprep.subr.bf16.mxu0 0
  %258 = vmatpush2.bf16.msra.mxu0 0
  %259 = vmatprep.subr.bf16.mxu0 0
  %260 = vmatpush2.bf16.msra.mxu0 0
  %261 = vmatprep.subr.bf16.mxu0 0
  %262 = vmatpush2.bf16.msra.mxu0 %v218
  %263 = vmatprep.mubr.bf16.mxu0 %v226
  %264 = vmatmul.mubr.bf16.gmra.mxu0 %v206
  %v265 = vpop.f32.mrf.mxu0
  %v266 = vadd.f32 %v223, %v265
  %v267 = vpop.f32.mrf.mxu0
  %v268 = vpop.f32.mrf.mxu0
  %v269 = vadd.f32 %v223, %v268
  %v270 = vpop.f32.mrf.mxu0
  %271 = vmatprep.mubr.bf16.mxu0 %v229
  %272 = vmatmul.mubr.bf16.gmra.mxu0 %v208
  %v273 = vpop.f32.mrf.mxu0
  %v274 = vadd.f32 %v223, %v273
  %v275 = vpop.f32.mrf.mxu0
  %v276 = vpop.f32.mrf.mxu0
  %v277 = vadd.f32 %v223, %v276
  %v278 = vpop.f32.mrf.mxu0
  %279 = vdwg.mxu0
  %v280 = vmul.f32 %v266, %v266
  %v281 = vmul.f32 %v269, %v269
  %v282 = vmul.f32 %v274, %v274
  %v283 = vmul.f32 %v277, %v277
  %v284 = vsel %vm76, %v280, 0.0
  %285 = vadd.xlane.f32.xlu0 %v284
  %v286 = vpop.xlane.xlu0 %285
  %v287 = vsel %vm76, %v281, 0.0
  %288 = vadd.xlane.f32.xlu0 %v287
  %v289 = vpop.xlane.xlu0 %288
  %v290 = vsel %vm76, %v282, 0.0
  %291 = vadd.xlane.f32.xlu0 %v290
  %v292 = vpop.xlane.xlu0 %291
  %v293 = vsel %vm76, %v283, 0.0
  %294 = vadd.xlane.f32.xlu0 %v293
  %v295 = vpop.xlane.xlu0 %294
  %v296 = vmul.f32 %v286, 0.5
  %v297 = vmul.f32 %v289, 0.5
  %v298 = vmul.f32 %v292, 0.5
  %v299 = vmul.f32 %v295, 0.5
  %v300 = vpack.c.bf16 %v269, %v266
  %v301 = vpack.c.bf16 %v277, %v274
  %v302 = vpack.c.bf16 %v75, %v74
  %v304 = vsel %vm76, %v300, 0
  %v307 = vsel %vm76, %v301, 0
  %309 = vmatprep.subr.bf16.mxu0 0
  %310 = vmatpush1.bf16.msra.mxu0 0
  %311 = vmatprep.subr.bf16.mxu0 0
  %312 = vmatpush1.bf16.msra.mxu0 0
  %313 = vmatprep.subr.bf16.mxu0 0
  %314 = vmatpush1.bf16.msra.mxu0 0
  %315 = vmatprep.subr.bf16.mxu0 0
  %316 = vmatpush1.bf16.msra.mxu0 0
  %317 = vmatprep.subr.bf16.mxu0 0
  %318 = vmatpush1.bf16.msra.mxu0 0
  %319 = vmatprep.subr.bf16.mxu0 0
  %320 = vmatpush1.bf16.msra.mxu0 0
  %321 = vmatprep.subr.bf16.mxu0 0
  %322 = vmatpush1.bf16.msra.mxu0 0
  %323 = vmatprep.subr.bf16.mxu0 0
  %324 = vmatpush1.bf16.msra.mxu0 %v302
  %325 = vmatprep.subr.bf16.mxu0 0
  %326 = vmatpush2.bf16.msra.mxu0 0
  %327 = vmatprep.subr.bf16.mxu0 0
  %328 = vmatpush2.bf16.msra.mxu0 0
  %329 = vmatprep.subr.bf16.mxu0 0
  %330 = vmatpush2.bf16.msra.mxu0 0
  %331 = vmatprep.subr.bf16.mxu0 0
  %332 = vmatpush2.bf16.msra.mxu0 0
  %333 = vmatprep.subr.bf16.mxu0 0
  %334 = vmatpush2.bf16.msra.mxu0 0
  %335 = vmatprep.subr.bf16.mxu0 0
  %336 = vmatpush2.bf16.msra.mxu0 0
  %337 = vmatprep.subr.bf16.mxu0 0
  %338 = vmatpush2.bf16.msra.mxu0 0
  %339 = vmatprep.subr.bf16.mxu0 0
  %340 = vmatpush2.bf16.msra.mxu0 0
  %341 = vmatprep.mubr.bf16.mxu0 0
  %342 = vmatmul.mubr.bf16.gmra.mxu0 %v304
  %v343 = vpop.f32.mrf.mxu0
  %v344 = vadd.f32 0.0, %v343
  %v345 = vpop.f32.mrf.mxu0
  %v346 = vpop.f32.mrf.mxu0
  %v347 = vadd.f32 0.0, %v346
  %v348 = vpop.f32.mrf.mxu0
  %349 = vmatprep.mubr.bf16.mxu0 0
  %350 = vmatmul.mubr.bf16.gmra.mxu0 %v307
  %v351 = vpop.f32.mrf.mxu0
  %v352 = vadd.f32 0.0, %v351
  %v353 = vpop.f32.mrf.mxu0
  %v354 = vpop.f32.mrf.mxu0
  %v355 = vadd.f32 0.0, %v354
  %v356 = vpop.f32.mrf.mxu0
  %357 = vdwg.mxu0
  %v358 = vsub.f32 %v344, %v296
  %v359 = vsub.f32 %v347, %v297
  %v360 = vsub.f32 %v352, %v298
  %v361 = vsub.f32 %v355, %v299
  %v362 = vmul.f32 %v358, 1.442695
  %v363 = vpow.pop %v362
  %v364 = vmul.f32 %v359, 1.442695
  %v365 = vpow.pop %v364
  %v366 = vmul.f32 %v360, 1.442695
  %v367 = vpow.pop %v366
  %v368 = vmul.f32 %v361, 1.442695
  %v369 = vpow.pop %v368
  %v370 = vmul.f32 %v363, 0.35355338
  %v371 = vmul.f32 %v365, 0.35355338
  %v372 = vmul.f32 %v367, 0.35355338
  %v373 = vmul.f32 %v369, 0.35355338
  %378 = vrot.lane.b32.xlu0 %v280, 112
  %v379 = vpop.permute.xlu0 %378
  %380 = vrot.lane.b32.xlu0 %v281, 112
  %v381 = vpop.permute.xlu0 %380
  %382 = vrot.lane.b32.xlu0 %v282, 112
  %v383 = vpop.permute.xlu0 %382
  %384 = vrot.lane.b32.xlu0 %v283, 112
  %v385 = vpop.permute.xlu0 %384
  %v390 = vsel %vm76, %v379, 0.0
  %391 = vadd.xlane.f32.xlu0 %v390
  %v392 = vpop.xlane.xlu0 %391
  %v393 = vsel %vm76, %v381, 0.0
  %394 = vadd.xlane.f32.xlu0 %v393
  %v395 = vpop.xlane.xlu0 %394
  %v396 = vsel %vm76, %v383, 0.0
  %397 = vadd.xlane.f32.xlu0 %v396
  %v398 = vpop.xlane.xlu0 %397
  %v399 = vsel %vm76, %v385, 0.0
  %400 = vadd.xlane.f32.xlu0 %v399
  %v401 = vpop.xlane.xlu0 %400
  %v402 = vmul.f32 %v392, 0.5
  %v403 = vmul.f32 %v395, 0.5
  %v404 = vmul.f32 %v398, 0.5
  %v405 = vmul.f32 %v401, 0.5
  %408 = vrot.lane.b32.xlu0 %v300, 112
  %v409 = vpop.permute.xlu0 %408
  %410 = vrot.lane.b32.xlu0 %v301, 112
  %v411 = vpop.permute.xlu0 %410
  %v413 = vsel %vm76, %v409, 0
  %v416 = vsel %vm76, %v411, 0
  %418 = vmatprep.subr.bf16.mxu0 0
  %419 = vmatpush1.bf16.msra.mxu0 0
  %420 = vmatprep.subr.bf16.mxu0 0
  %421 = vmatpush1.bf16.msra.mxu0 0
  %422 = vmatprep.subr.bf16.mxu0 0
  %423 = vmatpush1.bf16.msra.mxu0 0
  %424 = vmatprep.subr.bf16.mxu0 0
  %425 = vmatpush1.bf16.msra.mxu0 0
  %426 = vmatprep.subr.bf16.mxu0 0
  %427 = vmatpush1.bf16.msra.mxu0 0
  %428 = vmatprep.subr.bf16.mxu0 0
  %429 = vmatpush1.bf16.msra.mxu0 0
  %430 = vmatprep.subr.bf16.mxu0 0
  %431 = vmatpush1.bf16.msra.mxu0 0
  %432 = vmatprep.subr.bf16.mxu0 0
  %433 = vmatpush1.bf16.msra.mxu0 %v302
  %434 = vmatprep.subr.bf16.mxu0 0
  %435 = vmatpush2.bf16.msra.mxu0 0
  %436 = vmatprep.subr.bf16.mxu0 0
  %437 = vmatpush2.bf16.msra.mxu0 0
  %438 = vmatprep.subr.bf16.mxu0 0
  %439 = vmatpush2.bf16.msra.mxu0 0
  %440 = vmatprep.subr.bf16.mxu0 0
  %441 = vmatpush2.bf16.msra.mxu0 0
  %442 = vmatprep.subr.bf16.mxu0 0
  %443 = vmatpush2.bf16.msra.mxu0 0
  %444 = vmatprep.subr.bf16.mxu0 0
  %445 = vmatpush2.bf16.msra.mxu0 0
  %446 = vmatprep.subr.bf16.mxu0 0
  %447 = vmatpush2.bf16.msra.mxu0 0
  %448 = vmatprep.subr.bf16.mxu0 0
  %449 = vmatpush2.bf16.msra.mxu0 0
  %450 = vmatprep.mubr.bf16.mxu0 0
  %451 = vmatmul.mubr.bf16.gmra.mxu0 %v413
  %v452 = vpop.f32.mrf.mxu0
  %v453 = vadd.f32 0.0, %v452
  %v454 = vpop.f32.mrf.mxu0
  %v455 = vpop.f32.mrf.mxu0
  %v456 = vadd.f32 0.0, %v455
  %v457 = vpop.f32.mrf.mxu0
  %458 = vmatprep.mubr.bf16.mxu0 0
  %459 = vmatmul.mubr.bf16.gmra.mxu0 %v416
  %v460 = vpop.f32.mrf.mxu0
  %v461 = vadd.f32 0.0, %v460
  %v462 = vpop.f32.mrf.mxu0
  %v463 = vpop.f32.mrf.mxu0
  %v464 = vadd.f32 0.0, %v463
  %v465 = vpop.f32.mrf.mxu0
  %466 = vdwg.mxu0
  %v467 = vsub.f32 %v453, %v402
  %v468 = vsub.f32 %v456, %v403
  %v469 = vsub.f32 %v461, %v404
  %v470 = vsub.f32 %v464, %v405
  %v471 = vmul.f32 %v467, 1.442695
  %v472 = vpow.pop %v471
  %v473 = vmul.f32 %v468, 1.442695
  %v474 = vpow.pop %v473
  %v475 = vmul.f32 %v469, 1.442695
  %v476 = vpow.pop %v475
  %v477 = vmul.f32 %v470, 1.442695
  %v478 = vpow.pop %v477
  %v479 = vmul.f32 %v472, 0.35355338
  %v480 = vmul.f32 %v474, 0.35355338
  %v481 = vmul.f32 %v476, 0.35355338
  %v482 = vmul.f32 %v478, 0.35355338
  %vm483 = vcmask 64512
  %v484 = vsel %vm483, %v370, 0.0
  %v485 = vsel %vm483, %v371, 0.0
  %v486 = vadd.f32 %v484, %v485
  %v487 = vrot.slane %v486, 4
  %v488 = vadd.f32 %v486, %v487
  %v489 = vrot.slane %v488, 2
  %v490 = vadd.f32 %v488, %v489
  %v491 = vrot.slane %v490, 1
  %v492 = vadd.f32 %v490, %v491
  %493 = vxpose.xlu0.b32.start [1/16] %v370, 128
  %494 = vxpose.xlu0.b32.cont [2/16] %v371, 128
  %495 = vxpose.xlu0.b32.cont [3/16] 0.0, 128
  %496 = vxpose.xlu0.b32.cont [4/16] 0.0, 128
  %497 = vxpose.xlu0.b32.cont [5/16] 0.0, 128
  %498 = vxpose.xlu0.b32.cont [6/16] 0.0, 128
  %499 = vxpose.xlu0.b32.cont [7/16] 0.0, 128
  %500 = vxpose.xlu0.b32.cont [8/16] 0.0, 128
  %501 = vxpose.xlu0.b32.cont [9/16] 0.0, 128
  %502 = vxpose.xlu0.b32.cont [10/16] 0.0, 128
  %503 = vxpose.xlu0.b32.cont [11/16] 0.0, 128
  %504 = vxpose.xlu0.b32.cont [12/16] 0.0, 128
  %505 = vxpose.xlu0.b32.cont [13/16] 0.0, 128
  %506 = vxpose.xlu0.b32.cont [14/16] 0.0, 128
  %507 = vxpose.xlu0.b32.cont [15/16] 0.0, 128
  %508 = vxpose.xlu0.b32.end [16/16] 0.0, 128
  %v509 = vpop.trf.xlu0
  %v510 = vpop.trf.xlu0
  %v511 = vpop.trf.xlu0
  %v512 = vpop.trf.xlu0
  %v513 = vpop.trf.xlu0
  %v514 = vpop.trf.xlu0
  %v515 = vpop.trf.xlu0
  %v516 = vpop.trf.xlu0
  %v517 = vpop.trf.xlu0
  %v518 = vpop.trf.xlu0
  %v519 = vpop.trf.xlu0
  %v520 = vpop.trf.xlu0
  %v521 = vpop.trf.xlu0
  %v522 = vpop.trf.xlu0
  %v523 = vpop.trf.xlu0
  %v524 = vpop.trf.xlu0
  %527 = vrot.lane.b32.xlu0 %v266, 96
  %v528 = vpop.permute.xlu0 %527
  %529 = vrot.lane.b32.xlu0 %v269, 96
  %v530 = vpop.permute.xlu0 %529
  %v534 = vsel %vm76, %v509, 0
  %536 = vmatprep.subr.mxu0 0.0
  %537 = vmatpush1.msra.mxu0 0.0
  %538 = vmatprep.subr.mxu0 0.0
  %539 = vmatpush1.msra.mxu0 0.0
  %540 = vmatprep.subr.mxu0 0.0
  %541 = vmatpush1.msra.mxu0 0.0
  %542 = vmatprep.subr.mxu0 0.0
  %543 = vmatpush1.msra.mxu0 0.0
  %544 = vmatprep.subr.mxu0 0.0
  %545 = vmatpush1.msra.mxu0 0.0
  %546 = vmatprep.subr.mxu0 0.0
  %547 = vmatpush1.msra.mxu0 0.0
  %548 = vmatprep.subr.mxu0 0.0
  %549 = vmatpush1.msra.mxu0 0.0
  %550 = vmatprep.subr.mxu0 0.0
  %551 = vmatpush1.msra.mxu0 0.0
  %552 = vmatprep.subr.mxu0 0.0
  %553 = vmatpush1.msra.mxu0 0.0
  %554 = vmatprep.subr.mxu0 0.0
  %555 = vmatpush1.msra.mxu0 0.0
  %556 = vmatprep.subr.mxu0 0.0
  %557 = vmatpush1.msra.mxu0 0.0
  %558 = vmatprep.subr.mxu0 0.0
  %559 = vmatpush1.msra.mxu0 0.0
  %560 = vmatprep.subr.mxu0 0.0
  %561 = vmatpush1.msra.mxu0 0.0
  %562 = vmatprep.subr.mxu0 0.0
  %563 = vmatpush1.msra.mxu0 0.0
  %564 = vmatprep.subr.mxu0 0.0
  %565 = vmatpush1.msra.mxu0 %v530
  %566 = vmatprep.subr.mxu0 0.0
  %567 = vmatpush1.msra.mxu0 %v528
  %568 = vmatprep.subr.mxu0 0.0
  %569 = vmatpush2.msra.mxu0 0.0
  %570 = vmatprep.subr.mxu0 0.0
  %571 = vmatpush2.msra.mxu0 0.0
  %572 = vmatprep.subr.mxu0 0.0
  %573 = vmatpush2.msra.mxu0 0.0
  %574 = vmatprep.subr.mxu0 0.0
  %575 = vmatpush2.msra.mxu0 0.0
  %576 = vmatprep.subr.mxu0 0.0
  %577 = vmatpush2.msra.mxu0 0.0
  %578 = vmatprep.subr.mxu0 0.0
  %579 = vmatpush2.msra.mxu0 0.0
  %580 = vmatprep.subr.mxu0 0.0
  %581 = vmatpush2.msra.mxu0 0.0
  %582 = vmatprep.subr.mxu0 0.0
  %583 = vmatpush2.msra.mxu0 0.0
  %584 = vmatprep.subr.mxu0 0.0
  %585 = vmatpush2.msra.mxu0 0.0
  %586 = vmatprep.subr.mxu0 0.0
  %587 = vmatpush2.msra.mxu0 0.0
  %588 = vmatprep.subr.mxu0 0.0
  %589 = vmatpush2.msra.mxu0 0.0
  %590 = vmatprep.subr.mxu0 0.0
  %591 = vmatpush2.msra.mxu0 0.0
  %592 = vmatprep.subr.mxu0 0.0
  %593 = vmatpush2.msra.mxu0 0.0
  %594 = vmatprep.subr.mxu0 0.0
  %595 = vmatpush2.msra.mxu0 0.0
  %596 = vmatprep.subr.mxu0 0.0
  %597 = vmatpush2.msra.mxu0 0.0
  %598 = vmatprep.subr.mxu0 0.0
  %599 = vmatpush2.msra.mxu0 0.0
  %600 = vmatprep.mubr.f32.mxu0 0.0
  %601 = vmatmul.mubr.f32.gmra.mxu0 %v534
  %v602 = vpop.f32.mrf.mxu0
  %v603 = vadd.f32 0.0, %v602
  %v604 = vpop.f32.mrf.mxu0
  %605 = vdwg.mxu0
  %v606 = vmul.f32 %v479, %v492
  %v607 = vmul.f32 %v480, %v492
  %v608 = vsel %vm483, %v606, 0.0
  %609 = vadd.xlane.f32.xlu0 %v608
  %v610 = vpop.xlane.xlu0 %609
  %v611 = vsel %vm483, %v607, 0.0
  %612 = vadd.xlane.f32.xlu0 %v611
  %v613 = vpop.xlane.xlu0 %612
  %v615 = vsel %vm483, %v479, 0
  %v618 = vsel %vm483, %v480, 0
  %620 = vmatprep.subr.mxu0 0.0
  %621 = vmatpush1.msra.mxu0 0.0
  %622 = vmatprep.subr.mxu0 0.0
  %623 = vmatpush1.msra.mxu0 0.0
  %624 = vmatprep.subr.mxu0 0.0
  %625 = vmatpush1.msra.mxu0 0.0
  %626 = vmatprep.subr.mxu0 0.0
  %627 = vmatpush1.msra.mxu0 0.0
  %628 = vmatprep.subr.mxu0 0.0
  %629 = vmatpush1.msra.mxu0 0.0
  %630 = vmatprep.subr.mxu0 0.0
  %631 = vmatpush1.msra.mxu0 0.0
  %632 = vmatprep.subr.mxu0 0.0
  %633 = vmatpush1.msra.mxu0 0.0
  %634 = vmatprep.subr.mxu0 0.0
  %635 = vmatpush1.msra.mxu0 0.0
  %636 = vmatprep.subr.mxu0 0.0
  %637 = vmatpush1.msra.mxu0 0.0
  %638 = vmatprep.subr.mxu0 0.0
  %639 = vmatpush1.msra.mxu0 0.0
  %640 = vmatprep.subr.mxu0 0.0
  %641 = vmatpush1.msra.mxu0 0.0
  %642 = vmatprep.subr.mxu0 0.0
  %643 = vmatpush1.msra.mxu0 0.0
  %644 = vmatprep.subr.mxu0 0.0
  %645 = vmatpush1.msra.mxu0 0.0
  %646 = vmatprep.subr.mxu0 0.0
  %647 = vmatpush1.msra.mxu0 0.0
  %648 = vmatprep.subr.mxu0 0.0
  %649 = vmatpush1.msra.mxu0 0.0
  %650 = vmatprep.subr.mxu0 0.0
  %651 = vmatpush1.msra.mxu0 %v603
  %652 = vmatprep.subr.mxu0 0.0
  %653 = vmatpush2.msra.mxu0 0.0
  %654 = vmatprep.subr.mxu0 0.0
  %655 = vmatpush2.msra.mxu0 0.0
  %656 = vmatprep.subr.mxu0 0.0
  %657 = vmatpush2.msra.mxu0 0.0
  %658 = vmatprep.subr.mxu0 0.0
  %659 = vmatpush2.msra.mxu0 0.0
  %660 = vmatprep.subr.mxu0 0.0
  %661 = vmatpush2.msra.mxu0 0.0
  %662 = vmatprep.subr.mxu0 0.0
  %663 = vmatpush2.msra.mxu0 0.0
  %664 = vmatprep.subr.mxu0 0.0
  %665 = vmatpush2.msra.mxu0 0.0
  %666 = vmatprep.subr.mxu0 0.0
  %667 = vmatpush2.msra.mxu0 0.0
  %668 = vmatprep.subr.mxu0 0.0
  %669 = vmatpush2.msra.mxu0 0.0
  %670 = vmatprep.subr.mxu0 0.0
  %671 = vmatpush2.msra.mxu0 0.0
  %672 = vmatprep.subr.mxu0 0.0
  %673 = vmatpush2.msra.mxu0 0.0
  %674 = vmatprep.subr.mxu0 0.0
  %675 = vmatpush2.msra.mxu0 0.0
  %676 = vmatprep.subr.mxu0 0.0
  %677 = vmatpush2.msra.mxu0 0.0
  %678 = vmatprep.subr.mxu0 0.0
  %679 = vmatpush2.msra.mxu0 0.0
  %680 = vmatprep.subr.mxu0 0.0
  %681 = vmatpush2.msra.mxu0 0.0
  %682 = vmatprep.subr.mxu0 0.0
  %683 = vmatpush2.msra.mxu0 0.0
  %684 = vmatprep.mubr.f32.mxu0 0.0
  %685 = vmatmul.mubr.f32.gmra.mxu0 %v615
  %v686 = vpop.f32.mrf.mxu0
  %v687 = vadd.f32 0.0, %v686
  %v688 = vpop.f32.mrf.mxu0
  %689 = vmatprep.mubr.f32.mxu0 0.0
  %690 = vmatmul.mubr.f32.gmra.mxu0 %v618
  %v691 = vpop.f32.mrf.mxu0
  %v692 = vadd.f32 0.0, %v691
  %v693 = vpop.f32.mrf.mxu0
  %694 = vdwg.mxu0
  %v695 = vadd.f32 %v610, 1e-08
  %v696 = vadd.f32 %v613, 1e-08
  %v697 = vrcp.pop %v695
  %v698 = vmul.f32 %v687, %v697
  %v699 = vrcp.pop %v696
  %v700 = vmul.f32 %v692, %v699
  %v701 = vpack.c.bf16 %v700, %v698
  %v702 = vpack.c.bf16 %v69, %v68
  %v704 = vlaneseq
  %v705 = vshrl.u32 %v704, 7
  %v706 = vsub.s32 0, %v705
  %v707 = vrot.slane %v65, %v706
  %v710 = vsel %vm76, %v701, 0
  %712 = vmatprep.subr.bf16.mxu0 0
  %713 = vmatpush1.bf16.msra.mxu0 0
  %714 = vmatprep.subr.bf16.mxu0 0
  %715 = vmatpush1.bf16.msra.mxu0 0
  %716 = vmatprep.subr.bf16.mxu0 0
  %717 = vmatpush1.bf16.msra.mxu0 0
  %718 = vmatprep.subr.bf16.mxu0 0
  %719 = vmatpush1.bf16.msra.mxu0 0
  %720 = vmatprep.subr.bf16.mxu0 0
  %721 = vmatpush1.bf16.msra.mxu0 0
  %722 = vmatprep.subr.bf16.mxu0 0
  %723 = vmatpush1.bf16.msra.mxu0 0
  %724 = vmatprep.subr.bf16.mxu0 0
  %725 = vmatpush1.bf16.msra.mxu0 0
  %726 = vmatprep.subr.bf16.mxu0 0
  %727 = vmatpush1.bf16.msra.mxu0 %v702
  %728 = vmatprep.subr.bf16.mxu0 0
  %729 = vmatpush2.bf16.msra.mxu0 0
  %730 = vmatprep.subr.bf16.mxu0 0
  %731 = vmatpush2.bf16.msra.mxu0 0
  %732 = vmatprep.subr.bf16.mxu0 0
  %733 = vmatpush2.bf16.msra.mxu0 0
  %734 = vmatprep.subr.bf16.mxu0 0
  %735 = vmatpush2.bf16.msra.mxu0 0
  %736 = vmatprep.subr.bf16.mxu0 0
  %737 = vmatpush2.bf16.msra.mxu0 0
  %738 = vmatprep.subr.bf16.mxu0 0
  %739 = vmatpush2.bf16.msra.mxu0 0
  %740 = vmatprep.subr.bf16.mxu0 0
  %741 = vmatpush2.bf16.msra.mxu0 0
  %742 = vmatprep.subr.bf16.mxu0 0
  %743 = vmatpush2.bf16.msra.mxu0 0
  %744 = vmatprep.mubr.bf16.mxu0 0
  %745 = vmatmul.mubr.bf16.gmra.mxu0 %v710
  %v746 = vpop.f32.mrf.mxu0
  %v747 = vadd.f32 %v707, %v746
  %v748 = vpop.f32.mrf.mxu0
  %v749 = vpop.f32.mrf.mxu0
  %v750 = vadd.f32 %v707, %v749
  %v751 = vpop.f32.mrf.mxu0
  %752 = vdwg.mxu0
  %755 = vrot.lane.b32.xlu0 %v747, 32
  %v756 = vpop.permute.xlu0 %755
  %757 = vrot.lane.b32.xlu0 %v750, 32
  %v758 = vpop.permute.xlu0 %757
  %v761 = vadd.f32 %v266, %v756
  %v762 = vadd.f32 %v269, %v758
  %765 = vrot.lane.b32.xlu0 %v761, 96
  %v766 = vpop.permute.xlu0 %765
  %767 = vrot.lane.b32.xlu0 %v762, 96
  %v768 = vpop.permute.xlu0 %767
  %v771 = vsel %vm76, %v766, 0.0
  %772 = vadd.xlane.f32.xlu0 %v771
  %v773 = vpop.xlane.xlu0 %772
  %v774 = vsel %vm76, %v768, 0.0
  %775 = vadd.xlane.f32.xlu0 %v774
  %v776 = vpop.xlane.xlu0 %775
  %v777 = vrcp.pop 16.0
  %v778 = vmul.f32 %v773, %v777
  %v779 = vmul.f32 %v776, %v777
  %v780 = vsub.f32 %v761, %v778
  %v781 = vsub.f32 %v762, %v779
  %v782 = vmul.f32 %v780, %v780
  %v783 = vmul.f32 %v781, %v781
  %786 = vrot.lane.b32.xlu0 %v782, 96
  %v787 = vpop.permute.xlu0 %786
  %788 = vrot.lane.b32.xlu0 %v783, 96
  %v789 = vpop.permute.xlu0 %788
  %v792 = vsel %vm76, %v787, 0.0
  %793 = vadd.xlane.f32.xlu0 %v792
  %v794 = vpop.xlane.xlu0 %793
  %v795 = vsel %vm76, %v789, 0.0
  %796 = vadd.xlane.f32.xlu0 %v795
  %v797 = vpop.xlane.xlu0 %796
  %v798 = vmul.f32 %v794, %v777
  %v799 = vmul.f32 %v797, %v777
  %v800 = vadd.f32 %v798, 1e-05
  %v801 = vadd.f32 %v799, 1e-05
  %v802 = vrsqrt.pop %v800
  %v803 = vrsqrt.pop %v801
  %v804 = vmul.f32 %v780, %v802
  %v805 = vmul.f32 %v781, %v803
  %v807 = vlaneseq
  %v808 = vshrl.u32 %v807, 7
  %v809 = vsub.s32 0, %v808
  %v810 = vrot.slane %v62, %v809
  %811 = vrot.lane.b32.xlu0 %v810, 32
  %v812 = vpop.permute.xlu0 %811
  %v814 = vmul.f32 %v804, %v812
  %v815 = vmul.f32 %v805, %v812
  %v817 = vlaneseq
  %v818 = vshrl.u32 %v817, 7
  %v819 = vsub.s32 0, %v818
  %v820 = vrot.slane %v63, %v819
  %821 = vrot.lane.b32.xlu0 %v820, 32
  %v822 = vpop.permute.xlu0 %821
  %v824 = vadd.f32 %v814, %v822
  %v825 = vadd.f32 %v815, %v822
  %v826 = vpack.c.bf16 %v825, %v824
  %v827 = vpack.c.bf16 %v71, %v70
  %v829 = vlaneseq
  %v830 = vshrl.u32 %v829, 7
  %v831 = vsub.s32 0, %v830
  %v832 = vrot.slane %v66, %v831
  %835 = vrot.lane.b32.xlu0 %v826, 96
  %v836 = vpop.permute.xlu0 %835
  %v838 = vsel %vm76, %v836, 0
  %840 = vmatprep.subr.bf16.mxu0 0
  %841 = vmatpush1.bf16.msra.mxu0 0
  %842 = vmatprep.subr.bf16.mxu0 0
  %843 = vmatpush1.bf16.msra.mxu0 0
  %844 = vmatprep.subr.bf16.mxu0 0
  %845 = vmatpush1.bf16.msra.mxu0 0
  %846 = vmatprep.subr.bf16.mxu0 0
  %847 = vmatpush1.bf16.msra.mxu0 0
  %848 = vmatprep.subr.bf16.mxu0 0
  %849 = vmatpush1.bf16.msra.mxu0 0
  %850 = vmatprep.subr.bf16.mxu0 0
  %851 = vmatpush1.bf16.msra.mxu0 0
  %852 = vmatprep.subr.bf16.mxu0 0
  %853 = vmatpush1.bf16.msra.mxu0 0
  %854 = vmatprep.subr.bf16.mxu0 0
  %855 = vmatpush1.bf16.msra.mxu0 %v827
  %856 = vmatprep.subr.bf16.mxu0 0
  %857 = vmatpush2.bf16.msra.mxu0 0
  %858 = vmatprep.subr.bf16.mxu0 0
  %859 = vmatpush2.bf16.msra.mxu0 0
  %860 = vmatprep.subr.bf16.mxu0 0
  %861 = vmatpush2.bf16.msra.mxu0 0
  %862 = vmatprep.subr.bf16.mxu0 0
  %863 = vmatpush2.bf16.msra.mxu0 0
  %864 = vmatprep.subr.bf16.mxu0 0
  %865 = vmatpush2.bf16.msra.mxu0 0
  %866 = vmatprep.subr.bf16.mxu0 0
  %867 = vmatpush2.bf16.msra.mxu0 0
  %868 = vmatprep.subr.bf16.mxu0 0
  %869 = vmatpush2.bf16.msra.mxu0 0
  %870 = vmatprep.subr.bf16.mxu0 0
  %871 = vmatpush2.bf16.msra.mxu0 0
  %872 = vmatprep.mubr.bf16.mxu0 0
  %873 = vmatmul.mubr.bf16.gmra.mxu0 %v838
  %v874 = vpop.f32.mrf.mxu0
  %v875 = vadd.f32 %v832, %v874
  %v876 = vpop.f32.mrf.mxu0
  %v877 = vpop.f32.mrf.mxu0
  %v878 = vadd.f32 %v832, %v877
  %v879 = vpop.f32.mrf.mxu0
  %880 = vdwg.mxu0
  %v881 = vmul.f32 %v875, 0.5
  %v882 = vmul.f32 %v878, 0.5
  %v883 = vmul.f32 %v875, 0.70710677
  %v884 = vmul.f32 %v878, 0.70710677
  %vm885 = vcmp.ge.f32.partialorder %v883, 0.0
  %vm886 = vcmp.ge.f32.partialorder %v884, 0.0
  %v887 = vsel %vm885, 1.0, -1.0
  %v888 = vsel %vm886, 1.0, -1.0
  %v889 = vand.u32 2147483647, %v883
  %v890 = vand.u32 2147483647, %v884
  %v891 = vmul.f32 %v889, 0.3275911
  %v892 = vmul.f32 %v890, 0.3275911
  %v893 = vadd.f32 %v891, 1.0
  %v894 = vadd.f32 %v892, 1.0
  %v895 = vrcp.pop %v893
  %v896 = vmul.f32 1.0, %v895
  %v897 = vrcp.pop %v894
  %v898 = vmul.f32 1.0, %v897
  %v899 = vmul.f32 %v896, 1.0614054
  %v900 = vmul.f32 %v898, 1.0614054
  %v901 = vadd.f32 %v899, -1.4531521
  %v902 = vadd.f32 %v900, -1.4531521
  %v903 = vmul.f32 %v901, %v896
  %v904 = vmul.f32 %v902, %v898
  %v905 = vadd.f32 %v903, 1.4214138
  %v906 = vadd.f32 %v904, 1.4214138
  %v907 = vmul.f32 %v905, %v896
  %v908 = vmul.f32 %v906, %v898
  %v909 = vadd.f32 %v907, -0.28449672
  %v910 = vadd.f32 %v908, -0.28449672
  %v911 = vmul.f32 %v909, %v896
  %v912 = vmul.f32 %v910, %v898
  %v913 = vadd.f32 %v911, 0.2548296
  %v914 = vadd.f32 %v912, 0.2548296
  %v915 = vmul.f32 %v913, %v896
  %v916 = vmul.f32 %v914, %v898
  %v917 = vsub.f32 0.0, %v889
  %v918 = vsub.f32 0.0, %v890
  %v919 = vmul.f32 %v917, %v889
  %v920 = vmul.f32 %v918, %v890
  %v921 = vmul.f32 %v919, 1.442695
  %v922 = vpow.pop %v921
  %v923 = vmul.f32 %v920, 1.442695
  %v924 = vpow.pop %v923
  %v925 = vmul.f32 %v915, %v922
  %v926 = vmul.f32 %v916, %v924
  %v927 = vsub.f32 1.0, %v925
  %v928 = vsub.f32 1.0, %v926
  %v929 = vmul.f32 %v887, %v927
  %v930 = vmul.f32 %v888, %v928
  %v931 = vadd.f32 %v929, 1.0
  %v932 = vadd.f32 %v930, 1.0
  %v933 = vmul.f32 %v881, %v931
  %v934 = vmul.f32 %v882, %v932
  %v935 = vpack.c.bf16 %v934, %v933
  %v936 = vpack.c.bf16 %v73, %v72
  %v938 = vlaneseq
  %v939 = vshrl.u32 %v938, 7
  %v940 = vsub.s32 0, %v939
  %v941 = vrot.slane %v67, %v940
  %v944 = vsel %vm76, %v935, 0
  %946 = vmatprep.subr.bf16.mxu0 0
  %947 = vmatpush1.bf16.msra.mxu0 0
  %948 = vmatprep.subr.bf16.mxu0 0
  %949 = vmatpush1.bf16.msra.mxu0 0
  %950 = vmatprep.subr.bf16.mxu0 0
  %951 = vmatpush1.bf16.msra.mxu0 0
  %952 = vmatprep.subr.bf16.mxu0 0
  %953 = vmatpush1.bf16.msra.mxu0 0
  %954 = vmatprep.subr.bf16.mxu0 0
  %955 = vmatpush1.bf16.msra.mxu0 0
  %956 = vmatprep.subr.bf16.mxu0 0
  %957 = vmatpush1.bf16.msra.mxu0 0
  %958 = vmatprep.subr.bf16.mxu0 0
  %959 = vmatpush1.bf16.msra.mxu0 0
  %960 = vmatprep.subr.bf16.mxu0 0
  %961 = vmatpush1.bf16.msra.mxu0 %v936
  %962 = vmatprep.subr.bf16.mxu0 0
  %963 = vmatpush2.bf16.msra.mxu0 0
  %964 = vmatprep.subr.bf16.mxu0 0
  %965 = vmatpush2.bf16.msra.mxu0 0
  %966 = vmatprep.subr.bf16.mxu0 0
  %967 = vmatpush2.bf16.msra.mxu0 0
  %968 = vmatprep.subr.bf16.mxu0 0
  %969 = vmatpush2.bf16.msra.mxu0 0
  %970 = vmatprep.subr.bf16.mxu0 0
  %971 = vmatpush2.bf16.msra.mxu0 0
  %972 = vmatprep.subr.bf16.mxu0 0
  %973 = vmatpush2.bf16.msra.mxu0 0
  %974 = vmatprep.subr.bf16.mxu0 0
  %975 = vmatpush2.bf16.msra.mxu0 0
  %976 = vmatprep.subr.bf16.mxu0 0
  %977 = vmatpush2.bf16.msra.mxu0 0
  %978 = vmatprep.mubr.bf16.mxu0 0
  %979 = vmatmul.mubr.bf16.gmra.mxu0 %v944
  %v980 = vpop.f32.mrf.mxu0
  %v981 = vadd.f32 %v941, %v980
  %v982 = vpop.f32.mrf.mxu0
  %v983 = vpop.f32.mrf.mxu0
  %v984 = vadd.f32 %v941, %v983
  %v985 = vpop.f32.mrf.mxu0
  %986 = vdwg.mxu0
  %989 = vrot.lane.b32.xlu0 %v981, 32
  %v990 = vpop.permute.xlu0 %989
  %991 = vrot.lane.b32.xlu0 %v984, 32
  %v992 = vpop.permute.xlu0 %991
  %v995 = vadd.f32 %v761, %v990
  %v996 = vadd.f32 %v762, %v992
  %v997 = vpack.c.bf16 %v996, %v995
  %v999 = vunpack.c.l.b16 %v997
  %v1000 = vunpack.c.h.b16 %v997
  %v1001 = vpack.c.b16 %v999, %v999
  %v1002 = vpack.c.b16 %v1000, %v1000
  %1003 = vrot.lane.b32.xlu0 %v1001, 96
  %v1004 = vpop.permute.xlu0 %1003
  %1005 = vrot.lane.b32.xlu0 %v1002, 96
  %v1006 = vpop.permute.xlu0 %1005
  %vm1009 = vcmask 125952
  %1010 = vst.msk [vmem:[%s14] sm:$0xf] %vm1009, %v1004
  %1011 = vst.msk [vmem:[%s14 + $0x4] sm:$0xf] %vm1009, %v1006
  %v1012 = vsel %vm483, %v372, 0.0
  %v1013 = vsel %vm483, %v373, 0.0
  %v1014 = vadd.f32 %v1012, %v1013
  %v1015 = vrot.slane %v1014, 4
  %v1016 = vadd.f32 %v1014, %v1015
  %v1017 = vrot.slane %v1016, 2
  %v1018 = vadd.f32 %v1016, %v1017
  %v1019 = vrot.slane %v1018, 1
  %v1020 = vadd.f32 %v1018, %v1019
  %1021 = vxpose.xlu0.b32.start [1/16] %v372, 128
  %1022 = vxpose.xlu0.b32.cont [2/16] %v373, 128
  %1023 = vxpose.xlu0.b32.cont [3/16] 0.0, 128
  %1024 = vxpose.xlu0.b32.cont [4/16] 0.0, 128
  %1025 = vxpose.xlu0.b32.cont [5/16] 0.0, 128
  %1026 = vxpose.xlu0.b32.cont [6/16] 0.0, 128
  %1027 = vxpose.xlu0.b32.cont [7/16] 0.0, 128
  %1028 = vxpose.xlu0.b32.cont [8/16] 0.0, 128
  %1029 = vxpose.xlu0.b32.cont [9/16] 0.0, 128
  %1030 = vxpose.xlu0.b32.cont [10/16] 0.0, 128
  %1031 = vxpose.xlu0.b32.cont [11/16] 0.0, 128
  %1032 = vxpose.xlu0.b32.cont [12/16] 0.0, 128
  %1033 = vxpose.xlu0.b32.cont [13/16] 0.0, 128
  %1034 = vxpose.xlu0.b32.cont [14/16] 0.0, 128
  %1035 = vxpose.xlu0.b32.cont [15/16] 0.0, 128
  %1036 = vxpose.xlu0.b32.end [16/16] 0.0, 128
  %v1037 = vpop.trf.xlu0
  %v1038 = vpop.trf.xlu0
  %v1039 = vpop.trf.xlu0
  %v1040 = vpop.trf.xlu0
  %v1041 = vpop.trf.xlu0
  %v1042 = vpop.trf.xlu0
  %v1043 = vpop.trf.xlu0
  %v1044 = vpop.trf.xlu0
  %v1045 = vpop.trf.xlu0
  %v1046 = vpop.trf.xlu0
  %v1047 = vpop.trf.xlu0
  %v1048 = vpop.trf.xlu0
  %v1049 = vpop.trf.xlu0
  %v1050 = vpop.trf.xlu0
  %v1051 = vpop.trf.xlu0
  %v1052 = vpop.trf.xlu0
  %1055 = vrot.lane.b32.xlu0 %v274, 96
  %v1056 = vpop.permute.xlu0 %1055
  %1057 = vrot.lane.b32.xlu0 %v277, 96
  %v1058 = vpop.permute.xlu0 %1057
  %v1062 = vsel %vm76, %v1037, 0
  %1064 = vmatprep.subr.mxu0 0.0
  %1065 = vmatpush1.msra.mxu0 0.0
  %1066 = vmatprep.subr.mxu0 0.0
  %1067 = vmatpush1.msra.mxu0 0.0
  %1068 = vmatprep.subr.mxu0 0.0
  %1069 = vmatpush1.msra.mxu0 0.0
  %1070 = vmatprep.subr.mxu0 0.0
  %1071 = vmatpush1.msra.mxu0 0.0
  %1072 = vmatprep.subr.mxu0 0.0
  %1073 = vmatpush1.msra.mxu0 0.0
  %1074 = vmatprep.subr.mxu0 0.0
  %1075 = vmatpush1.msra.mxu0 0.0
  %1076 = vmatprep.subr.mxu0 0.0
  %1077 = vmatpush1.msra.mxu0 0.0
  %1078 = vmatprep.subr.mxu0 0.0
  %1079 = vmatpush1.msra.mxu0 0.0
  %1080 = vmatprep.subr.mxu0 0.0
  %1081 = vmatpush1.msra.mxu0 0.0
  %1082 = vmatprep.subr.mxu0 0.0
  %1083 = vmatpush1.msra.mxu0 0.0
  %1084 = vmatprep.subr.mxu0 0.0
  %1085 = vmatpush1.msra.mxu0 0.0
  %1086 = vmatprep.subr.mxu0 0.0
  %1087 = vmatpush1.msra.mxu0 0.0
  %1088 = vmatprep.subr.mxu0 0.0
  %1089 = vmatpush1.msra.mxu0 0.0
  %1090 = vmatprep.subr.mxu0 0.0
  %1091 = vmatpush1.msra.mxu0 0.0
  %1092 = vmatprep.subr.mxu0 0.0
  %1093 = vmatpush1.msra.mxu0 %v1058
  %1094 = vmatprep.subr.mxu0 0.0
  %1095 = vmatpush1.msra.mxu0 %v1056
  %1096 = vmatprep.subr.mxu0 0.0
  %1097 = vmatpush2.msra.mxu0 0.0
  %1098 = vmatprep.subr.mxu0 0.0
  %1099 = vmatpush2.msra.mxu0 0.0
  %1100 = vmatprep.subr.mxu0 0.0
  %1101 = vmatpush2.msra.mxu0 0.0
  %1102 = vmatprep.subr.mxu0 0.0
  %1103 = vmatpush2.msra.mxu0 0.0
  %1104 = vmatprep.subr.mxu0 0.0
  %1105 = vmatpush2.msra.mxu0 0.0
  %1106 = vmatprep.subr.mxu0 0.0
  %1107 = vmatpush2.msra.mxu0 0.0
  %1108 = vmatprep.subr.mxu0 0.0
  %1109 = vmatpush2.msra.mxu0 0.0
  %1110 = vmatprep.subr.mxu0 0.0
  %1111 = vmatpush2.msra.mxu0 0.0
  %1112 = vmatprep.subr.mxu0 0.0
  %1113 = vmatpush2.msra.mxu0 0.0
  %1114 = vmatprep.subr.mxu0 0.0
  %1115 = vmatpush2.msra.mxu0 0.0
  %1116 = vmatprep.subr.mxu0 0.0
  %1117 = vmatpush2.msra.mxu0 0.0
  %1118 = vmatprep.subr.mxu0 0.0
  %1119 = vmatpush2.msra.mxu0 0.0
  %1120 = vmatprep.subr.mxu0 0.0
  %1121 = vmatpush2.msra.mxu0 0.0
  %1122 = vmatprep.subr.mxu0 0.0
  %1123 = vmatpush2.msra.mxu0 0.0
  %1124 = vmatprep.subr.mxu0 0.0
  %1125 = vmatpush2.msra.mxu0 0.0
  %1126 = vmatprep.subr.mxu0 0.0
  %1127 = vmatpush2.msra.mxu0 0.0
  %1128 = vmatprep.mubr.f32.mxu0 0.0
  %1129 = vmatmul.mubr.f32.gmra.mxu0 %v1062
  %v1130 = vpop.f32.mrf.mxu0
  %v1131 = vadd.f32 0.0, %v1130
  %v1132 = vpop.f32.mrf.mxu0
  %1133 = vdwg.mxu0
  %v1134 = vmul.f32 %v481, %v1020
  %v1135 = vmul.f32 %v482, %v1020
  %v1136 = vsel %vm483, %v1134, 0.0
  %1137 = vadd.xlane.f32.xlu0 %v1136
  %v1138 = vpop.xlane.xlu0 %1137
  %v1139 = vsel %vm483, %v1135, 0.0
  %1140 = vadd.xlane.f32.xlu0 %v1139
  %v1141 = vpop.xlane.xlu0 %1140
  %v1143 = vsel %vm483, %v481, 0
  %v1146 = vsel %vm483, %v482, 0
  %1148 = vmatprep.subr.mxu0 0.0
  %1149 = vmatpush1.msra.mxu0 0.0
  %1150 = vmatprep.subr.mxu0 0.0
  %1151 = vmatpush1.msra.mxu0 0.0
  %1152 = vmatprep.subr.mxu0 0.0
  %1153 = vmatpush1.msra.mxu0 0.0
  %1154 = vmatprep.subr.mxu0 0.0
  %1155 = vmatpush1.msra.mxu0 0.0
  %1156 = vmatprep.subr.mxu0 0.0
  %1157 = vmatpush1.msra.mxu0 0.0
  %1158 = vmatprep.subr.mxu0 0.0
  %1159 = vmatpush1.msra.mxu0 0.0
  %1160 = vmatprep.subr.mxu0 0.0
  %1161 = vmatpush1.msra.mxu0 0.0
  %1162 = vmatprep.subr.mxu0 0.0
  %1163 = vmatpush1.msra.mxu0 0.0
  %1164 = vmatprep.subr.mxu0 0.0
  %1165 = vmatpush1.msra.mxu0 0.0
  %1166 = vmatprep.subr.mxu0 0.0
  %1167 = vmatpush1.msra.mxu0 0.0
  %1168 = vmatprep.subr.mxu0 0.0
  %1169 = vmatpush1.msra.mxu0 0.0
  %1170 = vmatprep.subr.mxu0 0.0
  %1171 = vmatpush1.msra.mxu0 0.0
  %1172 = vmatprep.subr.mxu0 0.0
  %1173 = vmatpush1.msra.mxu0 0.0
  %1174 = vmatprep.subr.mxu0 0.0
  %1175 = vmatpush1.msra.mxu0 0.0
  %1176 = vmatprep.subr.mxu0 0.0
  %1177 = vmatpush1.msra.mxu0 0.0
  %1178 = vmatprep.subr.mxu0 0.0
  %1179 = vmatpush1.msra.mxu0 %v1131
  %1180 = vmatprep.subr.mxu0 0.0
  %1181 = vmatpush2.msra.mxu0 0.0
  %1182 = vmatprep.subr.mxu0 0.0
  %1183 = vmatpush2.msra.mxu0 0.0
  %1184 = vmatprep.subr.mxu0 0.0
  %1185 = vmatpush2.msra.mxu0 0.0
  %1186 = vmatprep.subr.mxu0 0.0
  %1187 = vmatpush2.msra.mxu0 0.0
  %1188 = vmatprep.subr.mxu0 0.0
  %1189 = vmatpush2.msra.mxu0 0.0
  %1190 = vmatprep.subr.mxu0 0.0
  %1191 = vmatpush2.msra.mxu0 0.0
  %1192 = vmatprep.subr.mxu0 0.0
  %1193 = vmatpush2.msra.mxu0 0.0
  %1194 = vmatprep.subr.mxu0 0.0
  %1195 = vmatpush2.msra.mxu0 0.0
  %1196 = vmatprep.subr.mxu0 0.0
  %1197 = vmatpush2.msra.mxu0 0.0
  %1198 = vmatprep.subr.mxu0 0.0
  %1199 = vmatpush2.msra.mxu0 0.0
  %1200 = vmatprep.subr.mxu0 0.0
  %1201 = vmatpush2.msra.mxu0 0.0
  %1202 = vmatprep.subr.mxu0 0.0
  %1203 = vmatpush2.msra.mxu0 0.0
  %1204 = vmatprep.subr.mxu0 0.0
  %1205 = vmatpush2.msra.mxu0 0.0
  %1206 = vmatprep.subr.mxu0 0.0
  %1207 = vmatpush2.msra.mxu0 0.0
  %1208 = vmatprep.subr.mxu0 0.0
  %1209 = vmatpush2.msra.mxu0 0.0
  %1210 = vmatprep.subr.mxu0 0.0
  %1211 = vmatpush2.msra.mxu0 0.0
  %1212 = vmatprep.mubr.f32.mxu0 0.0
  %1213 = vmatmul.mubr.f32.gmra.mxu0 %v1143
  %v1214 = vpop.f32.mrf.mxu0
  %v1215 = vadd.f32 0.0, %v1214
  %v1216 = vpop.f32.mrf.mxu0
  %1217 = vmatprep.mubr.f32.mxu0 0.0
  %1218 = vmatmul.mubr.f32.gmra.mxu0 %v1146
  %v1219 = vpop.f32.mrf.mxu0
  %v1220 = vadd.f32 0.0, %v1219
  %v1221 = vpop.f32.mrf.mxu0
  %1222 = vdwg.mxu0
  %v1223 = vadd.f32 %v1138, 1e-08
  %v1224 = vadd.f32 %v1141, 1e-08
  %v1225 = vrcp.pop %v1223
  %v1226 = vmul.f32 %v1215, %v1225
  %v1227 = vrcp.pop %v1224
  %v1228 = vmul.f32 %v1220, %v1227
  %v1229 = vpack.c.bf16 %v1228, %v1226
  %v1231 = vsel %vm76, %v1229, 0
  %1233 = vmatprep.subr.bf16.mxu0 0
  %1234 = vmatpush1.bf16.msra.mxu0 0
  %1235 = vmatprep.subr.bf16.mxu0 0
  %1236 = vmatpush1.bf16.msra.mxu0 0
  %1237 = vmatprep.subr.bf16.mxu0 0
  %1238 = vmatpush1.bf16.msra.mxu0 0
  %1239 = vmatprep.subr.bf16.mxu0 0
  %1240 = vmatpush1.bf16.msra.mxu0 0
  %1241 = vmatprep.subr.bf16.mxu0 0
  %1242 = vmatpush1.bf16.msra.mxu0 0
  %1243 = vmatprep.subr.bf16.mxu0 0
  %1244 = vmatpush1.bf16.msra.mxu0 0
  %1245 = vmatprep.subr.bf16.mxu0 0
  %1246 = vmatpush1.bf16.msra.mxu0 0
  %1247 = vmatprep.subr.bf16.mxu0 0
  %1248 = vmatpush1.bf16.msra.mxu0 %v702
  %1249 = vmatprep.subr.bf16.mxu0 0
  %1250 = vmatpush2.bf16.msra.mxu0 0
  %1251 = vmatprep.subr.bf16.mxu0 0
  %1252 = vmatpush2.bf16.msra.mxu0 0
  %1253 = vmatprep.subr.bf16.mxu0 0
  %1254 = vmatpush2.bf16.msra.mxu0 0
  %1255 = vmatprep.subr.bf16.mxu0 0
  %1256 = vmatpush2.bf16.msra.mxu0 0
  %1257 = vmatprep.subr.bf16.mxu0 0
  %1258 = vmatpush2.bf16.msra.mxu0 0
  %1259 = vmatprep.subr.bf16.mxu0 0
  %1260 = vmatpush2.bf16.msra.mxu0 0
  %1261 = vmatprep.subr.bf16.mxu0 0
  %1262 = vmatpush2.bf16.msra.mxu0 0
  %1263 = vmatprep.subr.bf16.mxu0 0
  %1264 = vmatpush2.bf16.msra.mxu0 0
  %1265 = vmatprep.mubr.bf16.mxu0 0
  %1266 = vmatmul.mubr.bf16.gmra.mxu0 %v1231
  %v1267 = vpop.f32.mrf.mxu0
  %v1268 = vadd.f32 %v707, %v1267
  %v1269 = vpop.f32.mrf.mxu0
  %v1270 = vpop.f32.mrf.mxu0
  %v1271 = vadd.f32 %v707, %v1270
  %v1272 = vpop.f32.mrf.mxu0
  %1273 = vdwg.mxu0
  %1276 = vrot.lane.b32.xlu0 %v1268, 32
  %v1277 = vpop.permute.xlu0 %1276
  %1278 = vrot.lane.b32.xlu0 %v1271, 32
  %v1279 = vpop.permute.xlu0 %1278
  %v1282 = vadd.f32 %v274, %v1277
  %v1283 = vadd.f32 %v277, %v1279
  %1286 = vrot.lane.b32.xlu0 %v1282, 96
  %v1287 = vpop.permute.xlu0 %1286
  %1288 = vrot.lane.b32.xlu0 %v1283, 96
  %v1289 = vpop.permute.xlu0 %1288
  %v1292 = vsel %vm76, %v1287, 0.0
  %1293 = vadd.xlane.f32.xlu0 %v1292
  %v1294 = vpop.xlane.xlu0 %1293
  %v1295 = vsel %vm76, %v1289, 0.0
  %1296 = vadd.xlane.f32.xlu0 %v1295
  %v1297 = vpop.xlane.xlu0 %1296
  %v1298 = vmul.f32 %v1294, %v777
  %v1299 = vmul.f32 %v1297, %v777
  %v1300 = vsub.f32 %v1282, %v1298
  %v1301 = vsub.f32 %v1283, %v1299
  %v1302 = vmul.f32 %v1300, %v1300
  %v1303 = vmul.f32 %v1301, %v1301
  %1306 = vrot.lane.b32.xlu0 %v1302, 96
  %v1307 = vpop.permute.xlu0 %1306
  %1308 = vrot.lane.b32.xlu0 %v1303, 96
  %v1309 = vpop.permute.xlu0 %1308
  %v1312 = vsel %vm76, %v1307, 0.0
  %1313 = vadd.xlane.f32.xlu0 %v1312
  %v1314 = vpop.xlane.xlu0 %1313
  %v1315 = vsel %vm76, %v1309, 0.0
  %1316 = vadd.xlane.f32.xlu0 %v1315
  %v1317 = vpop.xlane.xlu0 %1316
  %v1318 = vmul.f32 %v1314, %v777
  %v1319 = vmul.f32 %v1317, %v777
  %v1320 = vadd.f32 %v1318, 1e-05
  %v1321 = vadd.f32 %v1319, 1e-05
  %v1322 = vrsqrt.pop %v1320
  %v1323 = vrsqrt.pop %v1321
  %v1324 = vmul.f32 %v1300, %v1322
  %v1325 = vmul.f32 %v1301, %v1323
  %v1326 = vmul.f32 %v1324, %v812
  %v1327 = vmul.f32 %v1325, %v812
  %v1328 = vadd.f32 %v1326, %v822
  %v1329 = vadd.f32 %v1327, %v822
  %v1330 = vpack.c.bf16 %v1329, %v1328
  %1332 = vrot.lane.b32.xlu0 %v1330, 96
  %v1333 = vpop.permute.xlu0 %1332
  %v1335 = vsel %vm76, %v1333, 0
  %1337 = vmatprep.subr.bf16.mxu0 0
  %1338 = vmatpush1.bf16.msra.mxu0 0
  %1339 = vmatprep.subr.bf16.mxu0 0
  %1340 = vmatpush1.bf16.msra.mxu0 0
  %1341 = vmatprep.subr.bf16.mxu0 0
  %1342 = vmatpush1.bf16.msra.mxu0 0
  %1343 = vmatprep.subr.bf16.mxu0 0
  %1344 = vmatpush1.bf16.msra.mxu0 0
  %1345 = vmatprep.subr.bf16.mxu0 0
  %1346 = vmatpush1.bf16.msra.mxu0 0
  %1347 = vmatprep.subr.bf16.mxu0 0
  %1348 = vmatpush1.bf16.msra.mxu0 0
  %1349 = vmatprep.subr.bf16.mxu0 0
  %1350 = vmatpush1.bf16.msra.mxu0 0
  %1351 = vmatprep.subr.bf16.mxu0 0
  %1352 = vmatpush1.bf16.msra.mxu0 %v827
  %1353 = vmatprep.subr.bf16.mxu0 0
  %1354 = vmatpush2.bf16.msra.mxu0 0
  %1355 = vmatprep.subr.bf16.mxu0 0
  %1356 = vmatpush2.bf16.msra.mxu0 0
  %1357 = vmatprep.subr.bf16.mxu0 0
  %1358 = vmatpush2.bf16.msra.mxu0 0
  %1359 = vmatprep.subr.bf16.mxu0 0
  %1360 = vmatpush2.bf16.msra.mxu0 0
  %1361 = vmatprep.subr.bf16.mxu0 0
  %1362 = vmatpush2.bf16.msra.mxu0 0
  %1363 = vmatprep.subr.bf16.mxu0 0
  %1364 = vmatpush2.bf16.msra.mxu0 0
  %1365 = vmatprep.subr.bf16.mxu0 0
  %1366 = vmatpush2.bf16.msra.mxu0 0
  %1367 = vmatprep.subr.bf16.mxu0 0
  %1368 = vmatpush2.bf16.msra.mxu0 0
  %1369 = vmatprep.mubr.bf16.mxu0 0
  %1370 = vmatmul.mubr.bf16.gmra.mxu0 %v1335
  %v1371 = vpop.f32.mrf.mxu0
  %v1372 = vadd.f32 %v832, %v1371
  %v1373 = vpop.f32.mrf.mxu0
  %v1374 = vpop.f32.mrf.mxu0
  %v1375 = vadd.f32 %v832, %v1374
  %v1376 = vpop.f32.mrf.mxu0
  %1377 = vdwg.mxu0
  %v1378 = vmul.f32 %v1372, 0.5
  %v1379 = vmul.f32 %v1375, 0.5
  %v1380 = vmul.f32 %v1372, 0.70710677
  %v1381 = vmul.f32 %v1375, 0.70710677
  %vm1382 = vcmp.ge.f32.partialorder %v1380, 0.0
  %vm1383 = vcmp.ge.f32.partialorder %v1381, 0.0
  %v1384 = vsel %vm1382, 1.0, -1.0
  %v1385 = vsel %vm1383, 1.0, -1.0
  %v1386 = vand.u32 2147483647, %v1380
  %v1387 = vand.u32 2147483647, %v1381
  %v1388 = vmul.f32 %v1386, 0.3275911
  %v1389 = vmul.f32 %v1387, 0.3275911
  %v1390 = vadd.f32 %v1388, 1.0
  %v1391 = vadd.f32 %v1389, 1.0
  %v1392 = vrcp.pop %v1390
  %v1393 = vmul.f32 1.0, %v1392
  %v1394 = vrcp.pop %v1391
  %v1395 = vmul.f32 1.0, %v1394
  %v1396 = vmul.f32 %v1393, 1.0614054
  %v1397 = vmul.f32 %v1395, 1.0614054
  %v1398 = vadd.f32 %v1396, -1.4531521
  %v1399 = vadd.f32 %v1397, -1.4531521
  %v1400 = vmul.f32 %v1398, %v1393
  %v1401 = vmul.f32 %v1399, %v1395
  %v1402 = vadd.f32 %v1400, 1.4214138
  %v1403 = vadd.f32 %v1401, 1.4214138
  %v1404 = vmul.f32 %v1402, %v1393
  %v1405 = vmul.f32 %v1403, %v1395
  %v1406 = vadd.f32 %v1404, -0.28449672
  %v1407 = vadd.f32 %v1405, -0.28449672
  %v1408 = vmul.f32 %v1406, %v1393
  %v1409 = vmul.f32 %v1407, %v1395
  %v1410 = vadd.f32 %v1408, 0.2548296
  %v1411 = vadd.f32 %v1409, 0.2548296
  %v1412 = vmul.f32 %v1410, %v1393
  %v1413 = vmul.f32 %v1411, %v1395
  %v1414 = vsub.f32 0.0, %v1386
  %v1415 = vsub.f32 0.0, %v1387
  %v1416 = vmul.f32 %v1414, %v1386
  %v1417 = vmul.f32 %v1415, %v1387
  %v1418 = vmul.f32 %v1416, 1.442695
  %v1419 = vpow.pop %v1418
  %v1420 = vmul.f32 %v1417, 1.442695
  %v1421 = vpow.pop %v1420
  %v1422 = vmul.f32 %v1412, %v1419
  %v1423 = vmul.f32 %v1413, %v1421
  %v1424 = vsub.f32 1.0, %v1422
  %v1425 = vsub.f32 1.0, %v1423
  %v1426 = vmul.f32 %v1384, %v1424
  %v1427 = vmul.f32 %v1385, %v1425
  %v1428 = vadd.f32 %v1426, 1.0
  %v1429 = vadd.f32 %v1427, 1.0
  %v1430 = vmul.f32 %v1378, %v1428
  %v1431 = vmul.f32 %v1379, %v1429
  %v1432 = vpack.c.bf16 %v1431, %v1430
  %v1434 = vsel %vm76, %v1432, 0
  %1436 = vmatprep.subr.bf16.mxu0 0
  %1437 = vmatpush1.bf16.msra.mxu0 0
  %1438 = vmatprep.subr.bf16.mxu0 0
  %1439 = vmatpush1.bf16.msra.mxu0 0
  %1440 = vmatprep.subr.bf16.mxu0 0
  %1441 = vmatpush1.bf16.msra.mxu0 0
  %1442 = vmatprep.subr.bf16.mxu0 0
  %1443 = vmatpush1.bf16.msra.mxu0 0
  %1444 = vmatprep.subr.bf16.mxu0 0
  %1445 = vmatpush1.bf16.msra.mxu0 0
  %1446 = vmatprep.subr.bf16.mxu0 0
  %1447 = vmatpush1.bf16.msra.mxu0 0
  %1448 = vmatprep.subr.bf16.mxu0 0
  %1449 = vmatpush1.bf16.msra.mxu0 0
  %1450 = vmatprep.subr.bf16.mxu0 0
  %1451 = vmatpush1.bf16.msra.mxu0 %v936
  %1452 = vmatprep.subr.bf16.mxu0 0
  %1453 = vmatpush2.bf16.msra.mxu0 0
  %1454 = vmatprep.subr.bf16.mxu0 0
  %1455 = vmatpush2.bf16.msra.mxu0 0
  %1456 = vmatprep.subr.bf16.mxu0 0
  %1457 = vmatpush2.bf16.msra.mxu0 0
  %1458 = vmatprep.subr.bf16.mxu0 0
  %1459 = vmatpush2.bf16.msra.mxu0 0
  %1460 = vmatprep.subr.bf16.mxu0 0
  %1461 = vmatpush2.bf16.msra.mxu0 0
  %1462 = vmatprep.subr.bf16.mxu0 0
  %1463 = vmatpush2.bf16.msra.mxu0 0
  %1464 = vmatprep.subr.bf16.mxu0 0
  %1465 = vmatpush2.bf16.msra.mxu0 0
  %1466 = vmatprep.subr.bf16.mxu0 0
  %1467 = vmatpush2.bf16.msra.mxu0 0
  %1468 = vmatprep.mubr.bf16.mxu0 0
  %1469 = vmatmul.mubr.bf16.gmra.mxu0 %v1434
  %v1470 = vpop.f32.mrf.mxu0
  %v1471 = vadd.f32 %v941, %v1470
  %v1472 = vpop.f32.mrf.mxu0
  %v1473 = vpop.f32.mrf.mxu0
  %v1474 = vadd.f32 %v941, %v1473
  %v1475 = vpop.f32.mrf.mxu0
  %1476 = vdwg.mxu0
  %1479 = vrot.lane.b32.xlu0 %v1471, 32
  %v1480 = vpop.permute.xlu0 %1479
  %1481 = vrot.lane.b32.xlu0 %v1474, 32
  %v1482 = vpop.permute.xlu0 %1481
  %v1485 = vadd.f32 %v1282, %v1480
  %v1486 = vadd.f32 %v1283, %v1482
  %v1487 = vpack.c.bf16 %v1486, %v1485
  %v1489 = vunpack.c.l.b16 %v1487
  %v1490 = vunpack.c.h.b16 %v1487
  %v1491 = vpack.c.b16 %v1489, %v1489
  %v1492 = vpack.c.b16 %v1490, %v1490
  %1493 = vrot.lane.b32.xlu0 %v1491, 96
  %v1494 = vpop.permute.xlu0 %1493
  %1495 = vrot.lane.b32.xlu0 %v1492, 96
  %v1496 = vpop.permute.xlu0 %1495
  %s1499 = scalar_lea.vmem %s14, 8
  %1500 = vst.msk [vmem:[%s1499] sm:$0xf] %vm1009, %v1494
  %1501 = vst.msk [vmem:[%s1499 + $0x4] sm:$0xf] %vm1009, %v1496
  // Predicated region
  $region58: #{adavit_forward.7} parent=0 // pred_check
    _
  $region59: #{adavit_forward.7} parent=0 // pred_check_branch
    %1503 = sbr.rel (0) target = $region61
  $region60: #{adavit_forward.7} parent=0 // pred_region
    _
  $region61: #{adavit_forward.7} parent=0 // pred_fallthru
    _
  // Predicated region
  $region62: #{adavit_forward.7} parent=0 // pred_check
    _
  $region63: #{adavit_forward.7} parent=0 // pred_check_branch
    %1505 = sbr.rel (0) target = $region65
  $region64: #{adavit_forward.7} parent=0 // pred_region
    _
  $region65: #{adavit_forward.7} parent=0 // pred_fallthru
    _

// kernel: adavit_forward.8
$region0: #{adavit_forward.8}
  #allocation0 [shape = 'u32[]', space=smem, size = 0x4, offset = 0x4, fixed_abs, tag = 'smem constant byte address 0x4 - core index']
  #allocation1 [shape = 'u32[144,128]{1,0:T(1,128)}', space=vmem, size = 0x12000, scoped, tag = 'internal scratch']
  %s0 = inlined_call_operand.vmem [shape: bf16[8,144], index: 0, kind: input, shape index: {}]
  %s1 = inlined_call_operand.vmem [shape: f32[144,64], index: 1, kind: input, shape index: {}]
  %s2 = inlined_call_operand.vmem [shape: f32[1,64], index: 2, kind: input, shape index: {}]
  %s3 = inlined_call_operand.vmem [shape: bf16[8,64], index: 3, kind: output, shape index: {}]
  %s4 = sld [smem:[#allocation0]]
  $region22: #{adavit_forward.8} parent=0
    _
  %s6 = ssub.s32 1, %s4
  %s7 = scalar_select 0, %s6, %s4
  // Predicated region
  $region2: #{adavit_forward.8} parent=0 // pred_check
    _
  $region3: #{adavit_forward.8} parent=0 // pred_check_branch
    %9 = sbr.rel (0) target = $region5
  $region4: #{adavit_forward.8} parent=0 // pred_region
    _
  $region5: #{adavit_forward.8} parent=0 // pred_fallthru
    _
  // Predicated region
  $region6: #{adavit_forward.8} parent=0 // pred_check
    _
  $region7: #{adavit_forward.8} parent=0 // pred_check_branch
    %11 = sbr.rel (0) target = $region9
  $region8: #{adavit_forward.8} parent=0 // pred_region
    _
  $region9: #{adavit_forward.8} parent=0 // pred_fallthru
    _
  // Predicated region
  $region10: #{adavit_forward.8} parent=0 // pred_check
    _
  $region11: #{adavit_forward.8} parent=0 // pred_check_branch
    %13 = sbr.rel (0) target = $region13
  $region12: #{adavit_forward.8} parent=0 // pred_region
    _
  $region13: #{adavit_forward.8} parent=0 // pred_fallthru
    _
  %v15 = vld [vmem:[%s0] sm:$0xff]
  %v16 = vld [vmem:[%s1] sm:$0xff]
  %v17 = vld [vmem:[%s1 + $0x8] sm:$0xff]
  %v18 = vld [vmem:[%s1 + $0x10] sm:$0xff]
  %v19 = vld [vmem:[%s1 + $0x18] sm:$0xff]
  %v20 = vld [vmem:[%s1 + $0x20] sm:$0xff]
  %v21 = vld [vmem:[%s1 + $0x28] sm:$0xff]
  %v22 = vld [vmem:[%s1 + $0x30] sm:$0xff]
  %v23 = vld [vmem:[%s1 + $0x38] sm:$0xff]
  %v24 = vld [vmem:[%s1 + $0x40] sm:$0xff]
  %v25 = vld [vmem:[%s1 + $0x48] sm:$0xff]
  %v26 = vld [vmem:[%s1 + $0x50] sm:$0xff]
  %v27 = vld [vmem:[%s1 + $0x58] sm:$0xff]
  %v28 = vld [vmem:[%s1 + $0x60] sm:$0xff]
  %v29 = vld [vmem:[%s1 + $0x68] sm:$0xff]
  %v30 = vld [vmem:[%s1 + $0x70] sm:$0xff]
  %v31 = vld [vmem:[%s1 + $0x78] sm:$0xff]
  %v32 = vld [vmem:[%s1 + $0x80] sm:$0xff]
  %v33 = vld [vmem:[%s1 + $0x88] sm:$0xff]
  %v34 = vpack.c.bf16 %v17, %v16
  %v35 = vpack.c.bf16 %v19, %v18
  %v36 = vpack.c.bf16 %v21, %v20
  %v37 = vpack.c.bf16 %v23, %v22
  %v38 = vpack.c.bf16 %v25, %v24
  %v39 = vpack.c.bf16 %v27, %v26
  %v40 = vpack.c.bf16 %v29, %v28
  %v41 = vpack.c.bf16 %v31, %v30
  %v42 = vpack.c.bf16 %v33, %v32
  %v43 = vld [vmem:[%s2] sm:$0x1]
  %v45 = vlaneseq
  %v46 = vshrl.u32 %v45, 7
  %v47 = vsub.s32 0, %v46
  %v48 = vrot.slane %v43, %v47
  %v51 = vunpack.c.l.b16 %v15
  %v52 = vunpack.c.h.b16 %v15
  %v53 = vpack.c.b16 %v51, %v51
  %v54 = vpack.c.b16 %v52, %v52
  %vm56 = vcmask 130048
  %v58 = vsel %vm56, %v54, 0
  %60 = vmatprep.subr.bf16.mxu0 0
  %61 = vmatpush1.bf16.msra.mxu0 %v41
  %62 = vmatprep.subr.bf16.mxu0 0
  %63 = vmatpush1.bf16.msra.mxu0 %v40
  %64 = vmatprep.subr.bf16.mxu0 0
  %65 = vmatpush1.bf16.msra.mxu0 %v39
  %66 = vmatprep.subr.bf16.mxu0 0
  %67 = vmatpush1.bf16.msra.mxu0 %v38
  %68 = vmatprep.subr.bf16.mxu0 0
  %69 = vmatpush1.bf16.msra.mxu0 %v37
  %70 = vmatprep.subr.bf16.mxu0 0
  %71 = vmatpush1.bf16.msra.mxu0 %v36
  %72 = vmatprep.subr.bf16.mxu0 0
  %73 = vmatpush1.bf16.msra.mxu0 %v35
  %74 = vmatprep.subr.bf16.mxu0 0
  %75 = vmatpush1.bf16.msra.mxu0 %v34
  %76 = vmatprep.subr.bf16.mxu0 0
  %77 = vmatpush2.bf16.msra.mxu0 0
  %78 = vmatprep.subr.bf16.mxu0 0
  %79 = vmatpush2.bf16.msra.mxu0 0
  %80 = vmatprep.subr.bf16.mxu0 0
  %81 = vmatpush2.bf16.msra.mxu0 0
  %82 = vmatprep.subr.bf16.mxu0 0
  %83 = vmatpush2.bf16.msra.mxu0 0
  %84 = vmatprep.subr.bf16.mxu0 0
  %85 = vmatpush2.bf16.msra.mxu0 0
  %86 = vmatprep.subr.bf16.mxu0 0
  %87 = vmatpush2.bf16.msra.mxu0 0
  %88 = vmatprep.subr.bf16.mxu0 0
  %89 = vmatpush2.bf16.msra.mxu0 0
  %90 = vmatprep.subr.bf16.mxu0 0
  %91 = vmatpush2.bf16.msra.mxu0 %v42
  %92 = vmatprep.mubr.bf16.mxu0 %v58
  %93 = vmatmul.mubr.bf16.gmra.mxu0 %v53
  %v94 = vpop.f32.mrf.mxu0
  %v95 = vadd.f32 %v48, %v94
  %v96 = vpop.f32.mrf.mxu0
  %v97 = vpop.f32.mrf.mxu0
  %v98 = vpop.f32.mrf.mxu0
  %99 = vdwg.mxu0
  %v100 = vpack.c.bf16 %v95, %v95
  %vm101 = vcmask 519168
  %102 = vst.msk [vmem:[%s3] sm:$0xf] %vm101, %v100
  // Predicated region
  $region14: #{adavit_forward.8} parent=0 // pred_check
    _
  $region15: #{adavit_forward.8} parent=0 // pred_check_branch
    %104 = sbr.rel (0) target = $region17
  $region16: #{adavit_forward.8} parent=0 // pred_region
    _
  $region17: #{adavit_forward.8} parent=0 // pred_fallthru
    _
  // Predicated region
  $region18: #{adavit_forward.8} parent=0 // pred_check
    _
  $region19: #{adavit_forward.8} parent=0 // pred_check_branch
    %106 = sbr.rel (0) target = $region21
  $region20: #{adavit_forward.8} parent=0 // pred_region
    _
  $region21: #{adavit_forward.8} parent=0 // pred_fallthru
    _

// kernel: adavit_forward.6
$region0: #{adavit_forward.6}
  #allocation0 [shape = 'u32[]', space=smem, size = 0x4, offset = 0x4, fixed_abs, tag = 'smem constant byte address 0x4 - core index']
  #allocation1 [shape = 'u32[144,128]{1,0:T(1,128)}', space=vmem, size = 0x12000, scoped, tag = 'internal scratch']
  %s0 = inlined_call_operand.vmem [shape: f32[2,64,147], index: 0, kind: input, shape index: {}]
  %s1 = inlined_call_operand.vmem [shape: f32[1,147], index: 1, kind: input, shape index: {}]
  %s2 = inlined_call_operand.vmem [shape: f32[1,147], index: 2, kind: input, shape index: {}]
  %s3 = inlined_call_operand.vmem [shape: f32[147,48], index: 3, kind: input, shape index: {}]
  %s4 = inlined_call_operand.vmem [shape: f32[1,48], index: 4, kind: input, shape index: {}]
  %s5 = inlined_call_operand.vmem [shape: f32[16,8], index: 5, kind: input, shape index: {}]
  %s6 = inlined_call_operand.vmem [shape: f32[16,16], index: 6, kind: input, shape index: {}]
  %s7 = inlined_call_operand.vmem [shape: f32[1,16], index: 7, kind: input, shape index: {}]
  %s8 = inlined_call_operand.vmem [shape: f32[1,16], index: 8, kind: input, shape index: {}]
  %s9 = inlined_call_operand.vmem [shape: f32[1,16], index: 9, kind: input, shape index: {}]
  %s10 = inlined_call_operand.vmem [shape: f32[16,16], index: 10, kind: input, shape index: {}]
  %s11 = inlined_call_operand.vmem [shape: f32[1,16], index: 11, kind: input, shape index: {}]
  %s12 = inlined_call_operand.vmem [shape: f32[16,16], index: 12, kind: input, shape index: {}]
  %s13 = inlined_call_operand.vmem [shape: f32[1,16], index: 13, kind: input, shape index: {}]
  %s14 = inlined_call_operand.vmem [shape: bf16[2,64,16], index: 14, kind: output, shape index: {}]
  %s15 = sld [smem:[#allocation0]]
  $region66: #{adavit_forward.6} parent=0
    _
  %s17 = ssub.s32 1, %s15
  %s18 = scalar_select 0, %s17, %s15
  // Predicated region
  $region2: #{adavit_forward.6} parent=0 // pred_check
    _
  $region3: #{adavit_forward.6} parent=0 // pred_check_branch
    %20 = sbr.rel (0) target = $region5
  $region4: #{adavit_forward.6} parent=0 // pred_region
    _
  $region5: #{adavit_forward.6} parent=0 // pred_fallthru
    _
  // Predicated region
  $region6: #{adavit_forward.6} parent=0 // pred_check
    _
  $region7: #{adavit_forward.6} parent=0 // pred_check_branch
    %22 = sbr.rel (0) target = $region9
  $region8: #{adavit_forward.6} parent=0 // pred_region
    _
  $region9: #{adavit_forward.6} parent=0 // pred_fallthru
    _
  // Predicated region
  $region10: #{adavit_forward.6} parent=0 // pred_check
    _
  $region11: #{adavit_forward.6} parent=0 // pred_check_branch
    %24 = sbr.rel (0) target = $region13
  $region12: #{adavit_forward.6} parent=0 // pred_region
    _
  $region13: #{adavit_forward.6} parent=0 // pred_fallthru
    _
  // Predicated region
  $region14: #{adavit_forward.6} parent=0 // pred_check
    _
  $region15: #{adavit_forward.6} parent=0 // pred_check_branch
    %26 = sbr.rel (0) target = $region17
  $region16: #{adavit_forward.6} parent=0 // pred_region
    _
  $region17: #{adavit_forward.6} parent=0 // pred_fallthru
    _
  // Predicated region
  $region18: #{adavit_forward.6} parent=0 // pred_check
    _
  $region19: #{adavit_forward.6} parent=0 // pred_check_branch
    %28 = sbr.rel (0) target = $region21
  $region20: #{adavit_forward.6} parent=0 // pred_region
    _
  $region21: #{adavit_forward.6} parent=0 // pred_fallthru
    _
  // Predicated region
  $region22: #{adavit_forward.6} parent=0 // pred_check
    _
  $region23: #{adavit_forward.6} parent=0 // pred_check_branch
    %30 = sbr.rel (0) target = $region25
  $region24: #{adavit_forward.6} parent=0 // pred_region
    _
  $region25: #{adavit_forward.6} parent=0 // pred_fallthru
    _
  // Predicated region
  $region26: #{adavit_forward.6} parent=0 // pred_check
    _
  $region27: #{adavit_forward.6} parent=0 // pred_check_branch
    %32 = sbr.rel (0) target = $region29
  $region28: #{adavit_forward.6} parent=0 // pred_region
    _
  $region29: #{adavit_forward.6} parent=0 // pred_fallthru
    _
  // Predicated region
  $region30: #{adavit_forward.6} parent=0 // pred_check
    _
  $region31: #{adavit_forward.6} parent=0 // pred_check_branch
    %34 = sbr.rel (0) target = $region33
  $region32: #{adavit_forward.6} parent=0 // pred_region
    _
  $region33: #{adavit_forward.6} parent=0 // pred_fallthru
    _
  // Predicated region
  $region34: #{adavit_forward.6} parent=0 // pred_check
    _
  $region35: #{adavit_forward.6} parent=0 // pred_check_branch
    %36 = sbr.rel (0) target = $region37
  $region36: #{adavit_forward.6} parent=0 // pred_region
    _
  $region37: #{adavit_forward.6} parent=0 // pred_fallthru
    _
  // Predicated region
  $region38: #{adavit_forward.6} parent=0 // pred_check
    _
  $region39: #{adavit_forward.6} parent=0 // pred_check_branch
    %38 = sbr.rel (0) target = $region41
  $region40: #{adavit_forward.6} parent=0 // pred_region
    _
  $region41: #{adavit_forward.6} parent=0 // pred_fallthru
    _
  // Predicated region
  $region42: #{adavit_forward.6} parent=0 // pred_check
    _
  $region43: #{adavit_forward.6} parent=0 // pred_check_branch
    %40 = sbr.rel (0) target = $region45
  $region44: #{adavit_forward.6} parent=0 // pred_region
    _
  $region45: #{adavit_forward.6} parent=0 // pred_fallthru
    _
  // Predicated region
  $region46: #{adavit_forward.6} parent=0 // pred_check
    _
  $region47: #{adavit_forward.6} parent=0 // pred_check_branch
    %42 = sbr.rel (0) target = $region49
  $region48: #{adavit_forward.6} parent=0 // pred_region
    _
  $region49: #{adavit_forward.6} parent=0 // pred_fallthru
    _
  // Predicated region
  $region50: #{adavit_forward.6} parent=0 // pred_check
    _
  $region51: #{adavit_forward.6} parent=0 // pred_check_branch
    %44 = sbr.rel (0) target = $region53
  $region52: #{adavit_forward.6} parent=0 // pred_region
    _
  $region53: #{adavit_forward.6} parent=0 // pred_fallthru
    _
  // Predicated region
  $region54: #{adavit_forward.6} parent=0 // pred_check
    _
  $region55: #{adavit_forward.6} parent=0 // pred_check_branch
    %46 = sbr.rel (0) target = $region57
  $region56: #{adavit_forward.6} parent=0 // pred_region
    _
  $region57: #{adavit_forward.6} parent=0 // pred_fallthru
    _
  %v48 = vld [vmem:[%s0] sm:$0xff]
  %v49 = vld [vmem:[%s0 + $0x8] sm:$0xff]
  %v50 = vld [vmem:[%s0 + $0x10] sm:$0xff]
  %v51 = vld [vmem:[%s0 + $0x18] sm:$0xff]
  %v52 = vld [vmem:[%s0 + $0x20] sm:$0xff]
  %v53 = vld [vmem:[%s0 + $0x28] sm:$0xff]
  %v54 = vld [vmem:[%s0 + $0x30] sm:$0xff]
  %v55 = vld [vmem:[%s0 + $0x38] sm:$0xff]
  %v56 = vld [vmem:[%s0 + $0x40] sm:$0xff]
  %v57 = vld [vmem:[%s0 + $0x48] sm:$0xff]
  %v58 = vld [vmem:[%s0 + $0x50] sm:$0xff]
  %v59 = vld [vmem:[%s0 + $0x58] sm:$0xff]
  %v60 = vld [vmem:[%s0 + $0x60] sm:$0xff]
  %v61 = vld [vmem:[%s0 + $0x68] sm:$0xff]
  %v62 = vld [vmem:[%s0 + $0x70] sm:$0xff]
  %v63 = vld [vmem:[%s0 + $0x78] sm:$0xff]
  %v64 = vld [vmem:[%s0 + $0x80] sm:$0xff]
  %v65 = vld [vmem:[%s0 + $0x88] sm:$0xff]
  %v66 = vld [vmem:[%s0 + $0x90] sm:$0xff]
  %v67 = vld [vmem:[%s0 + $0x98] sm:$0xff]
  %v68 = vld [vmem:[%s0 + $0xa0] sm:$0xff]
  %v69 = vld [vmem:[%s0 + $0xa8] sm:$0xff]
  %v70 = vld [vmem:[%s0 + $0xb0] sm:$0xff]
  %v71 = vld [vmem:[%s0 + $0xb8] sm:$0xff]
  %v72 = vld [vmem:[%s0 + $0xc0] sm:$0xff]
  %v73 = vld [vmem:[%s0 + $0xc8] sm:$0xff]
  %v74 = vld [vmem:[%s0 + $0xd0] sm:$0xff]
  %v75 = vld [vmem:[%s0 + $0xd8] sm:$0xff]
  %v76 = vld [vmem:[%s0 + $0xe0] sm:$0xff]
  %v77 = vld [vmem:[%s0 + $0xe8] sm:$0xff]
  %v78 = vld [vmem:[%s0 + $0xf0] sm:$0xff]
  %v79 = vld [vmem:[%s0 + $0xf8] sm:$0xff]
  %v80 = vld [vmem:[%s1] sm:$0x3]
  %v81 = vld [vmem:[%s2] sm:$0x3]
  %v82 = vld [vmem:[%s8] sm:$0x1]
  %v83 = vld [vmem:[%s9] sm:$0x1]
  %v84 = vld [vmem:[%s4] sm:$0x1]
  %v85 = vld [vmem:[%s7] sm:$0x1]
  %v86 = vld [vmem:[%s11] sm:$0x1]
  %v87 = vld [vmem:[%s13] sm:$0x1]
  %v88 = vld [vmem:[%s6] sm:$0xff]
  %v89 = vld [vmem:[%s6 + $0x8] sm:$0xff]
  %v90 = vld [vmem:[%s10] sm:$0xff]
  %v91 = vld [vmem:[%s10 + $0x8] sm:$0xff]
  %v92 = vld [vmem:[%s12] sm:$0xff]
  %v93 = vld [vmem:[%s12 + $0x8] sm:$0xff]
  %v94 = vld [vmem:[%s5] sm:$0xff]
  %v95 = vld [vmem:[%s5 + $0x8] sm:$0xff]
  %vm96 = vcmask 154624
  %v97 = vsel %vm96, %v49, 0.0
  %v98 = vadd.f32 %v48, %v97
  %99 = vadd.xlane.f32.xlu0 %v98
  %v100 = vpop.xlane.xlu0 %99
  %v101 = vsel %vm96, %v51, 0.0
  %v102 = vadd.f32 %v50, %v101
  %103 = vadd.xlane.f32.xlu0 %v102
  %v104 = vpop.xlane.xlu0 %103
  %v105 = vsel %vm96, %v53, 0.0
  %v106 = vadd.f32 %v52, %v105
  %107 = vadd.xlane.f32.xlu0 %v106
  %v108 = vpop.xlane.xlu0 %107
  %v109 = vsel %vm96, %v55, 0.0
  %v110 = vadd.f32 %v54, %v109
  %111 = vadd.xlane.f32.xlu0 %v110
  %v112 = vpop.xlane.xlu0 %111
  %v113 = vsel %vm96, %v57, 0.0
  %v114 = vadd.f32 %v56, %v113
  %115 = vadd.xlane.f32.xlu0 %v114
  %v116 = vpop.xlane.xlu0 %115
  %v117 = vsel %vm96, %v59, 0.0
  %v118 = vadd.f32 %v58, %v117
  %119 = vadd.xlane.f32.xlu0 %v118
  %v120 = vpop.xlane.xlu0 %119
  %v121 = vsel %vm96, %v61, 0.0
  %v122 = vadd.f32 %v60, %v121
  %123 = vadd.xlane.f32.xlu0 %v122
  %v124 = vpop.xlane.xlu0 %123
  %v125 = vsel %vm96, %v63, 0.0
  %v126 = vadd.f32 %v62, %v125
  %127 = vadd.xlane.f32.xlu0 %v126
  %v128 = vpop.xlane.xlu0 %127
  %v129 = vsel %vm96, %v65, 0.0
  %v130 = vadd.f32 %v64, %v129
  %131 = vadd.xlane.f32.xlu0 %v130
  %v132 = vpop.xlane.xlu0 %131
  %v133 = vsel %vm96, %v67, 0.0
  %v134 = vadd.f32 %v66, %v133
  %135 = vadd.xlane.f32.xlu0 %v134
  %v136 = vpop.xlane.xlu0 %135
  %v137 = vsel %vm96, %v69, 0.0
  %v138 = vadd.f32 %v68, %v137
  %139 = vadd.xlane.f32.xlu0 %v138
  %v140 = vpop.xlane.xlu0 %139
  %v141 = vsel %vm96, %v71, 0.0
  %v142 = vadd.f32 %v70, %v141
  %143 = vadd.xlane.f32.xlu0 %v142
  %v144 = vpop.xlane.xlu0 %143
  %v145 = vsel %vm96, %v73, 0.0
  %v146 = vadd.f32 %v72, %v145
  %147 = vadd.xlane.f32.xlu0 %v146
  %v148 = vpop.xlane.xlu0 %147
  %v149 = vsel %vm96, %v75, 0.0
  %v150 = vadd.f32 %v74, %v149
  %151 = vadd.xlane.f32.xlu0 %v150
  %v152 = vpop.xlane.xlu0 %151
  %v153 = vsel %vm96, %v77, 0.0
  %v154 = vadd.f32 %v76, %v153
  %155 = vadd.xlane.f32.xlu0 %v154
  %v156 = vpop.xlane.xlu0 %155
  %v157 = vsel %vm96, %v79, 0.0
  %v158 = vadd.f32 %v78, %v157
  %159 = vadd.xlane.f32.xlu0 %v158
  %v160 = vpop.xlane.xlu0 %159
  %v161 = vrcp.pop 147.0
  %v162 = vmul.f32 %v100, %v161
  %v163 = vmul.f32 %v104, %v161
  %v164 = vmul.f32 %v108, %v161
  %v165 = vmul.f32 %v112, %v161
  %v166 = vmul.f32 %v116, %v161
  %v167 = vmul.f32 %v120, %v161
  %v168 = vmul.f32 %v124, %v161
  %v169 = vmul.f32 %v128, %v161
  %v170 = vmul.f32 %v132, %v161
  %v171 = vmul.f32 %v136, %v161
  %v172 = vmul.f32 %v140, %v161
  %v173 = vmul.f32 %v144, %v161
  %v174 = vmul.f32 %v148, %v161
  %v175 = vmul.f32 %v152, %v161
  %v176 = vmul.f32 %v156, %v161
  %v177 = vmul.f32 %v160, %v161
  %v178 = vsub.f32 %v48, %v162
  %v179 = vsub.f32 %v49, %v162
  %v180 = vsub.f32 %v50, %v163
  %v181 = vsub.f32 %v51, %v163
  %v182 = vsub.f32 %v52, %v164
  %v183 = vsub.f32 %v53, %v164
  %v184 = vsub.f32 %v54, %v165
  %v185 = vsub.f32 %v55, %v165
  %v186 = vsub.f32 %v56, %v166
  %v187 = vsub.f32 %v57, %v166
  %v188 = vsub.f32 %v58, %v167
  %v189 = vsub.f32 %v59, %v167
  %v190 = vsub.f32 %v60, %v168
  %v191 = vsub.f32 %v61, %v168
  %v192 = vsub.f32 %v62, %v169
  %v193 = vsub.f32 %v63, %v169
  %v194 = vsub.f32 %v64, %v170
  %v195 = vsub.f32 %v65, %v170
  %v196 = vsub.f32 %v66, %v171
  %v197 = vsub.f32 %v67, %v171
  %v198 = vsub.f32 %v68, %v172
  %v199 = vsub.f32 %v69, %v172
  %v200 = vsub.f32 %v70, %v173
  %v201 = vsub.f32 %v71, %v173
  %v202 = vsub.f32 %v72, %v174
  %v203 = vsub.f32 %v73, %v174
  %v204 = vsub.f32 %v74, %v175
  %v205 = vsub.f32 %v75, %v175
  %v206 = vsub.f32 %v76, %v176
  %v207 = vsub.f32 %v77, %v176
  %v208 = vsub.f32 %v78, %v177
  %v209 = vsub.f32 %v79, %v177
  %v210 = vmul.f32 %v178, %v178
  %v211 = vmul.f32 %v179, %v179
  %v212 = vmul.f32 %v180, %v180
  %v213 = vmul.f32 %v181, %v181
  %v214 = vmul.f32 %v182, %v182
  %v215 = vmul.f32 %v183, %v183
  %v216 = vmul.f32 %v184, %v184
  %v217 = vmul.f32 %v185, %v185
  %v218 = vmul.f32 %v186, %v186
  %v219 = vmul.f32 %v187, %v187
  %v220 = vmul.f32 %v188, %v188
  %v221 = vmul.f32 %v189, %v189
  %v222 = vmul.f32 %v190, %v190
  %v223 = vmul.f32 %v191, %v191
  %v224 = vmul.f32 %v192, %v192
  %v225 = vmul.f32 %v193, %v193
  %v226 = vmul.f32 %v194, %v194
  %v227 = vmul.f32 %v195, %v195
  %v228 = vmul.f32 %v196, %v196
  %v229 = vmul.f32 %v197, %v197
  %v230 = vmul.f32 %v198, %v198
  %v231 = vmul.f32 %v199, %v199
  %v232 = vmul.f32 %v200, %v200
  %v233 = vmul.f32 %v201, %v201
  %v234 = vmul.f32 %v202, %v202
  %v235 = vmul.f32 %v203, %v203
  %v236 = vmul.f32 %v204, %v204
  %v237 = vmul.f32 %v205, %v205
  %v238 = vmul.f32 %v206, %v206
  %v239 = vmul.f32 %v207, %v207
  %v240 = vmul.f32 %v208, %v208
  %v241 = vmul.f32 %v209, %v209
  %v242 = vsel %vm96, %v211, 0.0
  %v243 = vadd.f32 %v210, %v242
  %244 = vadd.xlane.f32.xlu0 %v243
  %v245 = vpop.xlane.xlu0 %244
  %v246 = vsel %vm96, %v213, 0.0
  %v247 = vadd.f32 %v212, %v246
  %248 = vadd.xlane.f32.xlu0 %v247
  %v249 = vpop.xlane.xlu0 %248
  %v250 = vsel %vm96, %v215, 0.0
  %v251 = vadd.f32 %v214, %v250
  %252 = vadd.xlane.f32.xlu0 %v251
  %v253 = vpop.xlane.xlu0 %252
  %v254 = vsel %vm96, %v217, 0.0
  %v255 = vadd.f32 %v216, %v254
  %256 = vadd.xlane.f32.xlu0 %v255
  %v257 = vpop.xlane.xlu0 %256
  %v258 = vsel %vm96, %v219, 0.0
  %v259 = vadd.f32 %v218, %v258
  %260 = vadd.xlane.f32.xlu0 %v259
  %v261 = vpop.xlane.xlu0 %260
  %v262 = vsel %vm96, %v221, 0.0
  %v263 = vadd.f32 %v220, %v262
  %264 = vadd.xlane.f32.xlu0 %v263
  %v265 = vpop.xlane.xlu0 %264
  %v266 = vsel %vm96, %v223, 0.0
  %v267 = vadd.f32 %v222, %v266
  %268 = vadd.xlane.f32.xlu0 %v267
  %v269 = vpop.xlane.xlu0 %268
  %v270 = vsel %vm96, %v225, 0.0
  %v271 = vadd.f32 %v224, %v270
  %272 = vadd.xlane.f32.xlu0 %v271
  %v273 = vpop.xlane.xlu0 %272
  %v274 = vsel %vm96, %v227, 0.0
  %v275 = vadd.f32 %v226, %v274
  %276 = vadd.xlane.f32.xlu0 %v275
  %v277 = vpop.xlane.xlu0 %276
  %v278 = vsel %vm96, %v229, 0.0
  %v279 = vadd.f32 %v228, %v278
  %280 = vadd.xlane.f32.xlu0 %v279
  %v281 = vpop.xlane.xlu0 %280
  %v282 = vsel %vm96, %v231, 0.0
  %v283 = vadd.f32 %v230, %v282
  %284 = vadd.xlane.f32.xlu0 %v283
  %v285 = vpop.xlane.xlu0 %284
  %v286 = vsel %vm96, %v233, 0.0
  %v287 = vadd.f32 %v232, %v286
  %288 = vadd.xlane.f32.xlu0 %v287
  %v289 = vpop.xlane.xlu0 %288
  %v290 = vsel %vm96, %v235, 0.0
  %v291 = vadd.f32 %v234, %v290
  %292 = vadd.xlane.f32.xlu0 %v291
  %v293 = vpop.xlane.xlu0 %292
  %v294 = vsel %vm96, %v237, 0.0
  %v295 = vadd.f32 %v236, %v294
  %296 = vadd.xlane.f32.xlu0 %v295
  %v297 = vpop.xlane.xlu0 %296
  %v298 = vsel %vm96, %v239, 0.0
  %v299 = vadd.f32 %v238, %v298
  %300 = vadd.xlane.f32.xlu0 %v299
  %v301 = vpop.xlane.xlu0 %300
  %v302 = vsel %vm96, %v241, 0.0
  %v303 = vadd.f32 %v240, %v302
  %304 = vadd.xlane.f32.xlu0 %v303
  %v305 = vpop.xlane.xlu0 %304
  %v306 = vmul.f32 %v245, %v161
  %v307 = vmul.f32 %v249, %v161
  %v308 = vmul.f32 %v253, %v161
  %v309 = vmul.f32 %v257, %v161
  %v310 = vmul.f32 %v261, %v161
  %v311 = vmul.f32 %v265, %v161
  %v312 = vmul.f32 %v269, %v161
  %v313 = vmul.f32 %v273, %v161
  %v314 = vmul.f32 %v277, %v161
  %v315 = vmul.f32 %v281, %v161
  %v316 = vmul.f32 %v285, %v161
  %v317 = vmul.f32 %v289, %v161
  %v318 = vmul.f32 %v293, %v161
  %v319 = vmul.f32 %v297, %v161
  %v320 = vmul.f32 %v301, %v161
  %v321 = vmul.f32 %v305, %v161
  %v322 = vadd.f32 %v306, 1e-05
  %v323 = vadd.f32 %v307, 1e-05
  %v324 = vadd.f32 %v308, 1e-05
  %v325 = vadd.f32 %v309, 1e-05
  %v326 = vadd.f32 %v310, 1e-05
  %v327 = vadd.f32 %v311, 1e-05
  %v328 = vadd.f32 %v312, 1e-05
  %v329 = vadd.f32 %v313, 1e-05
  %v330 = vadd.f32 %v314, 1e-05
  %v331 = vadd.f32 %v315, 1e-05
  %v332 = vadd.f32 %v316, 1e-05
  %v333 = vadd.f32 %v317, 1e-05
  %v334 = vadd.f32 %v318, 1e-05
  %v335 = vadd.f32 %v319, 1e-05
  %v336 = vadd.f32 %v320, 1e-05
  %v337 = vadd.f32 %v321, 1e-05
  %v338 = vrsqrt.pop %v322
  %v339 = vrsqrt.pop %v323
  %v340 = vrsqrt.pop %v324
  %v341 = vrsqrt.pop %v325
  %v342 = vrsqrt.pop %v326
  %v343 = vrsqrt.pop %v327
  %v344 = vrsqrt.pop %v328
  %v345 = vrsqrt.pop %v329
  %v346 = vrsqrt.pop %v330
  %v347 = vrsqrt.pop %v331
  %v348 = vrsqrt.pop %v332
  %v349 = vrsqrt.pop %v333
  %v350 = vrsqrt.pop %v334
  %v351 = vrsqrt.pop %v335
  %v352 = vrsqrt.pop %v336
  %v353 = vrsqrt.pop %v337
  %v354 = vmul.f32 %v178, %v338
  %v355 = vmul.f32 %v179, %v338
  %v356 = vmul.f32 %v180, %v339
  %v357 = vmul.f32 %v181, %v339
  %v358 = vmul.f32 %v182, %v340
  %v359 = vmul.f32 %v183, %v340
  %v360 = vmul.f32 %v184, %v341
  %v361 = vmul.f32 %v185, %v341
  %v362 = vmul.f32 %v186, %v342
  %v363 = vmul.f32 %v187, %v342
  %v364 = vmul.f32 %v188, %v343
  %v365 = vmul.f32 %v189, %v343
  %v366 = vmul.f32 %v190, %v344
  %v367 = vmul.f32 %v191, %v344
  %v368 = vmul.f32 %v192, %v345
  %v369 = vmul.f32 %v193, %v345
  %v370 = vmul.f32 %v194, %v346
  %v371 = vmul.f32 %v195, %v346
  %v372 = vmul.f32 %v196, %v347
  %v373 = vmul.f32 %v197, %v347
  %v374 = vmul.f32 %v198, %v348
  %v375 = vmul.f32 %v199, %v348
  %v376 = vmul.f32 %v200, %v349
  %v377 = vmul.f32 %v201, %v349
  %v378 = vmul.f32 %v202, %v350
  %v379 = vmul.f32 %v203, %v350
  %v380 = vmul.f32 %v204, %v351
  %v381 = vmul.f32 %v205, %v351
  %v382 = vmul.f32 %v206, %v352
  %v383 = vmul.f32 %v207, %v352
  %v384 = vmul.f32 %v208, %v353
  %v385 = vmul.f32 %v209, %v353
  %v387 = vlaneseq
  %v388 = vshrl.u32 %v387, 7
  %v389 = vsub.s32 0, %v388
  %v390 = vrot.slane %v80, %v389
  %v391 = vlaneseq
  %v392 = vshrl.u32 %v391, 7
  %v393 = vsub.s32 1, %v392
  %v394 = vrot.slane %v80, %v393
  %v397 = vmul.f32 %v354, %v390
  %v398 = vmul.f32 %v355, %v394
  %v399 = vmul.f32 %v356, %v390
  %v400 = vmul.f32 %v357, %v394
  %v401 = vmul.f32 %v358, %v390
  %v402 = vmul.f32 %v359, %v394
  %v403 = vmul.f32 %v360, %v390
  %v404 = vmul.f32 %v361, %v394
  %v405 = vmul.f32 %v362, %v390
  %v406 = vmul.f32 %v363, %v394
  %v407 = vmul.f32 %v364, %v390
  %v408 = vmul.f32 %v365, %v394
  %v409 = vmul.f32 %v366, %v390
  %v410 = vmul.f32 %v367, %v394
  %v411 = vmul.f32 %v368, %v390
  %v412 = vmul.f32 %v369, %v394
  %v413 = vmul.f32 %v370, %v390
  %v414 = vmul.f32 %v371, %v394
  %v415 = vmul.f32 %v372, %v390
  %v416 = vmul.f32 %v373, %v394
  %v417 = vmul.f32 %v374, %v390
  %v418 = vmul.f32 %v375, %v394
  %v419 = vmul.f32 %v376, %v390
  %v420 = vmul.f32 %v377, %v394
  %v421 = vmul.f32 %v378, %v390
  %v422 = vmul.f32 %v379, %v394
  %v423 = vmul.f32 %v380, %v390
  %v424 = vmul.f32 %v381, %v394
  %v425 = vmul.f32 %v382, %v390
  %v426 = vmul.f32 %v383, %v394
  %v427 = vmul.f32 %v384, %v390
  %v428 = vmul.f32 %v385, %v394
  %v430 = vlaneseq
  %v431 = vshrl.u32 %v430, 7
  %v432 = vsub.s32 0, %v431
  %v433 = vrot.slane %v81, %v432
  %v434 = vlaneseq
  %v435 = vshrl.u32 %v434, 7
  %v436 = vsub.s32 1, %v435
  %v437 = vrot.slane %v81, %v436
  %v440 = vadd.f32 %v397, %v433
  %v441 = vadd.f32 %v398, %v437
  %v442 = vadd.f32 %v399, %v433
  %v443 = vadd.f32 %v400, %v437
  %v444 = vadd.f32 %v401, %v433
  %v445 = vadd.f32 %v402, %v437
  %v446 = vadd.f32 %v403, %v433
  %v447 = vadd.f32 %v404, %v437
  %v448 = vadd.f32 %v405, %v433
  %v449 = vadd.f32 %v406, %v437
  %v450 = vadd.f32 %v407, %v433
  %v451 = vadd.f32 %v408, %v437
  %v452 = vadd.f32 %v409, %v433
  %v453 = vadd.f32 %v410, %v437
  %v454 = vadd.f32 %v411, %v433
  %v455 = vadd.f32 %v412, %v437
  %v456 = vadd.f32 %v413, %v433
  %v457 = vadd.f32 %v414, %v437
  %v458 = vadd.f32 %v415, %v433
  %v459 = vadd.f32 %v416, %v437
  %v460 = vadd.f32 %v417, %v433
  %v461 = vadd.f32 %v418, %v437
  %v462 = vadd.f32 %v419, %v433
  %v463 = vadd.f32 %v420, %v437
  %v464 = vadd.f32 %v421, %v433
  %v465 = vadd.f32 %v422, %v437
  %v466 = vadd.f32 %v423, %v433
  %v467 = vadd.f32 %v424, %v437
  %v468 = vadd.f32 %v425, %v433
  %v469 = vadd.f32 %v426, %v437
  %v470 = vadd.f32 %v427, %v433
  %v471 = vadd.f32 %v428, %v437
  %v472 = vld [vmem:[%s3] sm:$0xff]
  %v473 = vld [vmem:[%s3 + $0x8] sm:$0xff]
  %v474 = vld [vmem:[%s3 + $0x10] sm:$0xff]
  %v475 = vld [vmem:[%s3 + $0x18] sm:$0xff]
  %v476 = vld [vmem:[%s3 + $0x20] sm:$0xff]
  %v477 = vld [vmem:[%s3 + $0x28] sm:$0xff]
  %v478 = vld [vmem:[%s3 + $0x30] sm:$0xff]
  %v479 = vld [vmem:[%s3 + $0x38] sm:$0xff]
  %v480 = vld [vmem:[%s3 + $0x40] sm:$0xff]
  %v481 = vld [vmem:[%s3 + $0x48] sm:$0xff]
  %v482 = vld [vmem:[%s3 + $0x50] sm:$0xff]
  %v483 = vld [vmem:[%s3 + $0x58] sm:$0xff]
  %v484 = vld [vmem:[%s3 + $0x60] sm:$0xff]
  %v485 = vld [vmem:[%s3 + $0x68] sm:$0xff]
  %v486 = vld [vmem:[%s3 + $0x70] sm:$0xff]
  %v487 = vld [vmem:[%s3 + $0x78] sm:$0xff]
  %v488 = vld [vmem:[%s3 + $0x80] sm:$0xff]
  %v489 = vld [vmem:[%s3 + $0x88] sm:$0xff]
  %v490 = vld [vmem:[%s3 + $0x90] sm:$0x7]
  %v491 = vpack.c.bf16 %v442, %v440
  %v492 = vpack.c.bf16 %v443, %v441
  %v493 = vpack.c.bf16 %v446, %v444
  %v494 = vpack.c.bf16 %v447, %v445
  %v495 = vpack.c.bf16 %v450, %v448
  %v496 = vpack.c.bf16 %v451, %v449
  %v497 = vpack.c.bf16 %v454, %v452
  %v498 = vpack.c.bf16 %v455, %v453
  %v499 = vpack.c.bf16 %v458, %v456
  %v500 = vpack.c.bf16 %v459, %v457
  %v501 = vpack.c.bf16 %v462, %v460
  %v502 = vpack.c.bf16 %v463, %v461
  %v503 = vpack.c.bf16 %v466, %v464
  %v504 = vpack.c.bf16 %v467, %v465
  %v505 = vpack.c.bf16 %v470, %v468
  %v506 = vpack.c.bf16 %v471, %v469
  %v507 = vpack.c.bf16 %v473, %v472
  %v508 = vpack.c.bf16 %v475, %v474
  %v509 = vpack.c.bf16 %v477, %v476
  %v510 = vpack.c.bf16 %v479, %v478
  %v511 = vpack.c.bf16 %v481, %v480
  %v512 = vpack.c.bf16 %v483, %v482
  %v513 = vpack.c.bf16 %v485, %v484
  %v514 = vpack.c.bf16 %v487, %v486
  %v515 = vpack.c.bf16 %v489, %v488
  %v516 = vpack.c.bf16 %v490, %v490
  %v518 = vlaneseq
  %v519 = vshrl.u32 %v518, 7
  %v520 = vsub.s32 0, %v519
  %v521 = vrot.slane %v84, %v520
  %v524 = vsel %vm96, %v492, 0
  %v527 = vsel %vm96, %v494, 0
  %v530 = vsel %vm96, %v496, 0
  %v533 = vsel %vm96, %v498, 0
  %v536 = vsel %vm96, %v500, 0
  %v539 = vsel %vm96, %v502, 0
  %v542 = vsel %vm96, %v504, 0
  %v545 = vsel %vm96, %v506, 0
  %vm547 = vcmask 1040384
  %vm548 = vcmask 1041408
  %v549 = vsel %vm547, 4294967295, 65535
  %v550 = vsel %vm548, %v549, 0
  %v552 = vand.u32 %v516, %v550
  %554 = vmatprep.subr.bf16.mxu0 0
  %555 = vmatpush1.bf16.msra.mxu0 %v514
  %556 = vmatprep.subr.bf16.mxu0 0
  %557 = vmatpush1.bf16.msra.mxu0 %v513
  %558 = vmatprep.subr.bf16.mxu0 0
  %559 = vmatpush1.bf16.msra.mxu0 %v512
  %560 = vmatprep.subr.bf16.mxu0 0
  %561 = vmatpush1.bf16.msra.mxu0 %v511
  %562 = vmatprep.subr.bf16.mxu0 0
  %563 = vmatpush1.bf16.msra.mxu0 %v510
  %564 = vmatprep.subr.bf16.mxu0 0
  %565 = vmatpush1.bf16.msra.mxu0 %v509
  %566 = vmatprep.subr.bf16.mxu0 0
  %567 = vmatpush1.bf16.msra.mxu0 %v508
  %568 = vmatprep.subr.bf16.mxu0 0
  %569 = vmatpush1.bf16.msra.mxu0 %v507
  %570 = vmatprep.subr.bf16.mxu0 0
  %571 = vmatpush2.bf16.msra.mxu0 0
  %572 = vmatprep.subr.bf16.mxu0 0
  %573 = vmatpush2.bf16.msra.mxu0 0
  %574 = vmatprep.subr.bf16.mxu0 0
  %575 = vmatpush2.bf16.msra.mxu0 0
  %576 = vmatprep.subr.bf16.mxu0 0
  %577 = vmatpush2.bf16.msra.mxu0 0
  %578 = vmatprep.subr.bf16.mxu0 0
  %579 = vmatpush2.bf16.msra.mxu0 0
  %580 = vmatprep.subr.bf16.mxu0 0
  %581 = vmatpush2.bf16.msra.mxu0 0
  %582 = vmatprep.subr.bf16.mxu0 0
  %583 = vmatpush2.bf16.msra.mxu0 %v552
  %584 = vmatprep.subr.bf16.mxu0 0
  %585 = vmatpush2.bf16.msra.mxu0 %v515
  %586 = vmatprep.mubr.bf16.mxu0 %v524
  %587 = vmatmul.mubr.bf16.gmra.mxu0 %v491
  %v588 = vpop.f32.mrf.mxu0
  %v589 = vadd.f32 %v521, %v588
  %v590 = vpop.f32.mrf.mxu0
  %v591 = vpop.f32.mrf.mxu0
  %v592 = vadd.f32 %v521, %v591
  %v593 = vpop.f32.mrf.mxu0
  %594 = vmatprep.mubr.bf16.mxu0 %v527
  %595 = vmatmul.mubr.bf16.gmra.mxu0 %v493
  %v596 = vpop.f32.mrf.mxu0
  %v597 = vadd.f32 %v521, %v596
  %v598 = vpop.f32.mrf.mxu0
  %v599 = vpop.f32.mrf.mxu0
  %v600 = vadd.f32 %v521, %v599
  %v601 = vpop.f32.mrf.mxu0
  %602 = vmatprep.mubr.bf16.mxu0 %v530
  %603 = vmatmul.mubr.bf16.gmra.mxu0 %v495
  %v604 = vpop.f32.mrf.mxu0
  %v605 = vadd.f32 %v521, %v604
  %v606 = vpop.f32.mrf.mxu0
  %v607 = vpop.f32.mrf.mxu0
  %v608 = vadd.f32 %v521, %v607
  %v609 = vpop.f32.mrf.mxu0
  %610 = vmatprep.mubr.bf16.mxu0 %v533
  %611 = vmatmul.mubr.bf16.gmra.mxu0 %v497
  %v612 = vpop.f32.mrf.mxu0
  %v613 = vadd.f32 %v521, %v612
  %v614 = vpop.f32.mrf.mxu0
  %v615 = vpop.f32.mrf.mxu0
  %v616 = vadd.f32 %v521, %v615
  %v617 = vpop.f32.mrf.mxu0
  %618 = vmatprep.mubr.bf16.mxu0 %v536
  %619 = vmatmul.mubr.bf16.gmra.mxu0 %v499
  %v620 = vpop.f32.mrf.mxu0
  %v621 = vadd.f32 %v521, %v620
  %v622 = vpop.f32.mrf.mxu0
  %v623 = vpop.f32.mrf.mxu0
  %v624 = vadd.f32 %v521, %v623
  %v625 = vpop.f32.mrf.mxu0
  %626 = vmatprep.mubr.bf16.mxu0 %v539
  %627 = vmatmul.mubr.bf16.gmra.mxu0 %v501
  %v628 = vpop.f32.mrf.mxu0
  %v629 = vadd.f32 %v521, %v628
  %v630 = vpop.f32.mrf.mxu0
  %v631 = vpop.f32.mrf.mxu0
  %v632 = vadd.f32 %v521, %v631
  %v633 = vpop.f32.mrf.mxu0
  %634 = vmatprep.mubr.bf16.mxu0 %v542
  %635 = vmatmul.mubr.bf16.gmra.mxu0 %v503
  %v636 = vpop.f32.mrf.mxu0
  %v637 = vadd.f32 %v521, %v636
  %v638 = vpop.f32.mrf.mxu0
  %v639 = vpop.f32.mrf.mxu0
  %v640 = vadd.f32 %v521, %v639
  %v641 = vpop.f32.mrf.mxu0
  %642 = vmatprep.mubr.bf16.mxu0 %v545
  %643 = vmatmul.mubr.bf16.gmra.mxu0 %v505
  %v644 = vpop.f32.mrf.mxu0
  %v645 = vadd.f32 %v521, %v644
  %v646 = vpop.f32.mrf.mxu0
  %v647 = vpop.f32.mrf.mxu0
  %v648 = vadd.f32 %v521, %v647
  %v649 = vpop.f32.mrf.mxu0
  %650 = vdwg.mxu0
  %v651 = vmul.f32 %v589, %v589
  %v652 = vmul.f32 %v592, %v592
  %v653 = vmul.f32 %v597, %v597
  %v654 = vmul.f32 %v600, %v600
  %v655 = vmul.f32 %v605, %v605
  %v656 = vmul.f32 %v608, %v608
  %v657 = vmul.f32 %v613, %v613
  %v658 = vmul.f32 %v616, %v616
  %v659 = vmul.f32 %v621, %v621
  %v660 = vmul.f32 %v624, %v624
  %v661 = vmul.f32 %v629, %v629
  %v662 = vmul.f32 %v632, %v632
  %v663 = vmul.f32 %v637, %v637
  %v664 = vmul.f32 %v640, %v640
  %v665 = vmul.f32 %v645, %v645
  %v666 = vmul.f32 %v648, %v648
  %vm667 = vcmask 130048
  %v668 = vsel %vm667, %v651, 0.0
  %669 = vadd.xlane.f32.xlu0 %v668
  %v670 = vpop.xlane.xlu0 %669
  %v671 = vsel %vm667, %v652, 0.0
  %672 = vadd.xlane.f32.xlu0 %v671
  %v673 = vpop.xlane.xlu0 %672
  %v674 = vsel %vm667, %v653, 0.0
  %675 = vadd.xlane.f32.xlu0 %v674
  %v676 = vpop.xlane.xlu0 %675
  %v677 = vsel %vm667, %v654, 0.0
  %678 = vadd.xlane.f32.xlu0 %v677
  %v679 = vpop.xlane.xlu0 %678
  %v680 = vsel %vm667, %v655, 0.0
  %681 = vadd.xlane.f32.xlu0 %v680
  %v682 = vpop.xlane.xlu0 %681
  %v683 = vsel %vm667, %v656, 0.0
  %684 = vadd.xlane.f32.xlu0 %v683
  %v685 = vpop.xlane.xlu0 %684
  %v686 = vsel %vm667, %v657, 0.0
  %687 = vadd.xlane.f32.xlu0 %v686
  %v688 = vpop.xlane.xlu0 %687
  %v689 = vsel %vm667, %v658, 0.0
  %690 = vadd.xlane.f32.xlu0 %v689
  %v691 = vpop.xlane.xlu0 %690
  %v692 = vsel %vm667, %v659, 0.0
  %693 = vadd.xlane.f32.xlu0 %v692
  %v694 = vpop.xlane.xlu0 %693
  %v695 = vsel %vm667, %v660, 0.0
  %696 = vadd.xlane.f32.xlu0 %v695
  %v697 = vpop.xlane.xlu0 %696
  %v698 = vsel %vm667, %v661, 0.0
  %699 = vadd.xlane.f32.xlu0 %v698
  %v700 = vpop.xlane.xlu0 %699
  %v701 = vsel %vm667, %v662, 0.0
  %702 = vadd.xlane.f32.xlu0 %v701
  %v703 = vpop.xlane.xlu0 %702
  %v704 = vsel %vm667, %v663, 0.0
  %705 = vadd.xlane.f32.xlu0 %v704
  %v706 = vpop.xlane.xlu0 %705
  %v707 = vsel %vm667, %v664, 0.0
  %708 = vadd.xlane.f32.xlu0 %v707
  %v709 = vpop.xlane.xlu0 %708
  %v710 = vsel %vm667, %v665, 0.0
  %711 = vadd.xlane.f32.xlu0 %v710
  %v712 = vpop.xlane.xlu0 %711
  %v713 = vsel %vm667, %v666, 0.0
  %714 = vadd.xlane.f32.xlu0 %v713
  %v715 = vpop.xlane.xlu0 %714
  %v716 = vmul.f32 %v670, 0.5
  %v717 = vmul.f32 %v673, 0.5
  %v718 = vmul.f32 %v676, 0.5
  %v719 = vmul.f32 %v679, 0.5
  %v720 = vmul.f32 %v682, 0.5
  %v721 = vmul.f32 %v685, 0.5
  %v722 = vmul.f32 %v688, 0.5
  %v723 = vmul.f32 %v691, 0.5
  %v724 = vmul.f32 %v694, 0.5
  %v725 = vmul.f32 %v697, 0.5
  %v726 = vmul.f32 %v700, 0.5
  %v727 = vmul.f32 %v703, 0.5
  %v728 = vmul.f32 %v706, 0.5
  %v729 = vmul.f32 %v709, 0.5
  %v730 = vmul.f32 %v712, 0.5
  %v731 = vmul.f32 %v715, 0.5
  %v732 = vpack.c.bf16 %v592, %v589
  %v733 = vpack.c.bf16 %v600, %v597
  %v734 = vpack.c.bf16 %v608, %v605
  %v735 = vpack.c.bf16 %v616, %v613
  %v736 = vpack.c.bf16 %v624, %v621
  %v737 = vpack.c.bf16 %v632, %v629
  %v738 = vpack.c.bf16 %v640, %v637
  %v739 = vpack.c.bf16 %v648, %v645
  %v740 = vpack.c.bf16 %v95, %v94
  %v742 = vsel %vm667, %v732, 0
  %v745 = vsel %vm667, %v733, 0
  %v748 = vsel %vm667, %v734, 0
  %v751 = vsel %vm667, %v735, 0
  %v754 = vsel %vm667, %v736, 0
  %v757 = vsel %vm667, %v737, 0
  %v760 = vsel %vm667, %v738, 0
  %v763 = vsel %vm667, %v739, 0
  %765 = vmatprep.subr.bf16.mxu0 0
  %766 = vmatpush1.bf16.msra.mxu0 0
  %767 = vmatprep.subr.bf16.mxu0 0
  %768 = vmatpush1.bf16.msra.mxu0 0
  %769 = vmatprep.subr.bf16.mxu0 0
  %770 = vmatpush1.bf16.msra.mxu0 0
  %771 = vmatprep.subr.bf16.mxu0 0
  %772 = vmatpush1.bf16.msra.mxu0 0
  %773 = vmatprep.subr.bf16.mxu0 0
  %774 = vmatpush1.bf16.msra.mxu0 0
  %775 = vmatprep.subr.bf16.mxu0 0
  %776 = vmatpush1.bf16.msra.mxu0 0
  %777 = vmatprep.subr.bf16.mxu0 0
  %778 = vmatpush1.bf16.msra.mxu0 0
  %779 = vmatprep.subr.bf16.mxu0 0
  %780 = vmatpush1.bf16.msra.mxu0 %v740
  %781 = vmatprep.subr.bf16.mxu0 0
  %782 = vmatpush2.bf16.msra.mxu0 0
  %783 = vmatprep.subr.bf16.mxu0 0
  %784 = vmatpush2.bf16.msra.mxu0 0
  %785 = vmatprep.subr.bf16.mxu0 0
  %786 = vmatpush2.bf16.msra.mxu0 0
  %787 = vmatprep.subr.bf16.mxu0 0
  %788 = vmatpush2.bf16.msra.mxu0 0
  %789 = vmatprep.subr.bf16.mxu0 0
  %790 = vmatpush2.bf16.msra.mxu0 0
  %791 = vmatprep.subr.bf16.mxu0 0
  %792 = vmatpush2.bf16.msra.mxu0 0
  %793 = vmatprep.subr.bf16.mxu0 0
  %794 = vmatpush2.bf16.msra.mxu0 0
  %795 = vmatprep.subr.bf16.mxu0 0
  %796 = vmatpush2.bf16.msra.mxu0 0
  %797 = vmatprep.mubr.bf16.mxu0 0
  %798 = vmatmul.mubr.bf16.gmra.mxu0 %v742
  %v799 = vpop.f32.mrf.mxu0
  %v800 = vadd.f32 0.0, %v799
  %v801 = vpop.f32.mrf.mxu0
  %v802 = vpop.f32.mrf.mxu0
  %v803 = vadd.f32 0.0, %v802
  %v804 = vpop.f32.mrf.mxu0
  %805 = vmatprep.mubr.bf16.mxu0 0
  %806 = vmatmul.mubr.bf16.gmra.mxu0 %v745
  %v807 = vpop.f32.mrf.mxu0
  %v808 = vadd.f32 0.0, %v807
  %v809 = vpop.f32.mrf.mxu0
  %v810 = vpop.f32.mrf.mxu0
  %v811 = vadd.f32 0.0, %v810
  %v812 = vpop.f32.mrf.mxu0
  %813 = vmatprep.mubr.bf16.mxu0 0
  %814 = vmatmul.mubr.bf16.gmra.mxu0 %v748
  %v815 = vpop.f32.mrf.mxu0
  %v816 = vadd.f32 0.0, %v815
  %v817 = vpop.f32.mrf.mxu0
  %v818 = vpop.f32.mrf.mxu0
  %v819 = vadd.f32 0.0, %v818
  %v820 = vpop.f32.mrf.mxu0
  %821 = vmatprep.mubr.bf16.mxu0 0
  %822 = vmatmul.mubr.bf16.gmra.mxu0 %v751
  %v823 = vpop.f32.mrf.mxu0
  %v824 = vadd.f32 0.0, %v823
  %v825 = vpop.f32.mrf.mxu0
  %v826 = vpop.f32.mrf.mxu0
  %v827 = vadd.f32 0.0, %v826
  %v828 = vpop.f32.mrf.mxu0
  %829 = vmatprep.mubr.bf16.mxu0 0
  %830 = vmatmul.mubr.bf16.gmra.mxu0 %v754
  %v831 = vpop.f32.mrf.mxu0
  %v832 = vadd.f32 0.0, %v831
  %v833 = vpop.f32.mrf.mxu0
  %v834 = vpop.f32.mrf.mxu0
  %v835 = vadd.f32 0.0, %v834
  %v836 = vpop.f32.mrf.mxu0
  %837 = vmatprep.mubr.bf16.mxu0 0
  %838 = vmatmul.mubr.bf16.gmra.mxu0 %v757
  %v839 = vpop.f32.mrf.mxu0
  %v840 = vadd.f32 0.0, %v839
  %v841 = vpop.f32.mrf.mxu0
  %v842 = vpop.f32.mrf.mxu0
  %v843 = vadd.f32 0.0, %v842
  %v844 = vpop.f32.mrf.mxu0
  %845 = vmatprep.mubr.bf16.mxu0 0
  %846 = vmatmul.mubr.bf16.gmra.mxu0 %v760
  %v847 = vpop.f32.mrf.mxu0
  %v848 = vadd.f32 0.0, %v847
  %v849 = vpop.f32.mrf.mxu0
  %v850 = vpop.f32.mrf.mxu0
  %v851 = vadd.f32 0.0, %v850
  %v852 = vpop.f32.mrf.mxu0
  %853 = vmatprep.mubr.bf16.mxu0 0
  %854 = vmatmul.mubr.bf16.gmra.mxu0 %v763
  %v855 = vpop.f32.mrf.mxu0
  %v856 = vadd.f32 0.0, %v855
  %v857 = vpop.f32.mrf.mxu0
  %v858 = vpop.f32.mrf.mxu0
  %v859 = vadd.f32 0.0, %v858
  %v860 = vpop.f32.mrf.mxu0
  %861 = vdwg.mxu0
  %v862 = vsub.f32 %v800, %v716
  %v863 = vsub.f32 %v803, %v717
  %v864 = vsub.f32 %v808, %v718
  %v865 = vsub.f32 %v811, %v719
  %v866 = vsub.f32 %v816, %v720
  %v867 = vsub.f32 %v819, %v721
  %v868 = vsub.f32 %v824, %v722
  %v869 = vsub.f32 %v827, %v723
  %v870 = vsub.f32 %v832, %v724
  %v871 = vsub.f32 %v835, %v725
  %v872 = vsub.f32 %v840, %v726
  %v873 = vsub.f32 %v843, %v727
  %v874 = vsub.f32 %v848, %v728
  %v875 = vsub.f32 %v851, %v729
  %v876 = vsub.f32 %v856, %v730
  %v877 = vsub.f32 %v859, %v731
  %v878 = vmul.f32 %v862, 1.442695
  %v879 = vpow.pop %v878
  %v880 = vmul.f32 %v863, 1.442695
  %v881 = vpow.pop %v880
  %v882 = vmul.f32 %v864, 1.442695
  %v883 = vpow.pop %v882
  %v884 = vmul.f32 %v865, 1.442695
  %v885 = vpow.pop %v884
  %v886 = vmul.f32 %v866, 1.442695
  %v887 = vpow.pop %v886
  %v888 = vmul.f32 %v867, 1.442695
  %v889 = vpow.pop %v888
  %v890 = vmul.f32 %v868, 1.442695
  %v891 = vpow.pop %v890
  %v892 = vmul.f32 %v869, 1.442695
  %v893 = vpow.pop %v892
  %v894 = vmul.f32 %v870, 1.442695
  %v895 = vpow.pop %v894
  %v896 = vmul.f32 %v871, 1.442695
  %v897 = vpow.pop %v896
  %v898 = vmul.f32 %v872, 1.442695
  %v899 = vpow.pop %v898
  %v900 = vmul.f32 %v873, 1.442695
  %v901 = vpow.pop %v900
  %v902 = vmul.f32 %v874, 1.442695
  %v903 = vpow.pop %v902
  %v904 = vmul.f32 %v875, 1.442695
  %v905 = vpow.pop %v904
  %v906 = vmul.f32 %v876, 1.442695
  %v907 = vpow.pop %v906
  %v908 = vmul.f32 %v877, 1.442695
  %v909 = vpow.pop %v908
  %v910 = vmul.f32 %v879, 0.35355338
  %v911 = vmul.f32 %v881, 0.35355338
  %v912 = vmul.f32 %v883, 0.35355338
  %v913 = vmul.f32 %v885, 0.35355338
  %v914 = vmul.f32 %v887, 0.35355338
  %v915 = vmul.f32 %v889, 0.35355338
  %v916 = vmul.f32 %v891, 0.35355338
  %v917 = vmul.f32 %v893, 0.35355338
  %v918 = vmul.f32 %v895, 0.35355338
  %v919 = vmul.f32 %v897, 0.35355338
  %v920 = vmul.f32 %v899, 0.35355338
  %v921 = vmul.f32 %v901, 0.35355338
  %v922 = vmul.f32 %v903, 0.35355338
  %v923 = vmul.f32 %v905, 0.35355338
  %v924 = vmul.f32 %v907, 0.35355338
  %v925 = vmul.f32 %v909, 0.35355338
  %942 = vrot.lane.b32.xlu0 %v651, 112
  %v943 = vpop.permute.xlu0 %942
  %944 = vrot.lane.b32.xlu0 %v652, 112
  %v945 = vpop.permute.xlu0 %944
  %946 = vrot.lane.b32.xlu0 %v653, 112
  %v947 = vpop.permute.xlu0 %946
  %948 = vrot.lane.b32.xlu0 %v654, 112
  %v949 = vpop.permute.xlu0 %948
  %950 = vrot.lane.b32.xlu0 %v655, 112
  %v951 = vpop.permute.xlu0 %950
  %952 = vrot.lane.b32.xlu0 %v656, 112
  %v953 = vpop.permute.xlu0 %952
  %954 = vrot.lane.b32.xlu0 %v657, 112
  %v955 = vpop.permute.xlu0 %954
  %956 = vrot.lane.b32.xlu0 %v658, 112
  %v957 = vpop.permute.xlu0 %956
  %958 = vrot.lane.b32.xlu0 %v659, 112
  %v959 = vpop.permute.xlu0 %958
  %960 = vrot.lane.b32.xlu0 %v660, 112
  %v961 = vpop.permute.xlu0 %960
  %962 = vrot.lane.b32.xlu0 %v661, 112
  %v963 = vpop.permute.xlu0 %962
  %964 = vrot.lane.b32.xlu0 %v662, 112
  %v965 = vpop.permute.xlu0 %964
  %966 = vrot.lane.b32.xlu0 %v663, 112
  %v967 = vpop.permute.xlu0 %966
  %968 = vrot.lane.b32.xlu0 %v664, 112
  %v969 = vpop.permute.xlu0 %968
  %970 = vrot.lane.b32.xlu0 %v665, 112
  %v971 = vpop.permute.xlu0 %970
  %972 = vrot.lane.b32.xlu0 %v666, 112
  %v973 = vpop.permute.xlu0 %972
  %v990 = vsel %vm667, %v943, 0.0
  %991 = vadd.xlane.f32.xlu0 %v990
  %v992 = vpop.xlane.xlu0 %991
  %v993 = vsel %vm667, %v945, 0.0
  %994 = vadd.xlane.f32.xlu0 %v993
  %v995 = vpop.xlane.xlu0 %994
  %v996 = vsel %vm667, %v947, 0.0
  %997 = vadd.xlane.f32.xlu0 %v996
  %v998 = vpop.xlane.xlu0 %997
  %v999 = vsel %vm667, %v949, 0.0
  %1000 = vadd.xlane.f32.xlu0 %v999
  %v1001 = vpop.xlane.xlu0 %1000
  %v1002 = vsel %vm667, %v951, 0.0
  %1003 = vadd.xlane.f32.xlu0 %v1002
  %v1004 = vpop.xlane.xlu0 %1003
  %v1005 = vsel %vm667, %v953, 0.0
  %1006 = vadd.xlane.f32.xlu0 %v1005
  %v1007 = vpop.xlane.xlu0 %1006
  %v1008 = vsel %vm667, %v955, 0.0
  %1009 = vadd.xlane.f32.xlu0 %v1008
  %v1010 = vpop.xlane.xlu0 %1009
  %v1011 = vsel %vm667, %v957, 0.0
  %1012 = vadd.xlane.f32.xlu0 %v1011
  %v1013 = vpop.xlane.xlu0 %1012
  %v1014 = vsel %vm667, %v959, 0.0
  %1015 = vadd.xlane.f32.xlu0 %v1014
  %v1016 = vpop.xlane.xlu0 %1015
  %v1017 = vsel %vm667, %v961, 0.0
  %1018 = vadd.xlane.f32.xlu0 %v1017
  %v1019 = vpop.xlane.xlu0 %1018
  %v1020 = vsel %vm667, %v963, 0.0
  %1021 = vadd.xlane.f32.xlu0 %v1020
  %v1022 = vpop.xlane.xlu0 %1021
  %v1023 = vsel %vm667, %v965, 0.0
  %1024 = vadd.xlane.f32.xlu0 %v1023
  %v1025 = vpop.xlane.xlu0 %1024
  %v1026 = vsel %vm667, %v967, 0.0
  %1027 = vadd.xlane.f32.xlu0 %v1026
  %v1028 = vpop.xlane.xlu0 %1027
  %v1029 = vsel %vm667, %v969, 0.0
  %1030 = vadd.xlane.f32.xlu0 %v1029
  %v1031 = vpop.xlane.xlu0 %1030
  %v1032 = vsel %vm667, %v971, 0.0
  %1033 = vadd.xlane.f32.xlu0 %v1032
  %v1034 = vpop.xlane.xlu0 %1033
  %v1035 = vsel %vm667, %v973, 0.0
  %1036 = vadd.xlane.f32.xlu0 %v1035
  %v1037 = vpop.xlane.xlu0 %1036
  %v1038 = vmul.f32 %v992, 0.5
  %v1039 = vmul.f32 %v995, 0.5
  %v1040 = vmul.f32 %v998, 0.5
  %v1041 = vmul.f32 %v1001, 0.5
  %v1042 = vmul.f32 %v1004, 0.5
  %v1043 = vmul.f32 %v1007, 0.5
  %v1044 = vmul.f32 %v1010, 0.5
  %v1045 = vmul.f32 %v1013, 0.5
  %v1046 = vmul.f32 %v1016, 0.5
  %v1047 = vmul.f32 %v1019, 0.5
  %v1048 = vmul.f32 %v1022, 0.5
  %v1049 = vmul.f32 %v1025, 0.5
  %v1050 = vmul.f32 %v1028, 0.5
  %v1051 = vmul.f32 %v1031, 0.5
  %v1052 = vmul.f32 %v1034, 0.5
  %v1053 = vmul.f32 %v1037, 0.5
  %1062 = vrot.lane.b32.xlu0 %v732, 112
  %v1063 = vpop.permute.xlu0 %1062
  %1064 = vrot.lane.b32.xlu0 %v733, 112
  %v1065 = vpop.permute.xlu0 %1064
  %1066 = vrot.lane.b32.xlu0 %v734, 112
  %v1067 = vpop.permute.xlu0 %1066
  %1068 = vrot.lane.b32.xlu0 %v735, 112
  %v1069 = vpop.permute.xlu0 %1068
  %1070 = vrot.lane.b32.xlu0 %v736, 112
  %v1071 = vpop.permute.xlu0 %1070
  %1072 = vrot.lane.b32.xlu0 %v737, 112
  %v1073 = vpop.permute.xlu0 %1072
  %1074 = vrot.lane.b32.xlu0 %v738, 112
  %v1075 = vpop.permute.xlu0 %1074
  %1076 = vrot.lane.b32.xlu0 %v739, 112
  %v1077 = vpop.permute.xlu0 %1076
  %v1079 = vsel %vm667, %v1063, 0
  %v1082 = vsel %vm667, %v1065, 0
  %v1085 = vsel %vm667, %v1067, 0
  %v1088 = vsel %vm667, %v1069, 0
  %v1091 = vsel %vm667, %v1071, 0
  %v1094 = vsel %vm667, %v1073, 0
  %v1097 = vsel %vm667, %v1075, 0
  %v1100 = vsel %vm667, %v1077, 0
  %1102 = vmatprep.subr.bf16.mxu0 0
  %1103 = vmatpush1.bf16.msra.mxu0 0
  %1104 = vmatprep.subr.bf16.mxu0 0
  %1105 = vmatpush1.bf16.msra.mxu0 0
  %1106 = vmatprep.subr.bf16.mxu0 0
  %1107 = vmatpush1.bf16.msra.mxu0 0
  %1108 = vmatprep.subr.bf16.mxu0 0
  %1109 = vmatpush1.bf16.msra.mxu0 0
  %1110 = vmatprep.subr.bf16.mxu0 0
  %1111 = vmatpush1.bf16.msra.mxu0 0
  %1112 = vmatprep.subr.bf16.mxu0 0
  %1113 = vmatpush1.bf16.msra.mxu0 0
  %1114 = vmatprep.subr.bf16.mxu0 0
  %1115 = vmatpush1.bf16.msra.mxu0 0
  %1116 = vmatprep.subr.bf16.mxu0 0
  %1117 = vmatpush1.bf16.msra.mxu0 %v740
  %1118 = vmatprep.subr.bf16.mxu0 0
  %1119 = vmatpush2.bf16.msra.mxu0 0
  %1120 = vmatprep.subr.bf16.mxu0 0
  %1121 = vmatpush2.bf16.msra.mxu0 0
  %1122 = vmatprep.subr.bf16.mxu0 0
  %1123 = vmatpush2.bf16.msra.mxu0 0
  %1124 = vmatprep.subr.bf16.mxu0 0
  %1125 = vmatpush2.bf16.msra.mxu0 0
  %1126 = vmatprep.subr.bf16.mxu0 0
  %1127 = vmatpush2.bf16.msra.mxu0 0
  %1128 = vmatprep.subr.bf16.mxu0 0
  %1129 = vmatpush2.bf16.msra.mxu0 0
  %1130 = vmatprep.subr.bf16.mxu0 0
  %1131 = vmatpush2.bf16.msra.mxu0 0
  %1132 = vmatprep.subr.bf16.mxu0 0
  %1133 = vmatpush2.bf16.msra.mxu0 0
  %1134 = vmatprep.mubr.bf16.mxu0 0
  %1135 = vmatmul.mubr.bf16.gmra.mxu0 %v1079
  %v1136 = vpop.f32.mrf.mxu0
  %v1137 = vadd.f32 0.0, %v1136
  %v1138 = vpop.f32.mrf.mxu0
  %v1139 = vpop.f32.mrf.mxu0
  %v1140 = vadd.f32 0.0, %v1139
  %v1141 = vpop.f32.mrf.mxu0
  %1142 = vmatprep.mubr.bf16.mxu0 0
  %1143 = vmatmul.mubr.bf16.gmra.mxu0 %v1082
  %v1144 = vpop.f32.mrf.mxu0
  %v1145 = vadd.f32 0.0, %v1144
  %v1146 = vpop.f32.mrf.mxu0
  %v1147 = vpop.f32.mrf.mxu0
  %v1148 = vadd.f32 0.0, %v1147
  %v1149 = vpop.f32.mrf.mxu0
  %1150 = vmatprep.mubr.bf16.mxu0 0
  %1151 = vmatmul.mubr.bf16.gmra.mxu0 %v1085
  %v1152 = vpop.f32.mrf.mxu0
  %v1153 = vadd.f32 0.0, %v1152
  %v1154 = vpop.f32.mrf.mxu0
  %v1155 = vpop.f32.mrf.mxu0
  %v1156 = vadd.f32 0.0, %v1155
  %v1157 = vpop.f32.mrf.mxu0
  %1158 = vmatprep.mubr.bf16.mxu0 0
  %1159 = vmatmul.mubr.bf16.gmra.mxu0 %v1088
  %v1160 = vpop.f32.mrf.mxu0
  %v1161 = vadd.f32 0.0, %v1160
  %v1162 = vpop.f32.mrf.mxu0
  %v1163 = vpop.f32.mrf.mxu0
  %v1164 = vadd.f32 0.0, %v1163
  %v1165 = vpop.f32.mrf.mxu0
  %1166 = vmatprep.mubr.bf16.mxu0 0
  %1167 = vmatmul.mubr.bf16.gmra.mxu0 %v1091
  %v1168 = vpop.f32.mrf.mxu0
  %v1169 = vadd.f32 0.0, %v1168
  %v1170 = vpop.f32.mrf.mxu0
  %v1171 = vpop.f32.mrf.mxu0
  %v1172 = vadd.f32 0.0, %v1171
  %v1173 = vpop.f32.mrf.mxu0
  %1174 = vmatprep.mubr.bf16.mxu0 0
  %1175 = vmatmul.mubr.bf16.gmra.mxu0 %v1094
  %v1176 = vpop.f32.mrf.mxu0
  %v1177 = vadd.f32 0.0, %v1176
  %v1178 = vpop.f32.mrf.mxu0
  %v1179 = vpop.f32.mrf.mxu0
  %v1180 = vadd.f32 0.0, %v1179
  %v1181 = vpop.f32.mrf.mxu0
  %1182 = vmatprep.mubr.bf16.mxu0 0
  %1183 = vmatmul.mubr.bf16.gmra.mxu0 %v1097
  %v1184 = vpop.f32.mrf.mxu0
  %v1185 = vadd.f32 0.0, %v1184
  %v1186 = vpop.f32.mrf.mxu0
  %v1187 = vpop.f32.mrf.mxu0
  %v1188 = vadd.f32 0.0, %v1187
  %v1189 = vpop.f32.mrf.mxu0
  %1190 = vmatprep.mubr.bf16.mxu0 0
  %1191 = vmatmul.mubr.bf16.gmra.mxu0 %v1100
  %v1192 = vpop.f32.mrf.mxu0
  %v1193 = vadd.f32 0.0, %v1192
  %v1194 = vpop.f32.mrf.mxu0
  %v1195 = vpop.f32.mrf.mxu0
  %v1196 = vadd.f32 0.0, %v1195
  %v1197 = vpop.f32.mrf.mxu0
  %1198 = vdwg.mxu0
  %v1199 = vsub.f32 %v1137, %v1038
  %v1200 = vsub.f32 %v1140, %v1039
  %v1201 = vsub.f32 %v1145, %v1040
  %v1202 = vsub.f32 %v1148, %v1041
  %v1203 = vsub.f32 %v1153, %v1042
  %v1204 = vsub.f32 %v1156, %v1043
  %v1205 = vsub.f32 %v1161, %v1044
  %v1206 = vsub.f32 %v1164, %v1045
  %v1207 = vsub.f32 %v1169, %v1046
  %v1208 = vsub.f32 %v1172, %v1047
  %v1209 = vsub.f32 %v1177, %v1048
  %v1210 = vsub.f32 %v1180, %v1049
  %v1211 = vsub.f32 %v1185, %v1050
  %v1212 = vsub.f32 %v1188, %v1051
  %v1213 = vsub.f32 %v1193, %v1052
  %v1214 = vsub.f32 %v1196, %v1053
  %v1215 = vmul.f32 %v1199, 1.442695
  %v1216 = vpow.pop %v1215
  %v1217 = vmul.f32 %v1200, 1.442695
  %v1218 = vpow.pop %v1217
  %v1219 = vmul.f32 %v1201, 1.442695
  %v1220 = vpow.pop %v1219
  %v1221 = vmul.f32 %v1202, 1.442695
  %v1222 = vpow.pop %v1221
  %v1223 = vmul.f32 %v1203, 1.442695
  %v1224 = vpow.pop %v1223
  %v1225 = vmul.f32 %v1204, 1.442695
  %v1226 = vpow.pop %v1225
  %v1227 = vmul.f32 %v1205, 1.442695
  %v1228 = vpow.pop %v1227
  %v1229 = vmul.f32 %v1206, 1.442695
  %v1230 = vpow.pop %v1229
  %v1231 = vmul.f32 %v1207, 1.442695
  %v1232 = vpow.pop %v1231
  %v1233 = vmul.f32 %v1208, 1.442695
  %v1234 = vpow.pop %v1233
  %v1235 = vmul.f32 %v1209, 1.442695
  %v1236 = vpow.pop %v1235
  %v1237 = vmul.f32 %v1210, 1.442695
  %v1238 = vpow.pop %v1237
  %v1239 = vmul.f32 %v1211, 1.442695
  %v1240 = vpow.pop %v1239
  %v1241 = vmul.f32 %v1212, 1.442695
  %v1242 = vpow.pop %v1241
  %v1243 = vmul.f32 %v1213, 1.442695
  %v1244 = vpow.pop %v1243
  %v1245 = vmul.f32 %v1214, 1.442695
  %v1246 = vpow.pop %v1245
  %v1247 = vmul.f32 %v1216, 0.35355338
  %v1248 = vmul.f32 %v1218, 0.35355338
  %v1249 = vmul.f32 %v1220, 0.35355338
  %v1250 = vmul.f32 %v1222, 0.35355338
  %v1251 = vmul.f32 %v1224, 0.35355338
  %v1252 = vmul.f32 %v1226, 0.35355338
  %v1253 = vmul.f32 %v1228, 0.35355338
  %v1254 = vmul.f32 %v1230, 0.35355338
  %v1255 = vmul.f32 %v1232, 0.35355338
  %v1256 = vmul.f32 %v1234, 0.35355338
  %v1257 = vmul.f32 %v1236, 0.35355338
  %v1258 = vmul.f32 %v1238, 0.35355338
  %v1259 = vmul.f32 %v1240, 0.35355338
  %v1260 = vmul.f32 %v1242, 0.35355338
  %v1261 = vmul.f32 %v1244, 0.35355338
  %v1262 = vmul.f32 %v1246, 0.35355338
  %vm1263 = vcmask 64512
  %v1264 = vsel %vm1263, %v910, 0.0
  %v1265 = vsel %vm1263, %v911, 0.0
  %v1266 = vadd.f32 %v1264, %v1265
  %v1267 = vsel %vm1263, %v912, 0.0
  %v1268 = vadd.f32 %v1266, %v1267
  %v1269 = vsel %vm1263, %v913, 0.0
  %v1270 = vadd.f32 %v1268, %v1269
  %v1271 = vsel %vm1263, %v914, 0.0
  %v1272 = vadd.f32 %v1270, %v1271
  %v1273 = vsel %vm1263, %v915, 0.0
  %v1274 = vadd.f32 %v1272, %v1273
  %v1275 = vsel %vm1263, %v916, 0.0
  %v1276 = vadd.f32 %v1274, %v1275
  %v1277 = vsel %vm1263, %v917, 0.0
  %v1278 = vadd.f32 %v1276, %v1277
  %v1279 = vrot.slane %v1278, 4
  %v1280 = vadd.f32 %v1278, %v1279
  %v1281 = vrot.slane %v1280, 2
  %v1282 = vadd.f32 %v1280, %v1281
  %v1283 = vrot.slane %v1282, 1
  %v1284 = vadd.f32 %v1282, %v1283
  %1285 = vxpose.xlu0.b32.start [1/16] %v910, 128
  %1286 = vxpose.xlu0.b32.cont [2/16] %v911, 128
  %1287 = vxpose.xlu0.b32.cont [3/16] %v912, 128
  %1288 = vxpose.xlu0.b32.cont [4/16] %v913, 128
  %1289 = vxpose.xlu0.b32.cont [5/16] %v914, 128
  %1290 = vxpose.xlu0.b32.cont [6/16] %v915, 128
  %1291 = vxpose.xlu0.b32.cont [7/16] %v916, 128
  %1292 = vxpose.xlu0.b32.cont [8/16] %v917, 128
  %1293 = vxpose.xlu0.b32.cont [9/16] 0.0, 128
  %1294 = vxpose.xlu0.b32.cont [10/16] 0.0, 128
  %1295 = vxpose.xlu0.b32.cont [11/16] 0.0, 128
  %1296 = vxpose.xlu0.b32.cont [12/16] 0.0, 128
  %1297 = vxpose.xlu0.b32.cont [13/16] 0.0, 128
  %1298 = vxpose.xlu0.b32.cont [14/16] 0.0, 128
  %1299 = vxpose.xlu0.b32.cont [15/16] 0.0, 128
  %1300 = vxpose.xlu0.b32.end [16/16] 0.0, 128
  %v1301 = vpop.trf.xlu0
  %v1302 = vpop.trf.xlu0
  %v1303 = vpop.trf.xlu0
  %v1304 = vpop.trf.xlu0
  %v1305 = vpop.trf.xlu0
  %v1306 = vpop.trf.xlu0
  %v1307 = vpop.trf.xlu0
  %v1308 = vpop.trf.xlu0
  %v1309 = vpop.trf.xlu0
  %v1310 = vpop.trf.xlu0
  %v1311 = vpop.trf.xlu0
  %v1312 = vpop.trf.xlu0
  %v1313 = vpop.trf.xlu0
  %v1314 = vpop.trf.xlu0
  %v1315 = vpop.trf.xlu0
  %v1316 = vpop.trf.xlu0
  %1325 = vrot.lane.b32.xlu0 %v589, 96
  %v1326 = vpop.permute.xlu0 %1325
  %1327 = vrot.lane.b32.xlu0 %v592, 96
  %v1328 = vpop.permute.xlu0 %1327
  %1329 = vrot.lane.b32.xlu0 %v597, 96
  %v1330 = vpop.permute.xlu0 %1329
  %1331 = vrot.lane.b32.xlu0 %v600, 96
  %v1332 = vpop.permute.xlu0 %1331
  %1333 = vrot.lane.b32.xlu0 %v605, 96
  %v1334 = vpop.permute.xlu0 %1333
  %1335 = vrot.lane.b32.xlu0 %v608, 96
  %v1336 = vpop.permute.xlu0 %1335
  %1337 = vrot.lane.b32.xlu0 %v613, 96
  %v1338 = vpop.permute.xlu0 %1337
  %1339 = vrot.lane.b32.xlu0 %v616, 96
  %v1340 = vpop.permute.xlu0 %1339
  %vm1349 = vcmask 523264
  %v1351 = vsel %vm1349, %v1301, 0
  %1353 = vmatprep.subr.mxu0 0.0
  %1354 = vmatpush1.msra.mxu0 0.0
  %1355 = vmatprep.subr.mxu0 0.0
  %1356 = vmatpush1.msra.mxu0 0.0
  %1357 = vmatprep.subr.mxu0 0.0
  %1358 = vmatpush1.msra.mxu0 0.0
  %1359 = vmatprep.subr.mxu0 0.0
  %1360 = vmatpush1.msra.mxu0 0.0
  %1361 = vmatprep.subr.mxu0 0.0
  %1362 = vmatpush1.msra.mxu0 0.0
  %1363 = vmatprep.subr.mxu0 0.0
  %1364 = vmatpush1.msra.mxu0 0.0
  %1365 = vmatprep.subr.mxu0 0.0
  %1366 = vmatpush1.msra.mxu0 0.0
  %1367 = vmatprep.subr.mxu0 0.0
  %1368 = vmatpush1.msra.mxu0 0.0
  %1369 = vmatprep.subr.mxu0 0.0
  %1370 = vmatpush1.msra.mxu0 %v1340
  %1371 = vmatprep.subr.mxu0 0.0
  %1372 = vmatpush1.msra.mxu0 %v1338
  %1373 = vmatprep.subr.mxu0 0.0
  %1374 = vmatpush1.msra.mxu0 %v1336
  %1375 = vmatprep.subr.mxu0 0.0
  %1376 = vmatpush1.msra.mxu0 %v1334
  %1377 = vmatprep.subr.mxu0 0.0
  %1378 = vmatpush1.msra.mxu0 %v1332
  %1379 = vmatprep.subr.mxu0 0.0
  %1380 = vmatpush1.msra.mxu0 %v1330
  %1381 = vmatprep.subr.mxu0 0.0
  %1382 = vmatpush1.msra.mxu0 %v1328
  %1383 = vmatprep.subr.mxu0 0.0
  %1384 = vmatpush1.msra.mxu0 %v1326
  %1385 = vmatprep.subr.mxu0 0.0
  %1386 = vmatpush2.msra.mxu0 0.0
  %1387 = vmatprep.subr.mxu0 0.0
  %1388 = vmatpush2.msra.mxu0 0.0
  %1389 = vmatprep.subr.mxu0 0.0
  %1390 = vmatpush2.msra.mxu0 0.0
  %1391 = vmatprep.subr.mxu0 0.0
  %1392 = vmatpush2.msra.mxu0 0.0
  %1393 = vmatprep.subr.mxu0 0.0
  %1394 = vmatpush2.msra.mxu0 0.0
  %1395 = vmatprep.subr.mxu0 0.0
  %1396 = vmatpush2.msra.mxu0 0.0
  %1397 = vmatprep.subr.mxu0 0.0
  %1398 = vmatpush2.msra.mxu0 0.0
  %1399 = vmatprep.subr.mxu0 0.0
  %1400 = vmatpush2.msra.mxu0 0.0
  %1401 = vmatprep.subr.mxu0 0.0
  %1402 = vmatpush2.msra.mxu0 0.0
  %1403 = vmatprep.subr.mxu0 0.0
  %1404 = vmatpush2.msra.mxu0 0.0
  %1405 = vmatprep.subr.mxu0 0.0
  %1406 = vmatpush2.msra.mxu0 0.0
  %1407 = vmatprep.subr.mxu0 0.0
  %1408 = vmatpush2.msra.mxu0 0.0
  %1409 = vmatprep.subr.mxu0 0.0
  %1410 = vmatpush2.msra.mxu0 0.0
  %1411 = vmatprep.subr.mxu0 0.0
  %1412 = vmatpush2.msra.mxu0 0.0
  %1413 = vmatprep.subr.mxu0 0.0
  %1414 = vmatpush2.msra.mxu0 0.0
  %1415 = vmatprep.subr.mxu0 0.0
  %1416 = vmatpush2.msra.mxu0 0.0
  %1417 = vmatprep.mubr.f32.mxu0 0.0
  %1418 = vmatmul.mubr.f32.gmra.mxu0 %v1351
  %v1419 = vpop.f32.mrf.mxu0
  %v1420 = vadd.f32 0.0, %v1419
  %v1421 = vpop.f32.mrf.mxu0
  %1422 = vdwg.mxu0
  %v1423 = vmul.f32 %v1247, %v1284
  %v1424 = vmul.f32 %v1248, %v1284
  %v1425 = vmul.f32 %v1249, %v1284
  %v1426 = vmul.f32 %v1250, %v1284
  %v1427 = vmul.f32 %v1251, %v1284
  %v1428 = vmul.f32 %v1252, %v1284
  %v1429 = vmul.f32 %v1253, %v1284
  %v1430 = vmul.f32 %v1254, %v1284
  %v1431 = vsel %vm1263, %v1423, 0.0
  %1432 = vadd.xlane.f32.xlu0 %v1431
  %v1433 = vpop.xlane.xlu0 %1432
  %v1434 = vsel %vm1263, %v1424, 0.0
  %1435 = vadd.xlane.f32.xlu0 %v1434
  %v1436 = vpop.xlane.xlu0 %1435
  %v1437 = vsel %vm1263, %v1425, 0.0
  %1438 = vadd.xlane.f32.xlu0 %v1437
  %v1439 = vpop.xlane.xlu0 %1438
  %v1440 = vsel %vm1263, %v1426, 0.0
  %1441 = vadd.xlane.f32.xlu0 %v1440
  %v1442 = vpop.xlane.xlu0 %1441
  %v1443 = vsel %vm1263, %v1427, 0.0
  %1444 = vadd.xlane.f32.xlu0 %v1443
  %v1445 = vpop.xlane.xlu0 %1444
  %v1446 = vsel %vm1263, %v1428, 0.0
  %1447 = vadd.xlane.f32.xlu0 %v1446
  %v1448 = vpop.xlane.xlu0 %1447
  %v1449 = vsel %vm1263, %v1429, 0.0
  %1450 = vadd.xlane.f32.xlu0 %v1449
  %v1451 = vpop.xlane.xlu0 %1450
  %v1452 = vsel %vm1263, %v1430, 0.0
  %1453 = vadd.xlane.f32.xlu0 %v1452
  %v1454 = vpop.xlane.xlu0 %1453
  %v1456 = vsel %vm1263, %v1247, 0
  %v1459 = vsel %vm1263, %v1248, 0
  %v1462 = vsel %vm1263, %v1249, 0
  %v1465 = vsel %vm1263, %v1250, 0
  %v1468 = vsel %vm1263, %v1251, 0
  %v1471 = vsel %vm1263, %v1252, 0
  %v1474 = vsel %vm1263, %v1253, 0
  %v1477 = vsel %vm1263, %v1254, 0
  %1479 = vmatprep.subr.mxu0 0.0
  %1480 = vmatpush1.msra.mxu0 0.0
  %1481 = vmatprep.subr.mxu0 0.0
  %1482 = vmatpush1.msra.mxu0 0.0
  %1483 = vmatprep.subr.mxu0 0.0
  %1484 = vmatpush1.msra.mxu0 0.0
  %1485 = vmatprep.subr.mxu0 0.0
  %1486 = vmatpush1.msra.mxu0 0.0
  %1487 = vmatprep.subr.mxu0 0.0
  %1488 = vmatpush1.msra.mxu0 0.0
  %1489 = vmatprep.subr.mxu0 0.0
  %1490 = vmatpush1.msra.mxu0 0.0
  %1491 = vmatprep.subr.mxu0 0.0
  %1492 = vmatpush1.msra.mxu0 0.0
  %1493 = vmatprep.subr.mxu0 0.0
  %1494 = vmatpush1.msra.mxu0 0.0
  %1495 = vmatprep.subr.mxu0 0.0
  %1496 = vmatpush1.msra.mxu0 0.0
  %1497 = vmatprep.subr.mxu0 0.0
  %1498 = vmatpush1.msra.mxu0 0.0
  %1499 = vmatprep.subr.mxu0 0.0
  %1500 = vmatpush1.msra.mxu0 0.0
  %1501 = vmatprep.subr.mxu0 0.0
  %1502 = vmatpush1.msra.mxu0 0.0
  %1503 = vmatprep.subr.mxu0 0.0
  %1504 = vmatpush1.msra.mxu0 0.0
  %1505 = vmatprep.subr.mxu0 0.0
  %1506 = vmatpush1.msra.mxu0 0.0
  %1507 = vmatprep.subr.mxu0 0.0
  %1508 = vmatpush1.msra.mxu0 0.0
  %1509 = vmatprep.subr.mxu0 0.0
  %1510 = vmatpush1.msra.mxu0 %v1420
  %1511 = vmatprep.subr.mxu0 0.0
  %1512 = vmatpush2.msra.mxu0 0.0
  %1513 = vmatprep.subr.mxu0 0.0
  %1514 = vmatpush2.msra.mxu0 0.0
  %1515 = vmatprep.subr.mxu0 0.0
  %1516 = vmatpush2.msra.mxu0 0.0
  %1517 = vmatprep.subr.mxu0 0.0
  %1518 = vmatpush2.msra.mxu0 0.0
  %1519 = vmatprep.subr.mxu0 0.0
  %1520 = vmatpush2.msra.mxu0 0.0
  %1521 = vmatprep.subr.mxu0 0.0
  %1522 = vmatpush2.msra.mxu0 0.0
  %1523 = vmatprep.subr.mxu0 0.0
  %1524 = vmatpush2.msra.mxu0 0.0
  %1525 = vmatprep.subr.mxu0 0.0
  %1526 = vmatpush2.msra.mxu0 0.0
  %1527 = vmatprep.subr.mxu0 0.0
  %1528 = vmatpush2.msra.mxu0 0.0
  %1529 = vmatprep.subr.mxu0 0.0
  %1530 = vmatpush2.msra.mxu0 0.0
  %1531 = vmatprep.subr.mxu0 0.0
  %1532 = vmatpush2.msra.mxu0 0.0
  %1533 = vmatprep.subr.mxu0 0.0
  %1534 = vmatpush2.msra.mxu0 0.0
  %1535 = vmatprep.subr.mxu0 0.0
  %1536 = vmatpush2.msra.mxu0 0.0
  %1537 = vmatprep.subr.mxu0 0.0
  %1538 = vmatpush2.msra.mxu0 0.0
  %1539 = vmatprep.subr.mxu0 0.0
  %1540 = vmatpush2.msra.mxu0 0.0
  %1541 = vmatprep.subr.mxu0 0.0
  %1542 = vmatpush2.msra.mxu0 0.0
  %1543 = vmatprep.mubr.f32.mxu0 0.0
  %1544 = vmatmul.mubr.f32.gmra.mxu0 %v1456
  %v1545 = vpop.f32.mrf.mxu0
  %v1546 = vadd.f32 0.0, %v1545
  %v1547 = vpop.f32.mrf.mxu0
  %1548 = vmatprep.mubr.f32.mxu0 0.0
  %1549 = vmatmul.mubr.f32.gmra.mxu0 %v1459
  %v1550 = vpop.f32.mrf.mxu0
  %v1551 = vadd.f32 0.0, %v1550
  %v1552 = vpop.f32.mrf.mxu0
  %1553 = vmatprep.mubr.f32.mxu0 0.0
  %1554 = vmatmul.mubr.f32.gmra.mxu0 %v1462
  %v1555 = vpop.f32.mrf.mxu0
  %v1556 = vadd.f32 0.0, %v1555
  %v1557 = vpop.f32.mrf.mxu0
  %1558 = vmatprep.mubr.f32.mxu0 0.0
  %1559 = vmatmul.mubr.f32.gmra.mxu0 %v1465
  %v1560 = vpop.f32.mrf.mxu0
  %v1561 = vadd.f32 0.0, %v1560
  %v1562 = vpop.f32.mrf.mxu0
  %1563 = vmatprep.mubr.f32.mxu0 0.0
  %1564 = vmatmul.mubr.f32.gmra.mxu0 %v1468
  %v1565 = vpop.f32.mrf.mxu0
  %v1566 = vadd.f32 0.0, %v1565
  %v1567 = vpop.f32.mrf.mxu0
  %1568 = vmatprep.mubr.f32.mxu0 0.0
  %1569 = vmatmul.mubr.f32.gmra.mxu0 %v1471
  %v1570 = vpop.f32.mrf.mxu0
  %v1571 = vadd.f32 0.0, %v1570
  %v1572 = vpop.f32.mrf.mxu0
  %1573 = vmatprep.mubr.f32.mxu0 0.0
  %1574 = vmatmul.mubr.f32.gmra.mxu0 %v1474
  %v1575 = vpop.f32.mrf.mxu0
  %v1576 = vadd.f32 0.0, %v1575
  %v1577 = vpop.f32.mrf.mxu0
  %1578 = vmatprep.mubr.f32.mxu0 0.0
  %1579 = vmatmul.mubr.f32.gmra.mxu0 %v1477
  %v1580 = vpop.f32.mrf.mxu0
  %v1581 = vadd.f32 0.0, %v1580
  %v1582 = vpop.f32.mrf.mxu0
  %1583 = vdwg.mxu0
  %v1584 = vadd.f32 %v1433, 1e-08
  %v1585 = vadd.f32 %v1436, 1e-08
  %v1586 = vadd.f32 %v1439, 1e-08
  %v1587 = vadd.f32 %v1442, 1e-08
  %v1588 = vadd.f32 %v1445, 1e-08
  %v1589 = vadd.f32 %v1448, 1e-08
  %v1590 = vadd.f32 %v1451, 1e-08
  %v1591 = vadd.f32 %v1454, 1e-08
  %v1592 = vrcp.pop %v1584
  %v1593 = vmul.f32 %v1546, %v1592
  %v1594 = vrcp.pop %v1585
  %v1595 = vmul.f32 %v1551, %v1594
  %v1596 = vrcp.pop %v1586
  %v1597 = vmul.f32 %v1556, %v1596
  %v1598 = vrcp.pop %v1587
  %v1599 = vmul.f32 %v1561, %v1598
  %v1600 = vrcp.pop %v1588
  %v1601 = vmul.f32 %v1566, %v1600
  %v1602 = vrcp.pop %v1589
  %v1603 = vmul.f32 %v1571, %v1602
  %v1604 = vrcp.pop %v1590
  %v1605 = vmul.f32 %v1576, %v1604
  %v1606 = vrcp.pop %v1591
  %v1607 = vmul.f32 %v1581, %v1606
  %v1608 = vpack.c.bf16 %v1595, %v1593
  %v1609 = vpack.c.bf16 %v1599, %v1597
  %v1610 = vpack.c.bf16 %v1603, %v1601
  %v1611 = vpack.c.bf16 %v1607, %v1605
  %v1612 = vpack.c.bf16 %v89, %v88
  %v1614 = vlaneseq
  %v1615 = vshrl.u32 %v1614, 7
  %v1616 = vsub.s32 0, %v1615
  %v1617 = vrot.slane %v85, %v1616
  %v1620 = vsel %vm667, %v1608, 0
  %v1623 = vsel %vm667, %v1609, 0
  %v1626 = vsel %vm667, %v1610, 0
  %v1629 = vsel %vm667, %v1611, 0
  %1631 = vmatprep.subr.bf16.mxu0 0
  %1632 = vmatpush1.bf16.msra.mxu0 0
  %1633 = vmatprep.subr.bf16.mxu0 0
  %1634 = vmatpush1.bf16.msra.mxu0 0
  %1635 = vmatprep.subr.bf16.mxu0 0
  %1636 = vmatpush1.bf16.msra.mxu0 0
  %1637 = vmatprep.subr.bf16.mxu0 0
  %1638 = vmatpush1.bf16.msra.mxu0 0
  %1639 = vmatprep.subr.bf16.mxu0 0
  %1640 = vmatpush1.bf16.msra.mxu0 0
  %1641 = vmatprep.subr.bf16.mxu0 0
  %1642 = vmatpush1.bf16.msra.mxu0 0
  %1643 = vmatprep.subr.bf16.mxu0 0
  %1644 = vmatpush1.bf16.msra.mxu0 0
  %1645 = vmatprep.subr.bf16.mxu0 0
  %1646 = vmatpush1.bf16.msra.mxu0 %v1612
  %1647 = vmatprep.subr.bf16.mxu0 0
  %1648 = vmatpush2.bf16.msra.mxu0 0
  %1649 = vmatprep.subr.bf16.mxu0 0
  %1650 = vmatpush2.bf16.msra.mxu0 0
  %1651 = vmatprep.subr.bf16.mxu0 0
  %1652 = vmatpush2.bf16.msra.mxu0 0
  %1653 = vmatprep.subr.bf16.mxu0 0
  %1654 = vmatpush2.bf16.msra.mxu0 0
  %1655 = vmatprep.subr.bf16.mxu0 0
  %1656 = vmatpush2.bf16.msra.mxu0 0
  %1657 = vmatprep.subr.bf16.mxu0 0
  %1658 = vmatpush2.bf16.msra.mxu0 0
  %1659 = vmatprep.subr.bf16.mxu0 0
  %1660 = vmatpush2.bf16.msra.mxu0 0
  %1661 = vmatprep.subr.bf16.mxu0 0
  %1662 = vmatpush2.bf16.msra.mxu0 0
  %1663 = vmatprep.mubr.bf16.mxu0 0
  %1664 = vmatmul.mubr.bf16.gmra.mxu0 %v1620
  %v1665 = vpop.f32.mrf.mxu0
  %v1666 = vadd.f32 %v1617, %v1665
  %v1667 = vpop.f32.mrf.mxu0
  %v1668 = vpop.f32.mrf.mxu0
  %v1669 = vadd.f32 %v1617, %v1668
  %v1670 = vpop.f32.mrf.mxu0
  %1671 = vmatprep.mubr.bf16.mxu0 0
  %1672 = vmatmul.mubr.bf16.gmra.mxu0 %v1623
  %v1673 = vpop.f32.mrf.mxu0
  %v1674 = vadd.f32 %v1617, %v1673
  %v1675 = vpop.f32.mrf.mxu0
  %v1676 = vpop.f32.mrf.mxu0
  %v1677 = vadd.f32 %v1617, %v1676
  %v1678 = vpop.f32.mrf.mxu0
  %1679 = vmatprep.mubr.bf16.mxu0 0
  %1680 = vmatmul.mubr.bf16.gmra.mxu0 %v1626
  %v1681 = vpop.f32.mrf.mxu0
  %v1682 = vadd.f32 %v1617, %v1681
  %v1683 = vpop.f32.mrf.mxu0
  %v1684 = vpop.f32.mrf.mxu0
  %v1685 = vadd.f32 %v1617, %v1684
  %v1686 = vpop.f32.mrf.mxu0
  %1687 = vmatprep.mubr.bf16.mxu0 0
  %1688 = vmatmul.mubr.bf16.gmra.mxu0 %v1629
  %v1689 = vpop.f32.mrf.mxu0
  %v1690 = vadd.f32 %v1617, %v1689
  %v1691 = vpop.f32.mrf.mxu0
  %v1692 = vpop.f32.mrf.mxu0
  %v1693 = vadd.f32 %v1617, %v1692
  %v1694 = vpop.f32.mrf.mxu0
  %1695 = vdwg.mxu0
  %1704 = vrot.lane.b32.xlu0 %v1666, 32
  %v1705 = vpop.permute.xlu0 %1704
  %1706 = vrot.lane.b32.xlu0 %v1669, 32
  %v1707 = vpop.permute.xlu0 %1706
  %1708 = vrot.lane.b32.xlu0 %v1674, 32
  %v1709 = vpop.permute.xlu0 %1708
  %1710 = vrot.lane.b32.xlu0 %v1677, 32
  %v1711 = vpop.permute.xlu0 %1710
  %1712 = vrot.lane.b32.xlu0 %v1682, 32
  %v1713 = vpop.permute.xlu0 %1712
  %1714 = vrot.lane.b32.xlu0 %v1685, 32
  %v1715 = vpop.permute.xlu0 %1714
  %1716 = vrot.lane.b32.xlu0 %v1690, 32
  %v1717 = vpop.permute.xlu0 %1716
  %1718 = vrot.lane.b32.xlu0 %v1693, 32
  %v1719 = vpop.permute.xlu0 %1718
  %v1728 = vadd.f32 %v589, %v1705
  %v1729 = vadd.f32 %v592, %v1707
  %v1730 = vadd.f32 %v597, %v1709
  %v1731 = vadd.f32 %v600, %v1711
  %v1732 = vadd.f32 %v605, %v1713
  %v1733 = vadd.f32 %v608, %v1715
  %v1734 = vadd.f32 %v613, %v1717
  %v1735 = vadd.f32 %v616, %v1719
  %1744 = vrot.lane.b32.xlu0 %v1728, 96
  %v1745 = vpop.permute.xlu0 %1744
  %1746 = vrot.lane.b32.xlu0 %v1729, 96
  %v1747 = vpop.permute.xlu0 %1746
  %1748 = vrot.lane.b32.xlu0 %v1730, 96
  %v1749 = vpop.permute.xlu0 %1748
  %1750 = vrot.lane.b32.xlu0 %v1731, 96
  %v1751 = vpop.permute.xlu0 %1750
  %1752 = vrot.lane.b32.xlu0 %v1732, 96
  %v1753 = vpop.permute.xlu0 %1752
  %1754 = vrot.lane.b32.xlu0 %v1733, 96
  %v1755 = vpop.permute.xlu0 %1754
  %1756 = vrot.lane.b32.xlu0 %v1734, 96
  %v1757 = vpop.permute.xlu0 %1756
  %1758 = vrot.lane.b32.xlu0 %v1735, 96
  %v1759 = vpop.permute.xlu0 %1758
  %v1768 = vsel %vm667, %v1745, 0.0
  %1769 = vadd.xlane.f32.xlu0 %v1768
  %v1770 = vpop.xlane.xlu0 %1769
  %v1771 = vsel %vm667, %v1747, 0.0
  %1772 = vadd.xlane.f32.xlu0 %v1771
  %v1773 = vpop.xlane.xlu0 %1772
  %v1774 = vsel %vm667, %v1749, 0.0
  %1775 = vadd.xlane.f32.xlu0 %v1774
  %v1776 = vpop.xlane.xlu0 %1775
  %v1777 = vsel %vm667, %v1751, 0.0
  %1778 = vadd.xlane.f32.xlu0 %v1777
  %v1779 = vpop.xlane.xlu0 %1778
  %v1780 = vsel %vm667, %v1753, 0.0
  %1781 = vadd.xlane.f32.xlu0 %v1780
  %v1782 = vpop.xlane.xlu0 %1781
  %v1783 = vsel %vm667, %v1755, 0.0
  %1784 = vadd.xlane.f32.xlu0 %v1783
  %v1785 = vpop.xlane.xlu0 %1784
  %v1786 = vsel %vm667, %v1757, 0.0
  %1787 = vadd.xlane.f32.xlu0 %v1786
  %v1788 = vpop.xlane.xlu0 %1787
  %v1789 = vsel %vm667, %v1759, 0.0
  %1790 = vadd.xlane.f32.xlu0 %v1789
  %v1791 = vpop.xlane.xlu0 %1790
  %v1792 = vrcp.pop 16.0
  %v1793 = vmul.f32 %v1770, %v1792
  %v1794 = vmul.f32 %v1773, %v1792
  %v1795 = vmul.f32 %v1776, %v1792
  %v1796 = vmul.f32 %v1779, %v1792
  %v1797 = vmul.f32 %v1782, %v1792
  %v1798 = vmul.f32 %v1785, %v1792
  %v1799 = vmul.f32 %v1788, %v1792
  %v1800 = vmul.f32 %v1791, %v1792
  %v1801 = vsub.f32 %v1728, %v1793
  %v1802 = vsub.f32 %v1729, %v1794
  %v1803 = vsub.f32 %v1730, %v1795
  %v1804 = vsub.f32 %v1731, %v1796
  %v1805 = vsub.f32 %v1732, %v1797
  %v1806 = vsub.f32 %v1733, %v1798
  %v1807 = vsub.f32 %v1734, %v1799
  %v1808 = vsub.f32 %v1735, %v1800
  %v1809 = vmul.f32 %v1801, %v1801
  %v1810 = vmul.f32 %v1802, %v1802
  %v1811 = vmul.f32 %v1803, %v1803
  %v1812 = vmul.f32 %v1804, %v1804
  %v1813 = vmul.f32 %v1805, %v1805
  %v1814 = vmul.f32 %v1806, %v1806
  %v1815 = vmul.f32 %v1807, %v1807
  %v1816 = vmul.f32 %v1808, %v1808
  %1825 = vrot.lane.b32.xlu0 %v1809, 96
  %v1826 = vpop.permute.xlu0 %1825
  %1827 = vrot.lane.b32.xlu0 %v1810, 96
  %v1828 = vpop.permute.xlu0 %1827
  %1829 = vrot.lane.b32.xlu0 %v1811, 96
  %v1830 = vpop.permute.xlu0 %1829
  %1831 = vrot.lane.b32.xlu0 %v1812, 96
  %v1832 = vpop.permute.xlu0 %1831
  %1833 = vrot.lane.b32.xlu0 %v1813, 96
  %v1834 = vpop.permute.xlu0 %1833
  %1835 = vrot.lane.b32.xlu0 %v1814, 96
  %v1836 = vpop.permute.xlu0 %1835
  %1837 = vrot.lane.b32.xlu0 %v1815, 96
  %v1838 = vpop.permute.xlu0 %1837
  %1839 = vrot.lane.b32.xlu0 %v1816, 96
  %v1840 = vpop.permute.xlu0 %1839
  %v1849 = vsel %vm667, %v1826, 0.0
  %1850 = vadd.xlane.f32.xlu0 %v1849
  %v1851 = vpop.xlane.xlu0 %1850
  %v1852 = vsel %vm667, %v1828, 0.0
  %1853 = vadd.xlane.f32.xlu0 %v1852
  %v1854 = vpop.xlane.xlu0 %1853
  %v1855 = vsel %vm667, %v1830, 0.0
  %1856 = vadd.xlane.f32.xlu0 %v1855
  %v1857 = vpop.xlane.xlu0 %1856
  %v1858 = vsel %vm667, %v1832, 0.0
  %1859 = vadd.xlane.f32.xlu0 %v1858
  %v1860 = vpop.xlane.xlu0 %1859
  %v1861 = vsel %vm667, %v1834, 0.0
  %1862 = vadd.xlane.f32.xlu0 %v1861
  %v1863 = vpop.xlane.xlu0 %1862
  %v1864 = vsel %vm667, %v1836, 0.0
  %1865 = vadd.xlane.f32.xlu0 %v1864
  %v1866 = vpop.xlane.xlu0 %1865
  %v1867 = vsel %vm667, %v1838, 0.0
  %1868 = vadd.xlane.f32.xlu0 %v1867
  %v1869 = vpop.xlane.xlu0 %1868
  %v1870 = vsel %vm667, %v1840, 0.0
  %1871 = vadd.xlane.f32.xlu0 %v1870
  %v1872 = vpop.xlane.xlu0 %1871
  %v1873 = vmul.f32 %v1851, %v1792
  %v1874 = vmul.f32 %v1854, %v1792
  %v1875 = vmul.f32 %v1857, %v1792
  %v1876 = vmul.f32 %v1860, %v1792
  %v1877 = vmul.f32 %v1863, %v1792
  %v1878 = vmul.f32 %v1866, %v1792
  %v1879 = vmul.f32 %v1869, %v1792
  %v1880 = vmul.f32 %v1872, %v1792
  %v1881 = vadd.f32 %v1873, 1e-05
  %v1882 = vadd.f32 %v1874, 1e-05
  %v1883 = vadd.f32 %v1875, 1e-05
  %v1884 = vadd.f32 %v1876, 1e-05
  %v1885 = vadd.f32 %v1877, 1e-05
  %v1886 = vadd.f32 %v1878, 1e-05
  %v1887 = vadd.f32 %v1879, 1e-05
  %v1888 = vadd.f32 %v1880, 1e-05
  %v1889 = vrsqrt.pop %v1881
  %v1890 = vrsqrt.pop %v1882
  %v1891 = vrsqrt.pop %v1883
  %v1892 = vrsqrt.pop %v1884
  %v1893 = vrsqrt.pop %v1885
  %v1894 = vrsqrt.pop %v1886
  %v1895 = vrsqrt.pop %v1887
  %v1896 = vrsqrt.pop %v1888
  %v1897 = vmul.f32 %v1801, %v1889
  %v1898 = vmul.f32 %v1802, %v1890
  %v1899 = vmul.f32 %v1803, %v1891
  %v1900 = vmul.f32 %v1804, %v1892
  %v1901 = vmul.f32 %v1805, %v1893
  %v1902 = vmul.f32 %v1806, %v1894
  %v1903 = vmul.f32 %v1807, %v1895
  %v1904 = vmul.f32 %v1808, %v1896
  %v1906 = vlaneseq
  %v1907 = vshrl.u32 %v1906, 7
  %v1908 = vsub.s32 0, %v1907
  %v1909 = vrot.slane %v82, %v1908
  %1910 = vrot.lane.b32.xlu0 %v1909, 32
  %v1911 = vpop.permute.xlu0 %1910
  %v1913 = vmul.f32 %v1897, %v1911
  %v1914 = vmul.f32 %v1898, %v1911
  %v1915 = vmul.f32 %v1899, %v1911
  %v1916 = vmul.f32 %v1900, %v1911
  %v1917 = vmul.f32 %v1901, %v1911
  %v1918 = vmul.f32 %v1902, %v1911
  %v1919 = vmul.f32 %v1903, %v1911
  %v1920 = vmul.f32 %v1904, %v1911
  %v1922 = vlaneseq
  %v1923 = vshrl.u32 %v1922, 7
  %v1924 = vsub.s32 0, %v1923
  %v1925 = vrot.slane %v83, %v1924
  %1926 = vrot.lane.b32.xlu0 %v1925, 32
  %v1927 = vpop.permute.xlu0 %1926
  %v1929 = vadd.f32 %v1913, %v1927
  %v1930 = vadd.f32 %v1914, %v1927
  %v1931 = vadd.f32 %v1915, %v1927
  %v1932 = vadd.f32 %v1916, %v1927
  %v1933 = vadd.f32 %v1917, %v1927
  %v1934 = vadd.f32 %v1918, %v1927
  %v1935 = vadd.f32 %v1919, %v1927
  %v1936 = vadd.f32 %v1920, %v1927
  %v1937 = vpack.c.bf16 %v1930, %v1929
  %v1938 = vpack.c.bf16 %v1932, %v1931
  %v1939 = vpack.c.bf16 %v1934, %v1933
  %v1940 = vpack.c.bf16 %v1936, %v1935
  %v1941 = vpack.c.bf16 %v91, %v90
  %v1943 = vlaneseq
  %v1944 = vshrl.u32 %v1943, 7
  %v1945 = vsub.s32 0, %v1944
  %v1946 = vrot.slane %v86, %v1945
  %1952 = vrot.lane.b32.xlu0 %v1937, 96
  %v1953 = vpop.permute.xlu0 %1952
  %1954 = vrot.lane.b32.xlu0 %v1938, 96
  %v1955 = vpop.permute.xlu0 %1954
  %1956 = vrot.lane.b32.xlu0 %v1939, 96
  %v1957 = vpop.permute.xlu0 %1956
  %1958 = vrot.lane.b32.xlu0 %v1940, 96
  %v1959 = vpop.permute.xlu0 %1958
  %v1961 = vsel %vm667, %v1953, 0
  %v1964 = vsel %vm667, %v1955, 0
  %v1967 = vsel %vm667, %v1957, 0
  %v1970 = vsel %vm667, %v1959, 0
  %1972 = vmatprep.subr.bf16.mxu0 0
  %1973 = vmatpush1.bf16.msra.mxu0 0
  %1974 = vmatprep.subr.bf16.mxu0 0
  %1975 = vmatpush1.bf16.msra.mxu0 0
  %1976 = vmatprep.subr.bf16.mxu0 0
  %1977 = vmatpush1.bf16.msra.mxu0 0
  %1978 = vmatprep.subr.bf16.mxu0 0
  %1979 = vmatpush1.bf16.msra.mxu0 0
  %1980 = vmatprep.subr.bf16.mxu0 0
  %1981 = vmatpush1.bf16.msra.mxu0 0
  %1982 = vmatprep.subr.bf16.mxu0 0
  %1983 = vmatpush1.bf16.msra.mxu0 0
  %1984 = vmatprep.subr.bf16.mxu0 0
  %1985 = vmatpush1.bf16.msra.mxu0 0
  %1986 = vmatprep.subr.bf16.mxu0 0
  %1987 = vmatpush1.bf16.msra.mxu0 %v1941
  %1988 = vmatprep.subr.bf16.mxu0 0
  %1989 = vmatpush2.bf16.msra.mxu0 0
  %1990 = vmatprep.subr.bf16.mxu0 0
  %1991 = vmatpush2.bf16.msra.mxu0 0
  %1992 = vmatprep.subr.bf16.mxu0 0
  %1993 = vmatpush2.bf16.msra.mxu0 0
  %1994 = vmatprep.subr.bf16.mxu0 0
  %1995 = vmatpush2.bf16.msra.mxu0 0
  %1996 = vmatprep.subr.bf16.mxu0 0
  %1997 = vmatpush2.bf16.msra.mxu0 0
  %1998 = vmatprep.subr.bf16.mxu0 0
  %1999 = vmatpush2.bf16.msra.mxu0 0
  %2000 = vmatprep.subr.bf16.mxu0 0
  %2001 = vmatpush2.bf16.msra.mxu0 0
  %2002 = vmatprep.subr.bf16.mxu0 0
  %2003 = vmatpush2.bf16.msra.mxu0 0
  %2004 = vmatprep.mubr.bf16.mxu0 0
  %2005 = vmatmul.mubr.bf16.gmra.mxu0 %v1961
  %v2006 = vpop.f32.mrf.mxu0
  %v2007 = vadd.f32 %v1946, %v2006
  %v2008 = vpop.f32.mrf.mxu0
  %v2009 = vpop.f32.mrf.mxu0
  %v2010 = vadd.f32 %v1946, %v2009
  %v2011 = vpop.f32.mrf.mxu0
  %2012 = vmatprep.mubr.bf16.mxu0 0
  %2013 = vmatmul.mubr.bf16.gmra.mxu0 %v1964
  %v2014 = vpop.f32.mrf.mxu0
  %v2015 = vadd.f32 %v1946, %v2014
  %v2016 = vpop.f32.mrf.mxu0
  %v2017 = vpop.f32.mrf.mxu0
  %v2018 = vadd.f32 %v1946, %v2017
  %v2019 = vpop.f32.mrf.mxu0
  %2020 = vmatprep.mubr.bf16.mxu0 0
  %2021 = vmatmul.mubr.bf16.gmra.mxu0 %v1967
  %v2022 = vpop.f32.mrf.mxu0
  %v2023 = vadd.f32 %v1946, %v2022
  %v2024 = vpop.f32.mrf.mxu0
  %v2025 = vpop.f32.mrf.mxu0
  %v2026 = vadd.f32 %v1946, %v2025
  %v2027 = vpop.f32.mrf.mxu0
  %2028 = vmatprep.mubr.bf16.mxu0 0
  %2029 = vmatmul.mubr.bf16.gmra.mxu0 %v1970
  %v2030 = vpop.f32.mrf.mxu0
  %v2031 = vadd.f32 %v1946, %v2030
  %v2032 = vpop.f32.mrf.mxu0
  %v2033 = vpop.f32.mrf.mxu0
  %v2034 = vadd.f32 %v1946, %v2033
  %v2035 = vpop.f32.mrf.mxu0
  %2036 = vdwg.mxu0
  %v2037 = vmul.f32 %v2007, 0.5
  %v2038 = vmul.f32 %v2010, 0.5
  %v2039 = vmul.f32 %v2015, 0.5
  %v2040 = vmul.f32 %v2018, 0.5
  %v2041 = vmul.f32 %v2023, 0.5
  %v2042 = vmul.f32 %v2026, 0.5
  %v2043 = vmul.f32 %v2031, 0.5
  %v2044 = vmul.f32 %v2034, 0.5
  %v2045 = vmul.f32 %v2007, 0.70710677
  %v2046 = vmul.f32 %v2010, 0.70710677
  %v2047 = vmul.f32 %v2015, 0.70710677
  %v2048 = vmul.f32 %v2018, 0.70710677
  %v2049 = vmul.f32 %v2023, 0.70710677
  %v2050 = vmul.f32 %v2026, 0.70710677
  %v2051 = vmul.f32 %v2031, 0.70710677
  %v2052 = vmul.f32 %v2034, 0.70710677
  %vm2053 = vcmp.ge.f32.partialorder %v2045, 0.0
  %vm2054 = vcmp.ge.f32.partialorder %v2046, 0.0
  %vm2055 = vcmp.ge.f32.partialorder %v2047, 0.0
  %vm2056 = vcmp.ge.f32.partialorder %v2048, 0.0
  %vm2057 = vcmp.ge.f32.partialorder %v2049, 0.0
  %vm2058 = vcmp.ge.f32.partialorder %v2050, 0.0
  %vm2059 = vcmp.ge.f32.partialorder %v2051, 0.0
  %vm2060 = vcmp.ge.f32.partialorder %v2052, 0.0
  %v2061 = vsel %vm2053, 1.0, -1.0
  %v2062 = vsel %vm2054, 1.0, -1.0
  %v2063 = vsel %vm2055, 1.0, -1.0
  %v2064 = vsel %vm2056, 1.0, -1.0
  %v2065 = vsel %vm2057, 1.0, -1.0
  %v2066 = vsel %vm2058, 1.0, -1.0
  %v2067 = vsel %vm2059, 1.0, -1.0
  %v2068 = vsel %vm2060, 1.0, -1.0
  %v2069 = vand.u32 2147483647, %v2045
  %v2070 = vand.u32 2147483647, %v2046
  %v2071 = vand.u32 2147483647, %v2047
  %v2072 = vand.u32 2147483647, %v2048
  %v2073 = vand.u32 2147483647, %v2049
  %v2074 = vand.u32 2147483647, %v2050
  %v2075 = vand.u32 2147483647, %v2051
  %v2076 = vand.u32 2147483647, %v2052
  %v2077 = vmul.f32 %v2069, 0.3275911
  %v2078 = vmul.f32 %v2070, 0.3275911
  %v2079 = vmul.f32 %v2071, 0.3275911
  %v2080 = vmul.f32 %v2072, 0.3275911
  %v2081 = vmul.f32 %v2073, 0.3275911
  %v2082 = vmul.f32 %v2074, 0.3275911
  %v2083 = vmul.f32 %v2075, 0.3275911
  %v2084 = vmul.f32 %v2076, 0.3275911
  %v2085 = vadd.f32 %v2077, 1.0
  %v2086 = vadd.f32 %v2078, 1.0
  %v2087 = vadd.f32 %v2079, 1.0
  %v2088 = vadd.f32 %v2080, 1.0
  %v2089 = vadd.f32 %v2081, 1.0
  %v2090 = vadd.f32 %v2082, 1.0
  %v2091 = vadd.f32 %v2083, 1.0
  %v2092 = vadd.f32 %v2084, 1.0
  %v2093 = vrcp.pop %v2085
  %v2094 = vmul.f32 1.0, %v2093
  %v2095 = vrcp.pop %v2086
  %v2096 = vmul.f32 1.0, %v2095
  %v2097 = vrcp.pop %v2087
  %v2098 = vmul.f32 1.0, %v2097
  %v2099 = vrcp.pop %v2088
  %v2100 = vmul.f32 1.0, %v2099
  %v2101 = vrcp.pop %v2089
  %v2102 = vmul.f32 1.0, %v2101
  %v2103 = vrcp.pop %v2090
  %v2104 = vmul.f32 1.0, %v2103
  %v2105 = vrcp.pop %v2091
  %v2106 = vmul.f32 1.0, %v2105
  %v2107 = vrcp.pop %v2092
  %v2108 = vmul.f32 1.0, %v2107
  %v2109 = vmul.f32 %v2094, 1.0614054
  %v2110 = vmul.f32 %v2096, 1.0614054
  %v2111 = vmul.f32 %v2098, 1.0614054
  %v2112 = vmul.f32 %v2100, 1.0614054
  %v2113 = vmul.f32 %v2102, 1.0614054
  %v2114 = vmul.f32 %v2104, 1.0614054
  %v2115 = vmul.f32 %v2106, 1.0614054
  %v2116 = vmul.f32 %v2108, 1.0614054
  %v2117 = vadd.f32 %v2109, -1.4531521
  %v2118 = vadd.f32 %v2110, -1.4531521
  %v2119 = vadd.f32 %v2111, -1.4531521
  %v2120 = vadd.f32 %v2112, -1.4531521
  %v2121 = vadd.f32 %v2113, -1.4531521
  %v2122 = vadd.f32 %v2114, -1.4531521
  %v2123 = vadd.f32 %v2115, -1.4531521
  %v2124 = vadd.f32 %v2116, -1.4531521
  %v2125 = vmul.f32 %v2117, %v2094
  %v2126 = vmul.f32 %v2118, %v2096
  %v2127 = vmul.f32 %v2119, %v2098
  %v2128 = vmul.f32 %v2120, %v2100
  %v2129 = vmul.f32 %v2121, %v2102
  %v2130 = vmul.f32 %v2122, %v2104
  %v2131 = vmul.f32 %v2123, %v2106
  %v2132 = vmul.f32 %v2124, %v2108
  %v2133 = vadd.f32 %v2125, 1.4214138
  %v2134 = vadd.f32 %v2126, 1.4214138
  %v2135 = vadd.f32 %v2127, 1.4214138
  %v2136 = vadd.f32 %v2128, 1.4214138
  %v2137 = vadd.f32 %v2129, 1.4214138
  %v2138 = vadd.f32 %v2130, 1.4214138
  %v2139 = vadd.f32 %v2131, 1.4214138
  %v2140 = vadd.f32 %v2132, 1.4214138
  %v2141 = vmul.f32 %v2133, %v2094
  %v2142 = vmul.f32 %v2134, %v2096
  %v2143 = vmul.f32 %v2135, %v2098
  %v2144 = vmul.f32 %v2136, %v2100
  %v2145 = vmul.f32 %v2137, %v2102
  %v2146 = vmul.f32 %v2138, %v2104
  %v2147 = vmul.f32 %v2139, %v2106
  %v2148 = vmul.f32 %v2140, %v2108
  %v2149 = vadd.f32 %v2141, -0.28449672
  %v2150 = vadd.f32 %v2142, -0.28449672
  %v2151 = vadd.f32 %v2143, -0.28449672
  %v2152 = vadd.f32 %v2144, -0.28449672
  %v2153 = vadd.f32 %v2145, -0.28449672
  %v2154 = vadd.f32 %v2146, -0.28449672
  %v2155 = vadd.f32 %v2147, -0.28449672
  %v2156 = vadd.f32 %v2148, -0.28449672
  %v2157 = vmul.f32 %v2149, %v2094
  %v2158 = vmul.f32 %v2150, %v2096
  %v2159 = vmul.f32 %v2151, %v2098
  %v2160 = vmul.f32 %v2152, %v2100
  %v2161 = vmul.f32 %v2153, %v2102
  %v2162 = vmul.f32 %v2154, %v2104
  %v2163 = vmul.f32 %v2155, %v2106
  %v2164 = vmul.f32 %v2156, %v2108
  %v2165 = vadd.f32 %v2157, 0.2548296
  %v2166 = vadd.f32 %v2158, 0.2548296
  %v2167 = vadd.f32 %v2159, 0.2548296
  %v2168 = vadd.f32 %v2160, 0.2548296
  %v2169 = vadd.f32 %v2161, 0.2548296
  %v2170 = vadd.f32 %v2162, 0.2548296
  %v2171 = vadd.f32 %v2163, 0.2548296
  %v2172 = vadd.f32 %v2164, 0.2548296
  %v2173 = vmul.f32 %v2165, %v2094
  %v2174 = vmul.f32 %v2166, %v2096
  %v2175 = vmul.f32 %v2167, %v2098
  %v2176 = vmul.f32 %v2168, %v2100
  %v2177 = vmul.f32 %v2169, %v2102
  %v2178 = vmul.f32 %v2170, %v2104
  %v2179 = vmul.f32 %v2171, %v2106
  %v2180 = vmul.f32 %v2172, %v2108
  %v2181 = vsub.f32 0.0, %v2069
  %v2182 = vsub.f32 0.0, %v2070
  %v2183 = vsub.f32 0.0, %v2071
  %v2184 = vsub.f32 0.0, %v2072
  %v2185 = vsub.f32 0.0, %v2073
  %v2186 = vsub.f32 0.0, %v2074
  %v2187 = vsub.f32 0.0, %v2075
  %v2188 = vsub.f32 0.0, %v2076
  %v2189 = vmul.f32 %v2181, %v2069
  %v2190 = vmul.f32 %v2182, %v2070
  %v2191 = vmul.f32 %v2183, %v2071
  %v2192 = vmul.f32 %v2184, %v2072
  %v2193 = vmul.f32 %v2185, %v2073
  %v2194 = vmul.f32 %v2186, %v2074
  %v2195 = vmul.f32 %v2187, %v2075
  %v2196 = vmul.f32 %v2188, %v2076
  %v2197 = vmul.f32 %v2189, 1.442695
  %v2198 = vpow.pop %v2197
  %v2199 = vmul.f32 %v2190, 1.442695
  %v2200 = vpow.pop %v2199
  %v2201 = vmul.f32 %v2191, 1.442695
  %v2202 = vpow.pop %v2201
  %v2203 = vmul.f32 %v2192, 1.442695
  %v2204 = vpow.pop %v2203
  %v2205 = vmul.f32 %v2193, 1.442695
  %v2206 = vpow.pop %v2205
  %v2207 = vmul.f32 %v2194, 1.442695
  %v2208 = vpow.pop %v2207
  %v2209 = vmul.f32 %v2195, 1.442695
  %v2210 = vpow.pop %v2209
  %v2211 = vmul.f32 %v2196, 1.442695
  %v2212 = vpow.pop %v2211
  %v2213 = vmul.f32 %v2173, %v2198
  %v2214 = vmul.f32 %v2174, %v2200
  %v2215 = vmul.f32 %v2175, %v2202
  %v2216 = vmul.f32 %v2176, %v2204
  %v2217 = vmul.f32 %v2177, %v2206
  %v2218 = vmul.f32 %v2178, %v2208
  %v2219 = vmul.f32 %v2179, %v2210
  %v2220 = vmul.f32 %v2180, %v2212
  %v2221 = vsub.f32 1.0, %v2213
  %v2222 = vsub.f32 1.0, %v2214
  %v2223 = vsub.f32 1.0, %v2215
  %v2224 = vsub.f32 1.0, %v2216
  %v2225 = vsub.f32 1.0, %v2217
  %v2226 = vsub.f32 1.0, %v2218
  %v2227 = vsub.f32 1.0, %v2219
  %v2228 = vsub.f32 1.0, %v2220
  %v2229 = vmul.f32 %v2061, %v2221
  %v2230 = vmul.f32 %v2062, %v2222
  %v2231 = vmul.f32 %v2063, %v2223
  %v2232 = vmul.f32 %v2064, %v2224
  %v2233 = vmul.f32 %v2065, %v2225
  %v2234 = vmul.f32 %v2066, %v2226
  %v2235 = vmul.f32 %v2067, %v2227
  %v2236 = vmul.f32 %v2068, %v2228
  %v2237 = vadd.f32 %v2229, 1.0
  %v2238 = vadd.f32 %v2230, 1.0
  %v2239 = vadd.f32 %v2231, 1.0
  %v2240 = vadd.f32 %v2232, 1.0
  %v2241 = vadd.f32 %v2233, 1.0
  %v2242 = vadd.f32 %v2234, 1.0
  %v2243 = vadd.f32 %v2235, 1.0
  %v2244 = vadd.f32 %v2236, 1.0
  %v2245 = vmul.f32 %v2037, %v2237
  %v2246 = vmul.f32 %v2038, %v2238
  %v2247 = vmul.f32 %v2039, %v2239
  %v2248 = vmul.f32 %v2040, %v2240
  %v2249 = vmul.f32 %v2041, %v2241
  %v2250 = vmul.f32 %v2042, %v2242
  %v2251 = vmul.f32 %v2043, %v2243
  %v2252 = vmul.f32 %v2044, %v2244
  %v2253 = vpack.c.bf16 %v2246, %v2245
  %v2254 = vpack.c.bf16 %v2248, %v2247
  %v2255 = vpack.c.bf16 %v2250, %v2249
  %v2256 = vpack.c.bf16 %v2252, %v2251
  %v2257 = vpack.c.bf16 %v93, %v92
  %v2259 = vlaneseq
  %v2260 = vshrl.u32 %v2259, 7
  %v2261 = vsub.s32 0, %v2260
  %v2262 = vrot.slane %v87, %v2261
  %v2265 = vsel %vm667, %v2253, 0
  %v2268 = vsel %vm667, %v2254, 0
  %v2271 = vsel %vm667, %v2255, 0
  %v2274 = vsel %vm667, %v2256, 0
  %2276 = vmatprep.subr.bf16.mxu0 0
  %2277 = vmatpush1.bf16.msra.mxu0 0
  %2278 = vmatprep.subr.bf16.mxu0 0
  %2279 = vmatpush1.bf16.msra.mxu0 0
  %2280 = vmatprep.subr.bf16.mxu0 0
  %2281 = vmatpush1.bf16.msra.mxu0 0
  %2282 = vmatprep.subr.bf16.mxu0 0
  %2283 = vmatpush1.bf16.msra.mxu0 0
  %2284 = vmatprep.subr.bf16.mxu0 0
  %2285 = vmatpush1.bf16.msra.mxu0 0
  %2286 = vmatprep.subr.bf16.mxu0 0
  %2287 = vmatpush1.bf16.msra.mxu0 0
  %2288 = vmatprep.subr.bf16.mxu0 0
  %2289 = vmatpush1.bf16.msra.mxu0 0
  %2290 = vmatprep.subr.bf16.mxu0 0
  %2291 = vmatpush1.bf16.msra.mxu0 %v2257
  %2292 = vmatprep.subr.bf16.mxu0 0
  %2293 = vmatpush2.bf16.msra.mxu0 0
  %2294 = vmatprep.subr.bf16.mxu0 0
  %2295 = vmatpush2.bf16.msra.mxu0 0
  %2296 = vmatprep.subr.bf16.mxu0 0
  %2297 = vmatpush2.bf16.msra.mxu0 0
  %2298 = vmatprep.subr.bf16.mxu0 0
  %2299 = vmatpush2.bf16.msra.mxu0 0
  %2300 = vmatprep.subr.bf16.mxu0 0
  %2301 = vmatpush2.bf16.msra.mxu0 0
  %2302 = vmatprep.subr.bf16.mxu0 0
  %2303 = vmatpush2.bf16.msra.mxu0 0
  %2304 = vmatprep.subr.bf16.mxu0 0
  %2305 = vmatpush2.bf16.msra.mxu0 0
  %2306 = vmatprep.subr.bf16.mxu0 0
  %2307 = vmatpush2.bf16.msra.mxu0 0
  %2308 = vmatprep.mubr.bf16.mxu0 0
  %2309 = vmatmul.mubr.bf16.gmra.mxu0 %v2265
  %v2310 = vpop.f32.mrf.mxu0
  %v2311 = vadd.f32 %v2262, %v2310
  %v2312 = vpop.f32.mrf.mxu0
  %v2313 = vpop.f32.mrf.mxu0
  %v2314 = vadd.f32 %v2262, %v2313
  %v2315 = vpop.f32.mrf.mxu0
  %2316 = vmatprep.mubr.bf16.mxu0 0
  %2317 = vmatmul.mubr.bf16.gmra.mxu0 %v2268
  %v2318 = vpop.f32.mrf.mxu0
  %v2319 = vadd.f32 %v2262, %v2318
  %v2320 = vpop.f32.mrf.mxu0
  %v2321 = vpop.f32.mrf.mxu0
  %v2322 = vadd.f32 %v2262, %v2321
  %v2323 = vpop.f32.mrf.mxu0
  %2324 = vmatprep.mubr.bf16.mxu0 0
  %2325 = vmatmul.mubr.bf16.gmra.mxu0 %v2271
  %v2326 = vpop.f32.mrf.mxu0
  %v2327 = vadd.f32 %v2262, %v2326
  %v2328 = vpop.f32.mrf.mxu0
  %v2329 = vpop.f32.mrf.mxu0
  %v2330 = vadd.f32 %v2262, %v2329
  %v2331 = vpop.f32.mrf.mxu0
  %2332 = vmatprep.mubr.bf16.mxu0 0
  %2333 = vmatmul.mubr.bf16.gmra.mxu0 %v2274
  %v2334 = vpop.f32.mrf.mxu0
  %v2335 = vadd.f32 %v2262, %v2334
  %v2336 = vpop.f32.mrf.mxu0
  %v2337 = vpop.f32.mrf.mxu0
  %v2338 = vadd.f32 %v2262, %v2337
  %v2339 = vpop.f32.mrf.mxu0
  %2340 = vdwg.mxu0
  %2349 = vrot.lane.b32.xlu0 %v2311, 32
  %v2350 = vpop.permute.xlu0 %2349
  %2351 = vrot.lane.b32.xlu0 %v2314, 32
  %v2352 = vpop.permute.xlu0 %2351
  %2353 = vrot.lane.b32.xlu0 %v2319, 32
  %v2354 = vpop.permute.xlu0 %2353
  %2355 = vrot.lane.b32.xlu0 %v2322, 32
  %v2356 = vpop.permute.xlu0 %2355
  %2357 = vrot.lane.b32.xlu0 %v2327, 32
  %v2358 = vpop.permute.xlu0 %2357
  %2359 = vrot.lane.b32.xlu0 %v2330, 32
  %v2360 = vpop.permute.xlu0 %2359
  %2361 = vrot.lane.b32.xlu0 %v2335, 32
  %v2362 = vpop.permute.xlu0 %2361
  %2363 = vrot.lane.b32.xlu0 %v2338, 32
  %v2364 = vpop.permute.xlu0 %2363
  %v2373 = vadd.f32 %v1728, %v2350
  %v2374 = vadd.f32 %v1729, %v2352
  %v2375 = vadd.f32 %v1730, %v2354
  %v2376 = vadd.f32 %v1731, %v2356
  %v2377 = vadd.f32 %v1732, %v2358
  %v2378 = vadd.f32 %v1733, %v2360
  %v2379 = vadd.f32 %v1734, %v2362
  %v2380 = vadd.f32 %v1735, %v2364
  %v2381 = vpack.c.bf16 %v2374, %v2373
  %v2382 = vpack.c.bf16 %v2376, %v2375
  %v2383 = vpack.c.bf16 %v2378, %v2377
  %v2384 = vpack.c.bf16 %v2380, %v2379
  %v2389 = vunpack.c.l.b16 %v2381
  %v2390 = vunpack.c.h.b16 %v2381
  %v2391 = vunpack.c.l.b16 %v2382
  %v2392 = vunpack.c.h.b16 %v2382
  %v2393 = vunpack.c.l.b16 %v2383
  %v2394 = vunpack.c.h.b16 %v2383
  %v2395 = vunpack.c.l.b16 %v2384
  %v2396 = vunpack.c.h.b16 %v2384
  %v2397 = vpack.c.b16 %v2389, %v2389
  %v2398 = vpack.c.b16 %v2390, %v2390
  %v2399 = vpack.c.b16 %v2391, %v2391
  %v2400 = vpack.c.b16 %v2392, %v2392
  %v2401 = vpack.c.b16 %v2393, %v2393
  %v2402 = vpack.c.b16 %v2394, %v2394
  %v2403 = vpack.c.b16 %v2395, %v2395
  %v2404 = vpack.c.b16 %v2396, %v2396
  %2405 = vrot.lane.b32.xlu0 %v2397, 96
  %v2406 = vpop.permute.xlu0 %2405
  %2407 = vrot.lane.b32.xlu0 %v2398, 96
  %v2408 = vpop.permute.xlu0 %2407
  %2409 = vrot.lane.b32.xlu0 %v2399, 96
  %v2410 = vpop.permute.xlu0 %2409
  %2411 = vrot.lane.b32.xlu0 %v2400, 96
  %v2412 = vpop.permute.xlu0 %2411
  %2413 = vrot.lane.b32.xlu0 %v2401, 96
  %v2414 = vpop.permute.xlu0 %2413
  %2415 = vrot.lane.b32.xlu0 %v2402, 96
  %v2416 = vpop.permute.xlu0 %2415
  %2417 = vrot.lane.b32.xlu0 %v2403, 96
  %v2418 = vpop.permute.xlu0 %2417
  %2419 = vrot.lane.b32.xlu0 %v2404, 96
  %v2420 = vpop.permute.xlu0 %2419
  %vm2429 = vcmask 125952
  %2430 = vst.msk [vmem:[%s14] sm:$0xf] %vm2429, %v2406
  %2431 = vst.msk [vmem:[%s14 + $0x4] sm:$0xf] %vm2429, %v2408
  %2432 = vst.msk [vmem:[%s14 + $0x8] sm:$0xf] %vm2429, %v2410
  %2433 = vst.msk [vmem:[%s14 + $0xc] sm:$0xf] %vm2429, %v2412
  %2434 = vst.msk [vmem:[%s14 + $0x10] sm:$0xf] %vm2429, %v2414
  %2435 = vst.msk [vmem:[%s14 + $0x14] sm:$0xf] %vm2429, %v2416
  %2436 = vst.msk [vmem:[%s14 + $0x18] sm:$0xf] %vm2429, %v2418
  %2437 = vst.msk [vmem:[%s14 + $0x1c] sm:$0xf] %vm2429, %v2420
  %v2438 = vsel %vm1263, %v918, 0.0
  %v2439 = vsel %vm1263, %v919, 0.0
  %v2440 = vadd.f32 %v2438, %v2439
  %v2441 = vsel %vm1263, %v920, 0.0
  %v2442 = vadd.f32 %v2440, %v2441
  %v2443 = vsel %vm1263, %v921, 0.0
  %v2444 = vadd.f32 %v2442, %v2443
  %v2445 = vsel %vm1263, %v922, 0.0
  %v2446 = vadd.f32 %v2444, %v2445
  %v2447 = vsel %vm1263, %v923, 0.0
  %v2448 = vadd.f32 %v2446, %v2447
  %v2449 = vsel %vm1263, %v924, 0.0
  %v2450 = vadd.f32 %v2448, %v2449
  %v2451 = vsel %vm1263, %v925, 0.0
  %v2452 = vadd.f32 %v2450, %v2451
  %v2453 = vrot.slane %v2452, 4
  %v2454 = vadd.f32 %v2452, %v2453
  %v2455 = vrot.slane %v2454, 2
  %v2456 = vadd.f32 %v2454, %v2455
  %v2457 = vrot.slane %v2456, 1
  %v2458 = vadd.f32 %v2456, %v2457
  %2459 = vxpose.xlu0.b32.start [1/16] %v918, 128
  %2460 = vxpose.xlu0.b32.cont [2/16] %v919, 128
  %2461 = vxpose.xlu0.b32.cont [3/16] %v920, 128
  %2462 = vxpose.xlu0.b32.cont [4/16] %v921, 128
  %2463 = vxpose.xlu0.b32.cont [5/16] %v922, 128
  %2464 = vxpose.xlu0.b32.cont [6/16] %v923, 128
  %2465 = vxpose.xlu0.b32.cont [7/16] %v924, 128
  %2466 = vxpose.xlu0.b32.cont [8/16] %v925, 128
  %2467 = vxpose.xlu0.b32.cont [9/16] 0.0, 128
  %2468 = vxpose.xlu0.b32.cont [10/16] 0.0, 128
  %2469 = vxpose.xlu0.b32.cont [11/16] 0.0, 128
  %2470 = vxpose.xlu0.b32.cont [12/16] 0.0, 128
  %2471 = vxpose.xlu0.b32.cont [13/16] 0.0, 128
  %2472 = vxpose.xlu0.b32.cont [14/16] 0.0, 128
  %2473 = vxpose.xlu0.b32.cont [15/16] 0.0, 128
  %2474 = vxpose.xlu0.b32.end [16/16] 0.0, 128
  %v2475 = vpop.trf.xlu0
  %v2476 = vpop.trf.xlu0
  %v2477 = vpop.trf.xlu0
  %v2478 = vpop.trf.xlu0
  %v2479 = vpop.trf.xlu0
  %v2480 = vpop.trf.xlu0
  %v2481 = vpop.trf.xlu0
  %v2482 = vpop.trf.xlu0
  %v2483 = vpop.trf.xlu0
  %v2484 = vpop.trf.xlu0
  %v2485 = vpop.trf.xlu0
  %v2486 = vpop.trf.xlu0
  %v2487 = vpop.trf.xlu0
  %v2488 = vpop.trf.xlu0
  %v2489 = vpop.trf.xlu0
  %v2490 = vpop.trf.xlu0
  %2499 = vrot.lane.b32.xlu0 %v621, 96
  %v2500 = vpop.permute.xlu0 %2499
  %2501 = vrot.lane.b32.xlu0 %v624, 96
  %v2502 = vpop.permute.xlu0 %2501
  %2503 = vrot.lane.b32.xlu0 %v629, 96
  %v2504 = vpop.permute.xlu0 %2503
  %2505 = vrot.lane.b32.xlu0 %v632, 96
  %v2506 = vpop.permute.xlu0 %2505
  %2507 = vrot.lane.b32.xlu0 %v637, 96
  %v2508 = vpop.permute.xlu0 %2507
  %2509 = vrot.lane.b32.xlu0 %v640, 96
  %v2510 = vpop.permute.xlu0 %2509
  %2511 = vrot.lane.b32.xlu0 %v645, 96
  %v2512 = vpop.permute.xlu0 %2511
  %2513 = vrot.lane.b32.xlu0 %v648, 96
  %v2514 = vpop.permute.xlu0 %2513
  %v2524 = vsel %vm1349, %v2475, 0
  %2526 = vmatprep.subr.mxu0 0.0
  %2527 = vmatpush1.msra.mxu0 0.0
  %2528 = vmatprep.subr.mxu0 0.0
  %2529 = vmatpush1.msra.mxu0 0.0
  %2530 = vmatprep.subr.mxu0 0.0
  %2531 = vmatpush1.msra.mxu0 0.0
  %2532 = vmatprep.subr.mxu0 0.0
  %2533 = vmatpush1.msra.mxu0 0.0
  %2534 = vmatprep.subr.mxu0 0.0
  %2535 = vmatpush1.msra.mxu0 0.0
  %2536 = vmatprep.subr.mxu0 0.0
  %2537 = vmatpush1.msra.mxu0 0.0
  %2538 = vmatprep.subr.mxu0 0.0
  %2539 = vmatpush1.msra.mxu0 0.0
  %2540 = vmatprep.subr.mxu0 0.0
  %2541 = vmatpush1.msra.mxu0 0.0
  %2542 = vmatprep.subr.mxu0 0.0
  %2543 = vmatpush1.msra.mxu0 %v2514
  %2544 = vmatprep.subr.mxu0 0.0
  %2545 = vmatpush1.msra.mxu0 %v2512
  %2546 = vmatprep.subr.mxu0 0.0
  %2547 = vmatpush1.msra.mxu0 %v2510
  %2548 = vmatprep.subr.mxu0 0.0
  %2549 = vmatpush1.msra.mxu0 %v2508
  %2550 = vmatprep.subr.mxu0 0.0
  %2551 = vmatpush1.msra.mxu0 %v2506
  %2552 = vmatprep.subr.mxu0 0.0
  %2553 = vmatpush1.msra.mxu0 %v2504
  %2554 = vmatprep.subr.mxu0 0.0
  %2555 = vmatpush1.msra.mxu0 %v2502
  %2556 = vmatprep.subr.mxu0 0.0
  %2557 = vmatpush1.msra.mxu0 %v2500
  %2558 = vmatprep.subr.mxu0 0.0
  %2559 = vmatpush2.msra.mxu0 0.0
  %2560 = vmatprep.subr.mxu0 0.0
  %2561 = vmatpush2.msra.mxu0 0.0
  %2562 = vmatprep.subr.mxu0 0.0
  %2563 = vmatpush2.msra.mxu0 0.0
  %2564 = vmatprep.subr.mxu0 0.0
  %2565 = vmatpush2.msra.mxu0 0.0
  %2566 = vmatprep.subr.mxu0 0.0
  %2567 = vmatpush2.msra.mxu0 0.0
  %2568 = vmatprep.subr.mxu0 0.0
  %2569 = vmatpush2.msra.mxu0 0.0
  %2570 = vmatprep.subr.mxu0 0.0
  %2571 = vmatpush2.msra.mxu0 0.0
  %2572 = vmatprep.subr.mxu0 0.0
  %2573 = vmatpush2.msra.mxu0 0.0
  %2574 = vmatprep.subr.mxu0 0.0
  %2575 = vmatpush2.msra.mxu0 0.0
  %2576 = vmatprep.subr.mxu0 0.0
  %2577 = vmatpush2.msra.mxu0 0.0
  %2578 = vmatprep.subr.mxu0 0.0
  %2579 = vmatpush2.msra.mxu0 0.0
  %2580 = vmatprep.subr.mxu0 0.0
  %2581 = vmatpush2.msra.mxu0 0.0
  %2582 = vmatprep.subr.mxu0 0.0
  %2583 = vmatpush2.msra.mxu0 0.0
  %2584 = vmatprep.subr.mxu0 0.0
  %2585 = vmatpush2.msra.mxu0 0.0
  %2586 = vmatprep.subr.mxu0 0.0
  %2587 = vmatpush2.msra.mxu0 0.0
  %2588 = vmatprep.subr.mxu0 0.0
  %2589 = vmatpush2.msra.mxu0 0.0
  %2590 = vmatprep.mubr.f32.mxu0 0.0
  %2591 = vmatmul.mubr.f32.gmra.mxu0 %v2524
  %v2592 = vpop.f32.mrf.mxu0
  %v2593 = vadd.f32 0.0, %v2592
  %v2594 = vpop.f32.mrf.mxu0
  %2595 = vdwg.mxu0
  %v2596 = vmul.f32 %v1255, %v2458
  %v2597 = vmul.f32 %v1256, %v2458
  %v2598 = vmul.f32 %v1257, %v2458
  %v2599 = vmul.f32 %v1258, %v2458
  %v2600 = vmul.f32 %v1259, %v2458
  %v2601 = vmul.f32 %v1260, %v2458
  %v2602 = vmul.f32 %v1261, %v2458
  %v2603 = vmul.f32 %v1262, %v2458
  %v2604 = vsel %vm1263, %v2596, 0.0
  %2605 = vadd.xlane.f32.xlu0 %v2604
  %v2606 = vpop.xlane.xlu0 %2605
  %v2607 = vsel %vm1263, %v2597, 0.0
  %2608 = vadd.xlane.f32.xlu0 %v2607
  %v2609 = vpop.xlane.xlu0 %2608
  %v2610 = vsel %vm1263, %v2598, 0.0
  %2611 = vadd.xlane.f32.xlu0 %v2610
  %v2612 = vpop.xlane.xlu0 %2611
  %v2613 = vsel %vm1263, %v2599, 0.0
  %2614 = vadd.xlane.f32.xlu0 %v2613
  %v2615 = vpop.xlane.xlu0 %2614
  %v2616 = vsel %vm1263, %v2600, 0.0
  %2617 = vadd.xlane.f32.xlu0 %v2616
  %v2618 = vpop.xlane.xlu0 %2617
  %v2619 = vsel %vm1263, %v2601, 0.0
  %2620 = vadd.xlane.f32.xlu0 %v2619
  %v2621 = vpop.xlane.xlu0 %2620
  %v2622 = vsel %vm1263, %v2602, 0.0
  %2623 = vadd.xlane.f32.xlu0 %v2622
  %v2624 = vpop.xlane.xlu0 %2623
  %v2625 = vsel %vm1263, %v2603, 0.0
  %2626 = vadd.xlane.f32.xlu0 %v2625
  %v2627 = vpop.xlane.xlu0 %2626
  %v2629 = vsel %vm1263, %v1255, 0
  %v2632 = vsel %vm1263, %v1256, 0
  %v2635 = vsel %vm1263, %v1257, 0
  %v2638 = vsel %vm1263, %v1258, 0
  %v2641 = vsel %vm1263, %v1259, 0
  %v2644 = vsel %vm1263, %v1260, 0
  %v2647 = vsel %vm1263, %v1261, 0
  %v2650 = vsel %vm1263, %v1262, 0
  %2652 = vmatprep.subr.mxu0 0.0
  %2653 = vmatpush1.msra.mxu0 0.0
  %2654 = vmatprep.subr.mxu0 0.0
  %2655 = vmatpush1.msra.mxu0 0.0
  %2656 = vmatprep.subr.mxu0 0.0
  %2657 = vmatpush1.msra.mxu0 0.0
  %2658 = vmatprep.subr.mxu0 0.0
  %2659 = vmatpush1.msra.mxu0 0.0
  %2660 = vmatprep.subr.mxu0 0.0
  %2661 = vmatpush1.msra.mxu0 0.0
  %2662 = vmatprep.subr.mxu0 0.0
  %2663 = vmatpush1.msra.mxu0 0.0
  %2664 = vmatprep.subr.mxu0 0.0
  %2665 = vmatpush1.msra.mxu0 0.0
  %2666 = vmatprep.subr.mxu0 0.0
  %2667 = vmatpush1.msra.mxu0 0.0
  %2668 = vmatprep.subr.mxu0 0.0
  %2669 = vmatpush1.msra.mxu0 0.0
  %2670 = vmatprep.subr.mxu0 0.0
  %2671 = vmatpush1.msra.mxu0 0.0
  %2672 = vmatprep.subr.mxu0 0.0
  %2673 = vmatpush1.msra.mxu0 0.0
  %2674 = vmatprep.subr.mxu0 0.0
  %2675 = vmatpush1.msra.mxu0 0.0
  %2676 = vmatprep.subr.mxu0 0.0
  %2677 = vmatpush1.msra.mxu0 0.0
  %2678 = vmatprep.subr.mxu0 0.0
  %2679 = vmatpush1.msra.mxu0 0.0
  %2680 = vmatprep.subr.mxu0 0.0
  %2681 = vmatpush1.msra.mxu0 0.0
  %2682 = vmatprep.subr.mxu0 0.0
  %2683 = vmatpush1.msra.mxu0 %v2593
  %2684 = vmatprep.subr.mxu0 0.0
  %2685 = vmatpush2.msra.mxu0 0.0
  %2686 = vmatprep.subr.mxu0 0.0
  %2687 = vmatpush2.msra.mxu0 0.0
  %2688 = vmatprep.subr.mxu0 0.0
  %2689 = vmatpush2.msra.mxu0 0.0
  %2690 = vmatprep.subr.mxu0 0.0
  %2691 = vmatpush2.msra.mxu0 0.0
  %2692 = vmatprep.subr.mxu0 0.0
  %2693 = vmatpush2.msra.mxu0 0.0
  %2694 = vmatprep.subr.mxu0 0.0
  %2695 = vmatpush2.msra.mxu0 0.0
  %2696 = vmatprep.subr.mxu0 0.0
  %2697 = vmatpush2.msra.mxu0 0.0
  %2698 = vmatprep.subr.mxu0 0.0
  %2699 = vmatpush2.msra.mxu0 0.0
  %2700 = vmatprep.subr.mxu0 0.0
  %2701 = vmatpush2.msra.mxu0 0.0
  %2702 = vmatprep.subr.mxu0 0.0
  %2703 = vmatpush2.msra.mxu0 0.0
  %2704 = vmatprep.subr.mxu0 0.0
  %2705 = vmatpush2.msra.mxu0 0.0
  %2706 = vmatprep.subr.mxu0 0.0
  %2707 = vmatpush2.msra.mxu0 0.0
  %2708 = vmatprep.subr.mxu0 0.0
  %2709 = vmatpush2.msra.mxu0 0.0
  %2710 = vmatprep.subr.mxu0 0.0
  %2711 = vmatpush2.msra.mxu0 0.0
  %2712 = vmatprep.subr.mxu0 0.0
  %2713 = vmatpush2.msra.mxu0 0.0
  %2714 = vmatprep.subr.mxu0 0.0
  %2715 = vmatpush2.msra.mxu0 0.0
  %2716 = vmatprep.mubr.f32.mxu0 0.0
  %2717 = vmatmul.mubr.f32.gmra.mxu0 %v2629
  %v2718 = vpop.f32.mrf.mxu0
  %v2719 = vadd.f32 0.0, %v2718
  %v2720 = vpop.f32.mrf.mxu0
  %2721 = vmatprep.mubr.f32.mxu0 0.0
  %2722 = vmatmul.mubr.f32.gmra.mxu0 %v2632
  %v2723 = vpop.f32.mrf.mxu0
  %v2724 = vadd.f32 0.0, %v2723
  %v2725 = vpop.f32.mrf.mxu0
  %2726 = vmatprep.mubr.f32.mxu0 0.0
  %2727 = vmatmul.mubr.f32.gmra.mxu0 %v2635
  %v2728 = vpop.f32.mrf.mxu0
  %v2729 = vadd.f32 0.0, %v2728
  %v2730 = vpop.f32.mrf.mxu0
  %2731 = vmatprep.mubr.f32.mxu0 0.0
  %2732 = vmatmul.mubr.f32.gmra.mxu0 %v2638
  %v2733 = vpop.f32.mrf.mxu0
  %v2734 = vadd.f32 0.0, %v2733
  %v2735 = vpop.f32.mrf.mxu0
  %2736 = vmatprep.mubr.f32.mxu0 0.0
  %2737 = vmatmul.mubr.f32.gmra.mxu0 %v2641
  %v2738 = vpop.f32.mrf.mxu0
  %v2739 = vadd.f32 0.0, %v2738
  %v2740 = vpop.f32.mrf.mxu0
  %2741 = vmatprep.mubr.f32.mxu0 0.0
  %2742 = vmatmul.mubr.f32.gmra.mxu0 %v2644
  %v2743 = vpop.f32.mrf.mxu0
  %v2744 = vadd.f32 0.0, %v2743
  %v2745 = vpop.f32.mrf.mxu0
  %2746 = vmatprep.mubr.f32.mxu0 0.0
  %2747 = vmatmul.mubr.f32.gmra.mxu0 %v2647
  %v2748 = vpop.f32.mrf.mxu0
  %v2749 = vadd.f32 0.0, %v2748
  %v2750 = vpop.f32.mrf.mxu0
  %2751 = vmatprep.mubr.f32.mxu0 0.0
  %2752 = vmatmul.mubr.f32.gmra.mxu0 %v2650
  %v2753 = vpop.f32.mrf.mxu0
  %v2754 = vadd.f32 0.0, %v2753
  %v2755 = vpop.f32.mrf.mxu0
  %2756 = vdwg.mxu0
  %v2757 = vadd.f32 %v2606, 1e-08
  %v2758 = vadd.f32 %v2609, 1e-08
  %v2759 = vadd.f32 %v2612, 1e-08
  %v2760 = vadd.f32 %v2615, 1e-08
  %v2761 = vadd.f32 %v2618, 1e-08
  %v2762 = vadd.f32 %v2621, 1e-08
  %v2763 = vadd.f32 %v2624, 1e-08
  %v2764 = vadd.f32 %v2627, 1e-08
  %v2765 = vrcp.pop %v2757
  %v2766 = vmul.f32 %v2719, %v2765
  %v2767 = vrcp.pop %v2758
  %v2768 = vmul.f32 %v2724, %v2767
  %v2769 = vrcp.pop %v2759
  %v2770 = vmul.f32 %v2729, %v2769
  %v2771 = vrcp.pop %v2760
  %v2772 = vmul.f32 %v2734, %v2771
  %v2773 = vrcp.pop %v2761
  %v2774 = vmul.f32 %v2739, %v2773
  %v2775 = vrcp.pop %v2762
  %v2776 = vmul.f32 %v2744, %v2775
  %v2777 = vrcp.pop %v2763
  %v2778 = vmul.f32 %v2749, %v2777
  %v2779 = vrcp.pop %v2764
  %v2780 = vmul.f32 %v2754, %v2779
  %v2781 = vpack.c.bf16 %v2768, %v2766
  %v2782 = vpack.c.bf16 %v2772, %v2770
  %v2783 = vpack.c.bf16 %v2776, %v2774
  %v2784 = vpack.c.bf16 %v2780, %v2778
  %v2786 = vsel %vm667, %v2781, 0
  %v2789 = vsel %vm667, %v2782, 0
  %v2792 = vsel %vm667, %v2783, 0
  %v2795 = vsel %vm667, %v2784, 0
  %2797 = vmatprep.subr.bf16.mxu0 0
  %2798 = vmatpush1.bf16.msra.mxu0 0
  %2799 = vmatprep.subr.bf16.mxu0 0
  %2800 = vmatpush1.bf16.msra.mxu0 0
  %2801 = vmatprep.subr.bf16.mxu0 0
  %2802 = vmatpush1.bf16.msra.mxu0 0
  %2803 = vmatprep.subr.bf16.mxu0 0
  %2804 = vmatpush1.bf16.msra.mxu0 0
  %2805 = vmatprep.subr.bf16.mxu0 0
  %2806 = vmatpush1.bf16.msra.mxu0 0
  %2807 = vmatprep.subr.bf16.mxu0 0
  %2808 = vmatpush1.bf16.msra.mxu0 0
  %2809 = vmatprep.subr.bf16.mxu0 0
  %2810 = vmatpush1.bf16.msra.mxu0 0
  %2811 = vmatprep.subr.bf16.mxu0 0
  %2812 = vmatpush1.bf16.msra.mxu0 %v1612
  %2813 = vmatprep.subr.bf16.mxu0 0
  %2814 = vmatpush2.bf16.msra.mxu0 0
  %2815 = vmatprep.subr.bf16.mxu0 0
  %2816 = vmatpush2.bf16.msra.mxu0 0
  %2817 = vmatprep.subr.bf16.mxu0 0
  %2818 = vmatpush2.bf16.msra.mxu0 0
  %2819 = vmatprep.subr.bf16.mxu0 0
  %2820 = vmatpush2.bf16.msra.mxu0 0
  %2821 = vmatprep.subr.bf16.mxu0 0
  %2822 = vmatpush2.bf16.msra.mxu0 0
  %2823 = vmatprep.subr.bf16.mxu0 0
  %2824 = vmatpush2.bf16.msra.mxu0 0
  %2825 = vmatprep.subr.bf16.mxu0 0
  %2826 = vmatpush2.bf16.msra.mxu0 0
  %2827 = vmatprep.subr.bf16.mxu0 0
  %2828 = vmatpush2.bf16.msra.mxu0 0
  %2829 = vmatprep.mubr.bf16.mxu0 0
  %2830 = vmatmul.mubr.bf16.gmra.mxu0 %v2786
  %v2831 = vpop.f32.mrf.mxu0
  %v2832 = vadd.f32 %v1617, %v2831
  %v2833 = vpop.f32.mrf.mxu0
  %v2834 = vpop.f32.mrf.mxu0
  %v2835 = vadd.f32 %v1617, %v2834
  %v2836 = vpop.f32.mrf.mxu0
  %2837 = vmatprep.mubr.bf16.mxu0 0
  %2838 = vmatmul.mubr.bf16.gmra.mxu0 %v2789
  %v2839 = vpop.f32.mrf.mxu0
  %v2840 = vadd.f32 %v1617, %v2839
  %v2841 = vpop.f32.mrf.mxu0
  %v2842 = vpop.f32.mrf.mxu0
  %v2843 = vadd.f32 %v1617, %v2842
  %v2844 = vpop.f32.mrf.mxu0
  %2845 = vmatprep.mubr.bf16.mxu0 0
  %2846 = vmatmul.mubr.bf16.gmra.mxu0 %v2792
  %v2847 = vpop.f32.mrf.mxu0
  %v2848 = vadd.f32 %v1617, %v2847
  %v2849 = vpop.f32.mrf.mxu0
  %v2850 = vpop.f32.mrf.mxu0
  %v2851 = vadd.f32 %v1617, %v2850
  %v2852 = vpop.f32.mrf.mxu0
  %2853 = vmatprep.mubr.bf16.mxu0 0
  %2854 = vmatmul.mubr.bf16.gmra.mxu0 %v2795
  %v2855 = vpop.f32.mrf.mxu0
  %v2856 = vadd.f32 %v1617, %v2855
  %v2857 = vpop.f32.mrf.mxu0
  %v2858 = vpop.f32.mrf.mxu0
  %v2859 = vadd.f32 %v1617, %v2858
  %v2860 = vpop.f32.mrf.mxu0
  %2861 = vdwg.mxu0
  %2870 = vrot.lane.b32.xlu0 %v2832, 32
  %v2871 = vpop.permute.xlu0 %2870
  %2872 = vrot.lane.b32.xlu0 %v2835, 32
  %v2873 = vpop.permute.xlu0 %2872
  %2874 = vrot.lane.b32.xlu0 %v2840, 32
  %v2875 = vpop.permute.xlu0 %2874
  %2876 = vrot.lane.b32.xlu0 %v2843, 32
  %v2877 = vpop.permute.xlu0 %2876
  %2878 = vrot.lane.b32.xlu0 %v2848, 32
  %v2879 = vpop.permute.xlu0 %2878
  %2880 = vrot.lane.b32.xlu0 %v2851, 32
  %v2881 = vpop.permute.xlu0 %2880
  %2882 = vrot.lane.b32.xlu0 %v2856, 32
  %v2883 = vpop.permute.xlu0 %2882
  %2884 = vrot.lane.b32.xlu0 %v2859, 32
  %v2885 = vpop.permute.xlu0 %2884
  %v2894 = vadd.f32 %v621, %v2871
  %v2895 = vadd.f32 %v624, %v2873
  %v2896 = vadd.f32 %v629, %v2875
  %v2897 = vadd.f32 %v632, %v2877
  %v2898 = vadd.f32 %v637, %v2879
  %v2899 = vadd.f32 %v640, %v2881
  %v2900 = vadd.f32 %v645, %v2883
  %v2901 = vadd.f32 %v648, %v2885
  %2910 = vrot.lane.b32.xlu0 %v2894, 96
  %v2911 = vpop.permute.xlu0 %2910
  %2912 = vrot.lane.b32.xlu0 %v2895, 96
  %v2913 = vpop.permute.xlu0 %2912
  %2914 = vrot.lane.b32.xlu0 %v2896, 96
  %v2915 = vpop.permute.xlu0 %2914
  %2916 = vrot.lane.b32.xlu0 %v2897, 96
  %v2917 = vpop.permute.xlu0 %2916
  %2918 = vrot.lane.b32.xlu0 %v2898, 96
  %v2919 = vpop.permute.xlu0 %2918
  %2920 = vrot.lane.b32.xlu0 %v2899, 96
  %v2921 = vpop.permute.xlu0 %2920
  %2922 = vrot.lane.b32.xlu0 %v2900, 96
  %v2923 = vpop.permute.xlu0 %2922
  %2924 = vrot.lane.b32.xlu0 %v2901, 96
  %v2925 = vpop.permute.xlu0 %2924
  %v2934 = vsel %vm667, %v2911, 0.0
  %2935 = vadd.xlane.f32.xlu0 %v2934
  %v2936 = vpop.xlane.xlu0 %2935
  %v2937 = vsel %vm667, %v2913, 0.0
  %2938 = vadd.xlane.f32.xlu0 %v2937
  %v2939 = vpop.xlane.xlu0 %2938
  %v2940 = vsel %vm667, %v2915, 0.0
  %2941 = vadd.xlane.f32.xlu0 %v2940
  %v2942 = vpop.xlane.xlu0 %2941
  %v2943 = vsel %vm667, %v2917, 0.0
  %2944 = vadd.xlane.f32.xlu0 %v2943
  %v2945 = vpop.xlane.xlu0 %2944
  %v2946 = vsel %vm667, %v2919, 0.0
  %2947 = vadd.xlane.f32.xlu0 %v2946
  %v2948 = vpop.xlane.xlu0 %2947
  %v2949 = vsel %vm667, %v2921, 0.0
  %2950 = vadd.xlane.f32.xlu0 %v2949
  %v2951 = vpop.xlane.xlu0 %2950
  %v2952 = vsel %vm667, %v2923, 0.0
  %2953 = vadd.xlane.f32.xlu0 %v2952
  %v2954 = vpop.xlane.xlu0 %2953
  %v2955 = vsel %vm667, %v2925, 0.0
  %2956 = vadd.xlane.f32.xlu0 %v2955
  %v2957 = vpop.xlane.xlu0 %2956
  %v2958 = vmul.f32 %v2936, %v1792
  %v2959 = vmul.f32 %v2939, %v1792
  %v2960 = vmul.f32 %v2942, %v1792
  %v2961 = vmul.f32 %v2945, %v1792
  %v2962 = vmul.f32 %v2948, %v1792
  %v2963 = vmul.f32 %v2951, %v1792
  %v2964 = vmul.f32 %v2954, %v1792
  %v2965 = vmul.f32 %v2957, %v1792
  %v2966 = vsub.f32 %v2894, %v2958
  %v2967 = vsub.f32 %v2895, %v2959
  %v2968 = vsub.f32 %v2896, %v2960
  %v2969 = vsub.f32 %v2897, %v2961
  %v2970 = vsub.f32 %v2898, %v2962
  %v2971 = vsub.f32 %v2899, %v2963
  %v2972 = vsub.f32 %v2900, %v2964
  %v2973 = vsub.f32 %v2901, %v2965
  %v2974 = vmul.f32 %v2966, %v2966
  %v2975 = vmul.f32 %v2967, %v2967
  %v2976 = vmul.f32 %v2968, %v2968
  %v2977 = vmul.f32 %v2969, %v2969
  %v2978 = vmul.f32 %v2970, %v2970
  %v2979 = vmul.f32 %v2971, %v2971
  %v2980 = vmul.f32 %v2972, %v2972
  %v2981 = vmul.f32 %v2973, %v2973
  %2990 = vrot.lane.b32.xlu0 %v2974, 96
  %v2991 = vpop.permute.xlu0 %2990
  %2992 = vrot.lane.b32.xlu0 %v2975, 96
  %v2993 = vpop.permute.xlu0 %2992
  %2994 = vrot.lane.b32.xlu0 %v2976, 96
  %v2995 = vpop.permute.xlu0 %2994
  %2996 = vrot.lane.b32.xlu0 %v2977, 96
  %v2997 = vpop.permute.xlu0 %2996
  %2998 = vrot.lane.b32.xlu0 %v2978, 96
  %v2999 = vpop.permute.xlu0 %2998
  %3000 = vrot.lane.b32.xlu0 %v2979, 96
  %v3001 = vpop.permute.xlu0 %3000
  %3002 = vrot.lane.b32.xlu0 %v2980, 96
  %v3003 = vpop.permute.xlu0 %3002
  %3004 = vrot.lane.b32.xlu0 %v2981, 96
  %v3005 = vpop.permute.xlu0 %3004
  %v3014 = vsel %vm667, %v2991, 0.0
  %3015 = vadd.xlane.f32.xlu0 %v3014
  %v3016 = vpop.xlane.xlu0 %3015
  %v3017 = vsel %vm667, %v2993, 0.0
  %3018 = vadd.xlane.f32.xlu0 %v3017
  %v3019 = vpop.xlane.xlu0 %3018
  %v3020 = vsel %vm667, %v2995, 0.0
  %3021 = vadd.xlane.f32.xlu0 %v3020
  %v3022 = vpop.xlane.xlu0 %3021
  %v3023 = vsel %vm667, %v2997, 0.0
  %3024 = vadd.xlane.f32.xlu0 %v3023
  %v3025 = vpop.xlane.xlu0 %3024
  %v3026 = vsel %vm667, %v2999, 0.0
  %3027 = vadd.xlane.f32.xlu0 %v3026
  %v3028 = vpop.xlane.xlu0 %3027
  %v3029 = vsel %vm667, %v3001, 0.0
  %3030 = vadd.xlane.f32.xlu0 %v3029
  %v3031 = vpop.xlane.xlu0 %3030
  %v3032 = vsel %vm667, %v3003, 0.0
  %3033 = vadd.xlane.f32.xlu0 %v3032
  %v3034 = vpop.xlane.xlu0 %3033
  %v3035 = vsel %vm667, %v3005, 0.0
  %3036 = vadd.xlane.f32.xlu0 %v3035
  %v3037 = vpop.xlane.xlu0 %3036
  %v3038 = vmul.f32 %v3016, %v1792
  %v3039 = vmul.f32 %v3019, %v1792
  %v3040 = vmul.f32 %v3022, %v1792
  %v3041 = vmul.f32 %v3025, %v1792
  %v3042 = vmul.f32 %v3028, %v1792
  %v3043 = vmul.f32 %v3031, %v1792
  %v3044 = vmul.f32 %v3034, %v1792
  %v3045 = vmul.f32 %v3037, %v1792
  %v3046 = vadd.f32 %v3038, 1e-05
  %v3047 = vadd.f32 %v3039, 1e-05
  %v3048 = vadd.f32 %v3040, 1e-05
  %v3049 = vadd.f32 %v3041, 1e-05
  %v3050 = vadd.f32 %v3042, 1e-05
  %v3051 = vadd.f32 %v3043, 1e-05
  %v3052 = vadd.f32 %v3044, 1e-05
  %v3053 = vadd.f32 %v3045, 1e-05
  %v3054 = vrsqrt.pop %v3046
  %v3055 = vrsqrt.pop %v3047
  %v3056 = vrsqrt.pop %v3048
  %v3057 = vrsqrt.pop %v3049
  %v3058 = vrsqrt.pop %v3050
  %v3059 = vrsqrt.pop %v3051
  %v3060 = vrsqrt.pop %v3052
  %v3061 = vrsqrt.pop %v3053
  %v3062 = vmul.f32 %v2966, %v3054
  %v3063 = vmul.f32 %v2967, %v3055
  %v3064 = vmul.f32 %v2968, %v3056
  %v3065 = vmul.f32 %v2969, %v3057
  %v3066 = vmul.f32 %v2970, %v3058
  %v3067 = vmul.f32 %v2971, %v3059
  %v3068 = vmul.f32 %v2972, %v3060
  %v3069 = vmul.f32 %v2973, %v3061
  %v3070 = vmul.f32 %v3062, %v1911
  %v3071 = vmul.f32 %v3063, %v1911
  %v3072 = vmul.f32 %v3064, %v1911
  %v3073 = vmul.f32 %v3065, %v1911
  %v3074 = vmul.f32 %v3066, %v1911
  %v3075 = vmul.f32 %v3067, %v1911
  %v3076 = vmul.f32 %v3068, %v1911
  %v3077 = vmul.f32 %v3069, %v1911
  %v3078 = vadd.f32 %v3070, %v1927
  %v3079 = vadd.f32 %v3071, %v1927
  %v3080 = vadd.f32 %v3072, %v1927
  %v3081 = vadd.f32 %v3073, %v1927
  %v3082 = vadd.f32 %v3074, %v1927
  %v3083 = vadd.f32 %v3075, %v1927
  %v3084 = vadd.f32 %v3076, %v1927
  %v3085 = vadd.f32 %v3077, %v1927
  %v3086 = vpack.c.bf16 %v3079, %v3078
  %v3087 = vpack.c.bf16 %v3081, %v3080
  %v3088 = vpack.c.bf16 %v3083, %v3082
  %v3089 = vpack.c.bf16 %v3085, %v3084
  %3094 = vrot.lane.b32.xlu0 %v3086, 96
  %v3095 = vpop.permute.xlu0 %3094
  %3096 = vrot.lane.b32.xlu0 %v3087, 96
  %v3097 = vpop.permute.xlu0 %3096
  %3098 = vrot.lane.b32.xlu0 %v3088, 96
  %v3099 = vpop.permute.xlu0 %3098
  %3100 = vrot.lane.b32.xlu0 %v3089, 96
  %v3101 = vpop.permute.xlu0 %3100
  %v3103 = vsel %vm667, %v3095, 0
  %v3106 = vsel %vm667, %v3097, 0
  %v3109 = vsel %vm667, %v3099, 0
  %v3112 = vsel %vm667, %v3101, 0
  %3114 = vmatprep.subr.bf16.mxu0 0
  %3115 = vmatpush1.bf16.msra.mxu0 0
  %3116 = vmatprep.subr.bf16.mxu0 0
  %3117 = vmatpush1.bf16.msra.mxu0 0
  %3118 = vmatprep.subr.bf16.mxu0 0
  %3119 = vmatpush1.bf16.msra.mxu0 0
  %3120 = vmatprep.subr.bf16.mxu0 0
  %3121 = vmatpush1.bf16.msra.mxu0 0
  %3122 = vmatprep.subr.bf16.mxu0 0
  %3123 = vmatpush1.bf16.msra.mxu0 0
  %3124 = vmatprep.subr.bf16.mxu0 0
  %3125 = vmatpush1.bf16.msra.mxu0 0
  %3126 = vmatprep.subr.bf16.mxu0 0
  %3127 = vmatpush1.bf16.msra.mxu0 0
  %3128 = vmatprep.subr.bf16.mxu0 0
  %3129 = vmatpush1.bf16.msra.mxu0 %v1941
  %3130 = vmatprep.subr.bf16.mxu0 0
  %3131 = vmatpush2.bf16.msra.mxu0 0
  %3132 = vmatprep.subr.bf16.mxu0 0
  %3133 = vmatpush2.bf16.msra.mxu0 0
  %3134 = vmatprep.subr.bf16.mxu0 0
  %3135 = vmatpush2.bf16.msra.mxu0 0
  %3136 = vmatprep.subr.bf16.mxu0 0
  %3137 = vmatpush2.bf16.msra.mxu0 0
  %3138 = vmatprep.subr.bf16.mxu0 0
  %3139 = vmatpush2.bf16.msra.mxu0 0
  %3140 = vmatprep.subr.bf16.mxu0 0
  %3141 = vmatpush2.bf16.msra.mxu0 0
  %3142 = vmatprep.subr.bf16.mxu0 0
  %3143 = vmatpush2.bf16.msra.mxu0 0
  %3144 = vmatprep.subr.bf16.mxu0 0
  %3145 = vmatpush2.bf16.msra.mxu0 0
  %3146 = vmatprep.mubr.bf16.mxu0 0
  %3147 = vmatmul.mubr.bf16.gmra.mxu0 %v3103
  %v3148 = vpop.f32.mrf.mxu0
  %v3149 = vadd.f32 %v1946, %v3148
  %v3150 = vpop.f32.mrf.mxu0
  %v3151 = vpop.f32.mrf.mxu0
  %v3152 = vadd.f32 %v1946, %v3151
  %v3153 = vpop.f32.mrf.mxu0
  %3154 = vmatprep.mubr.bf16.mxu0 0
  %3155 = vmatmul.mubr.bf16.gmra.mxu0 %v3106
  %v3156 = vpop.f32.mrf.mxu0
  %v3157 = vadd.f32 %v1946, %v3156
  %v3158 = vpop.f32.mrf.mxu0
  %v3159 = vpop.f32.mrf.mxu0
  %v3160 = vadd.f32 %v1946, %v3159
  %v3161 = vpop.f32.mrf.mxu0
  %3162 = vmatprep.mubr.bf16.mxu0 0
  %3163 = vmatmul.mubr.bf16.gmra.mxu0 %v3109
  %v3164 = vpop.f32.mrf.mxu0
  %v3165 = vadd.f32 %v1946, %v3164
  %v3166 = vpop.f32.mrf.mxu0
  %v3167 = vpop.f32.mrf.mxu0
  %v3168 = vadd.f32 %v1946, %v3167
  %v3169 = vpop.f32.mrf.mxu0
  %3170 = vmatprep.mubr.bf16.mxu0 0
  %3171 = vmatmul.mubr.bf16.gmra.mxu0 %v3112
  %v3172 = vpop.f32.mrf.mxu0
  %v3173 = vadd.f32 %v1946, %v3172
  %v3174 = vpop.f32.mrf.mxu0
  %v3175 = vpop.f32.mrf.mxu0
  %v3176 = vadd.f32 %v1946, %v3175
  %v3177 = vpop.f32.mrf.mxu0
  %3178 = vdwg.mxu0
  %v3179 = vmul.f32 %v3149, 0.5
  %v3180 = vmul.f32 %v3152, 0.5
  %v3181 = vmul.f32 %v3157, 0.5
  %v3182 = vmul.f32 %v3160, 0.5
  %v3183 = vmul.f32 %v3165, 0.5
  %v3184 = vmul.f32 %v3168, 0.5
  %v3185 = vmul.f32 %v3173, 0.5
  %v3186 = vmul.f32 %v3176, 0.5
  %v3187 = vmul.f32 %v3149, 0.70710677
  %v3188 = vmul.f32 %v3152, 0.70710677
  %v3189 = vmul.f32 %v3157, 0.70710677
  %v3190 = vmul.f32 %v3160, 0.70710677
  %v3191 = vmul.f32 %v3165, 0.70710677
  %v3192 = vmul.f32 %v3168, 0.70710677
  %v3193 = vmul.f32 %v3173, 0.70710677
  %v3194 = vmul.f32 %v3176, 0.70710677
  %vm3195 = vcmp.ge.f32.partialorder %v3187, 0.0
  %vm3196 = vcmp.ge.f32.partialorder %v3188, 0.0
  %vm3197 = vcmp.ge.f32.partialorder %v3189, 0.0
  %vm3198 = vcmp.ge.f32.partialorder %v3190, 0.0
  %vm3199 = vcmp.ge.f32.partialorder %v3191, 0.0
  %vm3200 = vcmp.ge.f32.partialorder %v3192, 0.0
  %vm3201 = vcmp.ge.f32.partialorder %v3193, 0.0
  %vm3202 = vcmp.ge.f32.partialorder %v3194, 0.0
  %v3203 = vsel %vm3195, 1.0, -1.0
  %v3204 = vsel %vm3196, 1.0, -1.0
  %v3205 = vsel %vm3197, 1.0, -1.0
  %v3206 = vsel %vm3198, 1.0, -1.0
  %v3207 = vsel %vm3199, 1.0, -1.0
  %v3208 = vsel %vm3200, 1.0, -1.0
  %v3209 = vsel %vm3201, 1.0, -1.0
  %v3210 = vsel %vm3202, 1.0, -1.0
  %v3211 = vand.u32 2147483647, %v3187
  %v3212 = vand.u32 2147483647, %v3188
  %v3213 = vand.u32 2147483647, %v3189
  %v3214 = vand.u32 2147483647, %v3190
  %v3215 = vand.u32 2147483647, %v3191
  %v3216 = vand.u32 2147483647, %v3192
  %v3217 = vand.u32 2147483647, %v3193
  %v3218 = vand.u32 2147483647, %v3194
  %v3219 = vmul.f32 %v3211, 0.3275911
  %v3220 = vmul.f32 %v3212, 0.3275911
  %v3221 = vmul.f32 %v3213, 0.3275911
  %v3222 = vmul.f32 %v3214, 0.3275911
  %v3223 = vmul.f32 %v3215, 0.3275911
  %v3224 = vmul.f32 %v3216, 0.3275911
  %v3225 = vmul.f32 %v3217, 0.3275911
  %v3226 = vmul.f32 %v3218, 0.3275911
  %v3227 = vadd.f32 %v3219, 1.0
  %v3228 = vadd.f32 %v3220, 1.0
  %v3229 = vadd.f32 %v3221, 1.0
  %v3230 = vadd.f32 %v3222, 1.0
  %v3231 = vadd.f32 %v3223, 1.0
  %v3232 = vadd.f32 %v3224, 1.0
  %v3233 = vadd.f32 %v3225, 1.0
  %v3234 = vadd.f32 %v3226, 1.0
  %v3235 = vrcp.pop %v3227
  %v3236 = vmul.f32 1.0, %v3235
  %v3237 = vrcp.pop %v3228
  %v3238 = vmul.f32 1.0, %v3237
  %v3239 = vrcp.pop %v3229
  %v3240 = vmul.f32 1.0, %v3239
  %v3241 = vrcp.pop %v3230
  %v3242 = vmul.f32 1.0, %v3241
  %v3243 = vrcp.pop %v3231
  %v3244 = vmul.f32 1.0, %v3243
  %v3245 = vrcp.pop %v3232
  %v3246 = vmul.f32 1.0, %v3245
  %v3247 = vrcp.pop %v3233
  %v3248 = vmul.f32 1.0, %v3247
  %v3249 = vrcp.pop %v3234
  %v3250 = vmul.f32 1.0, %v3249
  %v3251 = vmul.f32 %v3236, 1.0614054
  %v3252 = vmul.f32 %v3238, 1.0614054
  %v3253 = vmul.f32 %v3240, 1.0614054
  %v3254 = vmul.f32 %v3242, 1.0614054
  %v3255 = vmul.f32 %v3244, 1.0614054
  %v3256 = vmul.f32 %v3246, 1.0614054
  %v3257 = vmul.f32 %v3248, 1.0614054
  %v3258 = vmul.f32 %v3250, 1.0614054
  %v3259 = vadd.f32 %v3251, -1.4531521
  %v3260 = vadd.f32 %v3252, -1.4531521
  %v3261 = vadd.f32 %v3253, -1.4531521
  %v3262 = vadd.f32 %v3254, -1.4531521
  %v3263 = vadd.f32 %v3255, -1.4531521
  %v3264 = vadd.f32 %v3256, -1.4531521
  %v3265 = vadd.f32 %v3257, -1.4531521
  %v3266 = vadd.f32 %v3258, -1.4531521
  %v3267 = vmul.f32 %v3259, %v3236
  %v3268 = vmul.f32 %v3260, %v3238
  %v3269 = vmul.f32 %v3261, %v3240
  %v3270 = vmul.f32 %v3262, %v3242
  %v3271 = vmul.f32 %v3263, %v3244
  %v3272 = vmul.f32 %v3264, %v3246
  %v3273 = vmul.f32 %v3265, %v3248
  %v3274 = vmul.f32 %v3266, %v3250
  %v3275 = vadd.f32 %v3267, 1.4214138
  %v3276 = vadd.f32 %v3268, 1.4214138
  %v3277 = vadd.f32 %v3269, 1.4214138
  %v3278 = vadd.f32 %v3270, 1.4214138
  %v3279 = vadd.f32 %v3271, 1.4214138
  %v3280 = vadd.f32 %v3272, 1.4214138
  %v3281 = vadd.f32 %v3273, 1.4214138
  %v3282 = vadd.f32 %v3274, 1.4214138
  %v3283 = vmul.f32 %v3275, %v3236
  %v3284 = vmul.f32 %v3276, %v3238
  %v3285 = vmul.f32 %v3277, %v3240
  %v3286 = vmul.f32 %v3278, %v3242
  %v3287 = vmul.f32 %v3279, %v3244
  %v3288 = vmul.f32 %v3280, %v3246
  %v3289 = vmul.f32 %v3281, %v3248
  %v3290 = vmul.f32 %v3282, %v3250
  %v3291 = vadd.f32 %v3283, -0.28449672
  %v3292 = vadd.f32 %v3284, -0.28449672
  %v3293 = vadd.f32 %v3285, -0.28449672
  %v3294 = vadd.f32 %v3286, -0.28449672
  %v3295 = vadd.f32 %v3287, -0.28449672
  %v3296 = vadd.f32 %v3288, -0.28449672
  %v3297 = vadd.f32 %v3289, -0.28449672
  %v3298 = vadd.f32 %v3290, -0.28449672
  %v3299 = vmul.f32 %v3291, %v3236
  %v3300 = vmul.f32 %v3292, %v3238
  %v3301 = vmul.f32 %v3293, %v3240
  %v3302 = vmul.f32 %v3294, %v3242
  %v3303 = vmul.f32 %v3295, %v3244
  %v3304 = vmul.f32 %v3296, %v3246
  %v3305 = vmul.f32 %v3297, %v3248
  %v3306 = vmul.f32 %v3298, %v3250
  %v3307 = vadd.f32 %v3299, 0.2548296
  %v3308 = vadd.f32 %v3300, 0.2548296
  %v3309 = vadd.f32 %v3301, 0.2548296
  %v3310 = vadd.f32 %v3302, 0.2548296
  %v3311 = vadd.f32 %v3303, 0.2548296
  %v3312 = vadd.f32 %v3304, 0.2548296
  %v3313 = vadd.f32 %v3305, 0.2548296
  %v3314 = vadd.f32 %v3306, 0.2548296
  %v3315 = vmul.f32 %v3307, %v3236
  %v3316 = vmul.f32 %v3308, %v3238
  %v3317 = vmul.f32 %v3309, %v3240
  %v3318 = vmul.f32 %v3310, %v3242
  %v3319 = vmul.f32 %v3311, %v3244
  %v3320 = vmul.f32 %v3312, %v3246
  %v3321 = vmul.f32 %v3313, %v3248
  %v3322 = vmul.f32 %v3314, %v3250
  %v3323 = vsub.f32 0.0, %v3211
  %v3324 = vsub.f32 0.0, %v3212
  %v3325 = vsub.f32 0.0, %v3213
  %v3326 = vsub.f32 0.0, %v3214
  %v3327 = vsub.f32 0.0, %v3215
  %v3328 = vsub.f32 0.0, %v3216
  %v3329 = vsub.f32 0.0, %v3217
  %v3330 = vsub.f32 0.0, %v3218
  %v3331 = vmul.f32 %v3323, %v3211
  %v3332 = vmul.f32 %v3324, %v3212
  %v3333 = vmul.f32 %v3325, %v3213
  %v3334 = vmul.f32 %v3326, %v3214
  %v3335 = vmul.f32 %v3327, %v3215
  %v3336 = vmul.f32 %v3328, %v3216
  %v3337 = vmul.f32 %v3329, %v3217
  %v3338 = vmul.f32 %v3330, %v3218
  %v3339 = vmul.f32 %v3331, 1.442695
  %v3340 = vpow.pop %v3339
  %v3341 = vmul.f32 %v3332, 1.442695
  %v3342 = vpow.pop %v3341
  %v3343 = vmul.f32 %v3333, 1.442695
  %v3344 = vpow.pop %v3343
  %v3345 = vmul.f32 %v3334, 1.442695
  %v3346 = vpow.pop %v3345
  %v3347 = vmul.f32 %v3335, 1.442695
  %v3348 = vpow.pop %v3347
  %v3349 = vmul.f32 %v3336, 1.442695
  %v3350 = vpow.pop %v3349
  %v3351 = vmul.f32 %v3337, 1.442695
  %v3352 = vpow.pop %v3351
  %v3353 = vmul.f32 %v3338, 1.442695
  %v3354 = vpow.pop %v3353
  %v3355 = vmul.f32 %v3315, %v3340
  %v3356 = vmul.f32 %v3316, %v3342
  %v3357 = vmul.f32 %v3317, %v3344
  %v3358 = vmul.f32 %v3318, %v3346
  %v3359 = vmul.f32 %v3319, %v3348
  %v3360 = vmul.f32 %v3320, %v3350
  %v3361 = vmul.f32 %v3321, %v3352
  %v3362 = vmul.f32 %v3322, %v3354
  %v3363 = vsub.f32 1.0, %v3355
  %v3364 = vsub.f32 1.0, %v3356
  %v3365 = vsub.f32 1.0, %v3357
  %v3366 = vsub.f32 1.0, %v3358
  %v3367 = vsub.f32 1.0, %v3359
  %v3368 = vsub.f32 1.0, %v3360
  %v3369 = vsub.f32 1.0, %v3361
  %v3370 = vsub.f32 1.0, %v3362
  %v3371 = vmul.f32 %v3203, %v3363
  %v3372 = vmul.f32 %v3204, %v3364
  %v3373 = vmul.f32 %v3205, %v3365
  %v3374 = vmul.f32 %v3206, %v3366
  %v3375 = vmul.f32 %v3207, %v3367
  %v3376 = vmul.f32 %v3208, %v3368
  %v3377 = vmul.f32 %v3209, %v3369
  %v3378 = vmul.f32 %v3210, %v3370
  %v3379 = vadd.f32 %v3371, 1.0
  %v3380 = vadd.f32 %v3372, 1.0
  %v3381 = vadd.f32 %v3373, 1.0
  %v3382 = vadd.f32 %v3374, 1.0
  %v3383 = vadd.f32 %v3375, 1.0
  %v3384 = vadd.f32 %v3376, 1.0
  %v3385 = vadd.f32 %v3377, 1.0
  %v3386 = vadd.f32 %v3378, 1.0
  %v3387 = vmul.f32 %v3179, %v3379
  %v3388 = vmul.f32 %v3180, %v3380
  %v3389 = vmul.f32 %v3181, %v3381
  %v3390 = vmul.f32 %v3182, %v3382
  %v3391 = vmul.f32 %v3183, %v3383
  %v3392 = vmul.f32 %v3184, %v3384
  %v3393 = vmul.f32 %v3185, %v3385
  %v3394 = vmul.f32 %v3186, %v3386
  %v3395 = vpack.c.bf16 %v3388, %v3387
  %v3396 = vpack.c.bf16 %v3390, %v3389
  %v3397 = vpack.c.bf16 %v3392, %v3391
  %v3398 = vpack.c.bf16 %v3394, %v3393
  %v3400 = vsel %vm667, %v3395, 0
  %v3403 = vsel %vm667, %v3396, 0
  %v3406 = vsel %vm667, %v3397, 0
  %v3409 = vsel %vm667, %v3398, 0
  %3411 = vmatprep.subr.bf16.mxu0 0
  %3412 = vmatpush1.bf16.msra.mxu0 0
  %3413 = vmatprep.subr.bf16.mxu0 0
  %3414 = vmatpush1.bf16.msra.mxu0 0
  %3415 = vmatprep.subr.bf16.mxu0 0
  %3416 = vmatpush1.bf16.msra.mxu0 0
  %3417 = vmatprep.subr.bf16.mxu0 0
  %3418 = vmatpush1.bf16.msra.mxu0 0
  %3419 = vmatprep.subr.bf16.mxu0 0
  %3420 = vmatpush1.bf16.msra.mxu0 0
  %3421 = vmatprep.subr.bf16.mxu0 0
  %3422 = vmatpush1.bf16.msra.mxu0 0
  %3423 = vmatprep.subr.bf16.mxu0 0
  %3424 = vmatpush1.bf16.msra.mxu0 0
  %3425 = vmatprep.subr.bf16.mxu0 0
  %3426 = vmatpush1.bf16.msra.mxu0 %v2257
  %3427 = vmatprep.subr.bf16.mxu0 0
  %3428 = vmatpush2.bf16.msra.mxu0 0
  %3429 = vmatprep.subr.bf16.mxu0 0
  %3430 = vmatpush2.bf16.msra.mxu0 0
  %3431 = vmatprep.subr.bf16.mxu0 0
  %3432 = vmatpush2.bf16.msra.mxu0 0
  %3433 = vmatprep.subr.bf16.mxu0 0
  %3434 = vmatpush2.bf16.msra.mxu0 0
  %3435 = vmatprep.subr.bf16.mxu0 0
  %3436 = vmatpush2.bf16.msra.mxu0 0
  %3437 = vmatprep.subr.bf16.mxu0 0
  %3438 = vmatpush2.bf16.msra.mxu0 0
  %3439 = vmatprep.subr.bf16.mxu0 0
  %3440 = vmatpush2.bf16.msra.mxu0 0
  %3441 = vmatprep.subr.bf16.mxu0 0
  %3442 = vmatpush2.bf16.msra.mxu0 0
  %3443 = vmatprep.mubr.bf16.mxu0 0
  %3444 = vmatmul.mubr.bf16.gmra.mxu0 %v3400
  %v3445 = vpop.f32.mrf.mxu0
  %v3446 = vadd.f32 %v2262, %v3445
  %v3447 = vpop.f32.mrf.mxu0
  %v3448 = vpop.f32.mrf.mxu0
  %v3449 = vadd.f32 %v2262, %v3448
  %v3450 = vpop.f32.mrf.mxu0
  %3451 = vmatprep.mubr.bf16.mxu0 0
  %3452 = vmatmul.mubr.bf16.gmra.mxu0 %v3403
  %v3453 = vpop.f32.mrf.mxu0
  %v3454 = vadd.f32 %v2262, %v3453
  %v3455 = vpop.f32.mrf.mxu0
  %v3456 = vpop.f32.mrf.mxu0
  %v3457 = vadd.f32 %v2262, %v3456
  %v3458 = vpop.f32.mrf.mxu0
  %3459 = vmatprep.mubr.bf16.mxu0 0
  %3460 = vmatmul.mubr.bf16.gmra.mxu0 %v3406
  %v3461 = vpop.f32.mrf.mxu0
  %v3462 = vadd.f32 %v2262, %v3461
  %v3463 = vpop.f32.mrf.mxu0
  %v3464 = vpop.f32.mrf.mxu0
  %v3465 = vadd.f32 %v2262, %v3464
  %v3466 = vpop.f32.mrf.mxu0
  %3467 = vmatprep.mubr.bf16.mxu0 0
  %3468 = vmatmul.mubr.bf16.gmra.mxu0 %v3409
  %v3469 = vpop.f32.mrf.mxu0
  %v3470 = vadd.f32 %v2262, %v3469
  %v3471 = vpop.f32.mrf.mxu0
  %v3472 = vpop.f32.mrf.mxu0
  %v3473 = vadd.f32 %v2262, %v3472
  %v3474 = vpop.f32.mrf.mxu0
  %3475 = vdwg.mxu0
  %3484 = vrot.lane.b32.xlu0 %v3446, 32
  %v3485 = vpop.permute.xlu0 %3484
  %3486 = vrot.lane.b32.xlu0 %v3449, 32
  %v3487 = vpop.permute.xlu0 %3486
  %3488 = vrot.lane.b32.xlu0 %v3454, 32
  %v3489 = vpop.permute.xlu0 %3488
  %3490 = vrot.lane.b32.xlu0 %v3457, 32
  %v3491 = vpop.permute.xlu0 %3490
  %3492 = vrot.lane.b32.xlu0 %v3462, 32
  %v3493 = vpop.permute.xlu0 %3492
  %3494 = vrot.lane.b32.xlu0 %v3465, 32
  %v3495 = vpop.permute.xlu0 %3494
  %3496 = vrot.lane.b32.xlu0 %v3470, 32
  %v3497 = vpop.permute.xlu0 %3496
  %3498 = vrot.lane.b32.xlu0 %v3473, 32
  %v3499 = vpop.permute.xlu0 %3498
  %v3508 = vadd.f32 %v2894, %v3485
  %v3509 = vadd.f32 %v2895, %v3487
  %v3510 = vadd.f32 %v2896, %v3489
  %v3511 = vadd.f32 %v2897, %v3491
  %v3512 = vadd.f32 %v2898, %v3493
  %v3513 = vadd.f32 %v2899, %v3495
  %v3514 = vadd.f32 %v2900, %v3497
  %v3515 = vadd.f32 %v2901, %v3499
  %v3516 = vpack.c.bf16 %v3509, %v3508
  %v3517 = vpack.c.bf16 %v3511, %v3510
  %v3518 = vpack.c.bf16 %v3513, %v3512
  %v3519 = vpack.c.bf16 %v3515, %v3514
  %v3524 = vunpack.c.l.b16 %v3516
  %v3525 = vunpack.c.h.b16 %v3516
  %v3526 = vunpack.c.l.b16 %v3517
  %v3527 = vunpack.c.h.b16 %v3517
  %v3528 = vunpack.c.l.b16 %v3518
  %v3529 = vunpack.c.h.b16 %v3518
  %v3530 = vunpack.c.l.b16 %v3519
  %v3531 = vunpack.c.h.b16 %v3519
  %v3532 = vpack.c.b16 %v3524, %v3524
  %v3533 = vpack.c.b16 %v3525, %v3525
  %v3534 = vpack.c.b16 %v3526, %v3526
  %v3535 = vpack.c.b16 %v3527, %v3527
  %v3536 = vpack.c.b16 %v3528, %v3528
  %v3537 = vpack.c.b16 %v3529, %v3529
  %v3538 = vpack.c.b16 %v3530, %v3530
  %v3539 = vpack.c.b16 %v3531, %v3531
  %3540 = vrot.lane.b32.xlu0 %v3532, 96
  %v3541 = vpop.permute.xlu0 %3540
  %3542 = vrot.lane.b32.xlu0 %v3533, 96
  %v3543 = vpop.permute.xlu0 %3542
  %3544 = vrot.lane.b32.xlu0 %v3534, 96
  %v3545 = vpop.permute.xlu0 %3544
  %3546 = vrot.lane.b32.xlu0 %v3535, 96
  %v3547 = vpop.permute.xlu0 %3546
  %3548 = vrot.lane.b32.xlu0 %v3536, 96
  %v3549 = vpop.permute.xlu0 %3548
  %3550 = vrot.lane.b32.xlu0 %v3537, 96
  %v3551 = vpop.permute.xlu0 %3550
  %3552 = vrot.lane.b32.xlu0 %v3538, 96
  %v3553 = vpop.permute.xlu0 %3552
  %3554 = vrot.lane.b32.xlu0 %v3539, 96
  %v3555 = vpop.permute.xlu0 %3554
  %s3564 = scalar_lea.vmem %s14, 32
  %3565 = vst.msk [vmem:[%s3564] sm:$0xf] %vm2429, %v3541
  %3566 = vst.msk [vmem:[%s3564 + $0x4] sm:$0xf] %vm2429, %v3543
  %3567 = vst.msk [vmem:[%s3564 + $0x8] sm:$0xf] %vm2429, %v3545
  %3568 = vst.msk [vmem:[%s3564 + $0xc] sm:$0xf] %vm2429, %v3547
  %3569 = vst.msk [vmem:[%s3564 + $0x10] sm:$0xf] %vm2429, %v3549
  %3570 = vst.msk [vmem:[%s3564 + $0x14] sm:$0xf] %vm2429, %v3551
  %3571 = vst.msk [vmem:[%s3564 + $0x18] sm:$0xf] %vm2429, %v3553
  %3572 = vst.msk [vmem:[%s3564 + $0x1c] sm:$0xf] %vm2429, %v3555
  // Predicated region
  $region58: #{adavit_forward.6} parent=0 // pred_check
    _
  $region59: #{adavit_forward.6} parent=0 // pred_check_branch
    %3574 = sbr.rel (0) target = $region61
  $region60: #{adavit_forward.6} parent=0 // pred_region
    _
  $region61: #{adavit_forward.6} parent=0 // pred_fallthru
    _
  // Predicated region
  $region62: #{adavit_forward.6} parent=0 // pred_check
    _
  $region63: #{adavit_forward.6} parent=0 // pred_check_branch
    %3576 = sbr.rel (0) target = $region65
  $region64: #{adavit_forward.6} parent=0 // pred_region
    _
  $region65: #{adavit_forward.6} parent=0 // pred_fallthru
    _

// kernel: adavit_forward.11
$region0: #{adavit_forward.11}
  #allocation0 [shape = 'u32[]', space=smem, size = 0x4, offset = 0x4, fixed_abs, tag = 'smem constant byte address 0x4 - core index']
  #allocation1 [shape = 'u32[144,128]{1,0:T(1,128)}', space=vmem, size = 0x12000, scoped, tag = 'internal scratch']
  %s0 = inlined_call_operand.vmem [shape: bf16[2,64], index: 0, kind: input, shape index: {}]
  %s1 = inlined_call_operand.vmem [shape: f32[1,64], index: 1, kind: input, shape index: {}]
  %s2 = inlined_call_operand.vmem [shape: f32[1,64], index: 2, kind: input, shape index: {}]
  %s3 = inlined_call_operand.vmem [shape: f32[64,10], index: 3, kind: input, shape index: {}]
  %s4 = inlined_call_operand.vmem [shape: f32[1,10], index: 4, kind: input, shape index: {}]
  %s5 = inlined_call_operand.hbm [shape: f32[2,10], index: 5, kind: output, shape index: {}]
  %s6 = sld [smem:[#allocation0]]
  $region30: #{adavit_forward.11} parent=0
    _
  %s8 = ssub.s32 1, %s6
  %s9 = scalar_select 0, %s8, %s6
  $region1: #{adavit_forward.11} parent=0
    #allocation2 [shape = 'u8[1024]{0}', space=vmem, size = 0x400, scoped, tag = 'output window, operand 0, single buffered']
    #allocation3 [shape = 's32[1]{0}', space=sflag, size = 0x4, scoped, tag = 'scoped memory for adavit_forward.11']
    %10 = vsyncpa [#allocation3], 0
    // Predicated region
    $region2: #{adavit_forward.11} parent=1 // pred_check
      _
    $region3: #{adavit_forward.11} parent=1 // pred_check_branch
      %12 = sbr.rel (0) target = $region5
    $region4: #{adavit_forward.11} parent=1 // pred_region
      _
    $region5: #{adavit_forward.11} parent=1 // pred_fallthru
      _
    // Predicated region
    $region6: #{adavit_forward.11} parent=1 // pred_check
      _
    $region7: #{adavit_forward.11} parent=1 // pred_check_branch
      %14 = sbr.rel (0) target = $region9
    $region8: #{adavit_forward.11} parent=1 // pred_region
      _
    $region9: #{adavit_forward.11} parent=1 // pred_fallthru
      _
    // Predicated region
    $region10: #{adavit_forward.11} parent=1 // pred_check
      _
    $region11: #{adavit_forward.11} parent=1 // pred_check_branch
      %16 = sbr.rel (0) target = $region13
    $region12: #{adavit_forward.11} parent=1 // pred_region
      _
    $region13: #{adavit_forward.11} parent=1 // pred_fallthru
      _
    // Predicated region
    $region14: #{adavit_forward.11} parent=1 // pred_check
      _
    $region15: #{adavit_forward.11} parent=1 // pred_check_branch
      %18 = sbr.rel (0) target = $region17
    $region16: #{adavit_forward.11} parent=1 // pred_region
      _
    $region17: #{adavit_forward.11} parent=1 // pred_fallthru
      _
    // Predicated region
    $region18: #{adavit_forward.11} parent=1 // pred_check
      _
    $region19: #{adavit_forward.11} parent=1 // pred_check_branch
      %20 = sbr.rel (0) target = $region21
    $region20: #{adavit_forward.11} parent=1 // pred_region
      _
    $region21: #{adavit_forward.11} parent=1 // pred_fallthru
      _
    %v21 = vld [vmem:[%s0] sm:$0x1]
    %v22 = vunpack.c.l.bf16 %v21
    %v23 = vld [vmem:[%s1] sm:$0x1]
    %v24 = vld [vmem:[%s2] sm:$0x1]
    %vm25 = vcmask 517120
    %v26 = vsel %vm25, %v22, 0.0
    %27 = vadd.xlane.f32.xlu0 %v26
    %v28 = vpop.xlane.xlu0 %27
    %v29 = vrcp.pop 64.0
    %v30 = vmul.f32 %v28, %v29
    %v31 = vsub.f32 %v22, %v30
    %v32 = vmul.f32 %v31, %v31
    %v33 = vsel %vm25, %v32, 0.0
    %34 = vadd.xlane.f32.xlu0 %v33
    %v35 = vpop.xlane.xlu0 %34
    %v36 = vmul.f32 %v35, %v29
    %v37 = vadd.f32 %v36, 1e-05
    %v38 = vrsqrt.pop %v37
    %v39 = vmul.f32 %v31, %v38
    %v41 = vlaneseq
    %v42 = vshrl.u32 %v41, 7
    %v43 = vsub.s32 0, %v42
    %v44 = vrot.slane %v23, %v43
    %v46 = vmul.f32 %v39, %v44
    %v48 = vlaneseq
    %v49 = vshrl.u32 %v48, 7
    %v50 = vsub.s32 0, %v49
    %v51 = vrot.slane %v24, %v50
    %v53 = vadd.f32 %v46, %v51
    %v54 = vld [vmem:[%s3] sm:$0xff]
    %v55 = vld [vmem:[%s3 + $0x8] sm:$0xff]
    %v56 = vld [vmem:[%s3 + $0x10] sm:$0xff]
    %v57 = vld [vmem:[%s3 + $0x18] sm:$0xff]
    %v58 = vld [vmem:[%s3 + $0x20] sm:$0xff]
    %v59 = vld [vmem:[%s3 + $0x28] sm:$0xff]
    %v60 = vld [vmem:[%s3 + $0x30] sm:$0xff]
    %v61 = vld [vmem:[%s3 + $0x38] sm:$0xff]
    %v62 = vld [vmem:[%s4] sm:$0x1]
    %v64 = vlaneseq
    %v65 = vshrl.u32 %v64, 7
    %v66 = vsub.s32 0, %v65
    %v67 = vrot.slane %v62, %v66
    %vm69 = vcmask 523264
    %v71 = vsel %vm69, %v53, 0
    %73 = vmatprep.subr.mxu0 0.0
    %74 = vmatpush1.msra.mxu0 0.0
    %75 = vmatprep.subr.mxu0 0.0
    %76 = vmatpush1.msra.mxu0 0.0
    %77 = vmatprep.subr.mxu0 0.0
    %78 = vmatpush1.msra.mxu0 0.0
    %79 = vmatprep.subr.mxu0 0.0
    %80 = vmatpush1.msra.mxu0 0.0
    %81 = vmatprep.subr.mxu0 0.0
    %82 = vmatpush1.msra.mxu0 0.0
    %83 = vmatprep.subr.mxu0 0.0
    %84 = vmatpush1.msra.mxu0 0.0
    %85 = vmatprep.subr.mxu0 0.0
    %86 = vmatpush1.msra.mxu0 0.0
    %87 = vmatprep.subr.mxu0 0.0
    %88 = vmatpush1.msra.mxu0 0.0
    %89 = vmatprep.subr.mxu0 0.0
    %90 = vmatpush1.msra.mxu0 %v61
    %91 = vmatprep.subr.mxu0 0.0
    %92 = vmatpush1.msra.mxu0 %v60
    %93 = vmatprep.subr.mxu0 0.0
    %94 = vmatpush1.msra.mxu0 %v59
    %95 = vmatprep.subr.mxu0 0.0
    %96 = vmatpush1.msra.mxu0 %v58
    %97 = vmatprep.subr.mxu0 0.0
    %98 = vmatpush1.msra.mxu0 %v57
    %99 = vmatprep.subr.mxu0 0.0
    %100 = vmatpush1.msra.mxu0 %v56
    %101 = vmatprep.subr.mxu0 0.0
    %102 = vmatpush1.msra.mxu0 %v55
    %103 = vmatprep.subr.mxu0 0.0
    %104 = vmatpush1.msra.mxu0 %v54
    %105 = vmatprep.subr.mxu0 0.0
    %106 = vmatpush2.msra.mxu0 0.0
    %107 = vmatprep.subr.mxu0 0.0
    %108 = vmatpush2.msra.mxu0 0.0
    %109 = vmatprep.subr.mxu0 0.0
    %110 = vmatpush2.msra.mxu0 0.0
    %111 = vmatprep.subr.mxu0 0.0
    %112 = vmatpush2.msra.mxu0 0.0
    %113 = vmatprep.subr.mxu0 0.0
    %114 = vmatpush2.msra.mxu0 0.0
    %115 = vmatprep.subr.mxu0 0.0
    %116 = vmatpush2.msra.mxu0 0.0
    %117 = vmatprep.subr.mxu0 0.0
    %118 = vmatpush2.msra.mxu0 0.0
    %119 = vmatprep.subr.mxu0 0.0
    %120 = vmatpush2.msra.mxu0 0.0
    %121 = vmatprep.subr.mxu0 0.0
    %122 = vmatpush2.msra.mxu0 0.0
    %123 = vmatprep.subr.mxu0 0.0
    %124 = vmatpush2.msra.mxu0 0.0
    %125 = vmatprep.subr.mxu0 0.0
    %126 = vmatpush2.msra.mxu0 0.0
    %127 = vmatprep.subr.mxu0 0.0
    %128 = vmatpush2.msra.mxu0 0.0
    %129 = vmatprep.subr.mxu0 0.0
    %130 = vmatpush2.msra.mxu0 0.0
    %131 = vmatprep.subr.mxu0 0.0
    %132 = vmatpush2.msra.mxu0 0.0
    %133 = vmatprep.subr.mxu0 0.0
    %134 = vmatpush2.msra.mxu0 0.0
    %135 = vmatprep.subr.mxu0 0.0
    %136 = vmatpush2.msra.mxu0 0.0
    %137 = vmatprep.mubr.f32.mxu0 0.0
    %138 = vmatmul.mubr.f32.gmra.mxu0 %v71
    %v139 = vpop.f32.mrf.mxu0
    %v140 = vadd.f32 %v67, %v139
    %v141 = vpop.f32.mrf.mxu0
    %142 = vdwg.mxu0
    %vm143 = vcmask 74752
    %144 = vst.msk [vmem:[#allocation2] sm:$0x3] %vm143, %v140
    // Predicated region
    $region22: #{adavit_forward.11} parent=1 // pred_check
      _
    $region23: #{adavit_forward.11} parent=1 // pred_check_branch
      %146 = sbr.rel (0) target = $region25
    $region24: #{adavit_forward.11} parent=1 // pred_region
      %s148 = ssub.s32 32, 32
      %149 = vsyncadd [#allocation3], %s148
      %s151 = sshll.u32 [#allocation2], 4
      %s152 = int_to_ptr.vmem [resolvable:$true] %s151
      %154 = dma.vmem_to_hbm [thread:$0]  %s152, 32, %s5, [#allocation3]
    $region25: #{adavit_forward.11} parent=1 // pred_fallthru
      _
    // Predicated region
    $region26: #{adavit_forward.11} parent=1 // pred_check
      _
    $region27: #{adavit_forward.11} parent=1 // pred_check_branch
      %156 = sbr.rel (0) target = $region29
    $region28: #{adavit_forward.11} parent=1 // pred_region
      %157 = dma.done [#allocation3], 32
    $region29: #{adavit_forward.11} parent=1 // pred_fallthru
      _
    %158 = vsyncpa [#allocation3], 1

// kernel: adavit_forward.9
$region0: #{adavit_forward.9}
  #allocation0 [shape = 'u32[]', space=smem, size = 0x4, offset = 0x4, fixed_abs, tag = 'smem constant byte address 0x4 - core index']
  #allocation1 [shape = 'u32[144,128]{1,0:T(1,128)}', space=vmem, size = 0x12000, scoped, tag = 'internal scratch']
  %s0 = inlined_call_operand.vmem [shape: bf16[2,5,64], index: 0, kind: input, shape index: {}]
  %s1 = inlined_call_operand.vmem [shape: f32[1,64], index: 1, kind: input, shape index: {}]
  %s2 = inlined_call_operand.vmem [shape: f32[1,64], index: 2, kind: input, shape index: {}]
  %s3 = inlined_call_operand.vmem [shape: f32[64,192], index: 3, kind: input, shape index: {}]
  %s4 = inlined_call_operand.vmem [shape: f32[64,64], index: 4, kind: input, shape index: {}]
  %s5 = inlined_call_operand.vmem [shape: f32[1,64], index: 5, kind: input, shape index: {}]
  %s6 = inlined_call_operand.vmem [shape: f32[1,64], index: 6, kind: input, shape index: {}]
  %s7 = inlined_call_operand.vmem [shape: f32[1,64], index: 7, kind: input, shape index: {}]
  %s8 = inlined_call_operand.vmem [shape: f32[64,256], index: 8, kind: input, shape index: {}]
  %s9 = inlined_call_operand.vmem [shape: f32[1,256], index: 9, kind: input, shape index: {}]
  %s10 = inlined_call_operand.vmem [shape: f32[256,64], index: 10, kind: input, shape index: {}]
  %s11 = inlined_call_operand.vmem [shape: f32[1,64], index: 11, kind: input, shape index: {}]
  %s12 = inlined_call_operand.vmem [shape: bf16[2,5,64], index: 12, kind: output, shape index: {}]
  %s13 = sld [smem:[#allocation0]]
  $region58: #{adavit_forward.9} parent=0
    _
  %s15 = ssub.s32 1, %s13
  %s16 = scalar_select 0, %s15, %s13
  // Predicated region
  $region2: #{adavit_forward.9} parent=0 // pred_check
    _
  $region3: #{adavit_forward.9} parent=0 // pred_check_branch
    %18 = sbr.rel (0) target = $region5
  $region4: #{adavit_forward.9} parent=0 // pred_region
    _
  $region5: #{adavit_forward.9} parent=0 // pred_fallthru
    _
  // Predicated region
  $region6: #{adavit_forward.9} parent=0 // pred_check
    _
  $region7: #{adavit_forward.9} parent=0 // pred_check_branch
    %20 = sbr.rel (0) target = $region9
  $region8: #{adavit_forward.9} parent=0 // pred_region
    _
  $region9: #{adavit_forward.9} parent=0 // pred_fallthru
    _
  // Predicated region
  $region10: #{adavit_forward.9} parent=0 // pred_check
    _
  $region11: #{adavit_forward.9} parent=0 // pred_check_branch
    %22 = sbr.rel (0) target = $region13
  $region12: #{adavit_forward.9} parent=0 // pred_region
    _
  $region13: #{adavit_forward.9} parent=0 // pred_fallthru
    _
  // Predicated region
  $region14: #{adavit_forward.9} parent=0 // pred_check
    _
  $region15: #{adavit_forward.9} parent=0 // pred_check_branch
    %24 = sbr.rel (0) target = $region17
  $region16: #{adavit_forward.9} parent=0 // pred_region
    _
  $region17: #{adavit_forward.9} parent=0 // pred_fallthru
    _
  // Predicated region
  $region18: #{adavit_forward.9} parent=0 // pred_check
    _
  $region19: #{adavit_forward.9} parent=0 // pred_check_branch
    %26 = sbr.rel (0) target = $region21
  $region20: #{adavit_forward.9} parent=0 // pred_region
    _
  $region21: #{adavit_forward.9} parent=0 // pred_fallthru
    _
  // Predicated region
  $region22: #{adavit_forward.9} parent=0 // pred_check
    _
  $region23: #{adavit_forward.9} parent=0 // pred_check_branch
    %28 = sbr.rel (0) target = $region25
  $region24: #{adavit_forward.9} parent=0 // pred_region
    _
  $region25: #{adavit_forward.9} parent=0 // pred_fallthru
    _
  // Predicated region
  $region26: #{adavit_forward.9} parent=0 // pred_check
    _
  $region27: #{adavit_forward.9} parent=0 // pred_check_branch
    %30 = sbr.rel (0) target = $region29
  $region28: #{adavit_forward.9} parent=0 // pred_region
    _
  $region29: #{adavit_forward.9} parent=0 // pred_fallthru
    _
  // Predicated region
  $region30: #{adavit_forward.9} parent=0 // pred_check
    _
  $region31: #{adavit_forward.9} parent=0 // pred_check_branch
    %32 = sbr.rel (0) target = $region33
  $region32: #{adavit_forward.9} parent=0 // pred_region
    _
  $region33: #{adavit_forward.9} parent=0 // pred_fallthru
    _
  // Predicated region
  $region34: #{adavit_forward.9} parent=0 // pred_check
    _
  $region35: #{adavit_forward.9} parent=0 // pred_check_branch
    %34 = sbr.rel (0) target = $region37
  $region36: #{adavit_forward.9} parent=0 // pred_region
    _
  $region37: #{adavit_forward.9} parent=0 // pred_fallthru
    _
  // Predicated region
  $region38: #{adavit_forward.9} parent=0 // pred_check
    _
  $region39: #{adavit_forward.9} parent=0 // pred_check_branch
    %36 = sbr.rel (0) target = $region41
  $region40: #{adavit_forward.9} parent=0 // pred_region
    _
  $region41: #{adavit_forward.9} parent=0 // pred_fallthru
    _
  // Predicated region
  $region42: #{adavit_forward.9} parent=0 // pred_check
    _
  $region43: #{adavit_forward.9} parent=0 // pred_check_branch
    %38 = sbr.rel (0) target = $region45
  $region44: #{adavit_forward.9} parent=0 // pred_region
    _
  $region45: #{adavit_forward.9} parent=0 // pred_fallthru
    _
  // Predicated region
  $region46: #{adavit_forward.9} parent=0 // pred_check
    _
  $region47: #{adavit_forward.9} parent=0 // pred_check_branch
    %40 = sbr.rel (0) target = $region49
  $region48: #{adavit_forward.9} parent=0 // pred_region
    _
  $region49: #{adavit_forward.9} parent=0 // pred_fallthru
    _
  %v42 = vld [vmem:[%s1] sm:$0x1]
  %v43 = vld [vmem:[%s2] sm:$0x1]
  %v44 = vld [vmem:[%s6] sm:$0x1]
  %v45 = vld [vmem:[%s7] sm:$0x1]
  %v46 = vld [vmem:[%s5] sm:$0x1]
  %v47 = vld [vmem:[%s9] sm:$0x3]
  %v48 = vld [vmem:[%s11] sm:$0x1]
  %v49 = vld [vmem:[%s3] sm:$0xff]
  %v50 = vld [vmem:[%s3 + $0x8] sm:$0xff]
  %v51 = vld [vmem:[%s3 + $0x10] sm:$0xff]
  %v52 = vld [vmem:[%s3 + $0x18] sm:$0xff]
  %v53 = vld [vmem:[%s3 + $0x20] sm:$0xff]
  %v54 = vld [vmem:[%s3 + $0x28] sm:$0xff]
  %v55 = vld [vmem:[%s3 + $0x30] sm:$0xff]
  %v56 = vld [vmem:[%s3 + $0x38] sm:$0xff]
  %v57 = vld [vmem:[%s3 + $0x40] sm:$0xff]
  %v58 = vld [vmem:[%s3 + $0x48] sm:$0xff]
  %v59 = vld [vmem:[%s3 + $0x50] sm:$0xff]
  %v60 = vld [vmem:[%s3 + $0x58] sm:$0xff]
  %v61 = vld [vmem:[%s3 + $0x60] sm:$0xff]
  %v62 = vld [vmem:[%s3 + $0x68] sm:$0xff]
  %v63 = vld [vmem:[%s3 + $0x70] sm:$0xff]
  %v64 = vld [vmem:[%s3 + $0x78] sm:$0xff]
  %v65 = vld [vmem:[%s4] sm:$0xff]
  %v66 = vld [vmem:[%s4 + $0x8] sm:$0xff]
  %v67 = vld [vmem:[%s4 + $0x10] sm:$0xff]
  %v68 = vld [vmem:[%s4 + $0x18] sm:$0xff]
  %v69 = vld [vmem:[%s4 + $0x20] sm:$0xff]
  %v70 = vld [vmem:[%s4 + $0x28] sm:$0xff]
  %v71 = vld [vmem:[%s4 + $0x30] sm:$0xff]
  %v72 = vld [vmem:[%s4 + $0x38] sm:$0xff]
  %v73 = vld [vmem:[%s8] sm:$0xff]
  %v74 = vld [vmem:[%s8 + $0x8] sm:$0xff]
  %v75 = vld [vmem:[%s8 + $0x10] sm:$0xff]
  %v76 = vld [vmem:[%s8 + $0x18] sm:$0xff]
  %v77 = vld [vmem:[%s8 + $0x20] sm:$0xff]
  %v78 = vld [vmem:[%s8 + $0x28] sm:$0xff]
  %v79 = vld [vmem:[%s8 + $0x30] sm:$0xff]
  %v80 = vld [vmem:[%s8 + $0x38] sm:$0xff]
  %v81 = vld [vmem:[%s8 + $0x40] sm:$0xff]
  %v82 = vld [vmem:[%s8 + $0x48] sm:$0xff]
  %v83 = vld [vmem:[%s8 + $0x50] sm:$0xff]
  %v84 = vld [vmem:[%s8 + $0x58] sm:$0xff]
  %v85 = vld [vmem:[%s8 + $0x60] sm:$0xff]
  %v86 = vld [vmem:[%s8 + $0x68] sm:$0xff]
  %v87 = vld [vmem:[%s8 + $0x70] sm:$0xff]
  %v88 = vld [vmem:[%s8 + $0x78] sm:$0xff]
  %v89 = vld [vmem:[%s10] sm:$0xff]
  %v90 = vld [vmem:[%s10 + $0x8] sm:$0xff]
  %v91 = vld [vmem:[%s10 + $0x10] sm:$0xff]
  %v92 = vld [vmem:[%s10 + $0x18] sm:$0xff]
  %v93 = vld [vmem:[%s10 + $0x20] sm:$0xff]
  %v94 = vld [vmem:[%s10 + $0x28] sm:$0xff]
  %v95 = vld [vmem:[%s10 + $0x30] sm:$0xff]
  %v96 = vld [vmem:[%s10 + $0x38] sm:$0xff]
  %v97 = vld [vmem:[%s10 + $0x40] sm:$0xff]
  %v98 = vld [vmem:[%s10 + $0x48] sm:$0xff]
  %v99 = vld [vmem:[%s10 + $0x50] sm:$0xff]
  %v100 = vld [vmem:[%s10 + $0x58] sm:$0xff]
  %v101 = vld [vmem:[%s10 + $0x60] sm:$0xff]
  %v102 = vld [vmem:[%s10 + $0x68] sm:$0xff]
  %v103 = vld [vmem:[%s10 + $0x70] sm:$0xff]
  %v104 = vld [vmem:[%s10 + $0x78] sm:$0xff]
  %v105 = vld [vmem:[%s10 + $0x80] sm:$0xff]
  %v106 = vld [vmem:[%s10 + $0x88] sm:$0xff]
  %v107 = vld [vmem:[%s10 + $0x90] sm:$0xff]
  %v108 = vld [vmem:[%s10 + $0x98] sm:$0xff]
  %v109 = vld [vmem:[%s10 + $0xa0] sm:$0xff]
  %v110 = vld [vmem:[%s10 + $0xa8] sm:$0xff]
  %v111 = vld [vmem:[%s10 + $0xb0] sm:$0xff]
  %v112 = vld [vmem:[%s10 + $0xb8] sm:$0xff]
  %v113 = vld [vmem:[%s10 + $0xc0] sm:$0xff]
  %v114 = vld [vmem:[%s10 + $0xc8] sm:$0xff]
  %v115 = vld [vmem:[%s10 + $0xd0] sm:$0xff]
  %v116 = vld [vmem:[%s10 + $0xd8] sm:$0xff]
  %v117 = vld [vmem:[%s10 + $0xe0] sm:$0xff]
  %v118 = vld [vmem:[%s10 + $0xe8] sm:$0xff]
  %v119 = vld [vmem:[%s10 + $0xf0] sm:$0xff]
  %v120 = vld [vmem:[%s10 + $0xf8] sm:$0xff]
  %v121 = vld [vmem:[%s0] sm:$0x7]
  %v122 = vunpack.c.l.bf16 %v121
  %vm123 = vcmask 520192
  %v124 = vsel %vm123, %v122, 0.0
  %125 = vadd.xlane.f32.xlu0 %v124
  %v126 = vpop.xlane.xlu0 %125
  %v127 = vrcp.pop 64.0
  %v128 = vmul.f32 %v126, %v127
  %v129 = vsub.f32 %v122, %v128
  %v130 = vmul.f32 %v129, %v129
  %v131 = vsel %vm123, %v130, 0.0
  %132 = vadd.xlane.f32.xlu0 %v131
  %v133 = vpop.xlane.xlu0 %132
  %v134 = vmul.f32 %v133, %v127
  %v135 = vadd.f32 %v134, 1e-05
  %v136 = vrsqrt.pop %v135
  %v137 = vmul.f32 %v129, %v136
  %v139 = vlaneseq
  %v140 = vshrl.u32 %v139, 7
  %v141 = vsub.s32 0, %v140
  %v142 = vrot.slane %v42, %v141
  %v144 = vmul.f32 %v137, %v142
  %v146 = vlaneseq
  %v147 = vshrl.u32 %v146, 7
  %v148 = vsub.s32 0, %v147
  %v149 = vrot.slane %v43, %v148
  %v151 = vadd.f32 %v144, %v149
  %v152 = vpack.c.bf16 %v151, %v151
  %v153 = vpack.c.bf16 %v51, %v49
  %v154 = vpack.c.bf16 %v52, %v50
  %v155 = vpack.c.bf16 %v55, %v53
  %v156 = vpack.c.bf16 %v56, %v54
  %v157 = vpack.c.bf16 %v59, %v57
  %v158 = vpack.c.bf16 %v60, %v58
  %v159 = vpack.c.bf16 %v63, %v61
  %v160 = vpack.c.bf16 %v64, %v62
  %vm161 = vcmask 523264
  %v163 = vsel %vm161, %v152, 0
  %165 = vmatprep.subr.bf16.mxu0 0
  %166 = vmatpush1.bf16.msra.mxu0 0
  %167 = vmatprep.subr.bf16.mxu0 0
  %168 = vmatpush1.bf16.msra.mxu0 0
  %169 = vmatprep.subr.bf16.mxu0 0
  %170 = vmatpush1.bf16.msra.mxu0 0
  %171 = vmatprep.subr.bf16.mxu0 0
  %172 = vmatpush1.bf16.msra.mxu0 0
  %173 = vmatprep.subr.bf16.mxu0 %v160
  %174 = vmatpush1.bf16.msra.mxu0 %v159
  %175 = vmatprep.subr.bf16.mxu0 %v158
  %176 = vmatpush1.bf16.msra.mxu0 %v157
  %177 = vmatprep.subr.bf16.mxu0 %v156
  %178 = vmatpush1.bf16.msra.mxu0 %v155
  %179 = vmatprep.subr.bf16.mxu0 %v154
  %180 = vmatpush1.bf16.msra.mxu0 %v153
  %181 = vmatprep.subr.bf16.mxu0 0
  %182 = vmatpush2.bf16.msra.mxu0 0
  %183 = vmatprep.subr.bf16.mxu0 0
  %184 = vmatpush2.bf16.msra.mxu0 0
  %185 = vmatprep.subr.bf16.mxu0 0
  %186 = vmatpush2.bf16.msra.mxu0 0
  %187 = vmatprep.subr.bf16.mxu0 0
  %188 = vmatpush2.bf16.msra.mxu0 0
  %189 = vmatprep.subr.bf16.mxu0 0
  %190 = vmatpush2.bf16.msra.mxu0 0
  %191 = vmatprep.subr.bf16.mxu0 0
  %192 = vmatpush2.bf16.msra.mxu0 0
  %193 = vmatprep.subr.bf16.mxu0 0
  %194 = vmatpush2.bf16.msra.mxu0 0
  %195 = vmatprep.subr.bf16.mxu0 0
  %196 = vmatpush2.bf16.msra.mxu0 0
  %197 = vmatprep.mubr.bf16.mxu0 0
  %198 = vmatmul.mubr.bf16.gmra.mxu0 %v163
  %v199 = vpop.f32.mrf.mxu0
  %v200 = vadd.f32 0.0, %v199
  %v201 = vpop.f32.mrf.mxu0
  %v202 = vadd.f32 0.0, %v201
  %v203 = vpop.f32.mrf.mxu0
  %v204 = vpop.f32.mrf.mxu0
  %205 = vdwg.mxu0
  %207 = vrot.lane.b32.xlu0 %v200, 64
  %v208 = vpop.permute.xlu0 %207
  %vm209 = vcmask 130048
  %v210 = vsel %vm209, %v200, 0
  %v212 = vsel %vm209, %v208, 0
  %214 = vmatprep.subr.mxu0 0.0
  %215 = vmatpush1.xpose.msra.mxu0 0.0
  %216 = vmatprep.subr.mxu0 0.0
  %217 = vmatpush1.xpose.msra.mxu0 0.0
  %218 = vmatprep.subr.mxu0 0.0
  %219 = vmatpush1.xpose.msra.mxu0 0.0
  %220 = vmatprep.subr.mxu0 0.0
  %221 = vmatpush1.xpose.msra.mxu0 0.0
  %222 = vmatprep.subr.mxu0 0.0
  %223 = vmatpush1.xpose.msra.mxu0 0.0
  %224 = vmatprep.subr.mxu0 0.0
  %225 = vmatpush1.xpose.msra.mxu0 0.0
  %226 = vmatprep.subr.mxu0 0.0
  %227 = vmatpush1.xpose.msra.mxu0 0.0
  %228 = vmatprep.subr.mxu0 0.0
  %229 = vmatpush1.xpose.msra.mxu0 0.0
  %230 = vmatprep.subr.mxu0 0.0
  %231 = vmatpush1.xpose.msra.mxu0 0.0
  %232 = vmatprep.subr.mxu0 0.0
  %233 = vmatpush1.xpose.msra.mxu0 0.0
  %234 = vmatprep.subr.mxu0 0.0
  %235 = vmatpush1.xpose.msra.mxu0 0.0
  %236 = vmatprep.subr.mxu0 0.0
  %237 = vmatpush1.xpose.msra.mxu0 0.0
  %238 = vmatprep.subr.mxu0 0.0
  %239 = vmatpush1.xpose.msra.mxu0 0.0
  %240 = vmatprep.subr.mxu0 0.0
  %241 = vmatpush1.xpose.msra.mxu0 0.0
  %242 = vmatprep.subr.mxu0 0.0
  %243 = vmatpush1.xpose.msra.mxu0 0.0
  %244 = vmatprep.subr.mxu0 0.0
  %245 = vmatpush1.xpose.msra.mxu0 %v212
  %246 = vmatprep.subr.mxu0 0.0
  %247 = vmatpush2.xpose.msra.mxu0 0.0
  %248 = vmatprep.subr.mxu0 0.0
  %249 = vmatpush2.xpose.msra.mxu0 0.0
  %250 = vmatprep.subr.mxu0 0.0
  %251 = vmatpush2.xpose.msra.mxu0 0.0
  %252 = vmatprep.subr.mxu0 0.0
  %253 = vmatpush2.xpose.msra.mxu0 0.0
  %254 = vmatprep.subr.mxu0 0.0
  %255 = vmatpush2.xpose.msra.mxu0 0.0
  %256 = vmatprep.subr.mxu0 0.0
  %257 = vmatpush2.xpose.msra.mxu0 0.0
  %258 = vmatprep.subr.mxu0 0.0
  %259 = vmatpush2.xpose.msra.mxu0 0.0
  %260 = vmatprep.subr.mxu0 0.0
  %261 = vmatpush2.xpose.msra.mxu0 0.0
  %262 = vmatprep.subr.mxu0 0.0
  %263 = vmatpush2.xpose.msra.mxu0 0.0
  %264 = vmatprep.subr.mxu0 0.0
  %265 = vmatpush2.xpose.msra.mxu0 0.0
  %266 = vmatprep.subr.mxu0 0.0
  %267 = vmatpush2.xpose.msra.mxu0 0.0
  %268 = vmatprep.subr.mxu0 0.0
  %269 = vmatpush2.xpose.msra.mxu0 0.0
  %270 = vmatprep.subr.mxu0 0.0
  %271 = vmatpush2.xpose.msra.mxu0 0.0
  %272 = vmatprep.subr.mxu0 0.0
  %273 = vmatpush2.xpose.msra.mxu0 0.0
  %274 = vmatprep.subr.mxu0 0.0
  %275 = vmatpush2.xpose.msra.mxu0 0.0
  %276 = vmatprep.subr.mxu0 0.0
  %277 = vmatpush2.xpose.msra.mxu0 0.0
  %278 = vmatprep.mubr.f32.mxu0 0.0
  %279 = vmatmul.mubr.f32.gmra.mxu0 %v210
  %v280 = vpop.f32.mrf.mxu0
  %v281 = vadd.f32 0.0, %v280
  %v282 = vpop.f32.mrf.mxu0
  %283 = vdwg.mxu0
  %v284 = vmul.f32 %v281, 0.25
  %vm285 = vcmask 36864
  %v286 = vsel %vm285, %v284, -inf
  %287 = vmax.xlane.f32.xlu0 %v286
  %v288 = vpop.xlane.xlu0 %287
  %v289 = vsub.f32 %v284, %v288
  %v290 = vmul.f32 %v289, 1.442695
  %v291 = vpow.pop %v290
  %v292 = vsel %vm285, %v291, 0.0
  %293 = vadd.xlane.f32.xlu0 %v292
  %v294 = vpop.xlane.xlu0 %293
  %v295 = vrcp.pop %v294
  %v296 = vmul.f32 %v291, %v295
  %vm297 = vcmask 39936
  %v299 = vsel %vm297, %v296, 0
  %vm301 = vcmask 1044480
  %v303 = vsel %vm301, %v202, 0
  %305 = vmatprep.subr.mxu0 0.0
  %306 = vmatpush1.msra.mxu0 0.0
  %307 = vmatprep.subr.mxu0 0.0
  %308 = vmatpush1.msra.mxu0 0.0
  %309 = vmatprep.subr.mxu0 0.0
  %310 = vmatpush1.msra.mxu0 0.0
  %311 = vmatprep.subr.mxu0 0.0
  %312 = vmatpush1.msra.mxu0 0.0
  %313 = vmatprep.subr.mxu0 0.0
  %314 = vmatpush1.msra.mxu0 0.0
  %315 = vmatprep.subr.mxu0 0.0
  %316 = vmatpush1.msra.mxu0 0.0
  %317 = vmatprep.subr.mxu0 0.0
  %318 = vmatpush1.msra.mxu0 0.0
  %319 = vmatprep.subr.mxu0 0.0
  %320 = vmatpush1.msra.mxu0 0.0
  %321 = vmatprep.subr.mxu0 0.0
  %322 = vmatpush1.msra.mxu0 0.0
  %323 = vmatprep.subr.mxu0 0.0
  %324 = vmatpush1.msra.mxu0 0.0
  %325 = vmatprep.subr.mxu0 0.0
  %326 = vmatpush1.msra.mxu0 0.0
  %327 = vmatprep.subr.mxu0 0.0
  %328 = vmatpush1.msra.mxu0 0.0
  %329 = vmatprep.subr.mxu0 0.0
  %330 = vmatpush1.msra.mxu0 0.0
  %331 = vmatprep.subr.mxu0 0.0
  %332 = vmatpush1.msra.mxu0 0.0
  %333 = vmatprep.subr.mxu0 0.0
  %334 = vmatpush1.msra.mxu0 0.0
  %335 = vmatprep.subr.mxu0 0.0
  %336 = vmatpush1.msra.mxu0 %v303
  %337 = vmatprep.subr.mxu0 0.0
  %338 = vmatpush2.msra.mxu0 0.0
  %339 = vmatprep.subr.mxu0 0.0
  %340 = vmatpush2.msra.mxu0 0.0
  %341 = vmatprep.subr.mxu0 0.0
  %342 = vmatpush2.msra.mxu0 0.0
  %343 = vmatprep.subr.mxu0 0.0
  %344 = vmatpush2.msra.mxu0 0.0
  %345 = vmatprep.subr.mxu0 0.0
  %346 = vmatpush2.msra.mxu0 0.0
  %347 = vmatprep.subr.mxu0 0.0
  %348 = vmatpush2.msra.mxu0 0.0
  %349 = vmatprep.subr.mxu0 0.0
  %350 = vmatpush2.msra.mxu0 0.0
  %351 = vmatprep.subr.mxu0 0.0
  %352 = vmatpush2.msra.mxu0 0.0
  %353 = vmatprep.subr.mxu0 0.0
  %354 = vmatpush2.msra.mxu0 0.0
  %355 = vmatprep.subr.mxu0 0.0
  %356 = vmatpush2.msra.mxu0 0.0
  %357 = vmatprep.subr.mxu0 0.0
  %358 = vmatpush2.msra.mxu0 0.0
  %359 = vmatprep.subr.mxu0 0.0
  %360 = vmatpush2.msra.mxu0 0.0
  %361 = vmatprep.subr.mxu0 0.0
  %362 = vmatpush2.msra.mxu0 0.0
  %363 = vmatprep.subr.mxu0 0.0
  %364 = vmatpush2.msra.mxu0 0.0
  %365 = vmatprep.subr.mxu0 0.0
  %366 = vmatpush2.msra.mxu0 0.0
  %367 = vmatprep.subr.mxu0 0.0
  %368 = vmatpush2.msra.mxu0 0.0
  %369 = vmatprep.mubr.f32.mxu0 0.0
  %370 = vmatmul.mubr.f32.gmra.mxu0 %v299
  %v371 = vpop.f32.mrf.mxu0
  %v372 = vadd.f32 0.0, %v371
  %v373 = vpop.f32.mrf.mxu0
  %374 = vdwg.mxu0
  %v375 = vpack.c.bf16 %v372, %v372
  %v376 = vpack.c.bf16 %v66, %v65
  %377 = vrot.lane.b32.xlu0 %v200, 112
  %v378 = vpop.permute.xlu0 %377
  %379 = vrot.lane.b32.xlu0 %v200, 48
  %v380 = vpop.permute.xlu0 %379
  %v381 = vsel %vm209, %v378, 0
  %v383 = vsel %vm209, %v380, 0
  %385 = vmatprep.subr.mxu0 0.0
  %386 = vmatpush1.xpose.msra.mxu0 0.0
  %387 = vmatprep.subr.mxu0 0.0
  %388 = vmatpush1.xpose.msra.mxu0 0.0
  %389 = vmatprep.subr.mxu0 0.0
  %390 = vmatpush1.xpose.msra.mxu0 0.0
  %391 = vmatprep.subr.mxu0 0.0
  %392 = vmatpush1.xpose.msra.mxu0 0.0
  %393 = vmatprep.subr.mxu0 0.0
  %394 = vmatpush1.xpose.msra.mxu0 0.0
  %395 = vmatprep.subr.mxu0 0.0
  %396 = vmatpush1.xpose.msra.mxu0 0.0
  %397 = vmatprep.subr.mxu0 0.0
  %398 = vmatpush1.xpose.msra.mxu0 0.0
  %399 = vmatprep.subr.mxu0 0.0
  %400 = vmatpush1.xpose.msra.mxu0 0.0
  %401 = vmatprep.subr.mxu0 0.0
  %402 = vmatpush1.xpose.msra.mxu0 0.0
  %403 = vmatprep.subr.mxu0 0.0
  %404 = vmatpush1.xpose.msra.mxu0 0.0
  %405 = vmatprep.subr.mxu0 0.0
  %406 = vmatpush1.xpose.msra.mxu0 0.0
  %407 = vmatprep.subr.mxu0 0.0
  %408 = vmatpush1.xpose.msra.mxu0 0.0
  %409 = vmatprep.subr.mxu0 0.0
  %410 = vmatpush1.xpose.msra.mxu0 0.0
  %411 = vmatprep.subr.mxu0 0.0
  %412 = vmatpush1.xpose.msra.mxu0 0.0
  %413 = vmatprep.subr.mxu0 0.0
  %414 = vmatpush1.xpose.msra.mxu0 0.0
  %415 = vmatprep.subr.mxu0 0.0
  %416 = vmatpush1.xpose.msra.mxu0 %v383
  %417 = vmatprep.subr.mxu0 0.0
  %418 = vmatpush2.xpose.msra.mxu0 0.0
  %419 = vmatprep.subr.mxu0 0.0
  %420 = vmatpush2.xpose.msra.mxu0 0.0
  %421 = vmatprep.subr.mxu0 0.0
  %422 = vmatpush2.xpose.msra.mxu0 0.0
  %423 = vmatprep.subr.mxu0 0.0
  %424 = vmatpush2.xpose.msra.mxu0 0.0
  %425 = vmatprep.subr.mxu0 0.0
  %426 = vmatpush2.xpose.msra.mxu0 0.0
  %427 = vmatprep.subr.mxu0 0.0
  %428 = vmatpush2.xpose.msra.mxu0 0.0
  %429 = vmatprep.subr.mxu0 0.0
  %430 = vmatpush2.xpose.msra.mxu0 0.0
  %431 = vmatprep.subr.mxu0 0.0
  %432 = vmatpush2.xpose.msra.mxu0 0.0
  %433 = vmatprep.subr.mxu0 0.0
  %434 = vmatpush2.xpose.msra.mxu0 0.0
  %435 = vmatprep.subr.mxu0 0.0
  %436 = vmatpush2.xpose.msra.mxu0 0.0
  %437 = vmatprep.subr.mxu0 0.0
  %438 = vmatpush2.xpose.msra.mxu0 0.0
  %439 = vmatprep.subr.mxu0 0.0
  %440 = vmatpush2.xpose.msra.mxu0 0.0
  %441 = vmatprep.subr.mxu0 0.0
  %442 = vmatpush2.xpose.msra.mxu0 0.0
  %443 = vmatprep.subr.mxu0 0.0
  %444 = vmatpush2.xpose.msra.mxu0 0.0
  %445 = vmatprep.subr.mxu0 0.0
  %446 = vmatpush2.xpose.msra.mxu0 0.0
  %447 = vmatprep.subr.mxu0 0.0
  %448 = vmatpush2.xpose.msra.mxu0 0.0
  %449 = vmatprep.mubr.f32.mxu0 0.0
  %450 = vmatmul.mubr.f32.gmra.mxu0 %v381
  %v451 = vpop.f32.mrf.mxu0
  %v452 = vadd.f32 0.0, %v451
  %v453 = vpop.f32.mrf.mxu0
  %454 = vdwg.mxu0
  %v455 = vmul.f32 %v452, 0.25
  %v456 = vsel %vm285, %v455, -inf
  %457 = vmax.xlane.f32.xlu0 %v456
  %v458 = vpop.xlane.xlu0 %457
  %v459 = vsub.f32 %v455, %v458
  %v460 = vmul.f32 %v459, 1.442695
  %v461 = vpow.pop %v460
  %v462 = vsel %vm285, %v461, 0.0
  %463 = vadd.xlane.f32.xlu0 %v462
  %v464 = vpop.xlane.xlu0 %463
  %v465 = vrcp.pop %v464
  %v466 = vmul.f32 %v461, %v465
  %467 = vrot.lane.b32.xlu0 %v202, 112
  %v468 = vpop.permute.xlu0 %467
  %v470 = vsel %vm297, %v466, 0
  %v472 = vsel %vm301, %v468, 0
  %474 = vmatprep.subr.mxu0 0.0
  %475 = vmatpush1.msra.mxu0 0.0
  %476 = vmatprep.subr.mxu0 0.0
  %477 = vmatpush1.msra.mxu0 0.0
  %478 = vmatprep.subr.mxu0 0.0
  %479 = vmatpush1.msra.mxu0 0.0
  %480 = vmatprep.subr.mxu0 0.0
  %481 = vmatpush1.msra.mxu0 0.0
  %482 = vmatprep.subr.mxu0 0.0
  %483 = vmatpush1.msra.mxu0 0.0
  %484 = vmatprep.subr.mxu0 0.0
  %485 = vmatpush1.msra.mxu0 0.0
  %486 = vmatprep.subr.mxu0 0.0
  %487 = vmatpush1.msra.mxu0 0.0
  %488 = vmatprep.subr.mxu0 0.0
  %489 = vmatpush1.msra.mxu0 0.0
  %490 = vmatprep.subr.mxu0 0.0
  %491 = vmatpush1.msra.mxu0 0.0
  %492 = vmatprep.subr.mxu0 0.0
  %493 = vmatpush1.msra.mxu0 0.0
  %494 = vmatprep.subr.mxu0 0.0
  %495 = vmatpush1.msra.mxu0 0.0
  %496 = vmatprep.subr.mxu0 0.0
  %497 = vmatpush1.msra.mxu0 0.0
  %498 = vmatprep.subr.mxu0 0.0
  %499 = vmatpush1.msra.mxu0 0.0
  %500 = vmatprep.subr.mxu0 0.0
  %501 = vmatpush1.msra.mxu0 0.0
  %502 = vmatprep.subr.mxu0 0.0
  %503 = vmatpush1.msra.mxu0 0.0
  %504 = vmatprep.subr.mxu0 0.0
  %505 = vmatpush1.msra.mxu0 %v472
  %506 = vmatprep.subr.mxu0 0.0
  %507 = vmatpush2.msra.mxu0 0.0
  %508 = vmatprep.subr.mxu0 0.0
  %509 = vmatpush2.msra.mxu0 0.0
  %510 = vmatprep.subr.mxu0 0.0
  %511 = vmatpush2.msra.mxu0 0.0
  %512 = vmatprep.subr.mxu0 0.0
  %513 = vmatpush2.msra.mxu0 0.0
  %514 = vmatprep.subr.mxu0 0.0
  %515 = vmatpush2.msra.mxu0 0.0
  %516 = vmatprep.subr.mxu0 0.0
  %517 = vmatpush2.msra.mxu0 0.0
  %518 = vmatprep.subr.mxu0 0.0
  %519 = vmatpush2.msra.mxu0 0.0
  %520 = vmatprep.subr.mxu0 0.0
  %521 = vmatpush2.msra.mxu0 0.0
  %522 = vmatprep.subr.mxu0 0.0
  %523 = vmatpush2.msra.mxu0 0.0
  %524 = vmatprep.subr.mxu0 0.0
  %525 = vmatpush2.msra.mxu0 0.0
  %526 = vmatprep.subr.mxu0 0.0
  %527 = vmatpush2.msra.mxu0 0.0
  %528 = vmatprep.subr.mxu0 0.0
  %529 = vmatpush2.msra.mxu0 0.0
  %530 = vmatprep.subr.mxu0 0.0
  %531 = vmatpush2.msra.mxu0 0.0
  %532 = vmatprep.subr.mxu0 0.0
  %533 = vmatpush2.msra.mxu0 0.0
  %534 = vmatprep.subr.mxu0 0.0
  %535 = vmatpush2.msra.mxu0 0.0
  %536 = vmatprep.subr.mxu0 0.0
  %537 = vmatpush2.msra.mxu0 0.0
  %538 = vmatprep.mubr.f32.mxu0 0.0
  %539 = vmatmul.mubr.f32.gmra.mxu0 %v470
  %v540 = vpop.f32.mrf.mxu0
  %v541 = vadd.f32 0.0, %v540
  %v542 = vpop.f32.mrf.mxu0
  %543 = vdwg.mxu0
  %v544 = vpack.c.bf16 %v541, %v541
  %v545 = vpack.c.bf16 %v68, %v67
  %v547 = vsel %vm209, %v544, 0
  %549 = vmatprep.subr.bf16.mxu0 0
  %550 = vmatpush1.bf16.msra.mxu0 0
  %551 = vmatprep.subr.bf16.mxu0 0
  %552 = vmatpush1.bf16.msra.mxu0 0
  %553 = vmatprep.subr.bf16.mxu0 0
  %554 = vmatpush1.bf16.msra.mxu0 0
  %555 = vmatprep.subr.bf16.mxu0 0
  %556 = vmatpush1.bf16.msra.mxu0 0
  %557 = vmatprep.subr.bf16.mxu0 0
  %558 = vmatpush1.bf16.msra.mxu0 0
  %559 = vmatprep.subr.bf16.mxu0 0
  %560 = vmatpush1.bf16.msra.mxu0 0
  %561 = vmatprep.subr.bf16.mxu0 0
  %562 = vmatpush1.bf16.msra.mxu0 0
  %563 = vmatprep.subr.bf16.mxu0 0
  %564 = vmatpush1.bf16.msra.mxu0 %v545
  %565 = vmatprep.subr.bf16.mxu0 0
  %566 = vmatpush2.bf16.msra.mxu0 0
  %567 = vmatprep.subr.bf16.mxu0 0
  %568 = vmatpush2.bf16.msra.mxu0 0
  %569 = vmatprep.subr.bf16.mxu0 0
  %570 = vmatpush2.bf16.msra.mxu0 0
  %571 = vmatprep.subr.bf16.mxu0 0
  %572 = vmatpush2.bf16.msra.mxu0 0
  %573 = vmatprep.subr.bf16.mxu0 0
  %574 = vmatpush2.bf16.msra.mxu0 0
  %575 = vmatprep.subr.bf16.mxu0 0
  %576 = vmatpush2.bf16.msra.mxu0 0
  %577 = vmatprep.subr.bf16.mxu0 0
  %578 = vmatpush2.bf16.msra.mxu0 0
  %579 = vmatprep.subr.bf16.mxu0 0
  %580 = vmatpush2.bf16.msra.mxu0 0
  %581 = vmatprep.mubr.bf16.mxu0 0
  %582 = vmatmul.mubr.bf16.gmra.mxu0 %v547
  %v583 = vpop.f32.mrf.mxu0
  %v584 = vadd.f32 0.0, %v583
  %v585 = vpop.f32.mrf.mxu0
  %v586 = vpop.f32.mrf.mxu0
  %v587 = vpop.f32.mrf.mxu0
  %588 = vdwg.mxu0
  %v590 = vsel %vm209, %v375, 0
  %592 = vmatprep.subr.bf16.mxu0 0
  %593 = vmatpush1.bf16.msra.mxu0 0
  %594 = vmatprep.subr.bf16.mxu0 0
  %595 = vmatpush1.bf16.msra.mxu0 0
  %596 = vmatprep.subr.bf16.mxu0 0
  %597 = vmatpush1.bf16.msra.mxu0 0
  %598 = vmatprep.subr.bf16.mxu0 0
  %599 = vmatpush1.bf16.msra.mxu0 0
  %600 = vmatprep.subr.bf16.mxu0 0
  %601 = vmatpush1.bf16.msra.mxu0 0
  %602 = vmatprep.subr.bf16.mxu0 0
  %603 = vmatpush1.bf16.msra.mxu0 0
  %604 = vmatprep.subr.bf16.mxu0 0
  %605 = vmatpush1.bf16.msra.mxu0 0
  %606 = vmatprep.subr.bf16.mxu0 0
  %607 = vmatpush1.bf16.msra.mxu0 %v376
  %608 = vmatprep.subr.bf16.mxu0 0
  %609 = vmatpush2.bf16.msra.mxu0 0
  %610 = vmatprep.subr.bf16.mxu0 0
  %611 = vmatpush2.bf16.msra.mxu0 0
  %612 = vmatprep.subr.bf16.mxu0 0
  %613 = vmatpush2.bf16.msra.mxu0 0
  %614 = vmatprep.subr.bf16.mxu0 0
  %615 = vmatpush2.bf16.msra.mxu0 0
  %616 = vmatprep.subr.bf16.mxu0 0
  %617 = vmatpush2.bf16.msra.mxu0 0
  %618 = vmatprep.subr.bf16.mxu0 0
  %619 = vmatpush2.bf16.msra.mxu0 0
  %620 = vmatprep.subr.bf16.mxu0 0
  %621 = vmatpush2.bf16.msra.mxu0 0
  %622 = vmatprep.subr.bf16.mxu0 0
  %623 = vmatpush2.bf16.msra.mxu0 0
  %624 = vmatprep.mubr.bf16.mxu0 0
  %625 = vmatmul.mubr.bf16.gmra.mxu0 %v590
  %v626 = vpop.f32.mrf.mxu0
  %v627 = vadd.f32 %v584, %v626
  %v628 = vpop.f32.mrf.mxu0
  %v629 = vpop.f32.mrf.mxu0
  %v630 = vpop.f32.mrf.mxu0
  %631 = vdwg.mxu0
  %632 = vrot.lane.b32.xlu0 %v200, 96
  %v633 = vpop.permute.xlu0 %632
  %634 = vrot.lane.b32.xlu0 %v200, 32
  %v635 = vpop.permute.xlu0 %634
  %v636 = vsel %vm209, %v633, 0
  %v638 = vsel %vm209, %v635, 0
  %640 = vmatprep.subr.mxu0 0.0
  %641 = vmatpush1.xpose.msra.mxu0 0.0
  %642 = vmatprep.subr.mxu0 0.0
  %643 = vmatpush1.xpose.msra.mxu0 0.0
  %644 = vmatprep.subr.mxu0 0.0
  %645 = vmatpush1.xpose.msra.mxu0 0.0
  %646 = vmatprep.subr.mxu0 0.0
  %647 = vmatpush1.xpose.msra.mxu0 0.0
  %648 = vmatprep.subr.mxu0 0.0
  %649 = vmatpush1.xpose.msra.mxu0 0.0
  %650 = vmatprep.subr.mxu0 0.0
  %651 = vmatpush1.xpose.msra.mxu0 0.0
  %652 = vmatprep.subr.mxu0 0.0
  %653 = vmatpush1.xpose.msra.mxu0 0.0
  %654 = vmatprep.subr.mxu0 0.0
  %655 = vmatpush1.xpose.msra.mxu0 0.0
  %656 = vmatprep.subr.mxu0 0.0
  %657 = vmatpush1.xpose.msra.mxu0 0.0
  %658 = vmatprep.subr.mxu0 0.0
  %659 = vmatpush1.xpose.msra.mxu0 0.0
  %660 = vmatprep.subr.mxu0 0.0
  %661 = vmatpush1.xpose.msra.mxu0 0.0
  %662 = vmatprep.subr.mxu0 0.0
  %663 = vmatpush1.xpose.msra.mxu0 0.0
  %664 = vmatprep.subr.mxu0 0.0
  %665 = vmatpush1.xpose.msra.mxu0 0.0
  %666 = vmatprep.subr.mxu0 0.0
  %667 = vmatpush1.xpose.msra.mxu0 0.0
  %668 = vmatprep.subr.mxu0 0.0
  %669 = vmatpush1.xpose.msra.mxu0 0.0
  %670 = vmatprep.subr.mxu0 0.0
  %671 = vmatpush1.xpose.msra.mxu0 %v638
  %672 = vmatprep.subr.mxu0 0.0
  %673 = vmatpush2.xpose.msra.mxu0 0.0
  %674 = vmatprep.subr.mxu0 0.0
  %675 = vmatpush2.xpose.msra.mxu0 0.0
  %676 = vmatprep.subr.mxu0 0.0
  %677 = vmatpush2.xpose.msra.mxu0 0.0
  %678 = vmatprep.subr.mxu0 0.0
  %679 = vmatpush2.xpose.msra.mxu0 0.0
  %680 = vmatprep.subr.mxu0 0.0
  %681 = vmatpush2.xpose.msra.mxu0 0.0
  %682 = vmatprep.subr.mxu0 0.0
  %683 = vmatpush2.xpose.msra.mxu0 0.0
  %684 = vmatprep.subr.mxu0 0.0
  %685 = vmatpush2.xpose.msra.mxu0 0.0
  %686 = vmatprep.subr.mxu0 0.0
  %687 = vmatpush2.xpose.msra.mxu0 0.0
  %688 = vmatprep.subr.mxu0 0.0
  %689 = vmatpush2.xpose.msra.mxu0 0.0
  %690 = vmatprep.subr.mxu0 0.0
  %691 = vmatpush2.xpose.msra.mxu0 0.0
  %692 = vmatprep.subr.mxu0 0.0
  %693 = vmatpush2.xpose.msra.mxu0 0.0
  %694 = vmatprep.subr.mxu0 0.0
  %695 = vmatpush2.xpose.msra.mxu0 0.0
  %696 = vmatprep.subr.mxu0 0.0
  %697 = vmatpush2.xpose.msra.mxu0 0.0
  %698 = vmatprep.subr.mxu0 0.0
  %699 = vmatpush2.xpose.msra.mxu0 0.0
  %700 = vmatprep.subr.mxu0 0.0
  %701 = vmatpush2.xpose.msra.mxu0 0.0
  %702 = vmatprep.subr.mxu0 0.0
  %703 = vmatpush2.xpose.msra.mxu0 0.0
  %704 = vmatprep.mubr.f32.mxu0 0.0
  %705 = vmatmul.mubr.f32.gmra.mxu0 %v636
  %v706 = vpop.f32.mrf.mxu0
  %v707 = vadd.f32 0.0, %v706
  %v708 = vpop.f32.mrf.mxu0
  %709 = vdwg.mxu0
  %v710 = vmul.f32 %v707, 0.25
  %v711 = vsel %vm285, %v710, -inf
  %712 = vmax.xlane.f32.xlu0 %v711
  %v713 = vpop.xlane.xlu0 %712
  %v714 = vsub.f32 %v710, %v713
  %v715 = vmul.f32 %v714, 1.442695
  %v716 = vpow.pop %v715
  %v717 = vsel %vm285, %v716, 0.0
  %718 = vadd.xlane.f32.xlu0 %v717
  %v719 = vpop.xlane.xlu0 %718
  %v720 = vrcp.pop %v719
  %v721 = vmul.f32 %v716, %v720
  %722 = vrot.lane.b32.xlu0 %v202, 96
  %v723 = vpop.permute.xlu0 %722
  %v725 = vsel %vm297, %v721, 0
  %v727 = vsel %vm301, %v723, 0
  %729 = vmatprep.subr.mxu0 0.0
  %730 = vmatpush1.msra.mxu0 0.0
  %731 = vmatprep.subr.mxu0 0.0
  %732 = vmatpush1.msra.mxu0 0.0
  %733 = vmatprep.subr.mxu0 0.0
  %734 = vmatpush1.msra.mxu0 0.0
  %735 = vmatprep.subr.mxu0 0.0
  %736 = vmatpush1.msra.mxu0 0.0
  %737 = vmatprep.subr.mxu0 0.0
  %738 = vmatpush1.msra.mxu0 0.0
  %739 = vmatprep.subr.mxu0 0.0
  %740 = vmatpush1.msra.mxu0 0.0
  %741 = vmatprep.subr.mxu0 0.0
  %742 = vmatpush1.msra.mxu0 0.0
  %743 = vmatprep.subr.mxu0 0.0
  %744 = vmatpush1.msra.mxu0 0.0
  %745 = vmatprep.subr.mxu0 0.0
  %746 = vmatpush1.msra.mxu0 0.0
  %747 = vmatprep.subr.mxu0 0.0
  %748 = vmatpush1.msra.mxu0 0.0
  %749 = vmatprep.subr.mxu0 0.0
  %750 = vmatpush1.msra.mxu0 0.0
  %751 = vmatprep.subr.mxu0 0.0
  %752 = vmatpush1.msra.mxu0 0.0
  %753 = vmatprep.subr.mxu0 0.0
  %754 = vmatpush1.msra.mxu0 0.0
  %755 = vmatprep.subr.mxu0 0.0
  %756 = vmatpush1.msra.mxu0 0.0
  %757 = vmatprep.subr.mxu0 0.0
  %758 = vmatpush1.msra.mxu0 0.0
  %759 = vmatprep.subr.mxu0 0.0
  %760 = vmatpush1.msra.mxu0 %v727
  %761 = vmatprep.subr.mxu0 0.0
  %762 = vmatpush2.msra.mxu0 0.0
  %763 = vmatprep.subr.mxu0 0.0
  %764 = vmatpush2.msra.mxu0 0.0
  %765 = vmatprep.subr.mxu0 0.0
  %766 = vmatpush2.msra.mxu0 0.0
  %767 = vmatprep.subr.mxu0 0.0
  %768 = vmatpush2.msra.mxu0 0.0
  %769 = vmatprep.subr.mxu0 0.0
  %770 = vmatpush2.msra.mxu0 0.0
  %771 = vmatprep.subr.mxu0 0.0
  %772 = vmatpush2.msra.mxu0 0.0
  %773 = vmatprep.subr.mxu0 0.0
  %774 = vmatpush2.msra.mxu0 0.0
  %775 = vmatprep.subr.mxu0 0.0
  %776 = vmatpush2.msra.mxu0 0.0
  %777 = vmatprep.subr.mxu0 0.0
  %778 = vmatpush2.msra.mxu0 0.0
  %779 = vmatprep.subr.mxu0 0.0
  %780 = vmatpush2.msra.mxu0 0.0
  %781 = vmatprep.subr.mxu0 0.0
  %782 = vmatpush2.msra.mxu0 0.0
  %783 = vmatprep.subr.mxu0 0.0
  %784 = vmatpush2.msra.mxu0 0.0
  %785 = vmatprep.subr.mxu0 0.0
  %786 = vmatpush2.msra.mxu0 0.0
  %787 = vmatprep.subr.mxu0 0.0
  %788 = vmatpush2.msra.mxu0 0.0
  %789 = vmatprep.subr.mxu0 0.0
  %790 = vmatpush2.msra.mxu0 0.0
  %791 = vmatprep.subr.mxu0 0.0
  %792 = vmatpush2.msra.mxu0 0.0
  %793 = vmatprep.mubr.f32.mxu0 0.0
  %794 = vmatmul.mubr.f32.gmra.mxu0 %v725
  %v795 = vpop.f32.mrf.mxu0
  %v796 = vadd.f32 0.0, %v795
  %v797 = vpop.f32.mrf.mxu0
  %798 = vdwg.mxu0
  %v799 = vpack.c.bf16 %v796, %v796
  %v800 = vpack.c.bf16 %v70, %v69
  %v802 = vsel %vm209, %v799, 0
  %804 = vmatprep.subr.bf16.mxu0 0
  %805 = vmatpush1.bf16.msra.mxu0 0
  %806 = vmatprep.subr.bf16.mxu0 0
  %807 = vmatpush1.bf16.msra.mxu0 0
  %808 = vmatprep.subr.bf16.mxu0 0
  %809 = vmatpush1.bf16.msra.mxu0 0
  %810 = vmatprep.subr.bf16.mxu0 0
  %811 = vmatpush1.bf16.msra.mxu0 0
  %812 = vmatprep.subr.bf16.mxu0 0
  %813 = vmatpush1.bf16.msra.mxu0 0
  %814 = vmatprep.subr.bf16.mxu0 0
  %815 = vmatpush1.bf16.msra.mxu0 0
  %816 = vmatprep.subr.bf16.mxu0 0
  %817 = vmatpush1.bf16.msra.mxu0 0
  %818 = vmatprep.subr.bf16.mxu0 0
  %819 = vmatpush1.bf16.msra.mxu0 %v800
  %820 = vmatprep.subr.bf16.mxu0 0
  %821 = vmatpush2.bf16.msra.mxu0 0
  %822 = vmatprep.subr.bf16.mxu0 0
  %823 = vmatpush2.bf16.msra.mxu0 0
  %824 = vmatprep.subr.bf16.mxu0 0
  %825 = vmatpush2.bf16.msra.mxu0 0
  %826 = vmatprep.subr.bf16.mxu0 0
  %827 = vmatpush2.bf16.msra.mxu0 0
  %828 = vmatprep.subr.bf16.mxu0 0
  %829 = vmatpush2.bf16.msra.mxu0 0
  %830 = vmatprep.subr.bf16.mxu0 0
  %831 = vmatpush2.bf16.msra.mxu0 0
  %832 = vmatprep.subr.bf16.mxu0 0
  %833 = vmatpush2.bf16.msra.mxu0 0
  %834 = vmatprep.subr.bf16.mxu0 0
  %835 = vmatpush2.bf16.msra.mxu0 0
  %836 = vmatprep.mubr.bf16.mxu0 0
  %837 = vmatmul.mubr.bf16.gmra.mxu0 %v802
  %v838 = vpop.f32.mrf.mxu0
  %v839 = vadd.f32 0.0, %v838
  %v840 = vpop.f32.mrf.mxu0
  %v841 = vpop.f32.mrf.mxu0
  %v842 = vpop.f32.mrf.mxu0
  %843 = vdwg.mxu0
  %v844 = vadd.f32 %v627, %v839
  %845 = vrot.lane.b32.xlu0 %v200, 80
  %v846 = vpop.permute.xlu0 %845
  %847 = vrot.lane.b32.xlu0 %v200, 16
  %v848 = vpop.permute.xlu0 %847
  %v849 = vsel %vm209, %v846, 0
  %v851 = vsel %vm209, %v848, 0
  %853 = vmatprep.subr.mxu0 0.0
  %854 = vmatpush1.xpose.msra.mxu0 0.0
  %855 = vmatprep.subr.mxu0 0.0
  %856 = vmatpush1.xpose.msra.mxu0 0.0
  %857 = vmatprep.subr.mxu0 0.0
  %858 = vmatpush1.xpose.msra.mxu0 0.0
  %859 = vmatprep.subr.mxu0 0.0
  %860 = vmatpush1.xpose.msra.mxu0 0.0
  %861 = vmatprep.subr.mxu0 0.0
  %862 = vmatpush1.xpose.msra.mxu0 0.0
  %863 = vmatprep.subr.mxu0 0.0
  %864 = vmatpush1.xpose.msra.mxu0 0.0
  %865 = vmatprep.subr.mxu0 0.0
  %866 = vmatpush1.xpose.msra.mxu0 0.0
  %867 = vmatprep.subr.mxu0 0.0
  %868 = vmatpush1.xpose.msra.mxu0 0.0
  %869 = vmatprep.subr.mxu0 0.0
  %870 = vmatpush1.xpose.msra.mxu0 0.0
  %871 = vmatprep.subr.mxu0 0.0
  %872 = vmatpush1.xpose.msra.mxu0 0.0
  %873 = vmatprep.subr.mxu0 0.0
  %874 = vmatpush1.xpose.msra.mxu0 0.0
  %875 = vmatprep.subr.mxu0 0.0
  %876 = vmatpush1.xpose.msra.mxu0 0.0
  %877 = vmatprep.subr.mxu0 0.0
  %878 = vmatpush1.xpose.msra.mxu0 0.0
  %879 = vmatprep.subr.mxu0 0.0
  %880 = vmatpush1.xpose.msra.mxu0 0.0
  %881 = vmatprep.subr.mxu0 0.0
  %882 = vmatpush1.xpose.msra.mxu0 0.0
  %883 = vmatprep.subr.mxu0 0.0
  %884 = vmatpush1.xpose.msra.mxu0 %v851
  %885 = vmatprep.subr.mxu0 0.0
  %886 = vmatpush2.xpose.msra.mxu0 0.0
  %887 = vmatprep.subr.mxu0 0.0
  %888 = vmatpush2.xpose.msra.mxu0 0.0
  %889 = vmatprep.subr.mxu0 0.0
  %890 = vmatpush2.xpose.msra.mxu0 0.0
  %891 = vmatprep.subr.mxu0 0.0
  %892 = vmatpush2.xpose.msra.mxu0 0.0
  %893 = vmatprep.subr.mxu0 0.0
  %894 = vmatpush2.xpose.msra.mxu0 0.0
  %895 = vmatprep.subr.mxu0 0.0
  %896 = vmatpush2.xpose.msra.mxu0 0.0
  %897 = vmatprep.subr.mxu0 0.0
  %898 = vmatpush2.xpose.msra.mxu0 0.0
  %899 = vmatprep.subr.mxu0 0.0
  %900 = vmatpush2.xpose.msra.mxu0 0.0
  %901 = vmatprep.subr.mxu0 0.0
  %902 = vmatpush2.xpose.msra.mxu0 0.0
  %903 = vmatprep.subr.mxu0 0.0
  %904 = vmatpush2.xpose.msra.mxu0 0.0
  %905 = vmatprep.subr.mxu0 0.0
  %906 = vmatpush2.xpose.msra.mxu0 0.0
  %907 = vmatprep.subr.mxu0 0.0
  %908 = vmatpush2.xpose.msra.mxu0 0.0
  %909 = vmatprep.subr.mxu0 0.0
  %910 = vmatpush2.xpose.msra.mxu0 0.0
  %911 = vmatprep.subr.mxu0 0.0
  %912 = vmatpush2.xpose.msra.mxu0 0.0
  %913 = vmatprep.subr.mxu0 0.0
  %914 = vmatpush2.xpose.msra.mxu0 0.0
  %915 = vmatprep.subr.mxu0 0.0
  %916 = vmatpush2.xpose.msra.mxu0 0.0
  %917 = vmatprep.mubr.f32.mxu0 0.0
  %918 = vmatmul.mubr.f32.gmra.mxu0 %v849
  %v919 = vpop.f32.mrf.mxu0
  %v920 = vadd.f32 0.0, %v919
  %v921 = vpop.f32.mrf.mxu0
  %922 = vdwg.mxu0
  %v923 = vmul.f32 %v920, 0.25
  %v924 = vsel %vm285, %v923, -inf
  %925 = vmax.xlane.f32.xlu0 %v924
  %v926 = vpop.xlane.xlu0 %925
  %v927 = vsub.f32 %v923, %v926
  %v928 = vmul.f32 %v927, 1.442695
  %v929 = vpow.pop %v928
  %v930 = vsel %vm285, %v929, 0.0
  %931 = vadd.xlane.f32.xlu0 %v930
  %v932 = vpop.xlane.xlu0 %931
  %v933 = vrcp.pop %v932
  %v934 = vmul.f32 %v929, %v933
  %935 = vrot.lane.b32.xlu0 %v202, 80
  %v936 = vpop.permute.xlu0 %935
  %v938 = vsel %vm297, %v934, 0
  %v940 = vsel %vm301, %v936, 0
  %942 = vmatprep.subr.mxu0 0.0
  %943 = vmatpush1.msra.mxu0 0.0
  %944 = vmatprep.subr.mxu0 0.0
  %945 = vmatpush1.msra.mxu0 0.0
  %946 = vmatprep.subr.mxu0 0.0
  %947 = vmatpush1.msra.mxu0 0.0
  %948 = vmatprep.subr.mxu0 0.0
  %949 = vmatpush1.msra.mxu0 0.0
  %950 = vmatprep.subr.mxu0 0.0
  %951 = vmatpush1.msra.mxu0 0.0
  %952 = vmatprep.subr.mxu0 0.0
  %953 = vmatpush1.msra.mxu0 0.0
  %954 = vmatprep.subr.mxu0 0.0
  %955 = vmatpush1.msra.mxu0 0.0
  %956 = vmatprep.subr.mxu0 0.0
  %957 = vmatpush1.msra.mxu0 0.0
  %958 = vmatprep.subr.mxu0 0.0
  %959 = vmatpush1.msra.mxu0 0.0
  %960 = vmatprep.subr.mxu0 0.0
  %961 = vmatpush1.msra.mxu0 0.0
  %962 = vmatprep.subr.mxu0 0.0
  %963 = vmatpush1.msra.mxu0 0.0
  %964 = vmatprep.subr.mxu0 0.0
  %965 = vmatpush1.msra.mxu0 0.0
  %966 = vmatprep.subr.mxu0 0.0
  %967 = vmatpush1.msra.mxu0 0.0
  %968 = vmatprep.subr.mxu0 0.0
  %969 = vmatpush1.msra.mxu0 0.0
  %970 = vmatprep.subr.mxu0 0.0
  %971 = vmatpush1.msra.mxu0 0.0
  %972 = vmatprep.subr.mxu0 0.0
  %973 = vmatpush1.msra.mxu0 %v940
  %974 = vmatprep.subr.mxu0 0.0
  %975 = vmatpush2.msra.mxu0 0.0
  %976 = vmatprep.subr.mxu0 0.0
  %977 = vmatpush2.msra.mxu0 0.0
  %978 = vmatprep.subr.mxu0 0.0
  %979 = vmatpush2.msra.mxu0 0.0
  %980 = vmatprep.subr.mxu0 0.0
  %981 = vmatpush2.msra.mxu0 0.0
  %982 = vmatprep.subr.mxu0 0.0
  %983 = vmatpush2.msra.mxu0 0.0
  %984 = vmatprep.subr.mxu0 0.0
  %985 = vmatpush2.msra.mxu0 0.0
  %986 = vmatprep.subr.mxu0 0.0
  %987 = vmatpush2.msra.mxu0 0.0
  %988 = vmatprep.subr.mxu0 0.0
  %989 = vmatpush2.msra.mxu0 0.0
  %990 = vmatprep.subr.mxu0 0.0
  %991 = vmatpush2.msra.mxu0 0.0
  %992 = vmatprep.subr.mxu0 0.0
  %993 = vmatpush2.msra.mxu0 0.0
  %994 = vmatprep.subr.mxu0 0.0
  %995 = vmatpush2.msra.mxu0 0.0
  %996 = vmatprep.subr.mxu0 0.0
  %997 = vmatpush2.msra.mxu0 0.0
  %998 = vmatprep.subr.mxu0 0.0
  %999 = vmatpush2.msra.mxu0 0.0
  %1000 = vmatprep.subr.mxu0 0.0
  %1001 = vmatpush2.msra.mxu0 0.0
  %1002 = vmatprep.subr.mxu0 0.0
  %1003 = vmatpush2.msra.mxu0 0.0
  %1004 = vmatprep.subr.mxu0 0.0
  %1005 = vmatpush2.msra.mxu0 0.0
  %1006 = vmatprep.mubr.f32.mxu0 0.0
  %1007 = vmatmul.mubr.f32.gmra.mxu0 %v938
  %v1008 = vpop.f32.mrf.mxu0
  %v1009 = vadd.f32 0.0, %v1008
  %v1010 = vpop.f32.mrf.mxu0
  %1011 = vdwg.mxu0
  %v1012 = vpack.c.bf16 %v1009, %v1009
  %v1013 = vpack.c.bf16 %v72, %v71
  %v1015 = vsel %vm209, %v1012, 0
  %1017 = vmatprep.subr.bf16.mxu0 0
  %1018 = vmatpush1.bf16.msra.mxu0 0
  %1019 = vmatprep.subr.bf16.mxu0 0
  %1020 = vmatpush1.bf16.msra.mxu0 0
  %1021 = vmatprep.subr.bf16.mxu0 0
  %1022 = vmatpush1.bf16.msra.mxu0 0
  %1023 = vmatprep.subr.bf16.mxu0 0
  %1024 = vmatpush1.bf16.msra.mxu0 0
  %1025 = vmatprep.subr.bf16.mxu0 0
  %1026 = vmatpush1.bf16.msra.mxu0 0
  %1027 = vmatprep.subr.bf16.mxu0 0
  %1028 = vmatpush1.bf16.msra.mxu0 0
  %1029 = vmatprep.subr.bf16.mxu0 0
  %1030 = vmatpush1.bf16.msra.mxu0 0
  %1031 = vmatprep.subr.bf16.mxu0 0
  %1032 = vmatpush1.bf16.msra.mxu0 %v1013
  %1033 = vmatprep.subr.bf16.mxu0 0
  %1034 = vmatpush2.bf16.msra.mxu0 0
  %1035 = vmatprep.subr.bf16.mxu0 0
  %1036 = vmatpush2.bf16.msra.mxu0 0
  %1037 = vmatprep.subr.bf16.mxu0 0
  %1038 = vmatpush2.bf16.msra.mxu0 0
  %1039 = vmatprep.subr.bf16.mxu0 0
  %1040 = vmatpush2.bf16.msra.mxu0 0
  %1041 = vmatprep.subr.bf16.mxu0 0
  %1042 = vmatpush2.bf16.msra.mxu0 0
  %1043 = vmatprep.subr.bf16.mxu0 0
  %1044 = vmatpush2.bf16.msra.mxu0 0
  %1045 = vmatprep.subr.bf16.mxu0 0
  %1046 = vmatpush2.bf16.msra.mxu0 0
  %1047 = vmatprep.subr.bf16.mxu0 0
  %1048 = vmatpush2.bf16.msra.mxu0 0
  %1049 = vmatprep.mubr.bf16.mxu0 0
  %1050 = vmatmul.mubr.bf16.gmra.mxu0 %v1015
  %v1051 = vpop.f32.mrf.mxu0
  %v1052 = vadd.f32 0.0, %v1051
  %v1053 = vpop.f32.mrf.mxu0
  %v1054 = vpop.f32.mrf.mxu0
  %v1055 = vpop.f32.mrf.mxu0
  %1056 = vdwg.mxu0
  %v1057 = vadd.f32 %v844, %v1052
  %v1058 = vadd.f32 %v122, %v1057
  %v1060 = vlaneseq
  %v1061 = vshrl.u32 %v1060, 7
  %v1062 = vsub.s32 0, %v1061
  %v1063 = vrot.slane %v46, %v1062
  %v1065 = vadd.f32 %v1058, %v1063
  %v1066 = vsel %vm123, %v1065, 0.0
  %1067 = vadd.xlane.f32.xlu0 %v1066
  %v1068 = vpop.xlane.xlu0 %1067
  %v1069 = vmul.f32 %v1068, %v127
  %v1070 = vsub.f32 %v1065, %v1069
  %v1071 = vmul.f32 %v1070, %v1070
  %v1072 = vsel %vm123, %v1071, 0.0
  %1073 = vadd.xlane.f32.xlu0 %v1072
  %v1074 = vpop.xlane.xlu0 %1073
  %v1075 = vmul.f32 %v1074, %v127
  %v1076 = vadd.f32 %v1075, 1e-05
  %v1077 = vrsqrt.pop %v1076
  %v1078 = vmul.f32 %v1070, %v1077
  %v1080 = vlaneseq
  %v1081 = vshrl.u32 %v1080, 7
  %v1082 = vsub.s32 0, %v1081
  %v1083 = vrot.slane %v44, %v1082
  %v1085 = vmul.f32 %v1078, %v1083
  %v1087 = vlaneseq
  %v1088 = vshrl.u32 %v1087, 7
  %v1089 = vsub.s32 0, %v1088
  %v1090 = vrot.slane %v45, %v1089
  %v1092 = vadd.f32 %v1085, %v1090
  %v1093 = vpack.c.bf16 %v1092, %v1092
  %v1094 = vpack.c.bf16 %v75, %v73
  %v1095 = vpack.c.bf16 %v76, %v74
  %v1096 = vpack.c.bf16 %v79, %v77
  %v1097 = vpack.c.bf16 %v80, %v78
  %v1098 = vpack.c.bf16 %v83, %v81
  %v1099 = vpack.c.bf16 %v84, %v82
  %v1100 = vpack.c.bf16 %v87, %v85
  %v1101 = vpack.c.bf16 %v88, %v86
  %v1103 = vlaneseq
  %v1104 = vshrl.u32 %v1103, 7
  %v1105 = vsub.s32 0, %v1104
  %v1106 = vrot.slane %v47, %v1105
  %v1107 = vlaneseq
  %v1108 = vshrl.u32 %v1107, 7
  %v1109 = vsub.s32 1, %v1108
  %v1110 = vrot.slane %v47, %v1109
  %v1114 = vsel %vm161, %v1093, 0
  %1116 = vmatprep.subr.bf16.mxu0 0
  %1117 = vmatpush1.bf16.msra.mxu0 0
  %1118 = vmatprep.subr.bf16.mxu0 0
  %1119 = vmatpush1.bf16.msra.mxu0 0
  %1120 = vmatprep.subr.bf16.mxu0 0
  %1121 = vmatpush1.bf16.msra.mxu0 0
  %1122 = vmatprep.subr.bf16.mxu0 0
  %1123 = vmatpush1.bf16.msra.mxu0 0
  %1124 = vmatprep.subr.bf16.mxu0 %v1101
  %1125 = vmatpush1.bf16.msra.mxu0 %v1100
  %1126 = vmatprep.subr.bf16.mxu0 %v1099
  %1127 = vmatpush1.bf16.msra.mxu0 %v1098
  %1128 = vmatprep.subr.bf16.mxu0 %v1097
  %1129 = vmatpush1.bf16.msra.mxu0 %v1096
  %1130 = vmatprep.subr.bf16.mxu0 %v1095
  %1131 = vmatpush1.bf16.msra.mxu0 %v1094
  %1132 = vmatprep.subr.bf16.mxu0 0
  %1133 = vmatpush2.bf16.msra.mxu0 0
  %1134 = vmatprep.subr.bf16.mxu0 0
  %1135 = vmatpush2.bf16.msra.mxu0 0
  %1136 = vmatprep.subr.bf16.mxu0 0
  %1137 = vmatpush2.bf16.msra.mxu0 0
  %1138 = vmatprep.subr.bf16.mxu0 0
  %1139 = vmatpush2.bf16.msra.mxu0 0
  %1140 = vmatprep.subr.bf16.mxu0 0
  %1141 = vmatpush2.bf16.msra.mxu0 0
  %1142 = vmatprep.subr.bf16.mxu0 0
  %1143 = vmatpush2.bf16.msra.mxu0 0
  %1144 = vmatprep.subr.bf16.mxu0 0
  %1145 = vmatpush2.bf16.msra.mxu0 0
  %1146 = vmatprep.subr.bf16.mxu0 0
  %1147 = vmatpush2.bf16.msra.mxu0 0
  %1148 = vmatprep.mubr.bf16.mxu0 0
  %1149 = vmatmul.mubr.bf16.gmra.mxu0 %v1114
  %v1150 = vpop.f32.mrf.mxu0
  %v1151 = vadd.f32 %v1106, %v1150
  %v1152 = vpop.f32.mrf.mxu0
  %v1153 = vadd.f32 %v1110, %v1152
  %v1154 = vpop.f32.mrf.mxu0
  %v1155 = vpop.f32.mrf.mxu0
  %1156 = vdwg.mxu0
  %v1157 = vmul.f32 %v1151, 0.5
  %v1158 = vmul.f32 %v1153, 0.5
  %v1159 = vmul.f32 %v1151, 0.70710677
  %v1160 = vmul.f32 %v1153, 0.70710677
  %vm1161 = vcmp.ge.f32.partialorder %v1159, 0.0
  %vm1162 = vcmp.ge.f32.partialorder %v1160, 0.0
  %v1163 = vsel %vm1161, 1.0, -1.0
  %v1164 = vsel %vm1162, 1.0, -1.0
  %v1165 = vand.u32 2147483647, %v1159
  %v1166 = vand.u32 2147483647, %v1160
  %v1167 = vmul.f32 %v1165, 0.3275911
  %v1168 = vmul.f32 %v1166, 0.3275911
  %v1169 = vadd.f32 %v1167, 1.0
  %v1170 = vadd.f32 %v1168, 1.0
  %v1171 = vrcp.pop %v1169
  %v1172 = vmul.f32 1.0, %v1171
  %v1173 = vrcp.pop %v1170
  %v1174 = vmul.f32 1.0, %v1173
  %v1175 = vmul.f32 %v1172, 1.0614054
  %v1176 = vmul.f32 %v1174, 1.0614054
  %v1177 = vadd.f32 %v1175, -1.4531521
  %v1178 = vadd.f32 %v1176, -1.4531521
  %v1179 = vmul.f32 %v1177, %v1172
  %v1180 = vmul.f32 %v1178, %v1174
  %v1181 = vadd.f32 %v1179, 1.4214138
  %v1182 = vadd.f32 %v1180, 1.4214138
  %v1183 = vmul.f32 %v1181, %v1172
  %v1184 = vmul.f32 %v1182, %v1174
  %v1185 = vadd.f32 %v1183, -0.28449672
  %v1186 = vadd.f32 %v1184, -0.28449672
  %v1187 = vmul.f32 %v1185, %v1172
  %v1188 = vmul.f32 %v1186, %v1174
  %v1189 = vadd.f32 %v1187, 0.2548296
  %v1190 = vadd.f32 %v1188, 0.2548296
  %v1191 = vmul.f32 %v1189, %v1172
  %v1192 = vmul.f32 %v1190, %v1174
  %v1193 = vsub.f32 0.0, %v1165
  %v1194 = vsub.f32 0.0, %v1166
  %v1195 = vmul.f32 %v1193, %v1165
  %v1196 = vmul.f32 %v1194, %v1166
  %v1197 = vmul.f32 %v1195, 1.442695
  %v1198 = vpow.pop %v1197
  %v1199 = vmul.f32 %v1196, 1.442695
  %v1200 = vpow.pop %v1199
  %v1201 = vmul.f32 %v1191, %v1198
  %v1202 = vmul.f32 %v1192, %v1200
  %v1203 = vsub.f32 1.0, %v1201
  %v1204 = vsub.f32 1.0, %v1202
  %v1205 = vmul.f32 %v1163, %v1203
  %v1206 = vmul.f32 %v1164, %v1204
  %v1207 = vadd.f32 %v1205, 1.0
  %v1208 = vadd.f32 %v1206, 1.0
  %v1209 = vmul.f32 %v1157, %v1207
  %v1210 = vmul.f32 %v1158, %v1208
  %v1211 = vpack.c.bf16 %v1209, %v1209
  %v1212 = vpack.c.bf16 %v1210, %v1210
  %v1213 = vpack.c.bf16 %v90, %v89
  %v1214 = vpack.c.bf16 %v92, %v91
  %v1215 = vpack.c.bf16 %v94, %v93
  %v1216 = vpack.c.bf16 %v96, %v95
  %v1217 = vpack.c.bf16 %v98, %v97
  %v1218 = vpack.c.bf16 %v100, %v99
  %v1219 = vpack.c.bf16 %v102, %v101
  %v1220 = vpack.c.bf16 %v104, %v103
  %v1221 = vpack.c.bf16 %v106, %v105
  %v1222 = vpack.c.bf16 %v108, %v107
  %v1223 = vpack.c.bf16 %v110, %v109
  %v1224 = vpack.c.bf16 %v112, %v111
  %v1225 = vpack.c.bf16 %v114, %v113
  %v1226 = vpack.c.bf16 %v116, %v115
  %v1227 = vpack.c.bf16 %v118, %v117
  %v1228 = vpack.c.bf16 %v120, %v119
  %v1230 = vlaneseq
  %v1231 = vshrl.u32 %v1230, 7
  %v1232 = vsub.s32 0, %v1231
  %v1233 = vrot.slane %v48, %v1232
  %1235 = vmatprep.subr.bf16.mxu0 0
  %1236 = vmatpush1.bf16.msra.mxu0 %v1220
  %1237 = vmatprep.subr.bf16.mxu0 0
  %1238 = vmatpush1.bf16.msra.mxu0 %v1219
  %1239 = vmatprep.subr.bf16.mxu0 0
  %1240 = vmatpush1.bf16.msra.mxu0 %v1218
  %1241 = vmatprep.subr.bf16.mxu0 0
  %1242 = vmatpush1.bf16.msra.mxu0 %v1217
  %1243 = vmatprep.subr.bf16.mxu0 0
  %1244 = vmatpush1.bf16.msra.mxu0 %v1216
  %1245 = vmatprep.subr.bf16.mxu0 0
  %1246 = vmatpush1.bf16.msra.mxu0 %v1215
  %1247 = vmatprep.subr.bf16.mxu0 0
  %1248 = vmatpush1.bf16.msra.mxu0 %v1214
  %1249 = vmatprep.subr.bf16.mxu0 0
  %1250 = vmatpush1.bf16.msra.mxu0 %v1213
  %1251 = vmatprep.subr.bf16.mxu0 0
  %1252 = vmatpush2.bf16.msra.mxu0 %v1228
  %1253 = vmatprep.subr.bf16.mxu0 0
  %1254 = vmatpush2.bf16.msra.mxu0 %v1227
  %1255 = vmatprep.subr.bf16.mxu0 0
  %1256 = vmatpush2.bf16.msra.mxu0 %v1226
  %1257 = vmatprep.subr.bf16.mxu0 0
  %1258 = vmatpush2.bf16.msra.mxu0 %v1225
  %1259 = vmatprep.subr.bf16.mxu0 0
  %1260 = vmatpush2.bf16.msra.mxu0 %v1224
  %1261 = vmatprep.subr.bf16.mxu0 0
  %1262 = vmatpush2.bf16.msra.mxu0 %v1223
  %1263 = vmatprep.subr.bf16.mxu0 0
  %1264 = vmatpush2.bf16.msra.mxu0 %v1222
  %1265 = vmatprep.subr.bf16.mxu0 0
  %1266 = vmatpush2.bf16.msra.mxu0 %v1221
  %1267 = vmatprep.mubr.bf16.mxu0 %v1212
  %1268 = vmatmul.mubr.bf16.gmra.mxu0 %v1211
  %v1269 = vpop.f32.mrf.mxu0
  %v1270 = vadd.f32 %v1233, %v1269
  %v1271 = vpop.f32.mrf.mxu0
  %v1272 = vpop.f32.mrf.mxu0
  %v1273 = vpop.f32.mrf.mxu0
  %1274 = vdwg.mxu0
  %v1275 = vadd.f32 %v1065, %v1270
  %v1276 = vpack.c.bf16 %v1275, %v1275
  %vm1277 = vcmask 518144
  %vm1278 = vsmask.f32 2304
  %vm1279 = vmand %vm1277, %vm1278
  %v1280 = vld [vmem:[%s12] sm:$0x7]
  %v1281 = vsel %vm1279, %v1276, %v1280
  %1282 = vst [vmem:[%s12] sm:$0x7] %v1281
  %s1283 = scalar_lea.vmem %s0, 4
  %v1284 = vld [vmem:[%s1283] sm:$0x7]
  %v1285 = vunpack.c.l.bf16 %v1284
  %v1286 = vsel %vm123, %v1285, 0.0
  %1287 = vadd.xlane.f32.xlu0 %v1286
  %v1288 = vpop.xlane.xlu0 %1287
  %v1289 = vmul.f32 %v1288, %v127
  %v1290 = vsub.f32 %v1285, %v1289
  %v1291 = vmul.f32 %v1290, %v1290
  %v1292 = vsel %vm123, %v1291, 0.0
  %1293 = vadd.xlane.f32.xlu0 %v1292
  %v1294 = vpop.xlane.xlu0 %1293
  %v1295 = vmul.f32 %v1294, %v127
  %v1296 = vadd.f32 %v1295, 1e-05
  %v1297 = vrsqrt.pop %v1296
  %v1298 = vmul.f32 %v1290, %v1297
  %v1299 = vmul.f32 %v1298, %v142
  %v1300 = vadd.f32 %v1299, %v149
  %v1301 = vpack.c.bf16 %v1300, %v1300
  %v1303 = vsel %vm161, %v1301, 0
  %1305 = vmatprep.subr.bf16.mxu0 0
  %1306 = vmatpush1.bf16.msra.mxu0 0
  %1307 = vmatprep.subr.bf16.mxu0 0
  %1308 = vmatpush1.bf16.msra.mxu0 0
  %1309 = vmatprep.subr.bf16.mxu0 0
  %1310 = vmatpush1.bf16.msra.mxu0 0
  %1311 = vmatprep.subr.bf16.mxu0 0
  %1312 = vmatpush1.bf16.msra.mxu0 0
  %1313 = vmatprep.subr.bf16.mxu0 %v160
  %1314 = vmatpush1.bf16.msra.mxu0 %v159
  %1315 = vmatprep.subr.bf16.mxu0 %v158
  %1316 = vmatpush1.bf16.msra.mxu0 %v157
  %1317 = vmatprep.subr.bf16.mxu0 %v156
  %1318 = vmatpush1.bf16.msra.mxu0 %v155
  %1319 = vmatprep.subr.bf16.mxu0 %v154
  %1320 = vmatpush1.bf16.msra.mxu0 %v153
  %1321 = vmatprep.subr.bf16.mxu0 0
  %1322 = vmatpush2.bf16.msra.mxu0 0
  %1323 = vmatprep.subr.bf16.mxu0 0
  %1324 = vmatpush2.bf16.msra.mxu0 0
  %1325 = vmatprep.subr.bf16.mxu0 0
  %1326 = vmatpush2.bf16.msra.mxu0 0
  %1327 = vmatprep.subr.bf16.mxu0 0
  %1328 = vmatpush2.bf16.msra.mxu0 0
  %1329 = vmatprep.subr.bf16.mxu0 0
  %1330 = vmatpush2.bf16.msra.mxu0 0
  %1331 = vmatprep.subr.bf16.mxu0 0
  %1332 = vmatpush2.bf16.msra.mxu0 0
  %1333 = vmatprep.subr.bf16.mxu0 0
  %1334 = vmatpush2.bf16.msra.mxu0 0
  %1335 = vmatprep.subr.bf16.mxu0 0
  %1336 = vmatpush2.bf16.msra.mxu0 0
  %1337 = vmatprep.mubr.bf16.mxu0 0
  %1338 = vmatmul.mubr.bf16.gmra.mxu0 %v1303
  %v1339 = vpop.f32.mrf.mxu0
  %v1340 = vadd.f32 0.0, %v1339
  %v1341 = vpop.f32.mrf.mxu0
  %v1342 = vadd.f32 0.0, %v1341
  %v1343 = vpop.f32.mrf.mxu0
  %v1344 = vpop.f32.mrf.mxu0
  %1345 = vdwg.mxu0
  %1347 = vrot.lane.b32.xlu0 %v1340, 64
  %v1348 = vpop.permute.xlu0 %1347
  %v1349 = vsel %vm209, %v1340, 0
  %v1351 = vsel %vm209, %v1348, 0
  %1353 = vmatprep.subr.mxu0 0.0
  %1354 = vmatpush1.xpose.msra.mxu0 0.0
  %1355 = vmatprep.subr.mxu0 0.0
  %1356 = vmatpush1.xpose.msra.mxu0 0.0
  %1357 = vmatprep.subr.mxu0 0.0
  %1358 = vmatpush1.xpose.msra.mxu0 0.0
  %1359 = vmatprep.subr.mxu0 0.0
  %1360 = vmatpush1.xpose.msra.mxu0 0.0
  %1361 = vmatprep.subr.mxu0 0.0
  %1362 = vmatpush1.xpose.msra.mxu0 0.0
  %1363 = vmatprep.subr.mxu0 0.0
  %1364 = vmatpush1.xpose.msra.mxu0 0.0
  %1365 = vmatprep.subr.mxu0 0.0
  %1366 = vmatpush1.xpose.msra.mxu0 0.0
  %1367 = vmatprep.subr.mxu0 0.0
  %1368 = vmatpush1.xpose.msra.mxu0 0.0
  %1369 = vmatprep.subr.mxu0 0.0
  %1370 = vmatpush1.xpose.msra.mxu0 0.0
  %1371 = vmatprep.subr.mxu0 0.0
  %1372 = vmatpush1.xpose.msra.mxu0 0.0
  %1373 = vmatprep.subr.mxu0 0.0
  %1374 = vmatpush1.xpose.msra.mxu0 0.0
  %1375 = vmatprep.subr.mxu0 0.0
  %1376 = vmatpush1.xpose.msra.mxu0 0.0
  %1377 = vmatprep.subr.mxu0 0.0
  %1378 = vmatpush1.xpose.msra.mxu0 0.0
  %1379 = vmatprep.subr.mxu0 0.0
  %1380 = vmatpush1.xpose.msra.mxu0 0.0
  %1381 = vmatprep.subr.mxu0 0.0
  %1382 = vmatpush1.xpose.msra.mxu0 0.0
  %1383 = vmatprep.subr.mxu0 0.0
  %1384 = vmatpush1.xpose.msra.mxu0 %v1351
  %1385 = vmatprep.subr.mxu0 0.0
  %1386 = vmatpush2.xpose.msra.mxu0 0.0
  %1387 = vmatprep.subr.mxu0 0.0
  %1388 = vmatpush2.xpose.msra.mxu0 0.0
  %1389 = vmatprep.subr.mxu0 0.0
  %1390 = vmatpush2.xpose.msra.mxu0 0.0
  %1391 = vmatprep.subr.mxu0 0.0
  %1392 = vmatpush2.xpose.msra.mxu0 0.0
  %1393 = vmatprep.subr.mxu0 0.0
  %1394 = vmatpush2.xpose.msra.mxu0 0.0
  %1395 = vmatprep.subr.mxu0 0.0
  %1396 = vmatpush2.xpose.msra.mxu0 0.0
  %1397 = vmatprep.subr.mxu0 0.0
  %1398 = vmatpush2.xpose.msra.mxu0 0.0
  %1399 = vmatprep.subr.mxu0 0.0
  %1400 = vmatpush2.xpose.msra.mxu0 0.0
  %1401 = vmatprep.subr.mxu0 0.0
  %1402 = vmatpush2.xpose.msra.mxu0 0.0
  %1403 = vmatprep.subr.mxu0 0.0
  %1404 = vmatpush2.xpose.msra.mxu0 0.0
  %1405 = vmatprep.subr.mxu0 0.0
  %1406 = vmatpush2.xpose.msra.mxu0 0.0
  %1407 = vmatprep.subr.mxu0 0.0
  %1408 = vmatpush2.xpose.msra.mxu0 0.0
  %1409 = vmatprep.subr.mxu0 0.0
  %1410 = vmatpush2.xpose.msra.mxu0 0.0
  %1411 = vmatprep.subr.mxu0 0.0
  %1412 = vmatpush2.xpose.msra.mxu0 0.0
  %1413 = vmatprep.subr.mxu0 0.0
  %1414 = vmatpush2.xpose.msra.mxu0 0.0
  %1415 = vmatprep.subr.mxu0 0.0
  %1416 = vmatpush2.xpose.msra.mxu0 0.0
  %1417 = vmatprep.mubr.f32.mxu0 0.0
  %1418 = vmatmul.mubr.f32.gmra.mxu0 %v1349
  %v1419 = vpop.f32.mrf.mxu0
  %v1420 = vadd.f32 0.0, %v1419
  %v1421 = vpop.f32.mrf.mxu0
  %1422 = vdwg.mxu0
  %v1423 = vmul.f32 %v1420, 0.25
  %v1424 = vsel %vm285, %v1423, -inf
  %1425 = vmax.xlane.f32.xlu0 %v1424
  %v1426 = vpop.xlane.xlu0 %1425
  %v1427 = vsub.f32 %v1423, %v1426
  %v1428 = vmul.f32 %v1427, 1.442695
  %v1429 = vpow.pop %v1428
  %v1430 = vsel %vm285, %v1429, 0.0
  %1431 = vadd.xlane.f32.xlu0 %v1430
  %v1432 = vpop.xlane.xlu0 %1431
  %v1433 = vrcp.pop %v1432
  %v1434 = vmul.f32 %v1429, %v1433
  %v1436 = vsel %vm297, %v1434, 0
  %v1439 = vsel %vm301, %v1342, 0
  %1441 = vmatprep.subr.mxu0 0.0
  %1442 = vmatpush1.msra.mxu0 0.0
  %1443 = vmatprep.subr.mxu0 0.0
  %1444 = vmatpush1.msra.mxu0 0.0
  %1445 = vmatprep.subr.mxu0 0.0
  %1446 = vmatpush1.msra.mxu0 0.0
  %1447 = vmatprep.subr.mxu0 0.0
  %1448 = vmatpush1.msra.mxu0 0.0
  %1449 = vmatprep.subr.mxu0 0.0
  %1450 = vmatpush1.msra.mxu0 0.0
  %1451 = vmatprep.subr.mxu0 0.0
  %1452 = vmatpush1.msra.mxu0 0.0
  %1453 = vmatprep.subr.mxu0 0.0
  %1454 = vmatpush1.msra.mxu0 0.0
  %1455 = vmatprep.subr.mxu0 0.0
  %1456 = vmatpush1.msra.mxu0 0.0
  %1457 = vmatprep.subr.mxu0 0.0
  %1458 = vmatpush1.msra.mxu0 0.0
  %1459 = vmatprep.subr.mxu0 0.0
  %1460 = vmatpush1.msra.mxu0 0.0
  %1461 = vmatprep.subr.mxu0 0.0
  %1462 = vmatpush1.msra.mxu0 0.0
  %1463 = vmatprep.subr.mxu0 0.0
  %1464 = vmatpush1.msra.mxu0 0.0
  %1465 = vmatprep.subr.mxu0 0.0
  %1466 = vmatpush1.msra.mxu0 0.0
  %1467 = vmatprep.subr.mxu0 0.0
  %1468 = vmatpush1.msra.mxu0 0.0
  %1469 = vmatprep.subr.mxu0 0.0
  %1470 = vmatpush1.msra.mxu0 0.0
  %1471 = vmatprep.subr.mxu0 0.0
  %1472 = vmatpush1.msra.mxu0 %v1439
  %1473 = vmatprep.subr.mxu0 0.0
  %1474 = vmatpush2.msra.mxu0 0.0
  %1475 = vmatprep.subr.mxu0 0.0
  %1476 = vmatpush2.msra.mxu0 0.0
  %1477 = vmatprep.subr.mxu0 0.0
  %1478 = vmatpush2.msra.mxu0 0.0
  %1479 = vmatprep.subr.mxu0 0.0
  %1480 = vmatpush2.msra.mxu0 0.0
  %1481 = vmatprep.subr.mxu0 0.0
  %1482 = vmatpush2.msra.mxu0 0.0
  %1483 = vmatprep.subr.mxu0 0.0
  %1484 = vmatpush2.msra.mxu0 0.0
  %1485 = vmatprep.subr.mxu0 0.0
  %1486 = vmatpush2.msra.mxu0 0.0
  %1487 = vmatprep.subr.mxu0 0.0
  %1488 = vmatpush2.msra.mxu0 0.0
  %1489 = vmatprep.subr.mxu0 0.0
  %1490 = vmatpush2.msra.mxu0 0.0
  %1491 = vmatprep.subr.mxu0 0.0
  %1492 = vmatpush2.msra.mxu0 0.0
  %1493 = vmatprep.subr.mxu0 0.0
  %1494 = vmatpush2.msra.mxu0 0.0
  %1495 = vmatprep.subr.mxu0 0.0
  %1496 = vmatpush2.msra.mxu0 0.0
  %1497 = vmatprep.subr.mxu0 0.0
  %1498 = vmatpush2.msra.mxu0 0.0
  %1499 = vmatprep.subr.mxu0 0.0
  %1500 = vmatpush2.msra.mxu0 0.0
  %1501 = vmatprep.subr.mxu0 0.0
  %1502 = vmatpush2.msra.mxu0 0.0
  %1503 = vmatprep.subr.mxu0 0.0
  %1504 = vmatpush2.msra.mxu0 0.0
  %1505 = vmatprep.mubr.f32.mxu0 0.0
  %1506 = vmatmul.mubr.f32.gmra.mxu0 %v1436
  %v1507 = vpop.f32.mrf.mxu0
  %v1508 = vadd.f32 0.0, %v1507
  %v1509 = vpop.f32.mrf.mxu0
  %1510 = vdwg.mxu0
  %v1511 = vpack.c.bf16 %v1508, %v1508
  %1512 = vrot.lane.b32.xlu0 %v1340, 112
  %v1513 = vpop.permute.xlu0 %1512
  %1514 = vrot.lane.b32.xlu0 %v1340, 48
  %v1515 = vpop.permute.xlu0 %1514
  %v1516 = vsel %vm209, %v1513, 0
  %v1518 = vsel %vm209, %v1515, 0
  %1520 = vmatprep.subr.mxu0 0.0
  %1521 = vmatpush1.xpose.msra.mxu0 0.0
  %1522 = vmatprep.subr.mxu0 0.0
  %1523 = vmatpush1.xpose.msra.mxu0 0.0
  %1524 = vmatprep.subr.mxu0 0.0
  %1525 = vmatpush1.xpose.msra.mxu0 0.0
  %1526 = vmatprep.subr.mxu0 0.0
  %1527 = vmatpush1.xpose.msra.mxu0 0.0
  %1528 = vmatprep.subr.mxu0 0.0
  %1529 = vmatpush1.xpose.msra.mxu0 0.0
  %1530 = vmatprep.subr.mxu0 0.0
  %1531 = vmatpush1.xpose.msra.mxu0 0.0
  %1532 = vmatprep.subr.mxu0 0.0
  %1533 = vmatpush1.xpose.msra.mxu0 0.0
  %1534 = vmatprep.subr.mxu0 0.0
  %1535 = vmatpush1.xpose.msra.mxu0 0.0
  %1536 = vmatprep.subr.mxu0 0.0
  %1537 = vmatpush1.xpose.msra.mxu0 0.0
  %1538 = vmatprep.subr.mxu0 0.0
  %1539 = vmatpush1.xpose.msra.mxu0 0.0
  %1540 = vmatprep.subr.mxu0 0.0
  %1541 = vmatpush1.xpose.msra.mxu0 0.0
  %1542 = vmatprep.subr.mxu0 0.0
  %1543 = vmatpush1.xpose.msra.mxu0 0.0
  %1544 = vmatprep.subr.mxu0 0.0
  %1545 = vmatpush1.xpose.msra.mxu0 0.0
  %1546 = vmatprep.subr.mxu0 0.0
  %1547 = vmatpush1.xpose.msra.mxu0 0.0
  %1548 = vmatprep.subr.mxu0 0.0
  %1549 = vmatpush1.xpose.msra.mxu0 0.0
  %1550 = vmatprep.subr.mxu0 0.0
  %1551 = vmatpush1.xpose.msra.mxu0 %v1518
  %1552 = vmatprep.subr.mxu0 0.0
  %1553 = vmatpush2.xpose.msra.mxu0 0.0
  %1554 = vmatprep.subr.mxu0 0.0
  %1555 = vmatpush2.xpose.msra.mxu0 0.0
  %1556 = vmatprep.subr.mxu0 0.0
  %1557 = vmatpush2.xpose.msra.mxu0 0.0
  %1558 = vmatprep.subr.mxu0 0.0
  %1559 = vmatpush2.xpose.msra.mxu0 0.0
  %1560 = vmatprep.subr.mxu0 0.0
  %1561 = vmatpush2.xpose.msra.mxu0 0.0
  %1562 = vmatprep.subr.mxu0 0.0
  %1563 = vmatpush2.xpose.msra.mxu0 0.0
  %1564 = vmatprep.subr.mxu0 0.0
  %1565 = vmatpush2.xpose.msra.mxu0 0.0
  %1566 = vmatprep.subr.mxu0 0.0
  %1567 = vmatpush2.xpose.msra.mxu0 0.0
  %1568 = vmatprep.subr.mxu0 0.0
  %1569 = vmatpush2.xpose.msra.mxu0 0.0
  %1570 = vmatprep.subr.mxu0 0.0
  %1571 = vmatpush2.xpose.msra.mxu0 0.0
  %1572 = vmatprep.subr.mxu0 0.0
  %1573 = vmatpush2.xpose.msra.mxu0 0.0
  %1574 = vmatprep.subr.mxu0 0.0
  %1575 = vmatpush2.xpose.msra.mxu0 0.0
  %1576 = vmatprep.subr.mxu0 0.0
  %1577 = vmatpush2.xpose.msra.mxu0 0.0
  %1578 = vmatprep.subr.mxu0 0.0
  %1579 = vmatpush2.xpose.msra.mxu0 0.0
  %1580 = vmatprep.subr.mxu0 0.0
  %1581 = vmatpush2.xpose.msra.mxu0 0.0
  %1582 = vmatprep.subr.mxu0 0.0
  %1583 = vmatpush2.xpose.msra.mxu0 0.0
  %1584 = vmatprep.mubr.f32.mxu0 0.0
  %1585 = vmatmul.mubr.f32.gmra.mxu0 %v1516
  %v1586 = vpop.f32.mrf.mxu0
  %v1587 = vadd.f32 0.0, %v1586
  %v1588 = vpop.f32.mrf.mxu0
  %1589 = vdwg.mxu0
  %v1590 = vmul.f32 %v1587, 0.25
  %v1591 = vsel %vm285, %v1590, -inf
  %1592 = vmax.xlane.f32.xlu0 %v1591
  %v1593 = vpop.xlane.xlu0 %1592
  %v1594 = vsub.f32 %v1590, %v1593
  %v1595 = vmul.f32 %v1594, 1.442695
  %v1596 = vpow.pop %v1595
  %v1597 = vsel %vm285, %v1596, 0.0
  %1598 = vadd.xlane.f32.xlu0 %v1597
  %v1599 = vpop.xlane.xlu0 %1598
  %v1600 = vrcp.pop %v1599
  %v1601 = vmul.f32 %v1596, %v1600
  %1602 = vrot.lane.b32.xlu0 %v1342, 112
  %v1603 = vpop.permute.xlu0 %1602
  %v1605 = vsel %vm297, %v1601, 0
  %v1607 = vsel %vm301, %v1603, 0
  %1609 = vmatprep.subr.mxu0 0.0
  %1610 = vmatpush1.msra.mxu0 0.0
  %1611 = vmatprep.subr.mxu0 0.0
  %1612 = vmatpush1.msra.mxu0 0.0
  %1613 = vmatprep.subr.mxu0 0.0
  %1614 = vmatpush1.msra.mxu0 0.0
  %1615 = vmatprep.subr.mxu0 0.0
  %1616 = vmatpush1.msra.mxu0 0.0
  %1617 = vmatprep.subr.mxu0 0.0
  %1618 = vmatpush1.msra.mxu0 0.0
  %1619 = vmatprep.subr.mxu0 0.0
  %1620 = vmatpush1.msra.mxu0 0.0
  %1621 = vmatprep.subr.mxu0 0.0
  %1622 = vmatpush1.msra.mxu0 0.0
  %1623 = vmatprep.subr.mxu0 0.0
  %1624 = vmatpush1.msra.mxu0 0.0
  %1625 = vmatprep.subr.mxu0 0.0
  %1626 = vmatpush1.msra.mxu0 0.0
  %1627 = vmatprep.subr.mxu0 0.0
  %1628 = vmatpush1.msra.mxu0 0.0
  %1629 = vmatprep.subr.mxu0 0.0
  %1630 = vmatpush1.msra.mxu0 0.0
  %1631 = vmatprep.subr.mxu0 0.0
  %1632 = vmatpush1.msra.mxu0 0.0
  %1633 = vmatprep.subr.mxu0 0.0
  %1634 = vmatpush1.msra.mxu0 0.0
  %1635 = vmatprep.subr.mxu0 0.0
  %1636 = vmatpush1.msra.mxu0 0.0
  %1637 = vmatprep.subr.mxu0 0.0
  %1638 = vmatpush1.msra.mxu0 0.0
  %1639 = vmatprep.subr.mxu0 0.0
  %1640 = vmatpush1.msra.mxu0 %v1607
  %1641 = vmatprep.subr.mxu0 0.0
  %1642 = vmatpush2.msra.mxu0 0.0
  %1643 = vmatprep.subr.mxu0 0.0
  %1644 = vmatpush2.msra.mxu0 0.0
  %1645 = vmatprep.subr.mxu0 0.0
  %1646 = vmatpush2.msra.mxu0 0.0
  %1647 = vmatprep.subr.mxu0 0.0
  %1648 = vmatpush2.msra.mxu0 0.0
  %1649 = vmatprep.subr.mxu0 0.0
  %1650 = vmatpush2.msra.mxu0 0.0
  %1651 = vmatprep.subr.mxu0 0.0
  %1652 = vmatpush2.msra.mxu0 0.0
  %1653 = vmatprep.subr.mxu0 0.0
  %1654 = vmatpush2.msra.mxu0 0.0
  %1655 = vmatprep.subr.mxu0 0.0
  %1656 = vmatpush2.msra.mxu0 0.0
  %1657 = vmatprep.subr.mxu0 0.0
  %1658 = vmatpush2.msra.mxu0 0.0
  %1659 = vmatprep.subr.mxu0 0.0
  %1660 = vmatpush2.msra.mxu0 0.0
  %1661 = vmatprep.subr.mxu0 0.0
  %1662 = vmatpush2.msra.mxu0 0.0
  %1663 = vmatprep.subr.mxu0 0.0
  %1664 = vmatpush2.msra.mxu0 0.0
  %1665 = vmatprep.subr.mxu0 0.0
  %1666 = vmatpush2.msra.mxu0 0.0
  %1667 = vmatprep.subr.mxu0 0.0
  %1668 = vmatpush2.msra.mxu0 0.0
  %1669 = vmatprep.subr.mxu0 0.0
  %1670 = vmatpush2.msra.mxu0 0.0
  %1671 = vmatprep.subr.mxu0 0.0
  %1672 = vmatpush2.msra.mxu0 0.0
  %1673 = vmatprep.mubr.f32.mxu0 0.0
  %1674 = vmatmul.mubr.f32.gmra.mxu0 %v1605
  %v1675 = vpop.f32.mrf.mxu0
  %v1676 = vadd.f32 0.0, %v1675
  %v1677 = vpop.f32.mrf.mxu0
  %1678 = vdwg.mxu0
  %v1679 = vpack.c.bf16 %v1676, %v1676
  %v1681 = vsel %vm209, %v1679, 0
  %1683 = vmatprep.subr.bf16.mxu0 0
  %1684 = vmatpush1.bf16.msra.mxu0 0
  %1685 = vmatprep.subr.bf16.mxu0 0
  %1686 = vmatpush1.bf16.msra.mxu0 0
  %1687 = vmatprep.subr.bf16.mxu0 0
  %1688 = vmatpush1.bf16.msra.mxu0 0
  %1689 = vmatprep.subr.bf16.mxu0 0
  %1690 = vmatpush1.bf16.msra.mxu0 0
  %1691 = vmatprep.subr.bf16.mxu0 0
  %1692 = vmatpush1.bf16.msra.mxu0 0
  %1693 = vmatprep.subr.bf16.mxu0 0
  %1694 = vmatpush1.bf16.msra.mxu0 0
  %1695 = vmatprep.subr.bf16.mxu0 0
  %1696 = vmatpush1.bf16.msra.mxu0 0
  %1697 = vmatprep.subr.bf16.mxu0 0
  %1698 = vmatpush1.bf16.msra.mxu0 %v545
  %1699 = vmatprep.subr.bf16.mxu0 0
  %1700 = vmatpush2.bf16.msra.mxu0 0
  %1701 = vmatprep.subr.bf16.mxu0 0
  %1702 = vmatpush2.bf16.msra.mxu0 0
  %1703 = vmatprep.subr.bf16.mxu0 0
  %1704 = vmatpush2.bf16.msra.mxu0 0
  %1705 = vmatprep.subr.bf16.mxu0 0
  %1706 = vmatpush2.bf16.msra.mxu0 0
  %1707 = vmatprep.subr.bf16.mxu0 0
  %1708 = vmatpush2.bf16.msra.mxu0 0
  %1709 = vmatprep.subr.bf16.mxu0 0
  %1710 = vmatpush2.bf16.msra.mxu0 0
  %1711 = vmatprep.subr.bf16.mxu0 0
  %1712 = vmatpush2.bf16.msra.mxu0 0
  %1713 = vmatprep.subr.bf16.mxu0 0
  %1714 = vmatpush2.bf16.msra.mxu0 0
  %1715 = vmatprep.mubr.bf16.mxu0 0
  %1716 = vmatmul.mubr.bf16.gmra.mxu0 %v1681
  %v1717 = vpop.f32.mrf.mxu0
  %v1718 = vadd.f32 0.0, %v1717
  %v1719 = vpop.f32.mrf.mxu0
  %v1720 = vpop.f32.mrf.mxu0
  %v1721 = vpop.f32.mrf.mxu0
  %1722 = vdwg.mxu0
  %v1724 = vsel %vm209, %v1511, 0
  %1726 = vmatprep.subr.bf16.mxu0 0
  %1727 = vmatpush1.bf16.msra.mxu0 0
  %1728 = vmatprep.subr.bf16.mxu0 0
  %1729 = vmatpush1.bf16.msra.mxu0 0
  %1730 = vmatprep.subr.bf16.mxu0 0
  %1731 = vmatpush1.bf16.msra.mxu0 0
  %1732 = vmatprep.subr.bf16.mxu0 0
  %1733 = vmatpush1.bf16.msra.mxu0 0
  %1734 = vmatprep.subr.bf16.mxu0 0
  %1735 = vmatpush1.bf16.msra.mxu0 0
  %1736 = vmatprep.subr.bf16.mxu0 0
  %1737 = vmatpush1.bf16.msra.mxu0 0
  %1738 = vmatprep.subr.bf16.mxu0 0
  %1739 = vmatpush1.bf16.msra.mxu0 0
  %1740 = vmatprep.subr.bf16.mxu0 0
  %1741 = vmatpush1.bf16.msra.mxu0 %v376
  %1742 = vmatprep.subr.bf16.mxu0 0
  %1743 = vmatpush2.bf16.msra.mxu0 0
  %1744 = vmatprep.subr.bf16.mxu0 0
  %1745 = vmatpush2.bf16.msra.mxu0 0
  %1746 = vmatprep.subr.bf16.mxu0 0
  %1747 = vmatpush2.bf16.msra.mxu0 0
  %1748 = vmatprep.subr.bf16.mxu0 0
  %1749 = vmatpush2.bf16.msra.mxu0 0
  %1750 = vmatprep.subr.bf16.mxu0 0
  %1751 = vmatpush2.bf16.msra.mxu0 0
  %1752 = vmatprep.subr.bf16.mxu0 0
  %1753 = vmatpush2.bf16.msra.mxu0 0
  %1754 = vmatprep.subr.bf16.mxu0 0
  %1755 = vmatpush2.bf16.msra.mxu0 0
  %1756 = vmatprep.subr.bf16.mxu0 0
  %1757 = vmatpush2.bf16.msra.mxu0 0
  %1758 = vmatprep.mubr.bf16.mxu0 0
  %1759 = vmatmul.mubr.bf16.gmra.mxu0 %v1724
  %v1760 = vpop.f32.mrf.mxu0
  %v1761 = vadd.f32 %v1718, %v1760
  %v1762 = vpop.f32.mrf.mxu0
  %v1763 = vpop.f32.mrf.mxu0
  %v1764 = vpop.f32.mrf.mxu0
  %1765 = vdwg.mxu0
  %1766 = vrot.lane.b32.xlu0 %v1340, 96
  %v1767 = vpop.permute.xlu0 %1766
  %1768 = vrot.lane.b32.xlu0 %v1340, 32
  %v1769 = vpop.permute.xlu0 %1768
  %v1770 = vsel %vm209, %v1767, 0
  %v1772 = vsel %vm209, %v1769, 0
  %1774 = vmatprep.subr.mxu0 0.0
  %1775 = vmatpush1.xpose.msra.mxu0 0.0
  %1776 = vmatprep.subr.mxu0 0.0
  %1777 = vmatpush1.xpose.msra.mxu0 0.0
  %1778 = vmatprep.subr.mxu0 0.0
  %1779 = vmatpush1.xpose.msra.mxu0 0.0
  %1780 = vmatprep.subr.mxu0 0.0
  %1781 = vmatpush1.xpose.msra.mxu0 0.0
  %1782 = vmatprep.subr.mxu0 0.0
  %1783 = vmatpush1.xpose.msra.mxu0 0.0
  %1784 = vmatprep.subr.mxu0 0.0
  %1785 = vmatpush1.xpose.msra.mxu0 0.0
  %1786 = vmatprep.subr.mxu0 0.0
  %1787 = vmatpush1.xpose.msra.mxu0 0.0
  %1788 = vmatprep.subr.mxu0 0.0
  %1789 = vmatpush1.xpose.msra.mxu0 0.0
  %1790 = vmatprep.subr.mxu0 0.0
  %1791 = vmatpush1.xpose.msra.mxu0 0.0
  %1792 = vmatprep.subr.mxu0 0.0
  %1793 = vmatpush1.xpose.msra.mxu0 0.0
  %1794 = vmatprep.subr.mxu0 0.0
  %1795 = vmatpush1.xpose.msra.mxu0 0.0
  %1796 = vmatprep.subr.mxu0 0.0
  %1797 = vmatpush1.xpose.msra.mxu0 0.0
  %1798 = vmatprep.subr.mxu0 0.0
  %1799 = vmatpush1.xpose.msra.mxu0 0.0
  %1800 = vmatprep.subr.mxu0 0.0
  %1801 = vmatpush1.xpose.msra.mxu0 0.0
  %1802 = vmatprep.subr.mxu0 0.0
  %1803 = vmatpush1.xpose.msra.mxu0 0.0
  %1804 = vmatprep.subr.mxu0 0.0
  %1805 = vmatpush1.xpose.msra.mxu0 %v1772
  %1806 = vmatprep.subr.mxu0 0.0
  %1807 = vmatpush2.xpose.msra.mxu0 0.0
  %1808 = vmatprep.subr.mxu0 0.0
  %1809 = vmatpush2.xpose.msra.mxu0 0.0
  %1810 = vmatprep.subr.mxu0 0.0
  %1811 = vmatpush2.xpose.msra.mxu0 0.0
  %1812 = vmatprep.subr.mxu0 0.0
  %1813 = vmatpush2.xpose.msra.mxu0 0.0
  %1814 = vmatprep.subr.mxu0 0.0
  %1815 = vmatpush2.xpose.msra.mxu0 0.0
  %1816 = vmatprep.subr.mxu0 0.0
  %1817 = vmatpush2.xpose.msra.mxu0 0.0
  %1818 = vmatprep.subr.mxu0 0.0
  %1819 = vmatpush2.xpose.msra.mxu0 0.0
  %1820 = vmatprep.subr.mxu0 0.0
  %1821 = vmatpush2.xpose.msra.mxu0 0.0
  %1822 = vmatprep.subr.mxu0 0.0
  %1823 = vmatpush2.xpose.msra.mxu0 0.0
  %1824 = vmatprep.subr.mxu0 0.0
  %1825 = vmatpush2.xpose.msra.mxu0 0.0
  %1826 = vmatprep.subr.mxu0 0.0
  %1827 = vmatpush2.xpose.msra.mxu0 0.0
  %1828 = vmatprep.subr.mxu0 0.0
  %1829 = vmatpush2.xpose.msra.mxu0 0.0
  %1830 = vmatprep.subr.mxu0 0.0
  %1831 = vmatpush2.xpose.msra.mxu0 0.0
  %1832 = vmatprep.subr.mxu0 0.0
  %1833 = vmatpush2.xpose.msra.mxu0 0.0
  %1834 = vmatprep.subr.mxu0 0.0
  %1835 = vmatpush2.xpose.msra.mxu0 0.0
  %1836 = vmatprep.subr.mxu0 0.0
  %1837 = vmatpush2.xpose.msra.mxu0 0.0
  %1838 = vmatprep.mubr.f32.mxu0 0.0
  %1839 = vmatmul.mubr.f32.gmra.mxu0 %v1770
  %v1840 = vpop.f32.mrf.mxu0
  %v1841 = vadd.f32 0.0, %v1840
  %v1842 = vpop.f32.mrf.mxu0
  %1843 = vdwg.mxu0
  %v1844 = vmul.f32 %v1841, 0.25
  %v1845 = vsel %vm285, %v1844, -inf
  %1846 = vmax.xlane.f32.xlu0 %v1845
  %v1847 = vpop.xlane.xlu0 %1846
  %v1848 = vsub.f32 %v1844, %v1847
  %v1849 = vmul.f32 %v1848, 1.442695
  %v1850 = vpow.pop %v1849
  %v1851 = vsel %vm285, %v1850, 0.0
  %1852 = vadd.xlane.f32.xlu0 %v1851
  %v1853 = vpop.xlane.xlu0 %1852
  %v1854 = vrcp.pop %v1853
  %v1855 = vmul.f32 %v1850, %v1854
  %1856 = vrot.lane.b32.xlu0 %v1342, 96
  %v1857 = vpop.permute.xlu0 %1856
  %v1859 = vsel %vm297, %v1855, 0
  %v1861 = vsel %vm301, %v1857, 0
  %1863 = vmatprep.subr.mxu0 0.0
  %1864 = vmatpush1.msra.mxu0 0.0
  %1865 = vmatprep.subr.mxu0 0.0
  %1866 = vmatpush1.msra.mxu0 0.0
  %1867 = vmatprep.subr.mxu0 0.0
  %1868 = vmatpush1.msra.mxu0 0.0
  %1869 = vmatprep.subr.mxu0 0.0
  %1870 = vmatpush1.msra.mxu0 0.0
  %1871 = vmatprep.subr.mxu0 0.0
  %1872 = vmatpush1.msra.mxu0 0.0
  %1873 = vmatprep.subr.mxu0 0.0
  %1874 = vmatpush1.msra.mxu0 0.0
  %1875 = vmatprep.subr.mxu0 0.0
  %1876 = vmatpush1.msra.mxu0 0.0
  %1877 = vmatprep.subr.mxu0 0.0
  %1878 = vmatpush1.msra.mxu0 0.0
  %1879 = vmatprep.subr.mxu0 0.0
  %1880 = vmatpush1.msra.mxu0 0.0
  %1881 = vmatprep.subr.mxu0 0.0
  %1882 = vmatpush1.msra.mxu0 0.0
  %1883 = vmatprep.subr.mxu0 0.0
  %1884 = vmatpush1.msra.mxu0 0.0
  %1885 = vmatprep.subr.mxu0 0.0
  %1886 = vmatpush1.msra.mxu0 0.0
  %1887 = vmatprep.subr.mxu0 0.0
  %1888 = vmatpush1.msra.mxu0 0.0
  %1889 = vmatprep.subr.mxu0 0.0
  %1890 = vmatpush1.msra.mxu0 0.0
  %1891 = vmatprep.subr.mxu0 0.0
  %1892 = vmatpush1.msra.mxu0 0.0
  %1893 = vmatprep.subr.mxu0 0.0
  %1894 = vmatpush1.msra.mxu0 %v1861
  %1895 = vmatprep.subr.mxu0 0.0
  %1896 = vmatpush2.msra.mxu0 0.0
  %1897 = vmatprep.subr.mxu0 0.0
  %1898 = vmatpush2.msra.mxu0 0.0
  %1899 = vmatprep.subr.mxu0 0.0
  %1900 = vmatpush2.msra.mxu0 0.0
  %1901 = vmatprep.subr.mxu0 0.0
  %1902 = vmatpush2.msra.mxu0 0.0
  %1903 = vmatprep.subr.mxu0 0.0
  %1904 = vmatpush2.msra.mxu0 0.0
  %1905 = vmatprep.subr.mxu0 0.0
  %1906 = vmatpush2.msra.mxu0 0.0
  %1907 = vmatprep.subr.mxu0 0.0
  %1908 = vmatpush2.msra.mxu0 0.0
  %1909 = vmatprep.subr.mxu0 0.0
  %1910 = vmatpush2.msra.mxu0 0.0
  %1911 = vmatprep.subr.mxu0 0.0
  %1912 = vmatpush2.msra.mxu0 0.0
  %1913 = vmatprep.subr.mxu0 0.0
  %1914 = vmatpush2.msra.mxu0 0.0
  %1915 = vmatprep.subr.mxu0 0.0
  %1916 = vmatpush2.msra.mxu0 0.0
  %1917 = vmatprep.subr.mxu0 0.0
  %1918 = vmatpush2.msra.mxu0 0.0
  %1919 = vmatprep.subr.mxu0 0.0
  %1920 = vmatpush2.msra.mxu0 0.0
  %1921 = vmatprep.subr.mxu0 0.0
  %1922 = vmatpush2.msra.mxu0 0.0
  %1923 = vmatprep.subr.mxu0 0.0
  %1924 = vmatpush2.msra.mxu0 0.0
  %1925 = vmatprep.subr.mxu0 0.0
  %1926 = vmatpush2.msra.mxu0 0.0
  %1927 = vmatprep.mubr.f32.mxu0 0.0
  %1928 = vmatmul.mubr.f32.gmra.mxu0 %v1859
  %v1929 = vpop.f32.mrf.mxu0
  %v1930 = vadd.f32 0.0, %v1929
  %v1931 = vpop.f32.mrf.mxu0
  %1932 = vdwg.mxu0
  %v1933 = vpack.c.bf16 %v1930, %v1930
  %v1935 = vsel %vm209, %v1933, 0
  %1937 = vmatprep.subr.bf16.mxu0 0
  %1938 = vmatpush1.bf16.msra.mxu0 0
  %1939 = vmatprep.subr.bf16.mxu0 0
  %1940 = vmatpush1.bf16.msra.mxu0 0
  %1941 = vmatprep.subr.bf16.mxu0 0
  %1942 = vmatpush1.bf16.msra.mxu0 0
  %1943 = vmatprep.subr.bf16.mxu0 0
  %1944 = vmatpush1.bf16.msra.mxu0 0
  %1945 = vmatprep.subr.bf16.mxu0 0
  %1946 = vmatpush1.bf16.msra.mxu0 0
  %1947 = vmatprep.subr.bf16.mxu0 0
  %1948 = vmatpush1.bf16.msra.mxu0 0
  %1949 = vmatprep.subr.bf16.mxu0 0
  %1950 = vmatpush1.bf16.msra.mxu0 0
  %1951 = vmatprep.subr.bf16.mxu0 0
  %1952 = vmatpush1.bf16.msra.mxu0 %v800
  %1953 = vmatprep.subr.bf16.mxu0 0
  %1954 = vmatpush2.bf16.msra.mxu0 0
  %1955 = vmatprep.subr.bf16.mxu0 0
  %1956 = vmatpush2.bf16.msra.mxu0 0
  %1957 = vmatprep.subr.bf16.mxu0 0
  %1958 = vmatpush2.bf16.msra.mxu0 0
  %1959 = vmatprep.subr.bf16.mxu0 0
  %1960 = vmatpush2.bf16.msra.mxu0 0
  %1961 = vmatprep.subr.bf16.mxu0 0
  %1962 = vmatpush2.bf16.msra.mxu0 0
  %1963 = vmatprep.subr.bf16.mxu0 0
  %1964 = vmatpush2.bf16.msra.mxu0 0
  %1965 = vmatprep.subr.bf16.mxu0 0
  %1966 = vmatpush2.bf16.msra.mxu0 0
  %1967 = vmatprep.subr.bf16.mxu0 0
  %1968 = vmatpush2.bf16.msra.mxu0 0
  %1969 = vmatprep.mubr.bf16.mxu0 0
  %1970 = vmatmul.mubr.bf16.gmra.mxu0 %v1935
  %v1971 = vpop.f32.mrf.mxu0
  %v1972 = vadd.f32 0.0, %v1971
  %v1973 = vpop.f32.mrf.mxu0
  %v1974 = vpop.f32.mrf.mxu0
  %v1975 = vpop.f32.mrf.mxu0
  %1976 = vdwg.mxu0
  %v1977 = vadd.f32 %v1761, %v1972
  %1978 = vrot.lane.b32.xlu0 %v1340, 80
  %v1979 = vpop.permute.xlu0 %1978
  %1980 = vrot.lane.b32.xlu0 %v1340, 16
  %v1981 = vpop.permute.xlu0 %1980
  %v1982 = vsel %vm209, %v1979, 0
  %v1984 = vsel %vm209, %v1981, 0
  %1986 = vmatprep.subr.mxu0 0.0
  %1987 = vmatpush1.xpose.msra.mxu0 0.0
  %1988 = vmatprep.subr.mxu0 0.0
  %1989 = vmatpush1.xpose.msra.mxu0 0.0
  %1990 = vmatprep.subr.mxu0 0.0
  %1991 = vmatpush1.xpose.msra.mxu0 0.0
  %1992 = vmatprep.subr.mxu0 0.0
  %1993 = vmatpush1.xpose.msra.mxu0 0.0
  %1994 = vmatprep.subr.mxu0 0.0
  %1995 = vmatpush1.xpose.msra.mxu0 0.0
  %1996 = vmatprep.subr.mxu0 0.0
  %1997 = vmatpush1.xpose.msra.mxu0 0.0
  %1998 = vmatprep.subr.mxu0 0.0
  %1999 = vmatpush1.xpose.msra.mxu0 0.0
  %2000 = vmatprep.subr.mxu0 0.0
  %2001 = vmatpush1.xpose.msra.mxu0 0.0
  %2002 = vmatprep.subr.mxu0 0.0
  %2003 = vmatpush1.xpose.msra.mxu0 0.0
  %2004 = vmatprep.subr.mxu0 0.0
  %2005 = vmatpush1.xpose.msra.mxu0 0.0
  %2006 = vmatprep.subr.mxu0 0.0
  %2007 = vmatpush1.xpose.msra.mxu0 0.0
  %2008 = vmatprep.subr.mxu0 0.0
  %2009 = vmatpush1.xpose.msra.mxu0 0.0
  %2010 = vmatprep.subr.mxu0 0.0
  %2011 = vmatpush1.xpose.msra.mxu0 0.0
  %2012 = vmatprep.subr.mxu0 0.0
  %2013 = vmatpush1.xpose.msra.mxu0 0.0
  %2014 = vmatprep.subr.mxu0 0.0
  %2015 = vmatpush1.xpose.msra.mxu0 0.0
  %2016 = vmatprep.subr.mxu0 0.0
  %2017 = vmatpush1.xpose.msra.mxu0 %v1984
  %2018 = vmatprep.subr.mxu0 0.0
  %2019 = vmatpush2.xpose.msra.mxu0 0.0
  %2020 = vmatprep.subr.mxu0 0.0
  %2021 = vmatpush2.xpose.msra.mxu0 0.0
  %2022 = vmatprep.subr.mxu0 0.0
  %2023 = vmatpush2.xpose.msra.mxu0 0.0
  %2024 = vmatprep.subr.mxu0 0.0
  %2025 = vmatpush2.xpose.msra.mxu0 0.0
  %2026 = vmatprep.subr.mxu0 0.0
  %2027 = vmatpush2.xpose.msra.mxu0 0.0
  %2028 = vmatprep.subr.mxu0 0.0
  %2029 = vmatpush2.xpose.msra.mxu0 0.0
  %2030 = vmatprep.subr.mxu0 0.0
  %2031 = vmatpush2.xpose.msra.mxu0 0.0
  %2032 = vmatprep.subr.mxu0 0.0
  %2033 = vmatpush2.xpose.msra.mxu0 0.0
  %2034 = vmatprep.subr.mxu0 0.0
  %2035 = vmatpush2.xpose.msra.mxu0 0.0
  %2036 = vmatprep.subr.mxu0 0.0
  %2037 = vmatpush2.xpose.msra.mxu0 0.0
  %2038 = vmatprep.subr.mxu0 0.0
  %2039 = vmatpush2.xpose.msra.mxu0 0.0
  %2040 = vmatprep.subr.mxu0 0.0
  %2041 = vmatpush2.xpose.msra.mxu0 0.0
  %2042 = vmatprep.subr.mxu0 0.0
  %2043 = vmatpush2.xpose.msra.mxu0 0.0
  %2044 = vmatprep.subr.mxu0 0.0
  %2045 = vmatpush2.xpose.msra.mxu0 0.0
  %2046 = vmatprep.subr.mxu0 0.0
  %2047 = vmatpush2.xpose.msra.mxu0 0.0
  %2048 = vmatprep.subr.mxu0 0.0
  %2049 = vmatpush2.xpose.msra.mxu0 0.0
  %2050 = vmatprep.mubr.f32.mxu0 0.0
  %2051 = vmatmul.mubr.f32.gmra.mxu0 %v1982
  %v2052 = vpop.f32.mrf.mxu0
  %v2053 = vadd.f32 0.0, %v2052
  %v2054 = vpop.f32.mrf.mxu0
  %2055 = vdwg.mxu0
  %v2056 = vmul.f32 %v2053, 0.25
  %v2057 = vsel %vm285, %v2056, -inf
  %2058 = vmax.xlane.f32.xlu0 %v2057
  %v2059 = vpop.xlane.xlu0 %2058
  %v2060 = vsub.f32 %v2056, %v2059
  %v2061 = vmul.f32 %v2060, 1.442695
  %v2062 = vpow.pop %v2061
  %v2063 = vsel %vm285, %v2062, 0.0
  %2064 = vadd.xlane.f32.xlu0 %v2063
  %v2065 = vpop.xlane.xlu0 %2064
  %v2066 = vrcp.pop %v2065
  %v2067 = vmul.f32 %v2062, %v2066
  %2068 = vrot.lane.b32.xlu0 %v1342, 80
  %v2069 = vpop.permute.xlu0 %2068
  %v2071 = vsel %vm297, %v2067, 0
  %v2073 = vsel %vm301, %v2069, 0
  %2075 = vmatprep.subr.mxu0 0.0
  %2076 = vmatpush1.msra.mxu0 0.0
  %2077 = vmatprep.subr.mxu0 0.0
  %2078 = vmatpush1.msra.mxu0 0.0
  %2079 = vmatprep.subr.mxu0 0.0
  %2080 = vmatpush1.msra.mxu0 0.0
  %2081 = vmatprep.subr.mxu0 0.0
  %2082 = vmatpush1.msra.mxu0 0.0
  %2083 = vmatprep.subr.mxu0 0.0
  %2084 = vmatpush1.msra.mxu0 0.0
  %2085 = vmatprep.subr.mxu0 0.0
  %2086 = vmatpush1.msra.mxu0 0.0
  %2087 = vmatprep.subr.mxu0 0.0
  %2088 = vmatpush1.msra.mxu0 0.0
  %2089 = vmatprep.subr.mxu0 0.0
  %2090 = vmatpush1.msra.mxu0 0.0
  %2091 = vmatprep.subr.mxu0 0.0
  %2092 = vmatpush1.msra.mxu0 0.0
  %2093 = vmatprep.subr.mxu0 0.0
  %2094 = vmatpush1.msra.mxu0 0.0
  %2095 = vmatprep.subr.mxu0 0.0
  %2096 = vmatpush1.msra.mxu0 0.0
  %2097 = vmatprep.subr.mxu0 0.0
  %2098 = vmatpush1.msra.mxu0 0.0
  %2099 = vmatprep.subr.mxu0 0.0
  %2100 = vmatpush1.msra.mxu0 0.0
  %2101 = vmatprep.subr.mxu0 0.0
  %2102 = vmatpush1.msra.mxu0 0.0
  %2103 = vmatprep.subr.mxu0 0.0
  %2104 = vmatpush1.msra.mxu0 0.0
  %2105 = vmatprep.subr.mxu0 0.0
  %2106 = vmatpush1.msra.mxu0 %v2073
  %2107 = vmatprep.subr.mxu0 0.0
  %2108 = vmatpush2.msra.mxu0 0.0
  %2109 = vmatprep.subr.mxu0 0.0
  %2110 = vmatpush2.msra.mxu0 0.0
  %2111 = vmatprep.subr.mxu0 0.0
  %2112 = vmatpush2.msra.mxu0 0.0
  %2113 = vmatprep.subr.mxu0 0.0
  %2114 = vmatpush2.msra.mxu0 0.0
  %2115 = vmatprep.subr.mxu0 0.0
  %2116 = vmatpush2.msra.mxu0 0.0
  %2117 = vmatprep.subr.mxu0 0.0
  %2118 = vmatpush2.msra.mxu0 0.0
  %2119 = vmatprep.subr.mxu0 0.0
  %2120 = vmatpush2.msra.mxu0 0.0
  %2121 = vmatprep.subr.mxu0 0.0
  %2122 = vmatpush2.msra.mxu0 0.0
  %2123 = vmatprep.subr.mxu0 0.0
  %2124 = vmatpush2.msra.mxu0 0.0
  %2125 = vmatprep.subr.mxu0 0.0
  %2126 = vmatpush2.msra.mxu0 0.0
  %2127 = vmatprep.subr.mxu0 0.0
  %2128 = vmatpush2.msra.mxu0 0.0
  %2129 = vmatprep.subr.mxu0 0.0
  %2130 = vmatpush2.msra.mxu0 0.0
  %2131 = vmatprep.subr.mxu0 0.0
  %2132 = vmatpush2.msra.mxu0 0.0
  %2133 = vmatprep.subr.mxu0 0.0
  %2134 = vmatpush2.msra.mxu0 0.0
  %2135 = vmatprep.subr.mxu0 0.0
  %2136 = vmatpush2.msra.mxu0 0.0
  %2137 = vmatprep.subr.mxu0 0.0
  %2138 = vmatpush2.msra.mxu0 0.0
  %2139 = vmatprep.mubr.f32.mxu0 0.0
  %2140 = vmatmul.mubr.f32.gmra.mxu0 %v2071
  %v2141 = vpop.f32.mrf.mxu0
  %v2142 = vadd.f32 0.0, %v2141
  %v2143 = vpop.f32.mrf.mxu0
  %2144 = vdwg.mxu0
  %v2145 = vpack.c.bf16 %v2142, %v2142
  %v2147 = vsel %vm209, %v2145, 0
  %2149 = vmatprep.subr.bf16.mxu0 0
  %2150 = vmatpush1.bf16.msra.mxu0 0
  %2151 = vmatprep.subr.bf16.mxu0 0
  %2152 = vmatpush1.bf16.msra.mxu0 0
  %2153 = vmatprep.subr.bf16.mxu0 0
  %2154 = vmatpush1.bf16.msra.mxu0 0
  %2155 = vmatprep.subr.bf16.mxu0 0
  %2156 = vmatpush1.bf16.msra.mxu0 0
  %2157 = vmatprep.subr.bf16.mxu0 0
  %2158 = vmatpush1.bf16.msra.mxu0 0
  %2159 = vmatprep.subr.bf16.mxu0 0
  %2160 = vmatpush1.bf16.msra.mxu0 0
  %2161 = vmatprep.subr.bf16.mxu0 0
  %2162 = vmatpush1.bf16.msra.mxu0 0
  %2163 = vmatprep.subr.bf16.mxu0 0
  %2164 = vmatpush1.bf16.msra.mxu0 %v1013
  %2165 = vmatprep.subr.bf16.mxu0 0
  %2166 = vmatpush2.bf16.msra.mxu0 0
  %2167 = vmatprep.subr.bf16.mxu0 0
  %2168 = vmatpush2.bf16.msra.mxu0 0
  %2169 = vmatprep.subr.bf16.mxu0 0
  %2170 = vmatpush2.bf16.msra.mxu0 0
  %2171 = vmatprep.subr.bf16.mxu0 0
  %2172 = vmatpush2.bf16.msra.mxu0 0
  %2173 = vmatprep.subr.bf16.mxu0 0
  %2174 = vmatpush2.bf16.msra.mxu0 0
  %2175 = vmatprep.subr.bf16.mxu0 0
  %2176 = vmatpush2.bf16.msra.mxu0 0
  %2177 = vmatprep.subr.bf16.mxu0 0
  %2178 = vmatpush2.bf16.msra.mxu0 0
  %2179 = vmatprep.subr.bf16.mxu0 0
  %2180 = vmatpush2.bf16.msra.mxu0 0
  %2181 = vmatprep.mubr.bf16.mxu0 0
  %2182 = vmatmul.mubr.bf16.gmra.mxu0 %v2147
  %v2183 = vpop.f32.mrf.mxu0
  %v2184 = vadd.f32 0.0, %v2183
  %v2185 = vpop.f32.mrf.mxu0
  %v2186 = vpop.f32.mrf.mxu0
  %v2187 = vpop.f32.mrf.mxu0
  %2188 = vdwg.mxu0
  %v2189 = vadd.f32 %v1977, %v2184
  %v2190 = vadd.f32 %v1285, %v2189
  %v2191 = vadd.f32 %v2190, %v1063
  %v2192 = vsel %vm123, %v2191, 0.0
  %2193 = vadd.xlane.f32.xlu0 %v2192
  %v2194 = vpop.xlane.xlu0 %2193
  %v2195 = vmul.f32 %v2194, %v127
  %v2196 = vsub.f32 %v2191, %v2195
  %v2197 = vmul.f32 %v2196, %v2196
  %v2198 = vsel %vm123, %v2197, 0.0
  %2199 = vadd.xlane.f32.xlu0 %v2198
  %v2200 = vpop.xlane.xlu0 %2199
  %v2201 = vmul.f32 %v2200, %v127
  %v2202 = vadd.f32 %v2201, 1e-05
  %v2203 = vrsqrt.pop %v2202
  %v2204 = vmul.f32 %v2196, %v2203
  %v2205 = vmul.f32 %v2204, %v1083
  %v2206 = vadd.f32 %v2205, %v1090
  %v2207 = vpack.c.bf16 %v2206, %v2206
  %v2209 = vsel %vm161, %v2207, 0
  %2211 = vmatprep.subr.bf16.mxu0 0
  %2212 = vmatpush1.bf16.msra.mxu0 0
  %2213 = vmatprep.subr.bf16.mxu0 0
  %2214 = vmatpush1.bf16.msra.mxu0 0
  %2215 = vmatprep.subr.bf16.mxu0 0
  %2216 = vmatpush1.bf16.msra.mxu0 0
  %2217 = vmatprep.subr.bf16.mxu0 0
  %2218 = vmatpush1.bf16.msra.mxu0 0
  %2219 = vmatprep.subr.bf16.mxu0 %v1101
  %2220 = vmatpush1.bf16.msra.mxu0 %v1100
  %2221 = vmatprep.subr.bf16.mxu0 %v1099
  %2222 = vmatpush1.bf16.msra.mxu0 %v1098
  %2223 = vmatprep.subr.bf16.mxu0 %v1097
  %2224 = vmatpush1.bf16.msra.mxu0 %v1096
  %2225 = vmatprep.subr.bf16.mxu0 %v1095
  %2226 = vmatpush1.bf16.msra.mxu0 %v1094
  %2227 = vmatprep.subr.bf16.mxu0 0
  %2228 = vmatpush2.bf16.msra.mxu0 0
  %2229 = vmatprep.subr.bf16.mxu0 0
  %2230 = vmatpush2.bf16.msra.mxu0 0
  %2231 = vmatprep.subr.bf16.mxu0 0
  %2232 = vmatpush2.bf16.msra.mxu0 0
  %2233 = vmatprep.subr.bf16.mxu0 0
  %2234 = vmatpush2.bf16.msra.mxu0 0
  %2235 = vmatprep.subr.bf16.mxu0 0
  %2236 = vmatpush2.bf16.msra.mxu0 0
  %2237 = vmatprep.subr.bf16.mxu0 0
  %2238 = vmatpush2.bf16.msra.mxu0 0
  %2239 = vmatprep.subr.bf16.mxu0 0
  %2240 = vmatpush2.bf16.msra.mxu0 0
  %2241 = vmatprep.subr.bf16.mxu0 0
  %2242 = vmatpush2.bf16.msra.mxu0 0
  %2243 = vmatprep.mubr.bf16.mxu0 0
  %2244 = vmatmul.mubr.bf16.gmra.mxu0 %v2209
  %v2245 = vpop.f32.mrf.mxu0
  %v2246 = vadd.f32 %v1106, %v2245
  %v2247 = vpop.f32.mrf.mxu0
  %v2248 = vadd.f32 %v1110, %v2247
  %v2249 = vpop.f32.mrf.mxu0
  %v2250 = vpop.f32.mrf.mxu0
  %2251 = vdwg.mxu0
  %v2252 = vmul.f32 %v2246, 0.5
  %v2253 = vmul.f32 %v2248, 0.5
  %v2254 = vmul.f32 %v2246, 0.70710677
  %v2255 = vmul.f32 %v2248, 0.70710677
  %vm2256 = vcmp.ge.f32.partialorder %v2254, 0.0
  %vm2257 = vcmp.ge.f32.partialorder %v2255, 0.0
  %v2258 = vsel %vm2256, 1.0, -1.0
  %v2259 = vsel %vm2257, 1.0, -1.0
  %v2260 = vand.u32 2147483647, %v2254
  %v2261 = vand.u32 2147483647, %v2255
  %v2262 = vmul.f32 %v2260, 0.3275911
  %v2263 = vmul.f32 %v2261, 0.3275911
  %v2264 = vadd.f32 %v2262, 1.0
  %v2265 = vadd.f32 %v2263, 1.0
  %v2266 = vrcp.pop %v2264
  %v2267 = vmul.f32 1.0, %v2266
  %v2268 = vrcp.pop %v2265
  %v2269 = vmul.f32 1.0, %v2268
  %v2270 = vmul.f32 %v2267, 1.0614054
  %v2271 = vmul.f32 %v2269, 1.0614054
  %v2272 = vadd.f32 %v2270, -1.4531521
  %v2273 = vadd.f32 %v2271, -1.4531521
  %v2274 = vmul.f32 %v2272, %v2267
  %v2275 = vmul.f32 %v2273, %v2269
  %v2276 = vadd.f32 %v2274, 1.4214138
  %v2277 = vadd.f32 %v2275, 1.4214138
  %v2278 = vmul.f32 %v2276, %v2267
  %v2279 = vmul.f32 %v2277, %v2269
  %v2280 = vadd.f32 %v2278, -0.28449672
  %v2281 = vadd.f32 %v2279, -0.28449672
  %v2282 = vmul.f32 %v2280, %v2267
  %v2283 = vmul.f32 %v2281, %v2269
  %v2284 = vadd.f32 %v2282, 0.2548296
  %v2285 = vadd.f32 %v2283, 0.2548296
  %v2286 = vmul.f32 %v2284, %v2267
  %v2287 = vmul.f32 %v2285, %v2269
  %v2288 = vsub.f32 0.0, %v2260
  %v2289 = vsub.f32 0.0, %v2261
  %v2290 = vmul.f32 %v2288, %v2260
  %v2291 = vmul.f32 %v2289, %v2261
  %v2292 = vmul.f32 %v2290, 1.442695
  %v2293 = vpow.pop %v2292
  %v2294 = vmul.f32 %v2291, 1.442695
  %v2295 = vpow.pop %v2294
  %v2296 = vmul.f32 %v2286, %v2293
  %v2297 = vmul.f32 %v2287, %v2295
  %v2298 = vsub.f32 1.0, %v2296
  %v2299 = vsub.f32 1.0, %v2297
  %v2300 = vmul.f32 %v2258, %v2298
  %v2301 = vmul.f32 %v2259, %v2299
  %v2302 = vadd.f32 %v2300, 1.0
  %v2303 = vadd.f32 %v2301, 1.0
  %v2304 = vmul.f32 %v2252, %v2302
  %v2305 = vmul.f32 %v2253, %v2303
  %v2306 = vpack.c.bf16 %v2304, %v2304
  %v2307 = vpack.c.bf16 %v2305, %v2305
  %2308 = vmatprep.subr.bf16.mxu0 0
  %2309 = vmatpush1.bf16.msra.mxu0 %v1220
  %2310 = vmatprep.subr.bf16.mxu0 0
  %2311 = vmatpush1.bf16.msra.mxu0 %v1219
  %2312 = vmatprep.subr.bf16.mxu0 0
  %2313 = vmatpush1.bf16.msra.mxu0 %v1218
  %2314 = vmatprep.subr.bf16.mxu0 0
  %2315 = vmatpush1.bf16.msra.mxu0 %v1217
  %2316 = vmatprep.subr.bf16.mxu0 0
  %2317 = vmatpush1.bf16.msra.mxu0 %v1216
  %2318 = vmatprep.subr.bf16.mxu0 0
  %2319 = vmatpush1.bf16.msra.mxu0 %v1215
  %2320 = vmatprep.subr.bf16.mxu0 0
  %2321 = vmatpush1.bf16.msra.mxu0 %v1214
  %2322 = vmatprep.subr.bf16.mxu0 0
  %2323 = vmatpush1.bf16.msra.mxu0 %v1213
  %2324 = vmatprep.subr.bf16.mxu0 0
  %2325 = vmatpush2.bf16.msra.mxu0 %v1228
  %2326 = vmatprep.subr.bf16.mxu0 0
  %2327 = vmatpush2.bf16.msra.mxu0 %v1227
  %2328 = vmatprep.subr.bf16.mxu0 0
  %2329 = vmatpush2.bf16.msra.mxu0 %v1226
  %2330 = vmatprep.subr.bf16.mxu0 0
  %2331 = vmatpush2.bf16.msra.mxu0 %v1225
  %2332 = vmatprep.subr.bf16.mxu0 0
  %2333 = vmatpush2.bf16.msra.mxu0 %v1224
  %2334 = vmatprep.subr.bf16.mxu0 0
  %2335 = vmatpush2.bf16.msra.mxu0 %v1223
  %2336 = vmatprep.subr.bf16.mxu0 0
  %2337 = vmatpush2.bf16.msra.mxu0 %v1222
  %2338 = vmatprep.subr.bf16.mxu0 0
  %2339 = vmatpush2.bf16.msra.mxu0 %v1221
  %2340 = vmatprep.mubr.bf16.mxu0 %v2307
  %2341 = vmatmul.mubr.bf16.gmra.mxu0 %v2306
  %v2342 = vpop.f32.mrf.mxu0
  %v2343 = vadd.f32 %v1233, %v2342
  %v2344 = vpop.f32.mrf.mxu0
  %v2345 = vpop.f32.mrf.mxu0
  %v2346 = vpop.f32.mrf.mxu0
  %2347 = vdwg.mxu0
  %v2348 = vadd.f32 %v2191, %v2343
  %v2349 = vpack.c.bf16 %v2348, %v2348
  %s2350 = scalar_lea.vmem %s12, 4
  %v2351 = vld [vmem:[%s2350] sm:$0x7]
  %v2352 = vsel %vm1279, %v2349, %v2351
  %2353 = vst [vmem:[%s2350] sm:$0x7] %v2352
  // Predicated region
  $region50: #{adavit_forward.9} parent=0 // pred_check
    _
  $region51: #{adavit_forward.9} parent=0 // pred_check_branch
    %2355 = sbr.rel (0) target = $region53
  $region52: #{adavit_forward.9} parent=0 // pred_region
    _
  $region53: #{adavit_forward.9} parent=0 // pred_fallthru
    _
  // Predicated region
  $region54: #{adavit_forward.9} parent=0 // pred_check
    _
  $region55: #{adavit_forward.9} parent=0 // pred_check_branch
    %2357 = sbr.rel (0) target = $region57
  $region56: #{adavit_forward.9} parent=0 // pred_region
    _
  $region57: #{adavit_forward.9} parent=0 // pred_fallthru
    _

</llo_original>
